<compile_context>
chip_gen: v6e
topology: v6e:2x2x1
jax: 0.10.0
libtpu: 0.0.40
codegen_flags: <defaults>
</compile_context>

<pallas_src>
import jax
import jax.numpy as jnp
from jax import lax
from jax.experimental import pallas as pl
from jax.experimental.pallas import tpu as pltpu

LEAK = 0.2
EPS = 1e-5
CPAD = 128   # lane-dense channel padding (multiple of 128)
LEFT = 8     # sublane-aligned column offset of the scratch interior


def _leaky(x):
    return jnp.where(x >= 0, x, LEAK * x)


def _round_up(x, m):
    return ((x + m - 1) // m) * m


def _zero_halo(ref, W):
    """Zero the halo of an (H+2, WP, C) scratch whose interior is rows 1..H,
    cols LEFT..LEFT+W-1.  Only cells a 3x3 window can read outside the
    interior must be zero: rows 0 / H+1 and cols LEFT-1 / LEFT+W.  All stores
    are full-width rows or aligned 8-sublane slabs (no masked 1-sublane
    stores).  Done every grid step -> safe under megacore sharding."""
    Hp, Wp, C = ref.shape
    zrow = jnp.zeros((1, Wp, C), ref.dtype)
    ref[0:1, :, :] = zrow
    ref[Hp - 1:Hp, :, :] = zrow
    zcol = jnp.zeros((Hp, 8, C), ref.dtype)
    ref[:, 0:8, :] = zcol                                 # covers col LEFT-1
    ref[:, LEFT + W:LEFT + W + 8, :] = zcol               # covers col LEFT+W


def _conv3x3(pad_ref, w_ref, H, W, C):
    """3x3 conv over a zero-haloed (H+2, WP, C) scratch as 9 accumulated
    (H*W, C) @ (C, C) MXU dots (no materialized im2col patch)."""
    acc = None
    for kh in range(3):
        for kw in range(3):
            t = kh * 3 + kw
            win = pad_ref[kh:kh + H, LEFT - 1 + kw:LEFT - 1 + kw + W, :]
            d = jnp.dot(win.reshape(H * W, C), w_ref[t * C:(t + 1) * C, :],
                        preferred_element_type=jnp.float32)
            acc = d if acc is None else acc + d
    return acc


def residual_block_kernel(x_hbm, w1_ref, s1_ref, b1_ref, w2_ref, s2_ref, b2_ref,
                          o_ref, xp_ref, hp_ref, dma_sem):
    # x_hbm : (N, H, W, CPAD)  whole input, left in HBM (pl.ANY)
    # w*_ref: (9*CPAD, CPAD)   im2col conv weights
    # s*/b* : (1, CPAD)        folded BN scale / shift (conv bias included)
    # o_ref : (1, H, W, CPAD)
    # xp_ref, hp_ref: VMEM (H+2, WP, CPAD) halo scratches, interior at
    #                 rows 1..H, cols LEFT..LEFT+W-1 (sublane aligned)
    _, H, W, C = o_ref.shape
    n = pl.program_id(0)

    # Zero the xp halo, then DMA this batch element straight into the aligned
    # scratch interior; overlap the hp halo zeroing with the DMA.
    _zero_halo(xp_ref, W)
    cp = pltpu.make_async_copy(x_hbm.at[n],
                               xp_ref.at[1:H + 1, LEFT:LEFT + W, :],
                               dma_sem)
    cp.start()
    _zero_halo(hp_ref, W)
    cp.wait()

    # ---- conv1 (3x3, pad=1, stride=1) + folded bn1 + LeakyReLU(0.2) ----
    h = _leaky(_conv3x3(xp_ref, w1_ref, H, W, C) * s1_ref[...] + b1_ref[...])
    hp_ref[1:H + 1, LEFT:LEFT + W, :] = h.reshape(H, W, C)     # aligned store

    # ---- conv2 (3x3, pad=1, stride=1) + folded bn2 ----
    out = _conv3x3(hp_ref, w2_ref, H, W, C) * s2_ref[...] + b2_ref[...]

    # ---- residual add (identity skip, re-read from aligned interior) ----
    x_int = xp_ref[1:H + 1, LEFT:LEFT + W, :].reshape(H * W, C)
    o_ref[0] = _leaky(out + x_int).reshape(H, W, C)


def residual_block(x_nchw, params):
    """params = (w1k, s1, b1, w2k, s2, b2), already channel-padded to CPAD."""
    w1k, s1, b1, w2k, s2, b2 = params
    N, Cin, H, W = x_nchw.shape
    Cout = Cin  # identity-skip configuration (guarded in __main__)

    # NCHW -> NHWC, pad channel (lane) dim to 128. No spatial pad here: the
    # halo is built inside the kernel (scratch halo zeroed, interior DMA'd).
    x_nhwc = jnp.transpose(x_nchw, (0, 2, 3, 1))
    x_nhwc = jnp.pad(x_nhwc, ((0, 0), (0, 0), (0, 0), (0, CPAD - Cin)))

    WP = _round_up(LEFT + W + 8, 8)   # interior + left pad + right zero slab

    def const_spec(shape):
        # Constant blocks: single buffer, never re-fetched (index_map const).
        return pl.BlockSpec(shape, lambda n: (0, 0), pipeline_mode=pl.Buffered(1))

    out_nhwc = pl.pallas_call(
        residual_block_kernel,
        out_shape=jax.ShapeDtypeStruct((N, H, W, CPAD), jnp.float32),
        grid_spec=pltpu.PrefetchScalarGridSpec(
            num_scalar_prefetch=0,
            grid=(N,),
            in_specs=[
                pl.BlockSpec(memory_space=pl.ANY),   # x stays in HBM, manual DMA
                const_spec((9 * CPAD, CPAD)),
                const_spec((1, CPAD)),
                const_spec((1, CPAD)),
                const_spec((9 * CPAD, CPAD)),
                const_spec((1, CPAD)),
                const_spec((1, CPAD)),
            ],
            out_specs=pl.BlockSpec((1, H, W, CPAD), lambda n: (n, 0, 0, 0)),
            scratch_shapes=[
                pltpu.VMEM((H + 2, WP, CPAD), jnp.float32),   # haloed input
                pltpu.VMEM((H + 2, WP, CPAD), jnp.float32),   # haloed intermediate
                pltpu.SemaphoreType.DMA,
            ],
        ),
        compiler_params=pltpu.CompilerParams(
            dimension_semantics=("parallel",),        # v7x: 2 TCs take n=0,1
            vmem_limit_bytes=32 * 1024 * 1024,
        ),
    )(x_nhwc, w1k, s1, b1, w2k, s2, b2)

    return jnp.transpose(out_nhwc[..., :Cout], (0, 3, 1, 2))   # back to NCHW


# ---------------------------------------------------------------------------
# Parameter preparation (wrapper-side, one-time)
# ---------------------------------------------------------------------------
def _fold_bn(conv_b, gamma, beta, mean, var):
    s = gamma / jnp.sqrt(var + EPS)
    b = (conv_b - mean) * s + beta
    return s, b


def _prep_conv_weight(cw_oihw, cin, cout):
    # OIHW -> (kh, kw, ci, co), pad ci/co to CPAD, -> (9*CPAD, CPAD) im2col
    w = jnp.transpose(cw_oihw, (2, 3, 1, 0))                      # (3,3,Cin,Cout)
    w = jnp.pad(w, ((0, 0), (0, 0), (0, CPAD - cin), (0, CPAD - cout)))
    return w.reshape(9 * CPAD, CPAD)


def _pad_vec(v):
    return jnp.pad(v, (0, CPAD - v.shape[0])).reshape(1, CPAD)


# ---------------------------------------------------------------------------
# Pure-JAX reference matching the PyTorch module (eval-mode BN), NCHW
# ---------------------------------------------------------------------------
def reference_forward(x, cw1, cb1, g1, be1, m1, v1, cw2, cb2, g2, be2, m2, v2):
    def conv(x, w, b):
        y = lax.conv_general_dilated(x, w, (1, 1), ((1, 1), (1, 1)),
                                     dimension_numbers=('NCHW', 'OIHW', 'NCHW'))
        return y + b[None, :, None, None]

    def bn(y, g, be, m, v):
        return (y - m[None, :, None, None]) / jnp.sqrt(v[None, :, None, None] + EPS) \
               * g[None, :, None, None] + be[None, :, None, None]

    h = _leaky(bn(conv(x, cw1, cb1), g1, be1, m1, v1))
    o = bn(conv(h, cw2, cb2), g2, be2, m2, v2) + x   # identity skip
    return _leaky(o)


if __name__ == "__main__":
    N, Cin, Cout, H, W = 2, 4, 4, 16, 16
    assert Cin == Cout, "this kernel covers the identity-skip configuration"
    key = jax.random.PRNGKey(0)
    ks = jax.random.split(key, 13)

    # conv1 / bn1 parameters
    cw1 = 0.1 * jax.random.normal(ks[0], (Cout, Cin, 3, 3), jnp.float32)
    cb1 = 0.1 * jax.random.normal(ks[1], (Cout,), jnp.float32)
    g1 = 1.0 + 0.1 * jax.random.normal(ks[2], (Cout,), jnp.float32)
    be1 = 0.1 * jax.random.normal(ks[3], (Cout,), jnp.float32)
    m1 = 0.1 * jax.random.normal(ks[4], (Cout,), jnp.float32)
    v1 = 0.5 + 0.5 * jnp.abs(jax.random.normal(ks[5], (Cout,), jnp.float32))

    # conv2 / bn2 parameters
    cw2 = 0.1 * jax.random.normal(ks[6], (Cout, Cout, 3, 3), jnp.float32)
    cb2 = 0.1 * jax.random.normal(ks[7], (Cout,), jnp.float32)
    g2 = 1.0 + 0.1 * jax.random.normal(ks[8], (Cout,), jnp.float32)
    be2 = 0.1 * jax.random.normal(ks[9], (Cout,), jnp.float32)
    m2 = 0.1 * jax.random.normal(ks[10], (Cout,), jnp.float32)
    v2 = 0.5 + 0.5 * jnp.abs(jax.random.normal(ks[11], (Cout,), jnp.float32))

    x = jax.random.normal(ks[12], (N, Cin, H, W), jnp.float32)

    # Fold eval-mode BN (+ conv bias) into per-channel scale/shift; padded
    # channels get scale=0 / shift=0 so they stay exactly zero through the net.
    s1, b1f = _fold_bn(cb1, g1, be1, m1, v1)
    s2, b2f = _fold_bn(cb2, g2, be2, m2, v2)

    params = (_prep_conv_weight(cw1, Cin, Cout),
              _pad_vec(s1), _pad_vec(b1f),
              _prep_conv_weight(cw2, Cout, Cout),
              _pad_vec(s2), _pad_vec(b2f))

    out = residual_block(x, params)
    out = jax.block_until_ready(out)

    ref = reference_forward(x, cw1, cb1, g1, be1, m1, v1,
                            cw2, cb2, g2, be2, m2, v2)
    assert out.shape == (N, Cout, H, W)
    assert jnp.allclose(out, ref, atol=1e-4, rtol=1e-4), \
        f"max abs err {jnp.max(jnp.abs(out - ref))}"

    print("KERNEL_OK")
</pallas_src>

<mosaic_0001>
module attributes {stable_mosaic.version = 11 : i64} {
  func.func @residual_block_kernel(%arg0: i32, %arg1: memref<2x16x16x128xf32, #tpu.memory_space<any>>, %arg2: memref<1152x128xf32, #tpu.memory_space<vmem>>, %arg3: memref<1x128xf32, #tpu.memory_space<vmem>>, %arg4: memref<1x128xf32, #tpu.memory_space<vmem>>, %arg5: memref<1152x128xf32, #tpu.memory_space<vmem>>, %arg6: memref<1x128xf32, #tpu.memory_space<vmem>>, %arg7: memref<1x128xf32, #tpu.memory_space<vmem>>, %arg8: memref<1x16x16x128xf32, #tpu.memory_space<vmem>>, %arg9: memref<18x32x128xf32, #tpu.memory_space<vmem>>, %arg10: memref<18x32x128xf32, #tpu.memory_space<vmem>>, %arg11: memref<!tpu.dma_semaphore, #tpu.memory_space<semaphore_mem>>) attributes {dimension_semantics = [#tpu.dimension_semantics<parallel>], iteration_bounds = array<i64: 2>, scalar_prefetch = 0 : i64, scratch_operands = 3 : i64, tpu.core_type = #tpu.core_type<tc>, window_params = [{}, {pipeline_mode = #tpu.pipeline_mode<synchronous>, transform_indices = @transform_1, window_bounds = array<i64: 1152, 128>}, {pipeline_mode = #tpu.pipeline_mode<synchronous>, transform_indices = @transform_2, window_bounds = array<i64: 1, 128>}, {pipeline_mode = #tpu.pipeline_mode<synchronous>, transform_indices = @transform_3, window_bounds = array<i64: 1, 128>}, {pipeline_mode = #tpu.pipeline_mode<synchronous>, transform_indices = @transform_4, window_bounds = array<i64: 1152, 128>}, {pipeline_mode = #tpu.pipeline_mode<synchronous>, transform_indices = @transform_5, window_bounds = array<i64: 1, 128>}, {pipeline_mode = #tpu.pipeline_mode<synchronous>, transform_indices = @transform_6, window_bounds = array<i64: 1, 128>}, {transform_indices = @transform_7, window_bounds = array<i64: 1, 16, 16, 128>}]} {
    %cst = arith.constant 0.000000e+00 : f32
    %0 = vector.broadcast %cst : f32 to vector<1x32x128xf32>
    %c0 = arith.constant 0 : index
    %c0_0 = arith.constant 0 : index
    %c0_1 = arith.constant 0 : index
    %1 = vector.load %arg9[%c0, %c0_0, %c0_1] : memref<18x32x128xf32, #tpu.memory_space<vmem>>, vector<1x32x128xf32>
    tpu.vector_store %arg9[%c0, %c0_0, %c0_1], %0 {strides = array<i32>} : memref<18x32x128xf32, #tpu.memory_space<vmem>>, vector<1x32x128xf32>,
    %c17 = arith.constant 17 : index
    %c0_2 = arith.constant 0 : index
    %c0_3 = arith.constant 0 : index
    %2 = vector.load %arg9[%c17, %c0_2, %c0_3] : memref<18x32x128xf32, #tpu.memory_space<vmem>>, vector<1x32x128xf32>
    tpu.vector_store %arg9[%c17, %c0_2, %c0_3], %0 {strides = array<i32>} : memref<18x32x128xf32, #tpu.memory_space<vmem>>, vector<1x32x128xf32>,
    %cst_4 = arith.constant 0.000000e+00 : f32
    %3 = vector.broadcast %cst_4 : f32 to vector<18x8x128xf32>
    %c0_5 = arith.constant 0 : index
    %c0_6 = arith.constant 0 : index
    %c0_7 = arith.constant 0 : index
    %4 = vector.load %arg9[%c0_5, %c0_6, %c0_7] : memref<18x32x128xf32, #tpu.memory_space<vmem>>, vector<18x8x128xf32>
    tpu.vector_store %arg9[%c0_5, %c0_6, %c0_7], %3 {strides = array<i32>} : memref<18x32x128xf32, #tpu.memory_space<vmem>>, vector<18x8x128xf32>,
    %c0_8 = arith.constant 0 : index
    %c24 = arith.constant 24 : index
    %c0_9 = arith.constant 0 : index
    %5 = vector.load %arg9[%c0_8, %c24, %c0_9] : memref<18x32x128xf32, #tpu.memory_space<vmem>>, vector<18x8x128xf32>
    tpu.vector_store %arg9[%c0_8, %c24, %c0_9], %3 {strides = array<i32>} : memref<18x32x128xf32, #tpu.memory_space<vmem>>, vector<18x8x128xf32>,
    %c0_i32 = arith.constant 0 : i32
    %c0_i32_10 = arith.constant 0 : i32
    %c0_i32_11 = arith.constant 0 : i32
    %6 = tpu.memref_slice %arg1[%arg0, %c0_i32, %c0_i32_10, %c0_i32_11] : memref<2x16x16x128xf32, #tpu.memory_space<any>> -> memref<1x16x16x128xf32, #tpu.memory_space<any>>
    %7 = tpu.memref_squeeze %6 : memref<1x16x16x128xf32, #tpu.memory_space<any>> -> memref<16x16x128xf32, #tpu.memory_space<any>>
    %c1_i32 = arith.constant 1 : i32
    %c8_i32 = arith.constant 8 : i32
    %c0_i32_12 = arith.constant 0 : i32
    %8 = tpu.memref_slice %arg9[%c1_i32, %c8_i32, %c0_i32_12] : memref<18x32x128xf32, #tpu.memory_space<vmem>> -> memref<16x16x128xf32, #tpu.memory_space<vmem>>
    tpu.enqueue_dma source(%7 : memref<16x16x128xf32, #tpu.memory_space<any>>) target(%8 : memref<16x16x128xf32, #tpu.memory_space<vmem>>) target_semaphore(%arg11 : memref<!tpu.dma_semaphore, #tpu.memory_space<semaphore_mem>>)
    %cst_13 = arith.constant 0.000000e+00 : f32
    %9 = vector.broadcast %cst_13 : f32 to vector<1x32x128xf32>
    %c0_14 = arith.constant 0 : index
    %c0_15 = arith.constant 0 : index
    %c0_16 = arith.constant 0 : index
    %10 = vector.load %arg10[%c0_14, %c0_15, %c0_16] : memref<18x32x128xf32, #tpu.memory_space<vmem>>, vector<1x32x128xf32>
    tpu.vector_store %arg10[%c0_14, %c0_15, %c0_16], %9 {strides = array<i32>} : memref<18x32x128xf32, #tpu.memory_space<vmem>>, vector<1x32x128xf32>,
    %c17_17 = arith.constant 17 : index
    %c0_18 = arith.constant 0 : index
    %c0_19 = arith.constant 0 : index
    %11 = vector.load %arg10[%c17_17, %c0_18, %c0_19] : memref<18x32x128xf32, #tpu.memory_space<vmem>>, vector<1x32x128xf32>
    tpu.vector_store %arg10[%c17_17, %c0_18, %c0_19], %9 {strides = array<i32>} : memref<18x32x128xf32, #tpu.memory_space<vmem>>, vector<1x32x128xf32>,
    %cst_20 = arith.constant 0.000000e+00 : f32
    %12 = vector.broadcast %cst_20 : f32 to vector<18x8x128xf32>
    %c0_21 = arith.constant 0 : index
    %c0_22 = arith.constant 0 : index
    %c0_23 = arith.constant 0 : index
    %13 = vector.load %arg10[%c0_21, %c0_22, %c0_23] : memref<18x32x128xf32, #tpu.memory_space<vmem>>, vector<18x8x128xf32>
    tpu.vector_store %arg10[%c0_21, %c0_22, %c0_23], %12 {strides = array<i32>} : memref<18x32x128xf32, #tpu.memory_space<vmem>>, vector<18x8x128xf32>,
    %c0_24 = arith.constant 0 : index
    %c24_25 = arith.constant 24 : index
    %c0_26 = arith.constant 0 : index
    %14 = vector.load %arg10[%c0_24, %c24_25, %c0_26] : memref<18x32x128xf32, #tpu.memory_space<vmem>>, vector<18x8x128xf32>
    tpu.vector_store %arg10[%c0_24, %c24_25, %c0_26], %12 {strides = array<i32>} : memref<18x32x128xf32, #tpu.memory_space<vmem>>, vector<18x8x128xf32>,
    %c0_i32_27 = arith.constant 0 : i32
    %c0_i32_28 = arith.constant 0 : i32
    %c0_i32_29 = arith.constant 0 : i32
    %15 = tpu.memref_slice %arg1[%arg0, %c0_i32_27, %c0_i32_28, %c0_i32_29] : memref<2x16x16x128xf32, #tpu.memory_space<any>> -> memref<1x16x16x128xf32, #tpu.memory_space<any>>
    %16 = tpu.memref_squeeze %15 : memref<1x16x16x128xf32, #tpu.memory_space<any>> -> memref<16x16x128xf32, #tpu.memory_space<any>>
    %c1_i32_30 = arith.constant 1 : i32
    %c8_i32_31 = arith.constant 8 : i32
    %c0_i32_32 = arith.constant 0 : i32
    %17 = tpu.memref_slice %arg9[%c1_i32_30, %c8_i32_31, %c0_i32_32] : memref<18x32x128xf32, #tpu.memory_space<vmem>> -> memref<16x16x128xf32, #tpu.memory_space<vmem>>
    tpu.wait_dma2 semaphore(%arg11 : memref<!tpu.dma_semaphore, #tpu.memory_space<semaphore_mem>>) src(%16 : memref<16x16x128xf32, #tpu.memory_space<any>>) dst(%17 : memref<16x16x128xf32, #tpu.memory_space<vmem>>)
    %c0_33 = arith.constant 0 : index
    %c7 = arith.constant 7 : index
    %c0_34 = arith.constant 0 : index
    %18 = vector.load %arg9[%c0_33, %c7, %c0_34] : memref<18x32x128xf32, #tpu.memory_space<vmem>>, vector<16x16x128xf32>
    %19 = vector.shape_cast %18 : vector<16x16x128xf32> to vector<256x128xf32>
    %c0_35 = arith.constant 0 : index
    %c0_36 = arith.constant 0 : index
    %20 = vector.load %arg2[%c0_35, %c0_36] : memref<1152x128xf32, #tpu.memory_space<vmem>>, vector<128x128xf32>
    %cst_37 = arith.constant dense<0.000000e+00> : vector<256x128xf32>
    %21 = tpu.matmul %19, %20, %cst_37 {dimension_numbers = #tpu.dot_dimension_numbers<[1], [0], [0], [1], [0, 0, 1, 1], [], []>} : vector<256x128xf32>, vector<128x128xf32>, vector<256x128xf32> -> vector<256x128xf32>
    %c0_38 = arith.constant 0 : index
    %c8 = arith.constant 8 : index
    %c0_39 = arith.constant 0 : index
    %22 = vector.load %arg9[%c0_38, %c8, %c0_39] : memref<18x32x128xf32, #tpu.memory_space<vmem>>, vector<16x16x128xf32>
    %23 = vector.shape_cast %22 : vector<16x16x128xf32> to vector<256x128xf32>
    %c128 = arith.constant 128 : index
    %c0_40 = arith.constant 0 : index
    %24 = vector.load %arg2[%c128, %c0_40] : memref<1152x128xf32, #tpu.memory_space<vmem>>, vector<128x128xf32>
    %cst_41 = arith.constant dense<0.000000e+00> : vector<256x128xf32>
    %25 = tpu.matmul %23, %24, %cst_41 {dimension_numbers = #tpu.dot_dimension_numbers<[1], [0], [0], [1], [0, 0, 1, 1], [], []>} : vector<256x128xf32>, vector<128x128xf32>, vector<256x128xf32> -> vector<256x128xf32>
    %26 = arith.addf %21, %25 : vector<256x128xf32>
    %c0_42 = arith.constant 0 : index
    %c9 = arith.constant 9 : index
    %c0_43 = arith.constant 0 : index
    %27 = vector.load %arg9[%c0_42, %c9, %c0_43] : memref<18x32x128xf32, #tpu.memory_space<vmem>>, vector<16x16x128xf32>
    %28 = vector.shape_cast %27 : vector<16x16x128xf32> to vector<256x128xf32>
    %c256 = arith.constant 256 : index
    %c0_44 = arith.constant 0 : index
    %29 = vector.load %arg2[%c256, %c0_44] : memref<1152x128xf32, #tpu.memory_space<vmem>>, vector<128x128xf32>
    %cst_45 = arith.constant dense<0.000000e+00> : vector<256x128xf32>
    %30 = tpu.matmul %28, %29, %cst_45 {dimension_numbers = #tpu.dot_dimension_numbers<[1], [0], [0], [1], [0, 0, 1, 1], [], []>} : vector<256x128xf32>, vector<128x128xf32>, vector<256x128xf32> -> vector<256x128xf32>
    %31 = arith.addf %26, %30 : vector<256x128xf32>
    %c1 = arith.constant 1 : index
    %c7_46 = arith.constant 7 : index
    %c0_47 = arith.constant 0 : index
    %32 = vector.load %arg9[%c1, %c7_46, %c0_47] : memref<18x32x128xf32, #tpu.memory_space<vmem>>, vector<16x16x128xf32>
    %33 = vector.shape_cast %32 : vector<16x16x128xf32> to vector<256x128xf32>
    %c384 = arith.constant 384 : index
    %c0_48 = arith.constant 0 : index
    %34 = vector.load %arg2[%c384, %c0_48] : memref<1152x128xf32, #tpu.memory_space<vmem>>, vector<128x128xf32>
    %cst_49 = arith.constant dense<0.000000e+00> : vector<256x128xf32>
    %35 = tpu.matmul %33, %34, %cst_49 {dimension_numbers = #tpu.dot_dimension_numbers<[1], [0], [0], [1], [0, 0, 1, 1], [], []>} : vector<256x128xf32>, vector<128x128xf32>, vector<256x128xf32> -> vector<256x128xf32>
    %36 = arith.addf %31, %35 : vector<256x128xf32>
    %c1_50 = arith.constant 1 : index
    %c8_51 = arith.constant 8 : index
    %c0_52 = arith.constant 0 : index
    %37 = vector.load %arg9[%c1_50, %c8_51, %c0_52] : memref<18x32x128xf32, #tpu.memory_space<vmem>>, vector<16x16x128xf32>
    %38 = vector.shape_cast %37 : vector<16x16x128xf32> to vector<256x128xf32>
    %c512 = arith.constant 512 : index
    %c0_53 = arith.constant 0 : index
    %39 = vector.load %arg2[%c512, %c0_53] : memref<1152x128xf32, #tpu.memory_space<vmem>>, vector<128x128xf32>
    %cst_54 = arith.constant dense<0.000000e+00> : vector<256x128xf32>
    %40 = tpu.matmul %38, %39, %cst_54 {dimension_numbers = #tpu.dot_dimension_numbers<[1], [0], [0], [1], [0, 0, 1, 1], [], []>} : vector<256x128xf32>, vector<128x128xf32>, vector<256x128xf32> -> vector<256x128xf32>
    %41 = arith.addf %36, %40 : vector<256x128xf32>
    %c1_55 = arith.constant 1 : index
    %c9_56 = arith.constant 9 : index
    %c0_57 = arith.constant 0 : index
    %42 = vector.load %arg9[%c1_55, %c9_56, %c0_57] : memref<18x32x128xf32, #tpu.memory_space<vmem>>, vector<16x16x128xf32>
    %43 = vector.shape_cast %42 : vector<16x16x128xf32> to vector<256x128xf32>
    %c640 = arith.constant 640 : index
    %c0_58 = arith.constant 0 : index
    %44 = vector.load %arg2[%c640, %c0_58] : memref<1152x128xf32, #tpu.memory_space<vmem>>, vector<128x128xf32>
    %cst_59 = arith.constant dense<0.000000e+00> : vector<256x128xf32>
    %45 = tpu.matmul %43, %44, %cst_59 {dimension_numbers = #tpu.dot_dimension_numbers<[1], [0], [0], [1], [0, 0, 1, 1], [], []>} : vector<256x128xf32>, vector<128x128xf32>, vector<256x128xf32> -> vector<256x128xf32>
    %46 = arith.addf %41, %45 : vector<256x128xf32>
    %c2 = arith.constant 2 : index
    %c7_60 = arith.constant 7 : index
    %c0_61 = arith.constant 0 : index
    %47 = vector.load %arg9[%c2, %c7_60, %c0_61] : memref<18x32x128xf32, #tpu.memory_space<vmem>>, vector<16x16x128xf32>
    %48 = vector.shape_cast %47 : vector<16x16x128xf32> to vector<256x128xf32>
    %c768 = arith.constant 768 : index
    %c0_62 = arith.constant 0 : index
    %49 = vector.load %arg2[%c768, %c0_62] : memref<1152x128xf32, #tpu.memory_space<vmem>>, vector<128x128xf32>
    %cst_63 = arith.constant dense<0.000000e+00> : vector<256x128xf32>
    %50 = tpu.matmul %48, %49, %cst_63 {dimension_numbers = #tpu.dot_dimension_numbers<[1], [0], [0], [1], [0, 0, 1, 1], [], []>} : vector<256x128xf32>, vector<128x128xf32>, vector<256x128xf32> -> vector<256x128xf32>
    %51 = arith.addf %46, %50 : vector<256x128xf32>
    %c2_64 = arith.constant 2 : index
    %c8_65 = arith.constant 8 : index
    %c0_66 = arith.constant 0 : index
    %52 = vector.load %arg9[%c2_64, %c8_65, %c0_66] : memref<18x32x128xf32, #tpu.memory_space<vmem>>, vector<16x16x128xf32>
    %53 = vector.shape_cast %52 : vector<16x16x128xf32> to vector<256x128xf32>
    %c896 = arith.constant 896 : index
    %c0_67 = arith.constant 0 : index
    %54 = vector.load %arg2[%c896, %c0_67] : memref<1152x128xf32, #tpu.memory_space<vmem>>, vector<128x128xf32>
    %cst_68 = arith.constant dense<0.000000e+00> : vector<256x128xf32>
    %55 = tpu.matmul %53, %54, %cst_68 {dimension_numbers = #tpu.dot_dimension_numbers<[1], [0], [0], [1], [0, 0, 1, 1], [], []>} : vector<256x128xf32>, vector<128x128xf32>, vector<256x128xf32> -> vector<256x128xf32>
    %56 = arith.addf %51, %55 : vector<256x128xf32>
    %c2_69 = arith.constant 2 : index
    %c9_70 = arith.constant 9 : index
    %c0_71 = arith.constant 0 : index
    %57 = vector.load %arg9[%c2_69, %c9_70, %c0_71] : memref<18x32x128xf32, #tpu.memory_space<vmem>>, vector<16x16x128xf32>
    %58 = vector.shape_cast %57 : vector<16x16x128xf32> to vector<256x128xf32>
    %c1024 = arith.constant 1024 : index
    %c0_72 = arith.constant 0 : index
    %59 = vector.load %arg2[%c1024, %c0_72] : memref<1152x128xf32, #tpu.memory_space<vmem>>, vector<128x128xf32>
    %cst_73 = arith.constant dense<0.000000e+00> : vector<256x128xf32>
    %60 = tpu.matmul %58, %59, %cst_73 {dimension_numbers = #tpu.dot_dimension_numbers<[1], [0], [0], [1], [0, 0, 1, 1], [], []>} : vector<256x128xf32>, vector<128x128xf32>, vector<256x128xf32> -> vector<256x128xf32>
    %61 = arith.addf %56, %60 : vector<256x128xf32>
    %c0_74 = arith.constant 0 : index
    %c0_75 = arith.constant 0 : index
    %62 = vector.load %arg3[%c0_74, %c0_75] : memref<1x128xf32, #tpu.memory_space<vmem>>, vector<1x128xf32>
    %63 = vector.broadcast %62 : vector<1x128xf32> to vector<256x128xf32>
    %64 = arith.mulf %61, %63 : vector<256x128xf32>
    %c0_76 = arith.constant 0 : index
    %c0_77 = arith.constant 0 : index
    %65 = vector.load %arg4[%c0_76, %c0_77] : memref<1x128xf32, #tpu.memory_space<vmem>>, vector<1x128xf32>
    %66 = vector.broadcast %65 : vector<1x128xf32> to vector<256x128xf32>
    %67 = arith.addf %64, %66 : vector<256x128xf32>
    %cst_78 = arith.constant 0.000000e+00 : f32
    %68 = vector.broadcast %cst_78 : f32 to vector<256x128xf32>
    %69 = arith.cmpf oge, %67, %68 : vector<256x128xf32>
    %cst_79 = arith.constant 2.000000e-01 : f32
    %70 = vector.broadcast %cst_79 : f32 to vector<256x128xf32>
    %71 = arith.mulf %70, %67 : vector<256x128xf32>
    %72 = arith.select %69, %67, %71 : vector<256x128xi1>, vector<256x128xf32>
    %73 = vector.shape_cast %72 : vector<256x128xf32> to vector<16x16x128xf32>
    %c1_80 = arith.constant 1 : index
    %c8_81 = arith.constant 8 : index
    %c0_82 = arith.constant 0 : index
    %74 = vector.load %arg10[%c1_80, %c8_81, %c0_82] : memref<18x32x128xf32, #tpu.memory_space<vmem>>, vector<16x16x128xf32>
    tpu.vector_store %arg10[%c1_80, %c8_81, %c0_82], %73 {strides = array<i32>} : memref<18x32x128xf32, #tpu.memory_space<vmem>>, vector<16x16x128xf32>,
    %c0_83 = arith.constant 0 : index
    %c7_84 = arith.constant 7 : index
    %c0_85 = arith.constant 0 : index
    %75 = vector.load %arg10[%c0_83, %c7_84, %c0_85] : memref<18x32x128xf32, #tpu.memory_space<vmem>>, vector<16x16x128xf32>
    %76 = vector.shape_cast %75 : vector<16x16x128xf32> to vector<256x128xf32>
    %c0_86 = arith.constant 0 : index
    %c0_87 = arith.constant 0 : index
    %77 = vector.load %arg5[%c0_86, %c0_87] : memref<1152x128xf32, #tpu.memory_space<vmem>>, vector<128x128xf32>
    %cst_88 = arith.constant dense<0.000000e+00> : vector<256x128xf32>
    %78 = tpu.matmul %76, %77, %cst_88 {dimension_numbers = #tpu.dot_dimension_numbers<[1], [0], [0], [1], [0, 0, 1, 1], [], []>} : vector<256x128xf32>, vector<128x128xf32>, vector<256x128xf32> -> vector<256x128xf32>
    %c0_89 = arith.constant 0 : index
    %c8_90 = arith.constant 8 : index
    %c0_91 = arith.constant 0 : index
    %79 = vector.load %arg10[%c0_89, %c8_90, %c0_91] : memref<18x32x128xf32, #tpu.memory_space<vmem>>, vector<16x16x128xf32>
    %80 = vector.shape_cast %79 : vector<16x16x128xf32> to vector<256x128xf32>
    %c128_92 = arith.constant 128 : index
    %c0_93 = arith.constant 0 : index
    %81 = vector.load %arg5[%c128_92, %c0_93] : memref<1152x128xf32, #tpu.memory_space<vmem>>, vector<128x128xf32>
    %cst_94 = arith.constant dense<0.000000e+00> : vector<256x128xf32>
    %82 = tpu.matmul %80, %81, %cst_94 {dimension_numbers = #tpu.dot_dimension_numbers<[1], [0], [0], [1], [0, 0, 1, 1], [], []>} : vector<256x128xf32>, vector<128x128xf32>, vector<256x128xf32> -> vector<256x128xf32>
    %83 = arith.addf %78, %82 : vector<256x128xf32>
    %c0_95 = arith.constant 0 : index
    %c9_96 = arith.constant 9 : index
    %c0_97 = arith.constant 0 : index
    %84 = vector.load %arg10[%c0_95, %c9_96, %c0_97] : memref<18x32x128xf32, #tpu.memory_space<vmem>>, vector<16x16x128xf32>
    %85 = vector.shape_cast %84 : vector<16x16x128xf32> to vector<256x128xf32>
    %c256_98 = arith.constant 256 : index
    %c0_99 = arith.constant 0 : index
    %86 = vector.load %arg5[%c256_98, %c0_99] : memref<1152x128xf32, #tpu.memory_space<vmem>>, vector<128x128xf32>
    %cst_100 = arith.constant dense<0.000000e+00> : vector<256x128xf32>
    %87 = tpu.matmul %85, %86, %cst_100 {dimension_numbers = #tpu.dot_dimension_numbers<[1], [0], [0], [1], [0, 0, 1, 1], [], []>} : vector<256x128xf32>, vector<128x128xf32>, vector<256x128xf32> -> vector<256x128xf32>
    %88 = arith.addf %83, %87 : vector<256x128xf32>
    %c1_101 = arith.constant 1 : index
    %c7_102 = arith.constant 7 : index
    %c0_103 = arith.constant 0 : index
    %89 = vector.load %arg10[%c1_101, %c7_102, %c0_103] : memref<18x32x128xf32, #tpu.memory_space<vmem>>, vector<16x16x128xf32>
    %90 = vector.shape_cast %89 : vector<16x16x128xf32> to vector<256x128xf32>
    %c384_104 = arith.constant 384 : index
    %c0_105 = arith.constant 0 : index
    %91 = vector.load %arg5[%c384_104, %c0_105] : memref<1152x128xf32, #tpu.memory_space<vmem>>, vector<128x128xf32>
    %cst_106 = arith.constant dense<0.000000e+00> : vector<256x128xf32>
    %92 = tpu.matmul %90, %91, %cst_106 {dimension_numbers = #tpu.dot_dimension_numbers<[1], [0], [0], [1], [0, 0, 1, 1], [], []>} : vector<256x128xf32>, vector<128x128xf32>, vector<256x128xf32> -> vector<256x128xf32>
    %93 = arith.addf %88, %92 : vector<256x128xf32>
    %c1_107 = arith.constant 1 : index
    %c8_108 = arith.constant 8 : index
    %c0_109 = arith.constant 0 : index
    %94 = vector.load %arg10[%c1_107, %c8_108, %c0_109] : memref<18x32x128xf32, #tpu.memory_space<vmem>>, vector<16x16x128xf32>
    %95 = vector.shape_cast %94 : vector<16x16x128xf32> to vector<256x128xf32>
    %c512_110 = arith.constant 512 : index
    %c0_111 = arith.constant 0 : index
    %96 = vector.load %arg5[%c512_110, %c0_111] : memref<1152x128xf32, #tpu.memory_space<vmem>>, vector<128x128xf32>
    %cst_112 = arith.constant dense<0.000000e+00> : vector<256x128xf32>
    %97 = tpu.matmul %95, %96, %cst_112 {dimension_numbers = #tpu.dot_dimension_numbers<[1], [0], [0], [1], [0, 0, 1, 1], [], []>} : vector<256x128xf32>, vector<128x128xf32>, vector<256x128xf32> -> vector<256x128xf32>
    %98 = arith.addf %93, %97 : vector<256x128xf32>
    %c1_113 = arith.constant 1 : index
    %c9_114 = arith.constant 9 : index
    %c0_115 = arith.constant 0 : index
    %99 = vector.load %arg10[%c1_113, %c9_114, %c0_115] : memref<18x32x128xf32, #tpu.memory_space<vmem>>, vector<16x16x128xf32>
    %100 = vector.shape_cast %99 : vector<16x16x128xf32> to vector<256x128xf32>
    %c640_116 = arith.constant 640 : index
    %c0_117 = arith.constant 0 : index
    %101 = vector.load %arg5[%c640_116, %c0_117] : memref<1152x128xf32, #tpu.memory_space<vmem>>, vector<128x128xf32>
    %cst_118 = arith.constant dense<0.000000e+00> : vector<256x128xf32>
    %102 = tpu.matmul %100, %101, %cst_118 {dimension_numbers = #tpu.dot_dimension_numbers<[1], [0], [0], [1], [0, 0, 1, 1], [], []>} : vector<256x128xf32>, vector<128x128xf32>, vector<256x128xf32> -> vector<256x128xf32>
    %103 = arith.addf %98, %102 : vector<256x128xf32>
    %c2_119 = arith.constant 2 : index
    %c7_120 = arith.constant 7 : index
    %c0_121 = arith.constant 0 : index
    %104 = vector.load %arg10[%c2_119, %c7_120, %c0_121] : memref<18x32x128xf32, #tpu.memory_space<vmem>>, vector<16x16x128xf32>
    %105 = vector.shape_cast %104 : vector<16x16x128xf32> to vector<256x128xf32>
    %c768_122 = arith.constant 768 : index
    %c0_123 = arith.constant 0 : index
    %106 = vector.load %arg5[%c768_122, %c0_123] : memref<1152x128xf32, #tpu.memory_space<vmem>>, vector<128x128xf32>
    %cst_124 = arith.constant dense<0.000000e+00> : vector<256x128xf32>
    %107 = tpu.matmul %105, %106, %cst_124 {dimension_numbers = #tpu.dot_dimension_numbers<[1], [0], [0], [1], [0, 0, 1, 1], [], []>} : vector<256x128xf32>, vector<128x128xf32>, vector<256x128xf32> -> vector<256x128xf32>
    %108 = arith.addf %103, %107 : vector<256x128xf32>
    %c2_125 = arith.constant 2 : index
    %c8_126 = arith.constant 8 : index
    %c0_127 = arith.constant 0 : index
    %109 = vector.load %arg10[%c2_125, %c8_126, %c0_127] : memref<18x32x128xf32, #tpu.memory_space<vmem>>, vector<16x16x128xf32>
    %110 = vector.shape_cast %109 : vector<16x16x128xf32> to vector<256x128xf32>
    %c896_128 = arith.constant 896 : index
    %c0_129 = arith.constant 0 : index
    %111 = vector.load %arg5[%c896_128, %c0_129] : memref<1152x128xf32, #tpu.memory_space<vmem>>, vector<128x128xf32>
    %cst_130 = arith.constant dense<0.000000e+00> : vector<256x128xf32>
    %112 = tpu.matmul %110, %111, %cst_130 {dimension_numbers = #tpu.dot_dimension_numbers<[1], [0], [0], [1], [0, 0, 1, 1], [], []>} : vector<256x128xf32>, vector<128x128xf32>, vector<256x128xf32> -> vector<256x128xf32>
    %113 = arith.addf %108, %112 : vector<256x128xf32>
    %c2_131 = arith.constant 2 : index
    %c9_132 = arith.constant 9 : index
    %c0_133 = arith.constant 0 : index
    %114 = vector.load %arg10[%c2_131, %c9_132, %c0_133] : memref<18x32x128xf32, #tpu.memory_space<vmem>>, vector<16x16x128xf32>
    %115 = vector.shape_cast %114 : vector<16x16x128xf32> to vector<256x128xf32>
    %c1024_134 = arith.constant 1024 : index
    %c0_135 = arith.constant 0 : index
    %116 = vector.load %arg5[%c1024_134, %c0_135] : memref<1152x128xf32, #tpu.memory_space<vmem>>, vector<128x128xf32>
    %cst_136 = arith.constant dense<0.000000e+00> : vector<256x128xf32>
    %117 = tpu.matmul %115, %116, %cst_136 {dimension_numbers = #tpu.dot_dimension_numbers<[1], [0], [0], [1], [0, 0, 1, 1], [], []>} : vector<256x128xf32>, vector<128x128xf32>, vector<256x128xf32> -> vector<256x128xf32>
    %118 = arith.addf %113, %117 : vector<256x128xf32>
    %c0_137 = arith.constant 0 : index
    %c0_138 = arith.constant 0 : index
    %119 = vector.load %arg6[%c0_137, %c0_138] : memref<1x128xf32, #tpu.memory_space<vmem>>, vector<1x128xf32>
    %120 = vector.broadcast %119 : vector<1x128xf32> to vector<256x128xf32>
    %121 = arith.mulf %118, %120 : vector<256x128xf32>
    %c0_139 = arith.constant 0 : index
    %c0_140 = arith.constant 0 : index
    %122 = vector.load %arg7[%c0_139, %c0_140] : memref<1x128xf32, #tpu.memory_space<vmem>>, vector<1x128xf32>
    %123 = vector.broadcast %122 : vector<1x128xf32> to vector<256x128xf32>
    %124 = arith.addf %121, %123 : vector<256x128xf32>
    %c1_141 = arith.constant 1 : index
    %c8_142 = arith.constant 8 : index
    %c0_143 = arith.constant 0 : index
    %125 = vector.load %arg9[%c1_141, %c8_142, %c0_143] : memref<18x32x128xf32, #tpu.memory_space<vmem>>, vector<16x16x128xf32>
    %126 = vector.shape_cast %125 : vector<16x16x128xf32> to vector<256x128xf32>
    %127 = arith.addf %124, %126 : vector<256x128xf32>
    %cst_144 = arith.constant 0.000000e+00 : f32
    %128 = vector.broadcast %cst_144 : f32 to vector<256x128xf32>
    %129 = arith.cmpf oge, %127, %128 : vector<256x128xf32>
    %cst_145 = arith.constant 2.000000e-01 : f32
    %130 = vector.broadcast %cst_145 : f32 to vector<256x128xf32>
    %131 = arith.mulf %130, %127 : vector<256x128xf32>
    %132 = arith.select %129, %127, %131 : vector<256x128xi1>, vector<256x128xf32>
    %133 = vector.shape_cast %132 : vector<256x128xf32> to vector<16x16x128xf32>
    %c0_146 = arith.constant 0 : index
    %c0_147 = arith.constant 0 : index
    %c0_148 = arith.constant 0 : index
    %c0_149 = arith.constant 0 : index
    %134 = vector.load %arg8[%c0_146, %c0_147, %c0_148, %c0_149] : memref<1x16x16x128xf32, #tpu.memory_space<vmem>>, vector<1x16x16x128xf32>
    %135 = vector.shape_cast %134 : vector<1x16x16x128xf32> to vector<16x16x128xf32>
    %136 = vector.shape_cast %133 : vector<16x16x128xf32> to vector<1x16x16x128xf32>
    tpu.vector_store %arg8[%c0_146, %c0_147, %c0_148, %c0_149], %136 {strides = array<i32>} : memref<1x16x16x128xf32, #tpu.memory_space<vmem>>, vector<1x16x16x128xf32>,
    return
  }
  func.func @transform_1(%arg0: i32) -> (i32, i32) {
    %c0_i32 = arith.constant 0 : i32
    %c0_i32_0 = arith.constant 0 : i32
    %c0_i32_1 = arith.constant 0 : i32
    return %c0_i32, %c0_i32_0 : i32, i32
  }
  func.func @transform_2(%arg0: i32) -> (i32, i32) {
    %c0_i32 = arith.constant 0 : i32
    %c0_i32_0 = arith.constant 0 : i32
    %c0_i32_1 = arith.constant 0 : i32
    return %c0_i32, %c0_i32_0 : i32, i32
  }
  func.func @transform_3(%arg0: i32) -> (i32, i32) {
    %c0_i32 = arith.constant 0 : i32
    %c0_i32_0 = arith.constant 0 : i32
    %c0_i32_1 = arith.constant 0 : i32
    return %c0_i32, %c0_i32_0 : i32, i32
  }
  func.func @transform_4(%arg0: i32) -> (i32, i32) {
    %c0_i32 = arith.constant 0 : i32
    %c0_i32_0 = arith.constant 0 : i32
    %c0_i32_1 = arith.constant 0 : i32
    return %c0_i32, %c0_i32_0 : i32, i32
  }
  func.func @transform_5(%arg0: i32) -> (i32, i32) {
    %c0_i32 = arith.constant 0 : i32
    %c0_i32_0 = arith.constant 0 : i32
    %c0_i32_1 = arith.constant 0 : i32
    return %c0_i32, %c0_i32_0 : i32, i32
  }
  func.func @transform_6(%arg0: i32) -> (i32, i32) {
    %c0_i32 = arith.constant 0 : i32
    %c0_i32_0 = arith.constant 0 : i32
    %c0_i32_1 = arith.constant 0 : i32
    return %c0_i32, %c0_i32_0 : i32, i32
  }
  func.func @transform_7(%arg0: i32) -> (i32, i32, i32, i32) {
    %c0_i32 = arith.constant 0 : i32
    %c0_i32_0 = arith.constant 0 : i32
    %c0_i32_1 = arith.constant 0 : i32
    %c0_i32_2 = arith.constant 0 : i32
    return %arg0, %c0_i32, %c0_i32_0, %c0_i32_1 : i32, i32, i32, i32
  }
}

</mosaic_0001>

<llo_original>
// kernel: tpu_custom_call.1
$region0: #{tpu_custom_call.1}
  #allocation0 [shape = 'u32[]', space=smem, size = 0x4, offset = 0x4, fixed_abs, tag = 'smem constant byte address 0x4 - core index']
  #allocation1 [shape = 'u32[144,128]{1,0:T(1,128)}', space=vmem, size = 0x12000, scoped, tag = 'internal scratch']
  #allocation2 [shape = 'f32[18,32,128]{2,1,0:T(8,128)}', space=vmem, size = 0x48000, scoped, tag = 'scratch operand']
  #allocation3 [shape = 'f32[18,32,128]{2,1,0:T(8,128)}', space=vmem, size = 0x48000, scoped, tag = 'scratch operand']
  #allocation4 [shape = 's32[1]{0}', space=sflag, size = 0x4, scoped, tag = 'scratch operand']
  #allocation11 [shape = 's32[]', space=sflag, size = 0x4, offset = 0, fixed_abs, tag = 'sflag constant byte address 0x0 - dummy sync flag']
  %s0 = inlined_call_operand.hbm [shape: f32[2,16,16,128], index: 0, kind: input, shape index: {}]
  %s1 = inlined_call_operand.hbm [shape: f32[1152,128], index: 1, kind: input, shape index: {}]
  %s2 = inlined_call_operand.vmem [shape: f32[1,128], index: 2, kind: input, shape index: {}]
  %s3 = inlined_call_operand.vmem [shape: f32[1,128], index: 3, kind: input, shape index: {}]
  %s4 = inlined_call_operand.hbm [shape: f32[1152,128], index: 4, kind: input, shape index: {}]
  %s5 = inlined_call_operand.vmem [shape: f32[1,128], index: 5, kind: input, shape index: {}]
  %s6 = inlined_call_operand.vmem [shape: f32[1,128], index: 6, kind: input, shape index: {}]
  %s7 = inlined_call_operand.hbm [shape: f32[2,16,16,128], index: 7, kind: output, shape index: {}]
  %s8 = sld [smem:[#allocation0]]
  $region65: #{tpu_custom_call.1} parent=0
    _
  %s10 = ssub.s32 1, %s8
  %s11 = scalar_select 0, %s10, %s8
  $region1: #{tpu_custom_call.1} parent=0
    #allocation5 [shape = 'u8[589824]{0}', space=vmem, size = 0x90000, scoped, tag = 'input window, operand 1, single buffered']
    #allocation6 [shape = 's32[2]{0}', space=sflag, size = 0x8, scoped, tag = 'scoped memory for tpu_custom_call.1']
    #allocation7 [shape = 's32[2]{0}', space=sflag, size = 0x8, scoped, tag = 'scoped memory for tpu_custom_call.1']
    #allocation8 [shape = 'u8[589824]{0}', space=vmem, size = 0x90000, scoped, tag = 'input window, operand 4, single buffered']
    #allocation9 [shape = 's32[1]{0}', space=sflag, size = 0x4, scoped, tag = 'scoped memory for tpu_custom_call.1']
    #allocation10 [shape = 'u8[262144]{0}', space=vmem, size = 0x40000, scoped, tag = 'output window, operand 0']
    %12 = vsyncpa [#allocation6], 0
    %13 = vsyncpa [#allocation9], 0
    %14 = vsyncpa [#allocation7], 0
    %s15 = scalar_lea.sflag [#allocation7], 1
    %16 = vsyncpa %s15, 0
    loop: start=0, step=1, limit=4
    $region2: #{tpu_custom_call.1} parent=1 // loop_pre_header
      _
    $region3: #{tpu_custom_call.1} parent=1 // loop_header
      %s18 = sphi 0, %s22
      %p19 = scmp.ge.s32.totalorder %s18, 4
      %s26 = sphi 0, %s26
      %s28 = sphi 0, %s26
      %s29 = sphi 0, %s28
      %s43 = sphi 0, %s29
      %s47 = sphi 0, %s47
      %s49 = sphi 0, %s47
      %s50 = sphi 0, %s49
      %s64 = sphi 0, %s50
      %s68 = sphi 0, %s68
      %s70 = sphi 0, %s68
      %s71 = sphi 0, %s70
      %s85 = sphi 0, %s71
      %s89 = sphi 0, %s89
      %s91 = sphi 0, %s89
      %s92 = sphi 0, %s91
      %s106 = sphi 0, %s92
      %s110 = sphi 0, %s110
      %s112 = sphi 0, %s110
      %s113 = sphi 0, %s112
      %s127 = sphi 0, %s113
      %s131 = sphi 0, %s131
      %s133 = sphi 0, %s131
      %s134 = sphi 0, %s133
      %s148 = sphi 0, %s134
      %s154 = sphi 0, %s156
      %s157 = sphi 0, %s154
      %s158 = sphi 0, %s157
      %s174 = sphi 0, %s158
    $region4: #{tpu_custom_call.1} parent=1 // loop_header_branch
      %21 = sbr.rel (%p19) target = $region8
    $region5: #{tpu_custom_call.1} parent=1 // loop_body
      %s23 = ssub.s32 %s18, 1
      %s24 = ssub.s32 %s18, 2
      %s25 = sadd.s32 %s18, 1
      %s27 = sadd.s32 %s26, 1
      %p30 = scmp.eq.s32.totalorder %s18, 1
      %p31 = scmp.ne.s32.totalorder %s26, %s28
      %p32 = scmp.eq.s32.totalorder %s18, 0
      %p33 = por %p31, %p32
      %p34 = scmp.ne.s32.totalorder %s26, %s28
      %p35 = scmp.eq.s32.totalorder %s23, 1
      %p36 = por %p34, %p35
      %p37 = scmp.ne.s32.totalorder %s28, %s29
      %p38 = scmp.eq.s32.totalorder %s23, 0
      %p39 = por %p37, %p38
      %p40 = scmp.ne.s32.totalorder %s28, %s29
      %p41 = scmp.eq.s32.totalorder %s24, 1
      %p42 = por %p40, %p41
      %p44 = scmp.ne.s32.totalorder %s29, %s43
      %p45 = scmp.eq.s32.totalorder %s24, 0
      %p46 = por %p44, %p45
      %s48 = sadd.s32 %s47, 1
      %p51 = scmp.eq.s32.totalorder %s18, 1
      %p52 = scmp.ne.s32.totalorder %s47, %s49
      %p53 = scmp.eq.s32.totalorder %s18, 0
      %p54 = por %p52, %p53
      %p55 = scmp.ne.s32.totalorder %s47, %s49
      %p56 = scmp.eq.s32.totalorder %s23, 1
      %p57 = por %p55, %p56
      %p58 = scmp.ne.s32.totalorder %s49, %s50
      %p59 = scmp.eq.s32.totalorder %s23, 0
      %p60 = por %p58, %p59
      %p61 = scmp.ne.s32.totalorder %s49, %s50
      %p62 = scmp.eq.s32.totalorder %s24, 1
      %p63 = por %p61, %p62
      %p65 = scmp.ne.s32.totalorder %s50, %s64
      %p66 = scmp.eq.s32.totalorder %s24, 0
      %p67 = por %p65, %p66
      %s69 = sadd.s32 %s68, 1
      %p72 = scmp.eq.s32.totalorder %s18, 1
      %p73 = scmp.ne.s32.totalorder %s68, %s70
      %p74 = scmp.eq.s32.totalorder %s18, 0
      %p75 = por %p73, %p74
      %p76 = scmp.ne.s32.totalorder %s68, %s70
      %p77 = scmp.eq.s32.totalorder %s23, 1
      %p78 = por %p76, %p77
      %p79 = scmp.ne.s32.totalorder %s70, %s71
      %p80 = scmp.eq.s32.totalorder %s23, 0
      %p81 = por %p79, %p80
      %p82 = scmp.ne.s32.totalorder %s70, %s71
      %p83 = scmp.eq.s32.totalorder %s24, 1
      %p84 = por %p82, %p83
      %p86 = scmp.ne.s32.totalorder %s71, %s85
      %p87 = scmp.eq.s32.totalorder %s24, 0
      %p88 = por %p86, %p87
      %s90 = sadd.s32 %s89, 1
      %p93 = scmp.eq.s32.totalorder %s18, 1
      %p94 = scmp.ne.s32.totalorder %s89, %s91
      %p95 = scmp.eq.s32.totalorder %s18, 0
      %p96 = por %p94, %p95
      %p97 = scmp.ne.s32.totalorder %s89, %s91
      %p98 = scmp.eq.s32.totalorder %s23, 1
      %p99 = por %p97, %p98
      %p100 = scmp.ne.s32.totalorder %s91, %s92
      %p101 = scmp.eq.s32.totalorder %s23, 0
      %p102 = por %p100, %p101
      %p103 = scmp.ne.s32.totalorder %s91, %s92
      %p104 = scmp.eq.s32.totalorder %s24, 1
      %p105 = por %p103, %p104
      %p107 = scmp.ne.s32.totalorder %s92, %s106
      %p108 = scmp.eq.s32.totalorder %s24, 0
      %p109 = por %p107, %p108
      %s111 = sadd.s32 %s110, 1
      %p114 = scmp.eq.s32.totalorder %s18, 1
      %p115 = scmp.ne.s32.totalorder %s110, %s112
      %p116 = scmp.eq.s32.totalorder %s18, 0
      %p117 = por %p115, %p116
      %p118 = scmp.ne.s32.totalorder %s110, %s112
      %p119 = scmp.eq.s32.totalorder %s23, 1
      %p120 = por %p118, %p119
      %p121 = scmp.ne.s32.totalorder %s112, %s113
      %p122 = scmp.eq.s32.totalorder %s23, 0
      %p123 = por %p121, %p122
      %p124 = scmp.ne.s32.totalorder %s112, %s113
      %p125 = scmp.eq.s32.totalorder %s24, 1
      %p126 = por %p124, %p125
      %p128 = scmp.ne.s32.totalorder %s113, %s127
      %p129 = scmp.eq.s32.totalorder %s24, 0
      %p130 = por %p128, %p129
      %s132 = sadd.s32 %s131, 1
      %p135 = scmp.eq.s32.totalorder %s18, 1
      %p136 = scmp.ne.s32.totalorder %s131, %s133
      %p137 = scmp.eq.s32.totalorder %s18, 0
      %p138 = por %p136, %p137
      %p139 = scmp.ne.s32.totalorder %s131, %s133
      %p140 = scmp.eq.s32.totalorder %s23, 1
      %p141 = por %p139, %p140
      %p142 = scmp.ne.s32.totalorder %s133, %s134
      %p143 = scmp.eq.s32.totalorder %s23, 0
      %p144 = por %p142, %p143
      %p145 = scmp.ne.s32.totalorder %s133, %s134
      %p146 = scmp.eq.s32.totalorder %s24, 1
      %p147 = por %p145, %p146
      %p149 = scmp.ne.s32.totalorder %s134, %s148
      %p150 = scmp.eq.s32.totalorder %s24, 0
      %p151 = por %p149, %p150
      %s152 = ssub.s32 %s18, %s25
      %p153 = scmp.eq.s32.totalorder %s152, 0
      %s155 = sadd.s32 %s154, 1
      %s156 = scalar_select %p153, %s154, %s155
      %p159 = pneg %p153
      %p160 = scmp.eq.s32.totalorder %s18, 1
      %p161 = por %p159, %p160
      %p162 = scmp.ne.s32.totalorder %s154, %s157
      %p163 = scmp.eq.s32.totalorder %s18, 0
      %p164 = por %p162, %p163
      %p165 = scmp.ne.s32.totalorder %s154, %s157
      %p166 = scmp.eq.s32.totalorder %s23, 1
      %p167 = por %p165, %p166
      %p168 = scmp.ne.s32.totalorder %s157, %s158
      %p169 = scmp.eq.s32.totalorder %s23, 0
      %p170 = por %p168, %p169
      %p171 = scmp.ne.s32.totalorder %s157, %s158
      %p172 = scmp.eq.s32.totalorder %s24, 1
      %p173 = por %p171, %p172
      %p175 = scmp.ne.s32.totalorder %s158, %s174
      %p176 = scmp.eq.s32.totalorder %s24, 0
      %p177 = por %p175, %p176
      %p178 = scmp.le.s32.totalorder 1, %s18
      %p179 = scmp.lt.s32.totalorder %s18, 3
      %p180 = pnand %p178, %p179
      %p181 = pneg %p180
      // Predicated region
      $region9: #{tpu_custom_call.1} parent=5 // pred_check
        _
      $region10: #{tpu_custom_call.1} parent=5 // pred_check_branch
        %183 = sbr.rel (%p180) target = $region12
      $region11: #{tpu_custom_call.1} parent=5 // pred_region
        %s184 = ssub.s32 %s18, 1
        // Predicated region
        $region13: #{tpu_custom_call.1} parent=11 // pred_check
          %p185 = pneg %p39
        $region14: #{tpu_custom_call.1} parent=11 // pred_check_branch
          %187 = sbr.rel (%p185) target = $region16
        $region15: #{tpu_custom_call.1} parent=11 // pred_region
          %s189 = ssub.s32 18432, 18432
          %190 = vsyncadd [#allocation6], %s189
          %s191 = sshll.u32 [#allocation5], 4
          %s192 = int_to_ptr.vmem [resolvable:$true] %s191
          %197 = dma.hbm_to_vmem [thread:$0]  %s1, 18432, %s192, [#allocation6], 128, 128, 8
        $region16: #{tpu_custom_call.1} parent=11 // pred_fallthru
          _
        // Predicated region
        $region17: #{tpu_custom_call.1} parent=11 // pred_check
          %p198 = pneg %p60
        $region18: #{tpu_custom_call.1} parent=11 // pred_check_branch
          %200 = sbr.rel (%p198) target = $region20
        $region19: #{tpu_custom_call.1} parent=11 // pred_region
          _
        $region20: #{tpu_custom_call.1} parent=11 // pred_fallthru
          _
        // Predicated region
        $region21: #{tpu_custom_call.1} parent=11 // pred_check
          %p201 = pneg %p81
        $region22: #{tpu_custom_call.1} parent=11 // pred_check_branch
          %203 = sbr.rel (%p201) target = $region24
        $region23: #{tpu_custom_call.1} parent=11 // pred_region
          _
        $region24: #{tpu_custom_call.1} parent=11 // pred_fallthru
          _
        // Predicated region
        $region25: #{tpu_custom_call.1} parent=11 // pred_check
          %p204 = pneg %p102
        $region26: #{tpu_custom_call.1} parent=11 // pred_check_branch
          %206 = sbr.rel (%p204) target = $region28
        $region27: #{tpu_custom_call.1} parent=11 // pred_region
          %s208 = ssub.s32 18432, 18432
          %209 = vsyncadd [#allocation9], %s208
          %s210 = sshll.u32 [#allocation8], 4
          %s211 = int_to_ptr.vmem [resolvable:$true] %s210
          %216 = dma.hbm_to_vmem [thread:$0]  %s4, 18432, %s211, [#allocation9], 128, 128, 8
        $region28: #{tpu_custom_call.1} parent=11 // pred_fallthru
          _
        // Predicated region
        $region29: #{tpu_custom_call.1} parent=11 // pred_check
          %p217 = pneg %p123
        $region30: #{tpu_custom_call.1} parent=11 // pred_check_branch
          %219 = sbr.rel (%p217) target = $region32
        $region31: #{tpu_custom_call.1} parent=11 // pred_region
          _
        $region32: #{tpu_custom_call.1} parent=11 // pred_fallthru
          _
        // Predicated region
        $region33: #{tpu_custom_call.1} parent=11 // pred_check
          %p220 = pneg %p144
        $region34: #{tpu_custom_call.1} parent=11 // pred_check_branch
          %222 = sbr.rel (%p220) target = $region36
        $region35: #{tpu_custom_call.1} parent=11 // pred_region
          _
        $region36: #{tpu_custom_call.1} parent=11 // pred_fallthru
          _
      $region12: #{tpu_custom_call.1} parent=5 // pred_fallthru
        _
      %p223 = scmp.lt.s32.totalorder %s18, 2
      // Predicated region
      $region37: #{tpu_custom_call.1} parent=5 // pred_check
        %p224 = pneg %p223
      $region38: #{tpu_custom_call.1} parent=5 // pred_check_branch
        %226 = sbr.rel (%p224) target = $region40
      $region39: #{tpu_custom_call.1} parent=5 // pred_region
        _
      $region40: #{tpu_custom_call.1} parent=5 // pred_fallthru
        _
      %p227 = scmp.le.s32.totalorder 1, %s18
      %p228 = scmp.lt.s32.totalorder %s18, 3
      %p229 = pnand %p227, %p228
      %p230 = pneg %p229
      // Predicated region
      $region41: #{tpu_custom_call.1} parent=5 // pred_check
        _
      $region42: #{tpu_custom_call.1} parent=5 // pred_check_branch
        %232 = sbr.rel (%p229) target = $region44
      $region43: #{tpu_custom_call.1} parent=5 // pred_region
        %s233 = ssub.s32 %s18, 1
        // Predicated region
        $region45: #{tpu_custom_call.1} parent=43 // pred_check
          %p234 = pneg %p39
        $region46: #{tpu_custom_call.1} parent=43 // pred_check_branch
          %236 = sbr.rel (%p234) target = $region48
        $region47: #{tpu_custom_call.1} parent=43 // pred_region
          %237 = dma.done [#allocation6], 18432
        $region48: #{tpu_custom_call.1} parent=43 // pred_fallthru
          _
        // Predicated region
        $region49: #{tpu_custom_call.1} parent=43 // pred_check
          %p238 = pneg %p102
        $region50: #{tpu_custom_call.1} parent=43 // pred_check_branch
          %240 = sbr.rel (%p238) target = $region52
        $region51: #{tpu_custom_call.1} parent=43 // pred_region
          %241 = dma.done [#allocation9], 18432
        $region52: #{tpu_custom_call.1} parent=43 // pred_fallthru
          _
        %p242 = pneg %p39
        %p243 = pneg %p36
        %p244 = pneg %p60
        %p245 = pneg %p57
        %p246 = pneg %p81
        %p247 = pneg %p78
        %p248 = pneg %p102
        %p249 = pneg %p99
        %p250 = pneg %p123
        %p251 = pneg %p120
        %p252 = pneg %p144
        %p253 = pneg %p141
        %p254 = pneg %p170
        %p255 = pneg %p167
        %s256 = sand.u32 %s157, 1
        %s257 = scalar_lea.sflag [#allocation7], %s256
        %s258 = sand.u32 %s157, 1
        %s259 = smul.addr %s258, 256
        %s260 = scalar_lea.vmem [#allocation10], %s259
        %261 = vst [vmem:[#allocation2] sm:$0xff] 0.0
        %262 = vst [vmem:[#allocation2 + $0x8] sm:$0xff] 0.0
        %263 = vst [vmem:[#allocation2 + $0x10] sm:$0xff] 0.0
        %264 = vst [vmem:[#allocation2 + $0x18] sm:$0xff] 0.0
        %s265 = scalar_lea.vmem [#allocation2], 544
        %266 = vst [vmem:[%s265] sm:$0xff] 0.0
        %267 = vst [vmem:[%s265 + $0x8] sm:$0xff] 0.0
        %268 = vst [vmem:[%s265 + $0x10] sm:$0xff] 0.0
        %269 = vst [vmem:[%s265 + $0x18] sm:$0xff] 0.0
        %270 = vst [vmem:[#allocation2] sm:$0xff] 0.0
        %271 = vst [vmem:[#allocation2 + $0x20] sm:$0xff] 0.0
        %272 = vst [vmem:[#allocation2 + $0x40] sm:$0xff] 0.0
        %273 = vst [vmem:[#allocation2 + $0x60] sm:$0xff] 0.0
        %274 = vst [vmem:[#allocation2 + $0x80] sm:$0xff] 0.0
        %275 = vst [vmem:[#allocation2 + $0xa0] sm:$0xff] 0.0
        %276 = vst [vmem:[#allocation2 + $0xc0] sm:$0xff] 0.0
        %277 = vst [vmem:[#allocation2 + $0xe0] sm:$0xff] 0.0
        %278 = vst [vmem:[#allocation2 + $0x100] sm:$0xff] 0.0
        %279 = vst [vmem:[#allocation2 + $0x120] sm:$0xff] 0.0
        %280 = vst [vmem:[#allocation2 + $0x140] sm:$0xff] 0.0
        %281 = vst [vmem:[#allocation2 + $0x160] sm:$0xff] 0.0
        %282 = vst [vmem:[#allocation2 + $0x180] sm:$0xff] 0.0
        %283 = vst [vmem:[#allocation2 + $0x1a0] sm:$0xff] 0.0
        %284 = vst [vmem:[#allocation2 + $0x1c0] sm:$0xff] 0.0
        %285 = vst [vmem:[#allocation2 + $0x1e0] sm:$0xff] 0.0
        %286 = vst [vmem:[#allocation2 + $0x200] sm:$0xff] 0.0
        %287 = vst [vmem:[#allocation2 + $0x220] sm:$0xff] 0.0
        %288 = vst [vmem:[#allocation2 + $0x18] sm:$0xff] 0.0
        %289 = vst [vmem:[#allocation2 + $0x38] sm:$0xff] 0.0
        %290 = vst [vmem:[#allocation2 + $0x58] sm:$0xff] 0.0
        %291 = vst [vmem:[#allocation2 + $0x78] sm:$0xff] 0.0
        %292 = vst [vmem:[#allocation2 + $0x98] sm:$0xff] 0.0
        %293 = vst [vmem:[#allocation2 + $0xb8] sm:$0xff] 0.0
        %294 = vst [vmem:[#allocation2 + $0xd8] sm:$0xff] 0.0
        %295 = vst [vmem:[#allocation2 + $0xf8] sm:$0xff] 0.0
        %296 = vst [vmem:[#allocation2 + $0x118] sm:$0xff] 0.0
        %297 = vst [vmem:[#allocation2 + $0x138] sm:$0xff] 0.0
        %298 = vst [vmem:[#allocation2 + $0x158] sm:$0xff] 0.0
        %299 = vst [vmem:[#allocation2 + $0x178] sm:$0xff] 0.0
        %300 = vst [vmem:[#allocation2 + $0x198] sm:$0xff] 0.0
        %301 = vst [vmem:[#allocation2 + $0x1b8] sm:$0xff] 0.0
        %302 = vst [vmem:[#allocation2 + $0x1d8] sm:$0xff] 0.0
        %303 = vst [vmem:[#allocation2 + $0x1f8] sm:$0xff] 0.0
        %304 = vst [vmem:[#allocation2 + $0x218] sm:$0xff] 0.0
        %305 = vst [vmem:[#allocation2 + $0x238] sm:$0xff] 0.0
        %s306 = smul.u32 %s23, 256
        %s307 = smul.addr %s306, 16
        %s308 = scalar_lea.hbm %s0, %s307
        %s309 = scalar_lea.vmem [#allocation2], 40
        %s311 = sshll.u32 %s309, 4
        %s312 = int_to_ptr.vmem [resolvable:$true] %s311
        %314 = dma.hbm_to_vmem [thread:$0]  %s308, 4096, %s312, [#allocation4], 256, 512, 16
        %315 = vst [vmem:[#allocation3] sm:$0xff] 0.0
        %316 = vst [vmem:[#allocation3 + $0x8] sm:$0xff] 0.0
        %317 = vst [vmem:[#allocation3 + $0x10] sm:$0xff] 0.0
        %318 = vst [vmem:[#allocation3 + $0x18] sm:$0xff] 0.0
        %s319 = scalar_lea.vmem [#allocation3], 544
        %320 = vst [vmem:[%s319] sm:$0xff] 0.0
        %321 = vst [vmem:[%s319 + $0x8] sm:$0xff] 0.0
        %322 = vst [vmem:[%s319 + $0x10] sm:$0xff] 0.0
        %323 = vst [vmem:[%s319 + $0x18] sm:$0xff] 0.0
        %324 = vst [vmem:[#allocation3] sm:$0xff] 0.0
        %325 = vst [vmem:[#allocation3 + $0x20] sm:$0xff] 0.0
        %326 = vst [vmem:[#allocation3 + $0x40] sm:$0xff] 0.0
        %327 = vst [vmem:[#allocation3 + $0x60] sm:$0xff] 0.0
        %328 = vst [vmem:[#allocation3 + $0x80] sm:$0xff] 0.0
        %329 = vst [vmem:[#allocation3 + $0xa0] sm:$0xff] 0.0
        %330 = vst [vmem:[#allocation3 + $0xc0] sm:$0xff] 0.0
        %331 = vst [vmem:[#allocation3 + $0xe0] sm:$0xff] 0.0
        %332 = vst [vmem:[#allocation3 + $0x100] sm:$0xff] 0.0
        %333 = vst [vmem:[#allocation3 + $0x120] sm:$0xff] 0.0
        %334 = vst [vmem:[#allocation3 + $0x140] sm:$0xff] 0.0
        %335 = vst [vmem:[#allocation3 + $0x160] sm:$0xff] 0.0
        %336 = vst [vmem:[#allocation3 + $0x180] sm:$0xff] 0.0
        %337 = vst [vmem:[#allocation3 + $0x1a0] sm:$0xff] 0.0
        %338 = vst [vmem:[#allocation3 + $0x1c0] sm:$0xff] 0.0
        %339 = vst [vmem:[#allocation3 + $0x1e0] sm:$0xff] 0.0
        %340 = vst [vmem:[#allocation3 + $0x200] sm:$0xff] 0.0
        %341 = vst [vmem:[#allocation3 + $0x220] sm:$0xff] 0.0
        %342 = vst [vmem:[#allocation3 + $0x18] sm:$0xff] 0.0
        %343 = vst [vmem:[#allocation3 + $0x38] sm:$0xff] 0.0
        %344 = vst [vmem:[#allocation3 + $0x58] sm:$0xff] 0.0
        %345 = vst [vmem:[#allocation3 + $0x78] sm:$0xff] 0.0
        %346 = vst [vmem:[#allocation3 + $0x98] sm:$0xff] 0.0
        %347 = vst [vmem:[#allocation3 + $0xb8] sm:$0xff] 0.0
        %348 = vst [vmem:[#allocation3 + $0xd8] sm:$0xff] 0.0
        %349 = vst [vmem:[#allocation3 + $0xf8] sm:$0xff] 0.0
        %350 = vst [vmem:[#allocation3 + $0x118] sm:$0xff] 0.0
        %351 = vst [vmem:[#allocation3 + $0x138] sm:$0xff] 0.0
        %352 = vst [vmem:[#allocation3 + $0x158] sm:$0xff] 0.0
        %353 = vst [vmem:[#allocation3 + $0x178] sm:$0xff] 0.0
        %354 = vst [vmem:[#allocation3 + $0x198] sm:$0xff] 0.0
        %355 = vst [vmem:[#allocation3 + $0x1b8] sm:$0xff] 0.0
        %356 = vst [vmem:[#allocation3 + $0x1d8] sm:$0xff] 0.0
        %357 = vst [vmem:[#allocation3 + $0x1f8] sm:$0xff] 0.0
        %358 = vst [vmem:[#allocation3 + $0x218] sm:$0xff] 0.0
        %359 = vst [vmem:[#allocation3 + $0x238] sm:$0xff] 0.0
        %s360 = smul.u32 16, 16
        %s361 = smul.u32 %s360, 1
        %s362 = sshll.u32 %s361, 4
        %363 = dma.done [#allocation4], %s362
        %v364 = vld [vmem:[#allocation2 + $0x7] sm:$0xff]
        %v365 = vld [vmem:[#allocation2 + $0xf] sm:$0xff]
        %v366 = vld [vmem:[#allocation2 + $0x27] sm:$0xff]
        %v367 = vld [vmem:[#allocation2 + $0x2f] sm:$0xff]
        %v368 = vld [vmem:[#allocation2 + $0x47] sm:$0xff]
        %v369 = vld [vmem:[#allocation2 + $0x4f] sm:$0xff]
        %v370 = vld [vmem:[#allocation2 + $0x67] sm:$0xff]
        %v371 = vld [vmem:[#allocation2 + $0x6f] sm:$0xff]
        %v372 = vld [vmem:[#allocation2 + $0x87] sm:$0xff]
        %v373 = vld [vmem:[#allocation2 + $0x8f] sm:$0xff]
        %v374 = vld [vmem:[#allocation2 + $0xa7] sm:$0xff]
        %v375 = vld [vmem:[#allocation2 + $0xaf] sm:$0xff]
        %v376 = vld [vmem:[#allocation2 + $0xc7] sm:$0xff]
        %v377 = vld [vmem:[#allocation2 + $0xcf] sm:$0xff]
        %v378 = vld [vmem:[#allocation2 + $0xe7] sm:$0xff]
        %v379 = vld [vmem:[#allocation2 + $0xef] sm:$0xff]
        %v380 = vld [vmem:[#allocation2 + $0x107] sm:$0xff]
        %v381 = vld [vmem:[#allocation2 + $0x10f] sm:$0xff]
        %v382 = vld [vmem:[#allocation2 + $0x127] sm:$0xff]
        %v383 = vld [vmem:[#allocation2 + $0x12f] sm:$0xff]
        %v384 = vld [vmem:[#allocation2 + $0x147] sm:$0xff]
        %v385 = vld [vmem:[#allocation2 + $0x14f] sm:$0xff]
        %v386 = vld [vmem:[#allocation2 + $0x167] sm:$0xff]
        %v387 = vld [vmem:[#allocation2 + $0x16f] sm:$0xff]
        %v388 = vld [vmem:[#allocation2 + $0x187] sm:$0xff]
        %v389 = vld [vmem:[#allocation2 + $0x18f] sm:$0xff]
        %v390 = vld [vmem:[#allocation2 + $0x1a7] sm:$0xff]
        %v391 = vld [vmem:[#allocation2 + $0x1af] sm:$0xff]
        %v392 = vld [vmem:[#allocation2 + $0x1c7] sm:$0xff]
        %v393 = vld [vmem:[#allocation2 + $0x1cf] sm:$0xff]
        %v394 = vld [vmem:[#allocation2 + $0x1e7] sm:$0xff]
        %v395 = vld [vmem:[#allocation2 + $0x1ef] sm:$0xff]
        %v396 = vld [vmem:[#allocation5] sm:$0xff]
        %v397 = vld [vmem:[#allocation5 + $0x8] sm:$0xff]
        %v398 = vld [vmem:[#allocation5 + $0x10] sm:$0xff]
        %v399 = vld [vmem:[#allocation5 + $0x18] sm:$0xff]
        %v400 = vld [vmem:[#allocation5 + $0x20] sm:$0xff]
        %v401 = vld [vmem:[#allocation5 + $0x28] sm:$0xff]
        %v402 = vld [vmem:[#allocation5 + $0x30] sm:$0xff]
        %v403 = vld [vmem:[#allocation5 + $0x38] sm:$0xff]
        %v404 = vld [vmem:[#allocation5 + $0x40] sm:$0xff]
        %v405 = vld [vmem:[#allocation5 + $0x48] sm:$0xff]
        %v406 = vld [vmem:[#allocation5 + $0x50] sm:$0xff]
        %v407 = vld [vmem:[#allocation5 + $0x58] sm:$0xff]
        %v408 = vld [vmem:[#allocation5 + $0x60] sm:$0xff]
        %v409 = vld [vmem:[#allocation5 + $0x68] sm:$0xff]
        %v410 = vld [vmem:[#allocation5 + $0x70] sm:$0xff]
        %v411 = vld [vmem:[#allocation5 + $0x78] sm:$0xff]
        %v412 = vld [vmem:[#allocation2 + $0x8] sm:$0xff]
        %v413 = vld [vmem:[#allocation2 + $0x10] sm:$0xff]
        %v414 = vld [vmem:[#allocation2 + $0x28] sm:$0xff]
        %v415 = vld [vmem:[#allocation2 + $0x30] sm:$0xff]
        %v416 = vld [vmem:[#allocation2 + $0x48] sm:$0xff]
        %v417 = vld [vmem:[#allocation2 + $0x50] sm:$0xff]
        %v418 = vld [vmem:[#allocation2 + $0x68] sm:$0xff]
        %v419 = vld [vmem:[#allocation2 + $0x70] sm:$0xff]
        %v420 = vld [vmem:[#allocation2 + $0x88] sm:$0xff]
        %v421 = vld [vmem:[#allocation2 + $0x90] sm:$0xff]
        %v422 = vld [vmem:[#allocation2 + $0xa8] sm:$0xff]
        %v423 = vld [vmem:[#allocation2 + $0xb0] sm:$0xff]
        %v424 = vld [vmem:[#allocation2 + $0xc8] sm:$0xff]
        %v425 = vld [vmem:[#allocation2 + $0xd0] sm:$0xff]
        %v426 = vld [vmem:[#allocation2 + $0xe8] sm:$0xff]
        %v427 = vld [vmem:[#allocation2 + $0xf0] sm:$0xff]
        %v428 = vld [vmem:[#allocation2 + $0x108] sm:$0xff]
        %v429 = vld [vmem:[#allocation2 + $0x110] sm:$0xff]
        %v430 = vld [vmem:[#allocation2 + $0x128] sm:$0xff]
        %v431 = vld [vmem:[#allocation2 + $0x130] sm:$0xff]
        %v432 = vld [vmem:[#allocation2 + $0x148] sm:$0xff]
        %v433 = vld [vmem:[#allocation2 + $0x150] sm:$0xff]
        %v434 = vld [vmem:[#allocation2 + $0x168] sm:$0xff]
        %v435 = vld [vmem:[#allocation2 + $0x170] sm:$0xff]
        %v436 = vld [vmem:[#allocation2 + $0x188] sm:$0xff]
        %v437 = vld [vmem:[#allocation2 + $0x190] sm:$0xff]
        %v438 = vld [vmem:[#allocation2 + $0x1a8] sm:$0xff]
        %v439 = vld [vmem:[#allocation2 + $0x1b0] sm:$0xff]
        %v440 = vld [vmem:[#allocation2 + $0x1c8] sm:$0xff]
        %v441 = vld [vmem:[#allocation2 + $0x1d0] sm:$0xff]
        %v442 = vld [vmem:[#allocation2 + $0x1e8] sm:$0xff]
        %v443 = vld [vmem:[#allocation2 + $0x1f0] sm:$0xff]
        %v444 = vld [vmem:[#allocation5 + $0x80] sm:$0xff]
        %v445 = vld [vmem:[#allocation5 + $0x88] sm:$0xff]
        %v446 = vld [vmem:[#allocation5 + $0x90] sm:$0xff]
        %v447 = vld [vmem:[#allocation5 + $0x98] sm:$0xff]
        %v448 = vld [vmem:[#allocation5 + $0xa0] sm:$0xff]
        %v449 = vld [vmem:[#allocation5 + $0xa8] sm:$0xff]
        %v450 = vld [vmem:[#allocation5 + $0xb0] sm:$0xff]
        %v451 = vld [vmem:[#allocation5 + $0xb8] sm:$0xff]
        %v452 = vld [vmem:[#allocation5 + $0xc0] sm:$0xff]
        %v453 = vld [vmem:[#allocation5 + $0xc8] sm:$0xff]
        %v454 = vld [vmem:[#allocation5 + $0xd0] sm:$0xff]
        %v455 = vld [vmem:[#allocation5 + $0xd8] sm:$0xff]
        %v456 = vld [vmem:[#allocation5 + $0xe0] sm:$0xff]
        %v457 = vld [vmem:[#allocation5 + $0xe8] sm:$0xff]
        %v458 = vld [vmem:[#allocation5 + $0xf0] sm:$0xff]
        %v459 = vld [vmem:[#allocation5 + $0xf8] sm:$0xff]
        %460 = vmatprep.subr.mxu0 0.0
        %461 = vmatpush1.msra.mxu0 %v459
        %462 = vmatprep.subr.mxu0 0.0
        %463 = vmatpush1.msra.mxu0 %v458
        %464 = vmatprep.subr.mxu0 0.0
        %465 = vmatpush1.msra.mxu0 %v457
        %466 = vmatprep.subr.mxu0 0.0
        %467 = vmatpush1.msra.mxu0 %v456
        %468 = vmatprep.subr.mxu0 0.0
        %469 = vmatpush1.msra.mxu0 %v455
        %470 = vmatprep.subr.mxu0 0.0
        %471 = vmatpush1.msra.mxu0 %v454
        %472 = vmatprep.subr.mxu0 0.0
        %473 = vmatpush1.msra.mxu0 %v453
        %474 = vmatprep.subr.mxu0 0.0
        %475 = vmatpush1.msra.mxu0 %v452
        %476 = vmatprep.subr.mxu0 0.0
        %477 = vmatpush1.msra.mxu0 %v451
        %478 = vmatprep.subr.mxu0 0.0
        %479 = vmatpush1.msra.mxu0 %v450
        %480 = vmatprep.subr.mxu0 0.0
        %481 = vmatpush1.msra.mxu0 %v449
        %482 = vmatprep.subr.mxu0 0.0
        %483 = vmatpush1.msra.mxu0 %v448
        %484 = vmatprep.subr.mxu0 0.0
        %485 = vmatpush1.msra.mxu0 %v447
        %486 = vmatprep.subr.mxu0 0.0
        %487 = vmatpush1.msra.mxu0 %v446
        %488 = vmatprep.subr.mxu0 0.0
        %489 = vmatpush1.msra.mxu0 %v445
        %490 = vmatprep.subr.mxu0 0.0
        %491 = vmatpush1.msra.mxu0 %v444
        %492 = vmatprep.subr.mxu0 0.0
        %493 = vmatpush2.msra.mxu0 0.0
        %494 = vmatprep.subr.mxu0 0.0
        %495 = vmatpush2.msra.mxu0 0.0
        %496 = vmatprep.subr.mxu0 0.0
        %497 = vmatpush2.msra.mxu0 0.0
        %498 = vmatprep.subr.mxu0 0.0
        %499 = vmatpush2.msra.mxu0 0.0
        %500 = vmatprep.subr.mxu0 0.0
        %501 = vmatpush2.msra.mxu0 0.0
        %502 = vmatprep.subr.mxu0 0.0
        %503 = vmatpush2.msra.mxu0 0.0
        %504 = vmatprep.subr.mxu0 0.0
        %505 = vmatpush2.msra.mxu0 0.0
        %506 = vmatprep.subr.mxu0 0.0
        %507 = vmatpush2.msra.mxu0 0.0
        %508 = vmatprep.subr.mxu0 0.0
        %509 = vmatpush2.msra.mxu0 0.0
        %510 = vmatprep.subr.mxu0 0.0
        %511 = vmatpush2.msra.mxu0 0.0
        %512 = vmatprep.subr.mxu0 0.0
        %513 = vmatpush2.msra.mxu0 0.0
        %514 = vmatprep.subr.mxu0 0.0
        %515 = vmatpush2.msra.mxu0 0.0
        %516 = vmatprep.subr.mxu0 0.0
        %517 = vmatpush2.msra.mxu0 0.0
        %518 = vmatprep.subr.mxu0 0.0
        %519 = vmatpush2.msra.mxu0 0.0
        %520 = vmatprep.subr.mxu0 0.0
        %521 = vmatpush2.msra.mxu0 0.0
        %522 = vmatprep.subr.mxu0 0.0
        %523 = vmatpush2.msra.mxu0 0.0
        %524 = vmatprep.mubr.f32.mxu0 0.0
        %525 = vmatmul.mubr.f32.gmra.mxu0 %v412
        %v526 = vpop.f32.mrf.mxu0
        %v527 = vadd.f32 0.0, %v526
        %v528 = vpop.f32.mrf.mxu0
        %529 = vmatprep.mubr.f32.mxu0 0.0
        %530 = vmatmul.mubr.f32.gmra.mxu0 %v413
        %v531 = vpop.f32.mrf.mxu0
        %v532 = vadd.f32 0.0, %v531
        %v533 = vpop.f32.mrf.mxu0
        %534 = vmatprep.mubr.f32.mxu0 0.0
        %535 = vmatmul.mubr.f32.gmra.mxu0 %v414
        %v536 = vpop.f32.mrf.mxu0
        %v537 = vadd.f32 0.0, %v536
        %v538 = vpop.f32.mrf.mxu0
        %539 = vmatprep.mubr.f32.mxu0 0.0
        %540 = vmatmul.mubr.f32.gmra.mxu0 %v415
        %v541 = vpop.f32.mrf.mxu0
        %v542 = vadd.f32 0.0, %v541
        %v543 = vpop.f32.mrf.mxu0
        %544 = vmatprep.mubr.f32.mxu0 0.0
        %545 = vmatmul.mubr.f32.gmra.mxu0 %v416
        %v546 = vpop.f32.mrf.mxu0
        %v547 = vadd.f32 0.0, %v546
        %v548 = vpop.f32.mrf.mxu0
        %549 = vmatprep.mubr.f32.mxu0 0.0
        %550 = vmatmul.mubr.f32.gmra.mxu0 %v417
        %v551 = vpop.f32.mrf.mxu0
        %v552 = vadd.f32 0.0, %v551
        %v553 = vpop.f32.mrf.mxu0
        %554 = vmatprep.mubr.f32.mxu0 0.0
        %555 = vmatmul.mubr.f32.gmra.mxu0 %v418
        %v556 = vpop.f32.mrf.mxu0
        %v557 = vadd.f32 0.0, %v556
        %v558 = vpop.f32.mrf.mxu0
        %559 = vmatprep.mubr.f32.mxu0 0.0
        %560 = vmatmul.mubr.f32.gmra.mxu0 %v419
        %v561 = vpop.f32.mrf.mxu0
        %v562 = vadd.f32 0.0, %v561
        %v563 = vpop.f32.mrf.mxu0
        %564 = vmatprep.mubr.f32.mxu0 0.0
        %565 = vmatmul.mubr.f32.gmra.mxu0 %v420
        %v566 = vpop.f32.mrf.mxu0
        %v567 = vadd.f32 0.0, %v566
        %v568 = vpop.f32.mrf.mxu0
        %569 = vmatprep.mubr.f32.mxu0 0.0
        %570 = vmatmul.mubr.f32.gmra.mxu0 %v421
        %v571 = vpop.f32.mrf.mxu0
        %v572 = vadd.f32 0.0, %v571
        %v573 = vpop.f32.mrf.mxu0
        %574 = vmatprep.mubr.f32.mxu0 0.0
        %575 = vmatmul.mubr.f32.gmra.mxu0 %v422
        %v576 = vpop.f32.mrf.mxu0
        %v577 = vadd.f32 0.0, %v576
        %v578 = vpop.f32.mrf.mxu0
        %579 = vmatprep.mubr.f32.mxu0 0.0
        %580 = vmatmul.mubr.f32.gmra.mxu0 %v423
        %v581 = vpop.f32.mrf.mxu0
        %v582 = vadd.f32 0.0, %v581
        %v583 = vpop.f32.mrf.mxu0
        %584 = vmatprep.mubr.f32.mxu0 0.0
        %585 = vmatmul.mubr.f32.gmra.mxu0 %v424
        %v586 = vpop.f32.mrf.mxu0
        %v587 = vadd.f32 0.0, %v586
        %v588 = vpop.f32.mrf.mxu0
        %589 = vmatprep.mubr.f32.mxu0 0.0
        %590 = vmatmul.mubr.f32.gmra.mxu0 %v425
        %v591 = vpop.f32.mrf.mxu0
        %v592 = vadd.f32 0.0, %v591
        %v593 = vpop.f32.mrf.mxu0
        %594 = vmatprep.mubr.f32.mxu0 0.0
        %595 = vmatmul.mubr.f32.gmra.mxu0 %v426
        %v596 = vpop.f32.mrf.mxu0
        %v597 = vadd.f32 0.0, %v596
        %v598 = vpop.f32.mrf.mxu0
        %599 = vmatprep.mubr.f32.mxu0 0.0
        %600 = vmatmul.mubr.f32.gmra.mxu0 %v427
        %v601 = vpop.f32.mrf.mxu0
        %v602 = vadd.f32 0.0, %v601
        %v603 = vpop.f32.mrf.mxu0
        %604 = vmatprep.mubr.f32.mxu0 0.0
        %605 = vmatmul.mubr.f32.gmra.mxu0 %v428
        %v606 = vpop.f32.mrf.mxu0
        %v607 = vadd.f32 0.0, %v606
        %v608 = vpop.f32.mrf.mxu0
        %609 = vmatprep.mubr.f32.mxu0 0.0
        %610 = vmatmul.mubr.f32.gmra.mxu0 %v429
        %v611 = vpop.f32.mrf.mxu0
        %v612 = vadd.f32 0.0, %v611
        %v613 = vpop.f32.mrf.mxu0
        %614 = vmatprep.mubr.f32.mxu0 0.0
        %615 = vmatmul.mubr.f32.gmra.mxu0 %v430
        %v616 = vpop.f32.mrf.mxu0
        %v617 = vadd.f32 0.0, %v616
        %v618 = vpop.f32.mrf.mxu0
        %619 = vmatprep.mubr.f32.mxu0 0.0
        %620 = vmatmul.mubr.f32.gmra.mxu0 %v431
        %v621 = vpop.f32.mrf.mxu0
        %v622 = vadd.f32 0.0, %v621
        %v623 = vpop.f32.mrf.mxu0
        %624 = vmatprep.mubr.f32.mxu0 0.0
        %625 = vmatmul.mubr.f32.gmra.mxu0 %v432
        %v626 = vpop.f32.mrf.mxu0
        %v627 = vadd.f32 0.0, %v626
        %v628 = vpop.f32.mrf.mxu0
        %629 = vmatprep.mubr.f32.mxu0 0.0
        %630 = vmatmul.mubr.f32.gmra.mxu0 %v433
        %v631 = vpop.f32.mrf.mxu0
        %v632 = vadd.f32 0.0, %v631
        %v633 = vpop.f32.mrf.mxu0
        %634 = vmatprep.mubr.f32.mxu0 0.0
        %635 = vmatmul.mubr.f32.gmra.mxu0 %v434
        %v636 = vpop.f32.mrf.mxu0
        %v637 = vadd.f32 0.0, %v636
        %v638 = vpop.f32.mrf.mxu0
        %639 = vmatprep.mubr.f32.mxu0 0.0
        %640 = vmatmul.mubr.f32.gmra.mxu0 %v435
        %v641 = vpop.f32.mrf.mxu0
        %v642 = vadd.f32 0.0, %v641
        %v643 = vpop.f32.mrf.mxu0
        %644 = vmatprep.mubr.f32.mxu0 0.0
        %645 = vmatmul.mubr.f32.gmra.mxu0 %v436
        %v646 = vpop.f32.mrf.mxu0
        %v647 = vadd.f32 0.0, %v646
        %v648 = vpop.f32.mrf.mxu0
        %649 = vmatprep.mubr.f32.mxu0 0.0
        %650 = vmatmul.mubr.f32.gmra.mxu0 %v437
        %v651 = vpop.f32.mrf.mxu0
        %v652 = vadd.f32 0.0, %v651
        %v653 = vpop.f32.mrf.mxu0
        %654 = vmatprep.mubr.f32.mxu0 0.0
        %655 = vmatmul.mubr.f32.gmra.mxu0 %v438
        %v656 = vpop.f32.mrf.mxu0
        %v657 = vadd.f32 0.0, %v656
        %v658 = vpop.f32.mrf.mxu0
        %659 = vmatprep.mubr.f32.mxu0 0.0
        %660 = vmatmul.mubr.f32.gmra.mxu0 %v439
        %v661 = vpop.f32.mrf.mxu0
        %v662 = vadd.f32 0.0, %v661
        %v663 = vpop.f32.mrf.mxu0
        %664 = vmatprep.mubr.f32.mxu0 0.0
        %665 = vmatmul.mubr.f32.gmra.mxu0 %v440
        %v666 = vpop.f32.mrf.mxu0
        %v667 = vadd.f32 0.0, %v666
        %v668 = vpop.f32.mrf.mxu0
        %669 = vmatprep.mubr.f32.mxu0 0.0
        %670 = vmatmul.mubr.f32.gmra.mxu0 %v441
        %v671 = vpop.f32.mrf.mxu0
        %v672 = vadd.f32 0.0, %v671
        %v673 = vpop.f32.mrf.mxu0
        %674 = vmatprep.mubr.f32.mxu0 0.0
        %675 = vmatmul.mubr.f32.gmra.mxu0 %v442
        %v676 = vpop.f32.mrf.mxu0
        %v677 = vadd.f32 0.0, %v676
        %v678 = vpop.f32.mrf.mxu0
        %679 = vmatprep.mubr.f32.mxu0 0.0
        %680 = vmatmul.mubr.f32.gmra.mxu0 %v443
        %v681 = vpop.f32.mrf.mxu0
        %v682 = vadd.f32 0.0, %v681
        %v683 = vpop.f32.mrf.mxu0
        %684 = vdwg.mxu0
        %685 = vmatprep.subr.mxu0 0.0
        %686 = vmatpush1.msra.mxu0 %v411
        %687 = vmatprep.subr.mxu0 0.0
        %688 = vmatpush1.msra.mxu0 %v410
        %689 = vmatprep.subr.mxu0 0.0
        %690 = vmatpush1.msra.mxu0 %v409
        %691 = vmatprep.subr.mxu0 0.0
        %692 = vmatpush1.msra.mxu0 %v408
        %693 = vmatprep.subr.mxu0 0.0
        %694 = vmatpush1.msra.mxu0 %v407
        %695 = vmatprep.subr.mxu0 0.0
        %696 = vmatpush1.msra.mxu0 %v406
        %697 = vmatprep.subr.mxu0 0.0
        %698 = vmatpush1.msra.mxu0 %v405
        %699 = vmatprep.subr.mxu0 0.0
        %700 = vmatpush1.msra.mxu0 %v404
        %701 = vmatprep.subr.mxu0 0.0
        %702 = vmatpush1.msra.mxu0 %v403
        %703 = vmatprep.subr.mxu0 0.0
        %704 = vmatpush1.msra.mxu0 %v402
        %705 = vmatprep.subr.mxu0 0.0
        %706 = vmatpush1.msra.mxu0 %v401
        %707 = vmatprep.subr.mxu0 0.0
        %708 = vmatpush1.msra.mxu0 %v400
        %709 = vmatprep.subr.mxu0 0.0
        %710 = vmatpush1.msra.mxu0 %v399
        %711 = vmatprep.subr.mxu0 0.0
        %712 = vmatpush1.msra.mxu0 %v398
        %713 = vmatprep.subr.mxu0 0.0
        %714 = vmatpush1.msra.mxu0 %v397
        %715 = vmatprep.subr.mxu0 0.0
        %716 = vmatpush1.msra.mxu0 %v396
        %717 = vmatprep.subr.mxu0 0.0
        %718 = vmatpush2.msra.mxu0 0.0
        %719 = vmatprep.subr.mxu0 0.0
        %720 = vmatpush2.msra.mxu0 0.0
        %721 = vmatprep.subr.mxu0 0.0
        %722 = vmatpush2.msra.mxu0 0.0
        %723 = vmatprep.subr.mxu0 0.0
        %724 = vmatpush2.msra.mxu0 0.0
        %725 = vmatprep.subr.mxu0 0.0
        %726 = vmatpush2.msra.mxu0 0.0
        %727 = vmatprep.subr.mxu0 0.0
        %728 = vmatpush2.msra.mxu0 0.0
        %729 = vmatprep.subr.mxu0 0.0
        %730 = vmatpush2.msra.mxu0 0.0
        %731 = vmatprep.subr.mxu0 0.0
        %732 = vmatpush2.msra.mxu0 0.0
        %733 = vmatprep.subr.mxu0 0.0
        %734 = vmatpush2.msra.mxu0 0.0
        %735 = vmatprep.subr.mxu0 0.0
        %736 = vmatpush2.msra.mxu0 0.0
        %737 = vmatprep.subr.mxu0 0.0
        %738 = vmatpush2.msra.mxu0 0.0
        %739 = vmatprep.subr.mxu0 0.0
        %740 = vmatpush2.msra.mxu0 0.0
        %741 = vmatprep.subr.mxu0 0.0
        %742 = vmatpush2.msra.mxu0 0.0
        %743 = vmatprep.subr.mxu0 0.0
        %744 = vmatpush2.msra.mxu0 0.0
        %745 = vmatprep.subr.mxu0 0.0
        %746 = vmatpush2.msra.mxu0 0.0
        %747 = vmatprep.subr.mxu0 0.0
        %748 = vmatpush2.msra.mxu0 0.0
        %749 = vmatprep.mubr.f32.mxu0 0.0
        %750 = vmatmul.mubr.f32.gmra.mxu0 %v364
        %v751 = vpop.f32.mrf.mxu0
        %v752 = vadd.f32 %v527, %v751
        %v753 = vpop.f32.mrf.mxu0
        %754 = vmatprep.mubr.f32.mxu0 0.0
        %755 = vmatmul.mubr.f32.gmra.mxu0 %v365
        %v756 = vpop.f32.mrf.mxu0
        %v757 = vadd.f32 %v532, %v756
        %v758 = vpop.f32.mrf.mxu0
        %759 = vmatprep.mubr.f32.mxu0 0.0
        %760 = vmatmul.mubr.f32.gmra.mxu0 %v366
        %v761 = vpop.f32.mrf.mxu0
        %v762 = vadd.f32 %v537, %v761
        %v763 = vpop.f32.mrf.mxu0
        %764 = vmatprep.mubr.f32.mxu0 0.0
        %765 = vmatmul.mubr.f32.gmra.mxu0 %v367
        %v766 = vpop.f32.mrf.mxu0
        %v767 = vadd.f32 %v542, %v766
        %v768 = vpop.f32.mrf.mxu0
        %769 = vmatprep.mubr.f32.mxu0 0.0
        %770 = vmatmul.mubr.f32.gmra.mxu0 %v368
        %v771 = vpop.f32.mrf.mxu0
        %v772 = vadd.f32 %v547, %v771
        %v773 = vpop.f32.mrf.mxu0
        %774 = vmatprep.mubr.f32.mxu0 0.0
        %775 = vmatmul.mubr.f32.gmra.mxu0 %v369
        %v776 = vpop.f32.mrf.mxu0
        %v777 = vadd.f32 %v552, %v776
        %v778 = vpop.f32.mrf.mxu0
        %779 = vmatprep.mubr.f32.mxu0 0.0
        %780 = vmatmul.mubr.f32.gmra.mxu0 %v370
        %v781 = vpop.f32.mrf.mxu0
        %v782 = vadd.f32 %v557, %v781
        %v783 = vpop.f32.mrf.mxu0
        %784 = vmatprep.mubr.f32.mxu0 0.0
        %785 = vmatmul.mubr.f32.gmra.mxu0 %v371
        %v786 = vpop.f32.mrf.mxu0
        %v787 = vadd.f32 %v562, %v786
        %v788 = vpop.f32.mrf.mxu0
        %789 = vmatprep.mubr.f32.mxu0 0.0
        %790 = vmatmul.mubr.f32.gmra.mxu0 %v372
        %v791 = vpop.f32.mrf.mxu0
        %v792 = vadd.f32 %v567, %v791
        %v793 = vpop.f32.mrf.mxu0
        %794 = vmatprep.mubr.f32.mxu0 0.0
        %795 = vmatmul.mubr.f32.gmra.mxu0 %v373
        %v796 = vpop.f32.mrf.mxu0
        %v797 = vadd.f32 %v572, %v796
        %v798 = vpop.f32.mrf.mxu0
        %799 = vmatprep.mubr.f32.mxu0 0.0
        %800 = vmatmul.mubr.f32.gmra.mxu0 %v374
        %v801 = vpop.f32.mrf.mxu0
        %v802 = vadd.f32 %v577, %v801
        %v803 = vpop.f32.mrf.mxu0
        %804 = vmatprep.mubr.f32.mxu0 0.0
        %805 = vmatmul.mubr.f32.gmra.mxu0 %v375
        %v806 = vpop.f32.mrf.mxu0
        %v807 = vadd.f32 %v582, %v806
        %v808 = vpop.f32.mrf.mxu0
        %809 = vmatprep.mubr.f32.mxu0 0.0
        %810 = vmatmul.mubr.f32.gmra.mxu0 %v376
        %v811 = vpop.f32.mrf.mxu0
        %v812 = vadd.f32 %v587, %v811
        %v813 = vpop.f32.mrf.mxu0
        %814 = vmatprep.mubr.f32.mxu0 0.0
        %815 = vmatmul.mubr.f32.gmra.mxu0 %v377
        %v816 = vpop.f32.mrf.mxu0
        %v817 = vadd.f32 %v592, %v816
        %v818 = vpop.f32.mrf.mxu0
        %819 = vmatprep.mubr.f32.mxu0 0.0
        %820 = vmatmul.mubr.f32.gmra.mxu0 %v378
        %v821 = vpop.f32.mrf.mxu0
        %v822 = vadd.f32 %v597, %v821
        %v823 = vpop.f32.mrf.mxu0
        %824 = vmatprep.mubr.f32.mxu0 0.0
        %825 = vmatmul.mubr.f32.gmra.mxu0 %v379
        %v826 = vpop.f32.mrf.mxu0
        %v827 = vadd.f32 %v602, %v826
        %v828 = vpop.f32.mrf.mxu0
        %829 = vmatprep.mubr.f32.mxu0 0.0
        %830 = vmatmul.mubr.f32.gmra.mxu0 %v380
        %v831 = vpop.f32.mrf.mxu0
        %v832 = vadd.f32 %v607, %v831
        %v833 = vpop.f32.mrf.mxu0
        %834 = vmatprep.mubr.f32.mxu0 0.0
        %835 = vmatmul.mubr.f32.gmra.mxu0 %v381
        %v836 = vpop.f32.mrf.mxu0
        %v837 = vadd.f32 %v612, %v836
        %v838 = vpop.f32.mrf.mxu0
        %839 = vmatprep.mubr.f32.mxu0 0.0
        %840 = vmatmul.mubr.f32.gmra.mxu0 %v382
        %v841 = vpop.f32.mrf.mxu0
        %v842 = vadd.f32 %v617, %v841
        %v843 = vpop.f32.mrf.mxu0
        %844 = vmatprep.mubr.f32.mxu0 0.0
        %845 = vmatmul.mubr.f32.gmra.mxu0 %v383
        %v846 = vpop.f32.mrf.mxu0
        %v847 = vadd.f32 %v622, %v846
        %v848 = vpop.f32.mrf.mxu0
        %849 = vmatprep.mubr.f32.mxu0 0.0
        %850 = vmatmul.mubr.f32.gmra.mxu0 %v384
        %v851 = vpop.f32.mrf.mxu0
        %v852 = vadd.f32 %v627, %v851
        %v853 = vpop.f32.mrf.mxu0
        %854 = vmatprep.mubr.f32.mxu0 0.0
        %855 = vmatmul.mubr.f32.gmra.mxu0 %v385
        %v856 = vpop.f32.mrf.mxu0
        %v857 = vadd.f32 %v632, %v856
        %v858 = vpop.f32.mrf.mxu0
        %859 = vmatprep.mubr.f32.mxu0 0.0
        %860 = vmatmul.mubr.f32.gmra.mxu0 %v386
        %v861 = vpop.f32.mrf.mxu0
        %v862 = vadd.f32 %v637, %v861
        %v863 = vpop.f32.mrf.mxu0
        %864 = vmatprep.mubr.f32.mxu0 0.0
        %865 = vmatmul.mubr.f32.gmra.mxu0 %v387
        %v866 = vpop.f32.mrf.mxu0
        %v867 = vadd.f32 %v642, %v866
        %v868 = vpop.f32.mrf.mxu0
        %869 = vmatprep.mubr.f32.mxu0 0.0
        %870 = vmatmul.mubr.f32.gmra.mxu0 %v388
        %v871 = vpop.f32.mrf.mxu0
        %v872 = vadd.f32 %v647, %v871
        %v873 = vpop.f32.mrf.mxu0
        %874 = vmatprep.mubr.f32.mxu0 0.0
        %875 = vmatmul.mubr.f32.gmra.mxu0 %v389
        %v876 = vpop.f32.mrf.mxu0
        %v877 = vadd.f32 %v652, %v876
        %v878 = vpop.f32.mrf.mxu0
        %879 = vmatprep.mubr.f32.mxu0 0.0
        %880 = vmatmul.mubr.f32.gmra.mxu0 %v390
        %v881 = vpop.f32.mrf.mxu0
        %v882 = vadd.f32 %v657, %v881
        %v883 = vpop.f32.mrf.mxu0
        %884 = vmatprep.mubr.f32.mxu0 0.0
        %885 = vmatmul.mubr.f32.gmra.mxu0 %v391
        %v886 = vpop.f32.mrf.mxu0
        %v887 = vadd.f32 %v662, %v886
        %v888 = vpop.f32.mrf.mxu0
        %889 = vmatprep.mubr.f32.mxu0 0.0
        %890 = vmatmul.mubr.f32.gmra.mxu0 %v392
        %v891 = vpop.f32.mrf.mxu0
        %v892 = vadd.f32 %v667, %v891
        %v893 = vpop.f32.mrf.mxu0
        %894 = vmatprep.mubr.f32.mxu0 0.0
        %895 = vmatmul.mubr.f32.gmra.mxu0 %v393
        %v896 = vpop.f32.mrf.mxu0
        %v897 = vadd.f32 %v672, %v896
        %v898 = vpop.f32.mrf.mxu0
        %899 = vmatprep.mubr.f32.mxu0 0.0
        %900 = vmatmul.mubr.f32.gmra.mxu0 %v394
        %v901 = vpop.f32.mrf.mxu0
        %v902 = vadd.f32 %v677, %v901
        %v903 = vpop.f32.mrf.mxu0
        %904 = vmatprep.mubr.f32.mxu0 0.0
        %905 = vmatmul.mubr.f32.gmra.mxu0 %v395
        %v906 = vpop.f32.mrf.mxu0
        %v907 = vadd.f32 %v682, %v906
        %v908 = vpop.f32.mrf.mxu0
        %909 = vdwg.mxu0
        %v910 = vld [vmem:[#allocation2 + $0x9] sm:$0xff]
        %v911 = vld [vmem:[#allocation2 + $0x11] sm:$0xff]
        %v912 = vld [vmem:[#allocation2 + $0x29] sm:$0xff]
        %v913 = vld [vmem:[#allocation2 + $0x31] sm:$0xff]
        %v914 = vld [vmem:[#allocation2 + $0x49] sm:$0xff]
        %v915 = vld [vmem:[#allocation2 + $0x51] sm:$0xff]
        %v916 = vld [vmem:[#allocation2 + $0x69] sm:$0xff]
        %v917 = vld [vmem:[#allocation2 + $0x71] sm:$0xff]
        %v918 = vld [vmem:[#allocation2 + $0x89] sm:$0xff]
        %v919 = vld [vmem:[#allocation2 + $0x91] sm:$0xff]
        %v920 = vld [vmem:[#allocation2 + $0xa9] sm:$0xff]
        %v921 = vld [vmem:[#allocation2 + $0xb1] sm:$0xff]
        %v922 = vld [vmem:[#allocation2 + $0xc9] sm:$0xff]
        %v923 = vld [vmem:[#allocation2 + $0xd1] sm:$0xff]
        %v924 = vld [vmem:[#allocation2 + $0xe9] sm:$0xff]
        %v925 = vld [vmem:[#allocation2 + $0xf1] sm:$0xff]
        %v926 = vld [vmem:[#allocation2 + $0x109] sm:$0xff]
        %v927 = vld [vmem:[#allocation2 + $0x111] sm:$0xff]
        %v928 = vld [vmem:[#allocation2 + $0x129] sm:$0xff]
        %v929 = vld [vmem:[#allocation2 + $0x131] sm:$0xff]
        %v930 = vld [vmem:[#allocation2 + $0x149] sm:$0xff]
        %v931 = vld [vmem:[#allocation2 + $0x151] sm:$0xff]
        %v932 = vld [vmem:[#allocation2 + $0x169] sm:$0xff]
        %v933 = vld [vmem:[#allocation2 + $0x171] sm:$0xff]
        %v934 = vld [vmem:[#allocation2 + $0x189] sm:$0xff]
        %v935 = vld [vmem:[#allocation2 + $0x191] sm:$0xff]
        %v936 = vld [vmem:[#allocation2 + $0x1a9] sm:$0xff]
        %v937 = vld [vmem:[#allocation2 + $0x1b1] sm:$0xff]
        %v938 = vld [vmem:[#allocation2 + $0x1c9] sm:$0xff]
        %v939 = vld [vmem:[#allocation2 + $0x1d1] sm:$0xff]
        %v940 = vld [vmem:[#allocation2 + $0x1e9] sm:$0xff]
        %v941 = vld [vmem:[#allocation2 + $0x1f1] sm:$0xff]
        %v942 = vld [vmem:[#allocation5 + $0x100] sm:$0xff]
        %v943 = vld [vmem:[#allocation5 + $0x108] sm:$0xff]
        %v944 = vld [vmem:[#allocation5 + $0x110] sm:$0xff]
        %v945 = vld [vmem:[#allocation5 + $0x118] sm:$0xff]
        %v946 = vld [vmem:[#allocation5 + $0x120] sm:$0xff]
        %v947 = vld [vmem:[#allocation5 + $0x128] sm:$0xff]
        %v948 = vld [vmem:[#allocation5 + $0x130] sm:$0xff]
        %v949 = vld [vmem:[#allocation5 + $0x138] sm:$0xff]
        %v950 = vld [vmem:[#allocation5 + $0x140] sm:$0xff]
        %v951 = vld [vmem:[#allocation5 + $0x148] sm:$0xff]
        %v952 = vld [vmem:[#allocation5 + $0x150] sm:$0xff]
        %v953 = vld [vmem:[#allocation5 + $0x158] sm:$0xff]
        %v954 = vld [vmem:[#allocation5 + $0x160] sm:$0xff]
        %v955 = vld [vmem:[#allocation5 + $0x168] sm:$0xff]
        %v956 = vld [vmem:[#allocation5 + $0x170] sm:$0xff]
        %v957 = vld [vmem:[#allocation5 + $0x178] sm:$0xff]
        %958 = vmatprep.subr.mxu0 0.0
        %959 = vmatpush1.msra.mxu0 %v957
        %960 = vmatprep.subr.mxu0 0.0
        %961 = vmatpush1.msra.mxu0 %v956
        %962 = vmatprep.subr.mxu0 0.0
        %963 = vmatpush1.msra.mxu0 %v955
        %964 = vmatprep.subr.mxu0 0.0
        %965 = vmatpush1.msra.mxu0 %v954
        %966 = vmatprep.subr.mxu0 0.0
        %967 = vmatpush1.msra.mxu0 %v953
        %968 = vmatprep.subr.mxu0 0.0
        %969 = vmatpush1.msra.mxu0 %v952
        %970 = vmatprep.subr.mxu0 0.0
        %971 = vmatpush1.msra.mxu0 %v951
        %972 = vmatprep.subr.mxu0 0.0
        %973 = vmatpush1.msra.mxu0 %v950
        %974 = vmatprep.subr.mxu0 0.0
        %975 = vmatpush1.msra.mxu0 %v949
        %976 = vmatprep.subr.mxu0 0.0
        %977 = vmatpush1.msra.mxu0 %v948
        %978 = vmatprep.subr.mxu0 0.0
        %979 = vmatpush1.msra.mxu0 %v947
        %980 = vmatprep.subr.mxu0 0.0
        %981 = vmatpush1.msra.mxu0 %v946
        %982 = vmatprep.subr.mxu0 0.0
        %983 = vmatpush1.msra.mxu0 %v945
        %984 = vmatprep.subr.mxu0 0.0
        %985 = vmatpush1.msra.mxu0 %v944
        %986 = vmatprep.subr.mxu0 0.0
        %987 = vmatpush1.msra.mxu0 %v943
        %988 = vmatprep.subr.mxu0 0.0
        %989 = vmatpush1.msra.mxu0 %v942
        %990 = vmatprep.subr.mxu0 0.0
        %991 = vmatpush2.msra.mxu0 0.0
        %992 = vmatprep.subr.mxu0 0.0
        %993 = vmatpush2.msra.mxu0 0.0
        %994 = vmatprep.subr.mxu0 0.0
        %995 = vmatpush2.msra.mxu0 0.0
        %996 = vmatprep.subr.mxu0 0.0
        %997 = vmatpush2.msra.mxu0 0.0
        %998 = vmatprep.subr.mxu0 0.0
        %999 = vmatpush2.msra.mxu0 0.0
        %1000 = vmatprep.subr.mxu0 0.0
        %1001 = vmatpush2.msra.mxu0 0.0
        %1002 = vmatprep.subr.mxu0 0.0
        %1003 = vmatpush2.msra.mxu0 0.0
        %1004 = vmatprep.subr.mxu0 0.0
        %1005 = vmatpush2.msra.mxu0 0.0
        %1006 = vmatprep.subr.mxu0 0.0
        %1007 = vmatpush2.msra.mxu0 0.0
        %1008 = vmatprep.subr.mxu0 0.0
        %1009 = vmatpush2.msra.mxu0 0.0
        %1010 = vmatprep.subr.mxu0 0.0
        %1011 = vmatpush2.msra.mxu0 0.0
        %1012 = vmatprep.subr.mxu0 0.0
        %1013 = vmatpush2.msra.mxu0 0.0
        %1014 = vmatprep.subr.mxu0 0.0
        %1015 = vmatpush2.msra.mxu0 0.0
        %1016 = vmatprep.subr.mxu0 0.0
        %1017 = vmatpush2.msra.mxu0 0.0
        %1018 = vmatprep.subr.mxu0 0.0
        %1019 = vmatpush2.msra.mxu0 0.0
        %1020 = vmatprep.subr.mxu0 0.0
        %1021 = vmatpush2.msra.mxu0 0.0
        %1022 = vmatprep.mubr.f32.mxu0 0.0
        %1023 = vmatmul.mubr.f32.gmra.mxu0 %v910
        %v1024 = vpop.f32.mrf.mxu0
        %v1025 = vadd.f32 0.0, %v1024
        %v1026 = vpop.f32.mrf.mxu0
        %1027 = vmatprep.mubr.f32.mxu0 0.0
        %1028 = vmatmul.mubr.f32.gmra.mxu0 %v911
        %v1029 = vpop.f32.mrf.mxu0
        %v1030 = vadd.f32 0.0, %v1029
        %v1031 = vpop.f32.mrf.mxu0
        %1032 = vmatprep.mubr.f32.mxu0 0.0
        %1033 = vmatmul.mubr.f32.gmra.mxu0 %v912
        %v1034 = vpop.f32.mrf.mxu0
        %v1035 = vadd.f32 0.0, %v1034
        %v1036 = vpop.f32.mrf.mxu0
        %1037 = vmatprep.mubr.f32.mxu0 0.0
        %1038 = vmatmul.mubr.f32.gmra.mxu0 %v913
        %v1039 = vpop.f32.mrf.mxu0
        %v1040 = vadd.f32 0.0, %v1039
        %v1041 = vpop.f32.mrf.mxu0
        %1042 = vmatprep.mubr.f32.mxu0 0.0
        %1043 = vmatmul.mubr.f32.gmra.mxu0 %v914
        %v1044 = vpop.f32.mrf.mxu0
        %v1045 = vadd.f32 0.0, %v1044
        %v1046 = vpop.f32.mrf.mxu0
        %1047 = vmatprep.mubr.f32.mxu0 0.0
        %1048 = vmatmul.mubr.f32.gmra.mxu0 %v915
        %v1049 = vpop.f32.mrf.mxu0
        %v1050 = vadd.f32 0.0, %v1049
        %v1051 = vpop.f32.mrf.mxu0
        %1052 = vmatprep.mubr.f32.mxu0 0.0
        %1053 = vmatmul.mubr.f32.gmra.mxu0 %v916
        %v1054 = vpop.f32.mrf.mxu0
        %v1055 = vadd.f32 0.0, %v1054
        %v1056 = vpop.f32.mrf.mxu0
        %1057 = vmatprep.mubr.f32.mxu0 0.0
        %1058 = vmatmul.mubr.f32.gmra.mxu0 %v917
        %v1059 = vpop.f32.mrf.mxu0
        %v1060 = vadd.f32 0.0, %v1059
        %v1061 = vpop.f32.mrf.mxu0
        %1062 = vmatprep.mubr.f32.mxu0 0.0
        %1063 = vmatmul.mubr.f32.gmra.mxu0 %v918
        %v1064 = vpop.f32.mrf.mxu0
        %v1065 = vadd.f32 0.0, %v1064
        %v1066 = vpop.f32.mrf.mxu0
        %1067 = vmatprep.mubr.f32.mxu0 0.0
        %1068 = vmatmul.mubr.f32.gmra.mxu0 %v919
        %v1069 = vpop.f32.mrf.mxu0
        %v1070 = vadd.f32 0.0, %v1069
        %v1071 = vpop.f32.mrf.mxu0
        %1072 = vmatprep.mubr.f32.mxu0 0.0
        %1073 = vmatmul.mubr.f32.gmra.mxu0 %v920
        %v1074 = vpop.f32.mrf.mxu0
        %v1075 = vadd.f32 0.0, %v1074
        %v1076 = vpop.f32.mrf.mxu0
        %1077 = vmatprep.mubr.f32.mxu0 0.0
        %1078 = vmatmul.mubr.f32.gmra.mxu0 %v921
        %v1079 = vpop.f32.mrf.mxu0
        %v1080 = vadd.f32 0.0, %v1079
        %v1081 = vpop.f32.mrf.mxu0
        %1082 = vmatprep.mubr.f32.mxu0 0.0
        %1083 = vmatmul.mubr.f32.gmra.mxu0 %v922
        %v1084 = vpop.f32.mrf.mxu0
        %v1085 = vadd.f32 0.0, %v1084
        %v1086 = vpop.f32.mrf.mxu0
        %1087 = vmatprep.mubr.f32.mxu0 0.0
        %1088 = vmatmul.mubr.f32.gmra.mxu0 %v923
        %v1089 = vpop.f32.mrf.mxu0
        %v1090 = vadd.f32 0.0, %v1089
        %v1091 = vpop.f32.mrf.mxu0
        %1092 = vmatprep.mubr.f32.mxu0 0.0
        %1093 = vmatmul.mubr.f32.gmra.mxu0 %v924
        %v1094 = vpop.f32.mrf.mxu0
        %v1095 = vadd.f32 0.0, %v1094
        %v1096 = vpop.f32.mrf.mxu0
        %1097 = vmatprep.mubr.f32.mxu0 0.0
        %1098 = vmatmul.mubr.f32.gmra.mxu0 %v925
        %v1099 = vpop.f32.mrf.mxu0
        %v1100 = vadd.f32 0.0, %v1099
        %v1101 = vpop.f32.mrf.mxu0
        %1102 = vmatprep.mubr.f32.mxu0 0.0
        %1103 = vmatmul.mubr.f32.gmra.mxu0 %v926
        %v1104 = vpop.f32.mrf.mxu0
        %v1105 = vadd.f32 0.0, %v1104
        %v1106 = vpop.f32.mrf.mxu0
        %1107 = vmatprep.mubr.f32.mxu0 0.0
        %1108 = vmatmul.mubr.f32.gmra.mxu0 %v927
        %v1109 = vpop.f32.mrf.mxu0
        %v1110 = vadd.f32 0.0, %v1109
        %v1111 = vpop.f32.mrf.mxu0
        %1112 = vmatprep.mubr.f32.mxu0 0.0
        %1113 = vmatmul.mubr.f32.gmra.mxu0 %v928
        %v1114 = vpop.f32.mrf.mxu0
        %v1115 = vadd.f32 0.0, %v1114
        %v1116 = vpop.f32.mrf.mxu0
        %1117 = vmatprep.mubr.f32.mxu0 0.0
        %1118 = vmatmul.mubr.f32.gmra.mxu0 %v929
        %v1119 = vpop.f32.mrf.mxu0
        %v1120 = vadd.f32 0.0, %v1119
        %v1121 = vpop.f32.mrf.mxu0
        %1122 = vmatprep.mubr.f32.mxu0 0.0
        %1123 = vmatmul.mubr.f32.gmra.mxu0 %v930
        %v1124 = vpop.f32.mrf.mxu0
        %v1125 = vadd.f32 0.0, %v1124
        %v1126 = vpop.f32.mrf.mxu0
        %1127 = vmatprep.mubr.f32.mxu0 0.0
        %1128 = vmatmul.mubr.f32.gmra.mxu0 %v931
        %v1129 = vpop.f32.mrf.mxu0
        %v1130 = vadd.f32 0.0, %v1129
        %v1131 = vpop.f32.mrf.mxu0
        %1132 = vmatprep.mubr.f32.mxu0 0.0
        %1133 = vmatmul.mubr.f32.gmra.mxu0 %v932
        %v1134 = vpop.f32.mrf.mxu0
        %v1135 = vadd.f32 0.0, %v1134
        %v1136 = vpop.f32.mrf.mxu0
        %1137 = vmatprep.mubr.f32.mxu0 0.0
        %1138 = vmatmul.mubr.f32.gmra.mxu0 %v933
        %v1139 = vpop.f32.mrf.mxu0
        %v1140 = vadd.f32 0.0, %v1139
        %v1141 = vpop.f32.mrf.mxu0
        %1142 = vmatprep.mubr.f32.mxu0 0.0
        %1143 = vmatmul.mubr.f32.gmra.mxu0 %v934
        %v1144 = vpop.f32.mrf.mxu0
        %v1145 = vadd.f32 0.0, %v1144
        %v1146 = vpop.f32.mrf.mxu0
        %1147 = vmatprep.mubr.f32.mxu0 0.0
        %1148 = vmatmul.mubr.f32.gmra.mxu0 %v935
        %v1149 = vpop.f32.mrf.mxu0
        %v1150 = vadd.f32 0.0, %v1149
        %v1151 = vpop.f32.mrf.mxu0
        %1152 = vmatprep.mubr.f32.mxu0 0.0
        %1153 = vmatmul.mubr.f32.gmra.mxu0 %v936
        %v1154 = vpop.f32.mrf.mxu0
        %v1155 = vadd.f32 0.0, %v1154
        %v1156 = vpop.f32.mrf.mxu0
        %1157 = vmatprep.mubr.f32.mxu0 0.0
        %1158 = vmatmul.mubr.f32.gmra.mxu0 %v937
        %v1159 = vpop.f32.mrf.mxu0
        %v1160 = vadd.f32 0.0, %v1159
        %v1161 = vpop.f32.mrf.mxu0
        %1162 = vmatprep.mubr.f32.mxu0 0.0
        %1163 = vmatmul.mubr.f32.gmra.mxu0 %v938
        %v1164 = vpop.f32.mrf.mxu0
        %v1165 = vadd.f32 0.0, %v1164
        %v1166 = vpop.f32.mrf.mxu0
        %1167 = vmatprep.mubr.f32.mxu0 0.0
        %1168 = vmatmul.mubr.f32.gmra.mxu0 %v939
        %v1169 = vpop.f32.mrf.mxu0
        %v1170 = vadd.f32 0.0, %v1169
        %v1171 = vpop.f32.mrf.mxu0
        %1172 = vmatprep.mubr.f32.mxu0 0.0
        %1173 = vmatmul.mubr.f32.gmra.mxu0 %v940
        %v1174 = vpop.f32.mrf.mxu0
        %v1175 = vadd.f32 0.0, %v1174
        %v1176 = vpop.f32.mrf.mxu0
        %1177 = vmatprep.mubr.f32.mxu0 0.0
        %1178 = vmatmul.mubr.f32.gmra.mxu0 %v941
        %v1179 = vpop.f32.mrf.mxu0
        %v1180 = vadd.f32 0.0, %v1179
        %v1181 = vpop.f32.mrf.mxu0
        %1182 = vdwg.mxu0
        %v1183 = vadd.f32 %v752, %v1025
        %v1184 = vadd.f32 %v757, %v1030
        %v1185 = vadd.f32 %v762, %v1035
        %v1186 = vadd.f32 %v767, %v1040
        %v1187 = vadd.f32 %v772, %v1045
        %v1188 = vadd.f32 %v777, %v1050
        %v1189 = vadd.f32 %v782, %v1055
        %v1190 = vadd.f32 %v787, %v1060
        %v1191 = vadd.f32 %v792, %v1065
        %v1192 = vadd.f32 %v797, %v1070
        %v1193 = vadd.f32 %v802, %v1075
        %v1194 = vadd.f32 %v807, %v1080
        %v1195 = vadd.f32 %v812, %v1085
        %v1196 = vadd.f32 %v817, %v1090
        %v1197 = vadd.f32 %v822, %v1095
        %v1198 = vadd.f32 %v827, %v1100
        %v1199 = vadd.f32 %v832, %v1105
        %v1200 = vadd.f32 %v837, %v1110
        %v1201 = vadd.f32 %v842, %v1115
        %v1202 = vadd.f32 %v847, %v1120
        %v1203 = vadd.f32 %v852, %v1125
        %v1204 = vadd.f32 %v857, %v1130
        %v1205 = vadd.f32 %v862, %v1135
        %v1206 = vadd.f32 %v867, %v1140
        %v1207 = vadd.f32 %v872, %v1145
        %v1208 = vadd.f32 %v877, %v1150
        %v1209 = vadd.f32 %v882, %v1155
        %v1210 = vadd.f32 %v887, %v1160
        %v1211 = vadd.f32 %v892, %v1165
        %v1212 = vadd.f32 %v897, %v1170
        %v1213 = vadd.f32 %v902, %v1175
        %v1214 = vadd.f32 %v907, %v1180
        %s1215 = scalar_lea.vmem [#allocation2], 32
        %v1216 = vld [vmem:[%s1215 + $0x7] sm:$0xff]
        %v1217 = vld [vmem:[%s1215 + $0xf] sm:$0xff]
        %v1218 = vld [vmem:[%s1215 + $0x27] sm:$0xff]
        %v1219 = vld [vmem:[%s1215 + $0x2f] sm:$0xff]
        %v1220 = vld [vmem:[%s1215 + $0x47] sm:$0xff]
        %v1221 = vld [vmem:[%s1215 + $0x4f] sm:$0xff]
        %v1222 = vld [vmem:[%s1215 + $0x67] sm:$0xff]
        %v1223 = vld [vmem:[%s1215 + $0x6f] sm:$0xff]
        %v1224 = vld [vmem:[%s1215 + $0x87] sm:$0xff]
        %v1225 = vld [vmem:[%s1215 + $0x8f] sm:$0xff]
        %v1226 = vld [vmem:[%s1215 + $0xa7] sm:$0xff]
        %v1227 = vld [vmem:[%s1215 + $0xaf] sm:$0xff]
        %v1228 = vld [vmem:[%s1215 + $0xc7] sm:$0xff]
        %v1229 = vld [vmem:[%s1215 + $0xcf] sm:$0xff]
        %v1230 = vld [vmem:[%s1215 + $0xe7] sm:$0xff]
        %v1231 = vld [vmem:[%s1215 + $0xef] sm:$0xff]
        %v1232 = vld [vmem:[%s1215 + $0x107] sm:$0xff]
        %v1233 = vld [vmem:[%s1215 + $0x10f] sm:$0xff]
        %v1234 = vld [vmem:[%s1215 + $0x127] sm:$0xff]
        %v1235 = vld [vmem:[%s1215 + $0x12f] sm:$0xff]
        %v1236 = vld [vmem:[%s1215 + $0x147] sm:$0xff]
        %v1237 = vld [vmem:[%s1215 + $0x14f] sm:$0xff]
        %v1238 = vld [vmem:[%s1215 + $0x167] sm:$0xff]
        %v1239 = vld [vmem:[%s1215 + $0x16f] sm:$0xff]
        %v1240 = vld [vmem:[%s1215 + $0x187] sm:$0xff]
        %v1241 = vld [vmem:[%s1215 + $0x18f] sm:$0xff]
        %v1242 = vld [vmem:[%s1215 + $0x1a7] sm:$0xff]
        %v1243 = vld [vmem:[%s1215 + $0x1af] sm:$0xff]
        %v1244 = vld [vmem:[%s1215 + $0x1c7] sm:$0xff]
        %v1245 = vld [vmem:[%s1215 + $0x1cf] sm:$0xff]
        %v1246 = vld [vmem:[%s1215 + $0x1e7] sm:$0xff]
        %v1247 = vld [vmem:[%s1215 + $0x1ef] sm:$0xff]
        %v1248 = vld [vmem:[#allocation5 + $0x180] sm:$0xff]
        %v1249 = vld [vmem:[#allocation5 + $0x188] sm:$0xff]
        %v1250 = vld [vmem:[#allocation5 + $0x190] sm:$0xff]
        %v1251 = vld [vmem:[#allocation5 + $0x198] sm:$0xff]
        %v1252 = vld [vmem:[#allocation5 + $0x1a0] sm:$0xff]
        %v1253 = vld [vmem:[#allocation5 + $0x1a8] sm:$0xff]
        %v1254 = vld [vmem:[#allocation5 + $0x1b0] sm:$0xff]
        %v1255 = vld [vmem:[#allocation5 + $0x1b8] sm:$0xff]
        %v1256 = vld [vmem:[#allocation5 + $0x1c0] sm:$0xff]
        %v1257 = vld [vmem:[#allocation5 + $0x1c8] sm:$0xff]
        %v1258 = vld [vmem:[#allocation5 + $0x1d0] sm:$0xff]
        %v1259 = vld [vmem:[#allocation5 + $0x1d8] sm:$0xff]
        %v1260 = vld [vmem:[#allocation5 + $0x1e0] sm:$0xff]
        %v1261 = vld [vmem:[#allocation5 + $0x1e8] sm:$0xff]
        %v1262 = vld [vmem:[#allocation5 + $0x1f0] sm:$0xff]
        %v1263 = vld [vmem:[#allocation5 + $0x1f8] sm:$0xff]
        %1264 = vmatprep.subr.mxu0 0.0
        %1265 = vmatpush1.msra.mxu0 %v1263
        %1266 = vmatprep.subr.mxu0 0.0
        %1267 = vmatpush1.msra.mxu0 %v1262
        %1268 = vmatprep.subr.mxu0 0.0
        %1269 = vmatpush1.msra.mxu0 %v1261
        %1270 = vmatprep.subr.mxu0 0.0
        %1271 = vmatpush1.msra.mxu0 %v1260
        %1272 = vmatprep.subr.mxu0 0.0
        %1273 = vmatpush1.msra.mxu0 %v1259
        %1274 = vmatprep.subr.mxu0 0.0
        %1275 = vmatpush1.msra.mxu0 %v1258
        %1276 = vmatprep.subr.mxu0 0.0
        %1277 = vmatpush1.msra.mxu0 %v1257
        %1278 = vmatprep.subr.mxu0 0.0
        %1279 = vmatpush1.msra.mxu0 %v1256
        %1280 = vmatprep.subr.mxu0 0.0
        %1281 = vmatpush1.msra.mxu0 %v1255
        %1282 = vmatprep.subr.mxu0 0.0
        %1283 = vmatpush1.msra.mxu0 %v1254
        %1284 = vmatprep.subr.mxu0 0.0
        %1285 = vmatpush1.msra.mxu0 %v1253
        %1286 = vmatprep.subr.mxu0 0.0
        %1287 = vmatpush1.msra.mxu0 %v1252
        %1288 = vmatprep.subr.mxu0 0.0
        %1289 = vmatpush1.msra.mxu0 %v1251
        %1290 = vmatprep.subr.mxu0 0.0
        %1291 = vmatpush1.msra.mxu0 %v1250
        %1292 = vmatprep.subr.mxu0 0.0
        %1293 = vmatpush1.msra.mxu0 %v1249
        %1294 = vmatprep.subr.mxu0 0.0
        %1295 = vmatpush1.msra.mxu0 %v1248
        %1296 = vmatprep.subr.mxu0 0.0
        %1297 = vmatpush2.msra.mxu0 0.0
        %1298 = vmatprep.subr.mxu0 0.0
        %1299 = vmatpush2.msra.mxu0 0.0
        %1300 = vmatprep.subr.mxu0 0.0
        %1301 = vmatpush2.msra.mxu0 0.0
        %1302 = vmatprep.subr.mxu0 0.0
        %1303 = vmatpush2.msra.mxu0 0.0
        %1304 = vmatprep.subr.mxu0 0.0
        %1305 = vmatpush2.msra.mxu0 0.0
        %1306 = vmatprep.subr.mxu0 0.0
        %1307 = vmatpush2.msra.mxu0 0.0
        %1308 = vmatprep.subr.mxu0 0.0
        %1309 = vmatpush2.msra.mxu0 0.0
        %1310 = vmatprep.subr.mxu0 0.0
        %1311 = vmatpush2.msra.mxu0 0.0
        %1312 = vmatprep.subr.mxu0 0.0
        %1313 = vmatpush2.msra.mxu0 0.0
        %1314 = vmatprep.subr.mxu0 0.0
        %1315 = vmatpush2.msra.mxu0 0.0
        %1316 = vmatprep.subr.mxu0 0.0
        %1317 = vmatpush2.msra.mxu0 0.0
        %1318 = vmatprep.subr.mxu0 0.0
        %1319 = vmatpush2.msra.mxu0 0.0
        %1320 = vmatprep.subr.mxu0 0.0
        %1321 = vmatpush2.msra.mxu0 0.0
        %1322 = vmatprep.subr.mxu0 0.0
        %1323 = vmatpush2.msra.mxu0 0.0
        %1324 = vmatprep.subr.mxu0 0.0
        %1325 = vmatpush2.msra.mxu0 0.0
        %1326 = vmatprep.subr.mxu0 0.0
        %1327 = vmatpush2.msra.mxu0 0.0
        %1328 = vmatprep.mubr.f32.mxu0 0.0
        %1329 = vmatmul.mubr.f32.gmra.mxu0 %v1216
        %v1330 = vpop.f32.mrf.mxu0
        %v1331 = vadd.f32 0.0, %v1330
        %v1332 = vpop.f32.mrf.mxu0
        %1333 = vmatprep.mubr.f32.mxu0 0.0
        %1334 = vmatmul.mubr.f32.gmra.mxu0 %v1217
        %v1335 = vpop.f32.mrf.mxu0
        %v1336 = vadd.f32 0.0, %v1335
        %v1337 = vpop.f32.mrf.mxu0
        %1338 = vmatprep.mubr.f32.mxu0 0.0
        %1339 = vmatmul.mubr.f32.gmra.mxu0 %v1218
        %v1340 = vpop.f32.mrf.mxu0
        %v1341 = vadd.f32 0.0, %v1340
        %v1342 = vpop.f32.mrf.mxu0
        %1343 = vmatprep.mubr.f32.mxu0 0.0
        %1344 = vmatmul.mubr.f32.gmra.mxu0 %v1219
        %v1345 = vpop.f32.mrf.mxu0
        %v1346 = vadd.f32 0.0, %v1345
        %v1347 = vpop.f32.mrf.mxu0
        %1348 = vmatprep.mubr.f32.mxu0 0.0
        %1349 = vmatmul.mubr.f32.gmra.mxu0 %v1220
        %v1350 = vpop.f32.mrf.mxu0
        %v1351 = vadd.f32 0.0, %v1350
        %v1352 = vpop.f32.mrf.mxu0
        %1353 = vmatprep.mubr.f32.mxu0 0.0
        %1354 = vmatmul.mubr.f32.gmra.mxu0 %v1221
        %v1355 = vpop.f32.mrf.mxu0
        %v1356 = vadd.f32 0.0, %v1355
        %v1357 = vpop.f32.mrf.mxu0
        %1358 = vmatprep.mubr.f32.mxu0 0.0
        %1359 = vmatmul.mubr.f32.gmra.mxu0 %v1222
        %v1360 = vpop.f32.mrf.mxu0
        %v1361 = vadd.f32 0.0, %v1360
        %v1362 = vpop.f32.mrf.mxu0
        %1363 = vmatprep.mubr.f32.mxu0 0.0
        %1364 = vmatmul.mubr.f32.gmra.mxu0 %v1223
        %v1365 = vpop.f32.mrf.mxu0
        %v1366 = vadd.f32 0.0, %v1365
        %v1367 = vpop.f32.mrf.mxu0
        %1368 = vmatprep.mubr.f32.mxu0 0.0
        %1369 = vmatmul.mubr.f32.gmra.mxu0 %v1224
        %v1370 = vpop.f32.mrf.mxu0
        %v1371 = vadd.f32 0.0, %v1370
        %v1372 = vpop.f32.mrf.mxu0
        %1373 = vmatprep.mubr.f32.mxu0 0.0
        %1374 = vmatmul.mubr.f32.gmra.mxu0 %v1225
        %v1375 = vpop.f32.mrf.mxu0
        %v1376 = vadd.f32 0.0, %v1375
        %v1377 = vpop.f32.mrf.mxu0
        %1378 = vmatprep.mubr.f32.mxu0 0.0
        %1379 = vmatmul.mubr.f32.gmra.mxu0 %v1226
        %v1380 = vpop.f32.mrf.mxu0
        %v1381 = vadd.f32 0.0, %v1380
        %v1382 = vpop.f32.mrf.mxu0
        %1383 = vmatprep.mubr.f32.mxu0 0.0
        %1384 = vmatmul.mubr.f32.gmra.mxu0 %v1227
        %v1385 = vpop.f32.mrf.mxu0
        %v1386 = vadd.f32 0.0, %v1385
        %v1387 = vpop.f32.mrf.mxu0
        %1388 = vmatprep.mubr.f32.mxu0 0.0
        %1389 = vmatmul.mubr.f32.gmra.mxu0 %v1228
        %v1390 = vpop.f32.mrf.mxu0
        %v1391 = vadd.f32 0.0, %v1390
        %v1392 = vpop.f32.mrf.mxu0
        %1393 = vmatprep.mubr.f32.mxu0 0.0
        %1394 = vmatmul.mubr.f32.gmra.mxu0 %v1229
        %v1395 = vpop.f32.mrf.mxu0
        %v1396 = vadd.f32 0.0, %v1395
        %v1397 = vpop.f32.mrf.mxu0
        %1398 = vmatprep.mubr.f32.mxu0 0.0
        %1399 = vmatmul.mubr.f32.gmra.mxu0 %v1230
        %v1400 = vpop.f32.mrf.mxu0
        %v1401 = vadd.f32 0.0, %v1400
        %v1402 = vpop.f32.mrf.mxu0
        %1403 = vmatprep.mubr.f32.mxu0 0.0
        %1404 = vmatmul.mubr.f32.gmra.mxu0 %v1231
        %v1405 = vpop.f32.mrf.mxu0
        %v1406 = vadd.f32 0.0, %v1405
        %v1407 = vpop.f32.mrf.mxu0
        %1408 = vmatprep.mubr.f32.mxu0 0.0
        %1409 = vmatmul.mubr.f32.gmra.mxu0 %v1232
        %v1410 = vpop.f32.mrf.mxu0
        %v1411 = vadd.f32 0.0, %v1410
        %v1412 = vpop.f32.mrf.mxu0
        %1413 = vmatprep.mubr.f32.mxu0 0.0
        %1414 = vmatmul.mubr.f32.gmra.mxu0 %v1233
        %v1415 = vpop.f32.mrf.mxu0
        %v1416 = vadd.f32 0.0, %v1415
        %v1417 = vpop.f32.mrf.mxu0
        %1418 = vmatprep.mubr.f32.mxu0 0.0
        %1419 = vmatmul.mubr.f32.gmra.mxu0 %v1234
        %v1420 = vpop.f32.mrf.mxu0
        %v1421 = vadd.f32 0.0, %v1420
        %v1422 = vpop.f32.mrf.mxu0
        %1423 = vmatprep.mubr.f32.mxu0 0.0
        %1424 = vmatmul.mubr.f32.gmra.mxu0 %v1235
        %v1425 = vpop.f32.mrf.mxu0
        %v1426 = vadd.f32 0.0, %v1425
        %v1427 = vpop.f32.mrf.mxu0
        %1428 = vmatprep.mubr.f32.mxu0 0.0
        %1429 = vmatmul.mubr.f32.gmra.mxu0 %v1236
        %v1430 = vpop.f32.mrf.mxu0
        %v1431 = vadd.f32 0.0, %v1430
        %v1432 = vpop.f32.mrf.mxu0
        %1433 = vmatprep.mubr.f32.mxu0 0.0
        %1434 = vmatmul.mubr.f32.gmra.mxu0 %v1237
        %v1435 = vpop.f32.mrf.mxu0
        %v1436 = vadd.f32 0.0, %v1435
        %v1437 = vpop.f32.mrf.mxu0
        %1438 = vmatprep.mubr.f32.mxu0 0.0
        %1439 = vmatmul.mubr.f32.gmra.mxu0 %v1238
        %v1440 = vpop.f32.mrf.mxu0
        %v1441 = vadd.f32 0.0, %v1440
        %v1442 = vpop.f32.mrf.mxu0
        %1443 = vmatprep.mubr.f32.mxu0 0.0
        %1444 = vmatmul.mubr.f32.gmra.mxu0 %v1239
        %v1445 = vpop.f32.mrf.mxu0
        %v1446 = vadd.f32 0.0, %v1445
        %v1447 = vpop.f32.mrf.mxu0
        %1448 = vmatprep.mubr.f32.mxu0 0.0
        %1449 = vmatmul.mubr.f32.gmra.mxu0 %v1240
        %v1450 = vpop.f32.mrf.mxu0
        %v1451 = vadd.f32 0.0, %v1450
        %v1452 = vpop.f32.mrf.mxu0
        %1453 = vmatprep.mubr.f32.mxu0 0.0
        %1454 = vmatmul.mubr.f32.gmra.mxu0 %v1241
        %v1455 = vpop.f32.mrf.mxu0
        %v1456 = vadd.f32 0.0, %v1455
        %v1457 = vpop.f32.mrf.mxu0
        %1458 = vmatprep.mubr.f32.mxu0 0.0
        %1459 = vmatmul.mubr.f32.gmra.mxu0 %v1242
        %v1460 = vpop.f32.mrf.mxu0
        %v1461 = vadd.f32 0.0, %v1460
        %v1462 = vpop.f32.mrf.mxu0
        %1463 = vmatprep.mubr.f32.mxu0 0.0
        %1464 = vmatmul.mubr.f32.gmra.mxu0 %v1243
        %v1465 = vpop.f32.mrf.mxu0
        %v1466 = vadd.f32 0.0, %v1465
        %v1467 = vpop.f32.mrf.mxu0
        %1468 = vmatprep.mubr.f32.mxu0 0.0
        %1469 = vmatmul.mubr.f32.gmra.mxu0 %v1244
        %v1470 = vpop.f32.mrf.mxu0
        %v1471 = vadd.f32 0.0, %v1470
        %v1472 = vpop.f32.mrf.mxu0
        %1473 = vmatprep.mubr.f32.mxu0 0.0
        %1474 = vmatmul.mubr.f32.gmra.mxu0 %v1245
        %v1475 = vpop.f32.mrf.mxu0
        %v1476 = vadd.f32 0.0, %v1475
        %v1477 = vpop.f32.mrf.mxu0
        %1478 = vmatprep.mubr.f32.mxu0 0.0
        %1479 = vmatmul.mubr.f32.gmra.mxu0 %v1246
        %v1480 = vpop.f32.mrf.mxu0
        %v1481 = vadd.f32 0.0, %v1480
        %v1482 = vpop.f32.mrf.mxu0
        %1483 = vmatprep.mubr.f32.mxu0 0.0
        %1484 = vmatmul.mubr.f32.gmra.mxu0 %v1247
        %v1485 = vpop.f32.mrf.mxu0
        %v1486 = vadd.f32 0.0, %v1485
        %v1487 = vpop.f32.mrf.mxu0
        %1488 = vdwg.mxu0
        %v1489 = vadd.f32 %v1183, %v1331
        %v1490 = vadd.f32 %v1184, %v1336
        %v1491 = vadd.f32 %v1185, %v1341
        %v1492 = vadd.f32 %v1186, %v1346
        %v1493 = vadd.f32 %v1187, %v1351
        %v1494 = vadd.f32 %v1188, %v1356
        %v1495 = vadd.f32 %v1189, %v1361
        %v1496 = vadd.f32 %v1190, %v1366
        %v1497 = vadd.f32 %v1191, %v1371
        %v1498 = vadd.f32 %v1192, %v1376
        %v1499 = vadd.f32 %v1193, %v1381
        %v1500 = vadd.f32 %v1194, %v1386
        %v1501 = vadd.f32 %v1195, %v1391
        %v1502 = vadd.f32 %v1196, %v1396
        %v1503 = vadd.f32 %v1197, %v1401
        %v1504 = vadd.f32 %v1198, %v1406
        %v1505 = vadd.f32 %v1199, %v1411
        %v1506 = vadd.f32 %v1200, %v1416
        %v1507 = vadd.f32 %v1201, %v1421
        %v1508 = vadd.f32 %v1202, %v1426
        %v1509 = vadd.f32 %v1203, %v1431
        %v1510 = vadd.f32 %v1204, %v1436
        %v1511 = vadd.f32 %v1205, %v1441
        %v1512 = vadd.f32 %v1206, %v1446
        %v1513 = vadd.f32 %v1207, %v1451
        %v1514 = vadd.f32 %v1208, %v1456
        %v1515 = vadd.f32 %v1209, %v1461
        %v1516 = vadd.f32 %v1210, %v1466
        %v1517 = vadd.f32 %v1211, %v1471
        %v1518 = vadd.f32 %v1212, %v1476
        %v1519 = vadd.f32 %v1213, %v1481
        %v1520 = vadd.f32 %v1214, %v1486
        %v1521 = vld [vmem:[%s1215 + $0x8] sm:$0xff]
        %v1522 = vld [vmem:[%s1215 + $0x10] sm:$0xff]
        %v1523 = vld [vmem:[%s1215 + $0x28] sm:$0xff]
        %v1524 = vld [vmem:[%s1215 + $0x30] sm:$0xff]
        %v1525 = vld [vmem:[%s1215 + $0x48] sm:$0xff]
        %v1526 = vld [vmem:[%s1215 + $0x50] sm:$0xff]
        %v1527 = vld [vmem:[%s1215 + $0x68] sm:$0xff]
        %v1528 = vld [vmem:[%s1215 + $0x70] sm:$0xff]
        %v1529 = vld [vmem:[%s1215 + $0x88] sm:$0xff]
        %v1530 = vld [vmem:[%s1215 + $0x90] sm:$0xff]
        %v1531 = vld [vmem:[%s1215 + $0xa8] sm:$0xff]
        %v1532 = vld [vmem:[%s1215 + $0xb0] sm:$0xff]
        %v1533 = vld [vmem:[%s1215 + $0xc8] sm:$0xff]
        %v1534 = vld [vmem:[%s1215 + $0xd0] sm:$0xff]
        %v1535 = vld [vmem:[%s1215 + $0xe8] sm:$0xff]
        %v1536 = vld [vmem:[%s1215 + $0xf0] sm:$0xff]
        %v1537 = vld [vmem:[%s1215 + $0x108] sm:$0xff]
        %v1538 = vld [vmem:[%s1215 + $0x110] sm:$0xff]
        %v1539 = vld [vmem:[%s1215 + $0x128] sm:$0xff]
        %v1540 = vld [vmem:[%s1215 + $0x130] sm:$0xff]
        %v1541 = vld [vmem:[%s1215 + $0x148] sm:$0xff]
        %v1542 = vld [vmem:[%s1215 + $0x150] sm:$0xff]
        %v1543 = vld [vmem:[%s1215 + $0x168] sm:$0xff]
        %v1544 = vld [vmem:[%s1215 + $0x170] sm:$0xff]
        %v1545 = vld [vmem:[%s1215 + $0x188] sm:$0xff]
        %v1546 = vld [vmem:[%s1215 + $0x190] sm:$0xff]
        %v1547 = vld [vmem:[%s1215 + $0x1a8] sm:$0xff]
        %v1548 = vld [vmem:[%s1215 + $0x1b0] sm:$0xff]
        %v1549 = vld [vmem:[%s1215 + $0x1c8] sm:$0xff]
        %v1550 = vld [vmem:[%s1215 + $0x1d0] sm:$0xff]
        %v1551 = vld [vmem:[%s1215 + $0x1e8] sm:$0xff]
        %v1552 = vld [vmem:[%s1215 + $0x1f0] sm:$0xff]
        %v1553 = vld [vmem:[#allocation5 + $0x200] sm:$0xff]
        %v1554 = vld [vmem:[#allocation5 + $0x208] sm:$0xff]
        %v1555 = vld [vmem:[#allocation5 + $0x210] sm:$0xff]
        %v1556 = vld [vmem:[#allocation5 + $0x218] sm:$0xff]
        %v1557 = vld [vmem:[#allocation5 + $0x220] sm:$0xff]
        %v1558 = vld [vmem:[#allocation5 + $0x228] sm:$0xff]
        %v1559 = vld [vmem:[#allocation5 + $0x230] sm:$0xff]
        %v1560 = vld [vmem:[#allocation5 + $0x238] sm:$0xff]
        %v1561 = vld [vmem:[#allocation5 + $0x240] sm:$0xff]
        %v1562 = vld [vmem:[#allocation5 + $0x248] sm:$0xff]
        %v1563 = vld [vmem:[#allocation5 + $0x250] sm:$0xff]
        %v1564 = vld [vmem:[#allocation5 + $0x258] sm:$0xff]
        %v1565 = vld [vmem:[#allocation5 + $0x260] sm:$0xff]
        %v1566 = vld [vmem:[#allocation5 + $0x268] sm:$0xff]
        %v1567 = vld [vmem:[#allocation5 + $0x270] sm:$0xff]
        %v1568 = vld [vmem:[#allocation5 + $0x278] sm:$0xff]
        %1569 = vmatprep.subr.mxu0 0.0
        %1570 = vmatpush1.msra.mxu0 %v1568
        %1571 = vmatprep.subr.mxu0 0.0
        %1572 = vmatpush1.msra.mxu0 %v1567
        %1573 = vmatprep.subr.mxu0 0.0
        %1574 = vmatpush1.msra.mxu0 %v1566
        %1575 = vmatprep.subr.mxu0 0.0
        %1576 = vmatpush1.msra.mxu0 %v1565
        %1577 = vmatprep.subr.mxu0 0.0
        %1578 = vmatpush1.msra.mxu0 %v1564
        %1579 = vmatprep.subr.mxu0 0.0
        %1580 = vmatpush1.msra.mxu0 %v1563
        %1581 = vmatprep.subr.mxu0 0.0
        %1582 = vmatpush1.msra.mxu0 %v1562
        %1583 = vmatprep.subr.mxu0 0.0
        %1584 = vmatpush1.msra.mxu0 %v1561
        %1585 = vmatprep.subr.mxu0 0.0
        %1586 = vmatpush1.msra.mxu0 %v1560
        %1587 = vmatprep.subr.mxu0 0.0
        %1588 = vmatpush1.msra.mxu0 %v1559
        %1589 = vmatprep.subr.mxu0 0.0
        %1590 = vmatpush1.msra.mxu0 %v1558
        %1591 = vmatprep.subr.mxu0 0.0
        %1592 = vmatpush1.msra.mxu0 %v1557
        %1593 = vmatprep.subr.mxu0 0.0
        %1594 = vmatpush1.msra.mxu0 %v1556
        %1595 = vmatprep.subr.mxu0 0.0
        %1596 = vmatpush1.msra.mxu0 %v1555
        %1597 = vmatprep.subr.mxu0 0.0
        %1598 = vmatpush1.msra.mxu0 %v1554
        %1599 = vmatprep.subr.mxu0 0.0
        %1600 = vmatpush1.msra.mxu0 %v1553
        %1601 = vmatprep.subr.mxu0 0.0
        %1602 = vmatpush2.msra.mxu0 0.0
        %1603 = vmatprep.subr.mxu0 0.0
        %1604 = vmatpush2.msra.mxu0 0.0
        %1605 = vmatprep.subr.mxu0 0.0
        %1606 = vmatpush2.msra.mxu0 0.0
        %1607 = vmatprep.subr.mxu0 0.0
        %1608 = vmatpush2.msra.mxu0 0.0
        %1609 = vmatprep.subr.mxu0 0.0
        %1610 = vmatpush2.msra.mxu0 0.0
        %1611 = vmatprep.subr.mxu0 0.0
        %1612 = vmatpush2.msra.mxu0 0.0
        %1613 = vmatprep.subr.mxu0 0.0
        %1614 = vmatpush2.msra.mxu0 0.0
        %1615 = vmatprep.subr.mxu0 0.0
        %1616 = vmatpush2.msra.mxu0 0.0
        %1617 = vmatprep.subr.mxu0 0.0
        %1618 = vmatpush2.msra.mxu0 0.0
        %1619 = vmatprep.subr.mxu0 0.0
        %1620 = vmatpush2.msra.mxu0 0.0
        %1621 = vmatprep.subr.mxu0 0.0
        %1622 = vmatpush2.msra.mxu0 0.0
        %1623 = vmatprep.subr.mxu0 0.0
        %1624 = vmatpush2.msra.mxu0 0.0
        %1625 = vmatprep.subr.mxu0 0.0
        %1626 = vmatpush2.msra.mxu0 0.0
        %1627 = vmatprep.subr.mxu0 0.0
        %1628 = vmatpush2.msra.mxu0 0.0
        %1629 = vmatprep.subr.mxu0 0.0
        %1630 = vmatpush2.msra.mxu0 0.0
        %1631 = vmatprep.subr.mxu0 0.0
        %1632 = vmatpush2.msra.mxu0 0.0
        %1633 = vmatprep.mubr.f32.mxu0 0.0
        %1634 = vmatmul.mubr.f32.gmra.mxu0 %v1521
        %v1635 = vpop.f32.mrf.mxu0
        %v1636 = vadd.f32 0.0, %v1635
        %v1637 = vpop.f32.mrf.mxu0
        %1638 = vmatprep.mubr.f32.mxu0 0.0
        %1639 = vmatmul.mubr.f32.gmra.mxu0 %v1522
        %v1640 = vpop.f32.mrf.mxu0
        %v1641 = vadd.f32 0.0, %v1640
        %v1642 = vpop.f32.mrf.mxu0
        %1643 = vmatprep.mubr.f32.mxu0 0.0
        %1644 = vmatmul.mubr.f32.gmra.mxu0 %v1523
        %v1645 = vpop.f32.mrf.mxu0
        %v1646 = vadd.f32 0.0, %v1645
        %v1647 = vpop.f32.mrf.mxu0
        %1648 = vmatprep.mubr.f32.mxu0 0.0
        %1649 = vmatmul.mubr.f32.gmra.mxu0 %v1524
        %v1650 = vpop.f32.mrf.mxu0
        %v1651 = vadd.f32 0.0, %v1650
        %v1652 = vpop.f32.mrf.mxu0
        %1653 = vmatprep.mubr.f32.mxu0 0.0
        %1654 = vmatmul.mubr.f32.gmra.mxu0 %v1525
        %v1655 = vpop.f32.mrf.mxu0
        %v1656 = vadd.f32 0.0, %v1655
        %v1657 = vpop.f32.mrf.mxu0
        %1658 = vmatprep.mubr.f32.mxu0 0.0
        %1659 = vmatmul.mubr.f32.gmra.mxu0 %v1526
        %v1660 = vpop.f32.mrf.mxu0
        %v1661 = vadd.f32 0.0, %v1660
        %v1662 = vpop.f32.mrf.mxu0
        %1663 = vmatprep.mubr.f32.mxu0 0.0
        %1664 = vmatmul.mubr.f32.gmra.mxu0 %v1527
        %v1665 = vpop.f32.mrf.mxu0
        %v1666 = vadd.f32 0.0, %v1665
        %v1667 = vpop.f32.mrf.mxu0
        %1668 = vmatprep.mubr.f32.mxu0 0.0
        %1669 = vmatmul.mubr.f32.gmra.mxu0 %v1528
        %v1670 = vpop.f32.mrf.mxu0
        %v1671 = vadd.f32 0.0, %v1670
        %v1672 = vpop.f32.mrf.mxu0
        %1673 = vmatprep.mubr.f32.mxu0 0.0
        %1674 = vmatmul.mubr.f32.gmra.mxu0 %v1529
        %v1675 = vpop.f32.mrf.mxu0
        %v1676 = vadd.f32 0.0, %v1675
        %v1677 = vpop.f32.mrf.mxu0
        %1678 = vmatprep.mubr.f32.mxu0 0.0
        %1679 = vmatmul.mubr.f32.gmra.mxu0 %v1530
        %v1680 = vpop.f32.mrf.mxu0
        %v1681 = vadd.f32 0.0, %v1680
        %v1682 = vpop.f32.mrf.mxu0
        %1683 = vmatprep.mubr.f32.mxu0 0.0
        %1684 = vmatmul.mubr.f32.gmra.mxu0 %v1531
        %v1685 = vpop.f32.mrf.mxu0
        %v1686 = vadd.f32 0.0, %v1685
        %v1687 = vpop.f32.mrf.mxu0
        %1688 = vmatprep.mubr.f32.mxu0 0.0
        %1689 = vmatmul.mubr.f32.gmra.mxu0 %v1532
        %v1690 = vpop.f32.mrf.mxu0
        %v1691 = vadd.f32 0.0, %v1690
        %v1692 = vpop.f32.mrf.mxu0
        %1693 = vmatprep.mubr.f32.mxu0 0.0
        %1694 = vmatmul.mubr.f32.gmra.mxu0 %v1533
        %v1695 = vpop.f32.mrf.mxu0
        %v1696 = vadd.f32 0.0, %v1695
        %v1697 = vpop.f32.mrf.mxu0
        %1698 = vmatprep.mubr.f32.mxu0 0.0
        %1699 = vmatmul.mubr.f32.gmra.mxu0 %v1534
        %v1700 = vpop.f32.mrf.mxu0
        %v1701 = vadd.f32 0.0, %v1700
        %v1702 = vpop.f32.mrf.mxu0
        %1703 = vmatprep.mubr.f32.mxu0 0.0
        %1704 = vmatmul.mubr.f32.gmra.mxu0 %v1535
        %v1705 = vpop.f32.mrf.mxu0
        %v1706 = vadd.f32 0.0, %v1705
        %v1707 = vpop.f32.mrf.mxu0
        %1708 = vmatprep.mubr.f32.mxu0 0.0
        %1709 = vmatmul.mubr.f32.gmra.mxu0 %v1536
        %v1710 = vpop.f32.mrf.mxu0
        %v1711 = vadd.f32 0.0, %v1710
        %v1712 = vpop.f32.mrf.mxu0
        %1713 = vmatprep.mubr.f32.mxu0 0.0
        %1714 = vmatmul.mubr.f32.gmra.mxu0 %v1537
        %v1715 = vpop.f32.mrf.mxu0
        %v1716 = vadd.f32 0.0, %v1715
        %v1717 = vpop.f32.mrf.mxu0
        %1718 = vmatprep.mubr.f32.mxu0 0.0
        %1719 = vmatmul.mubr.f32.gmra.mxu0 %v1538
        %v1720 = vpop.f32.mrf.mxu0
        %v1721 = vadd.f32 0.0, %v1720
        %v1722 = vpop.f32.mrf.mxu0
        %1723 = vmatprep.mubr.f32.mxu0 0.0
        %1724 = vmatmul.mubr.f32.gmra.mxu0 %v1539
        %v1725 = vpop.f32.mrf.mxu0
        %v1726 = vadd.f32 0.0, %v1725
        %v1727 = vpop.f32.mrf.mxu0
        %1728 = vmatprep.mubr.f32.mxu0 0.0
        %1729 = vmatmul.mubr.f32.gmra.mxu0 %v1540
        %v1730 = vpop.f32.mrf.mxu0
        %v1731 = vadd.f32 0.0, %v1730
        %v1732 = vpop.f32.mrf.mxu0
        %1733 = vmatprep.mubr.f32.mxu0 0.0
        %1734 = vmatmul.mubr.f32.gmra.mxu0 %v1541
        %v1735 = vpop.f32.mrf.mxu0
        %v1736 = vadd.f32 0.0, %v1735
        %v1737 = vpop.f32.mrf.mxu0
        %1738 = vmatprep.mubr.f32.mxu0 0.0
        %1739 = vmatmul.mubr.f32.gmra.mxu0 %v1542
        %v1740 = vpop.f32.mrf.mxu0
        %v1741 = vadd.f32 0.0, %v1740
        %v1742 = vpop.f32.mrf.mxu0
        %1743 = vmatprep.mubr.f32.mxu0 0.0
        %1744 = vmatmul.mubr.f32.gmra.mxu0 %v1543
        %v1745 = vpop.f32.mrf.mxu0
        %v1746 = vadd.f32 0.0, %v1745
        %v1747 = vpop.f32.mrf.mxu0
        %1748 = vmatprep.mubr.f32.mxu0 0.0
        %1749 = vmatmul.mubr.f32.gmra.mxu0 %v1544
        %v1750 = vpop.f32.mrf.mxu0
        %v1751 = vadd.f32 0.0, %v1750
        %v1752 = vpop.f32.mrf.mxu0
        %1753 = vmatprep.mubr.f32.mxu0 0.0
        %1754 = vmatmul.mubr.f32.gmra.mxu0 %v1545
        %v1755 = vpop.f32.mrf.mxu0
        %v1756 = vadd.f32 0.0, %v1755
        %v1757 = vpop.f32.mrf.mxu0
        %1758 = vmatprep.mubr.f32.mxu0 0.0
        %1759 = vmatmul.mubr.f32.gmra.mxu0 %v1546
        %v1760 = vpop.f32.mrf.mxu0
        %v1761 = vadd.f32 0.0, %v1760
        %v1762 = vpop.f32.mrf.mxu0
        %1763 = vmatprep.mubr.f32.mxu0 0.0
        %1764 = vmatmul.mubr.f32.gmra.mxu0 %v1547
        %v1765 = vpop.f32.mrf.mxu0
        %v1766 = vadd.f32 0.0, %v1765
        %v1767 = vpop.f32.mrf.mxu0
        %1768 = vmatprep.mubr.f32.mxu0 0.0
        %1769 = vmatmul.mubr.f32.gmra.mxu0 %v1548
        %v1770 = vpop.f32.mrf.mxu0
        %v1771 = vadd.f32 0.0, %v1770
        %v1772 = vpop.f32.mrf.mxu0
        %1773 = vmatprep.mubr.f32.mxu0 0.0
        %1774 = vmatmul.mubr.f32.gmra.mxu0 %v1549
        %v1775 = vpop.f32.mrf.mxu0
        %v1776 = vadd.f32 0.0, %v1775
        %v1777 = vpop.f32.mrf.mxu0
        %1778 = vmatprep.mubr.f32.mxu0 0.0
        %1779 = vmatmul.mubr.f32.gmra.mxu0 %v1550
        %v1780 = vpop.f32.mrf.mxu0
        %v1781 = vadd.f32 0.0, %v1780
        %v1782 = vpop.f32.mrf.mxu0
        %1783 = vmatprep.mubr.f32.mxu0 0.0
        %1784 = vmatmul.mubr.f32.gmra.mxu0 %v1551
        %v1785 = vpop.f32.mrf.mxu0
        %v1786 = vadd.f32 0.0, %v1785
        %v1787 = vpop.f32.mrf.mxu0
        %1788 = vmatprep.mubr.f32.mxu0 0.0
        %1789 = vmatmul.mubr.f32.gmra.mxu0 %v1552
        %v1790 = vpop.f32.mrf.mxu0
        %v1791 = vadd.f32 0.0, %v1790
        %v1792 = vpop.f32.mrf.mxu0
        %1793 = vdwg.mxu0
        %v1794 = vadd.f32 %v1489, %v1636
        %v1795 = vadd.f32 %v1490, %v1641
        %v1796 = vadd.f32 %v1491, %v1646
        %v1797 = vadd.f32 %v1492, %v1651
        %v1798 = vadd.f32 %v1493, %v1656
        %v1799 = vadd.f32 %v1494, %v1661
        %v1800 = vadd.f32 %v1495, %v1666
        %v1801 = vadd.f32 %v1496, %v1671
        %v1802 = vadd.f32 %v1497, %v1676
        %v1803 = vadd.f32 %v1498, %v1681
        %v1804 = vadd.f32 %v1499, %v1686
        %v1805 = vadd.f32 %v1500, %v1691
        %v1806 = vadd.f32 %v1501, %v1696
        %v1807 = vadd.f32 %v1502, %v1701
        %v1808 = vadd.f32 %v1503, %v1706
        %v1809 = vadd.f32 %v1504, %v1711
        %v1810 = vadd.f32 %v1505, %v1716
        %v1811 = vadd.f32 %v1506, %v1721
        %v1812 = vadd.f32 %v1507, %v1726
        %v1813 = vadd.f32 %v1508, %v1731
        %v1814 = vadd.f32 %v1509, %v1736
        %v1815 = vadd.f32 %v1510, %v1741
        %v1816 = vadd.f32 %v1511, %v1746
        %v1817 = vadd.f32 %v1512, %v1751
        %v1818 = vadd.f32 %v1513, %v1756
        %v1819 = vadd.f32 %v1514, %v1761
        %v1820 = vadd.f32 %v1515, %v1766
        %v1821 = vadd.f32 %v1516, %v1771
        %v1822 = vadd.f32 %v1517, %v1776
        %v1823 = vadd.f32 %v1518, %v1781
        %v1824 = vadd.f32 %v1519, %v1786
        %v1825 = vadd.f32 %v1520, %v1791
        %v1826 = vld [vmem:[%s1215 + $0x9] sm:$0xff]
        %v1827 = vld [vmem:[%s1215 + $0x11] sm:$0xff]
        %v1828 = vld [vmem:[%s1215 + $0x29] sm:$0xff]
        %v1829 = vld [vmem:[%s1215 + $0x31] sm:$0xff]
        %v1830 = vld [vmem:[%s1215 + $0x49] sm:$0xff]
        %v1831 = vld [vmem:[%s1215 + $0x51] sm:$0xff]
        %v1832 = vld [vmem:[%s1215 + $0x69] sm:$0xff]
        %v1833 = vld [vmem:[%s1215 + $0x71] sm:$0xff]
        %v1834 = vld [vmem:[%s1215 + $0x89] sm:$0xff]
        %v1835 = vld [vmem:[%s1215 + $0x91] sm:$0xff]
        %v1836 = vld [vmem:[%s1215 + $0xa9] sm:$0xff]
        %v1837 = vld [vmem:[%s1215 + $0xb1] sm:$0xff]
        %v1838 = vld [vmem:[%s1215 + $0xc9] sm:$0xff]
        %v1839 = vld [vmem:[%s1215 + $0xd1] sm:$0xff]
        %v1840 = vld [vmem:[%s1215 + $0xe9] sm:$0xff]
        %v1841 = vld [vmem:[%s1215 + $0xf1] sm:$0xff]
        %v1842 = vld [vmem:[%s1215 + $0x109] sm:$0xff]
        %v1843 = vld [vmem:[%s1215 + $0x111] sm:$0xff]
        %v1844 = vld [vmem:[%s1215 + $0x129] sm:$0xff]
        %v1845 = vld [vmem:[%s1215 + $0x131] sm:$0xff]
        %v1846 = vld [vmem:[%s1215 + $0x149] sm:$0xff]
        %v1847 = vld [vmem:[%s1215 + $0x151] sm:$0xff]
        %v1848 = vld [vmem:[%s1215 + $0x169] sm:$0xff]
        %v1849 = vld [vmem:[%s1215 + $0x171] sm:$0xff]
        %v1850 = vld [vmem:[%s1215 + $0x189] sm:$0xff]
        %v1851 = vld [vmem:[%s1215 + $0x191] sm:$0xff]
        %v1852 = vld [vmem:[%s1215 + $0x1a9] sm:$0xff]
        %v1853 = vld [vmem:[%s1215 + $0x1b1] sm:$0xff]
        %v1854 = vld [vmem:[%s1215 + $0x1c9] sm:$0xff]
        %v1855 = vld [vmem:[%s1215 + $0x1d1] sm:$0xff]
        %v1856 = vld [vmem:[%s1215 + $0x1e9] sm:$0xff]
        %v1857 = vld [vmem:[%s1215 + $0x1f1] sm:$0xff]
        %v1858 = vld [vmem:[#allocation5 + $0x280] sm:$0xff]
        %v1859 = vld [vmem:[#allocation5 + $0x288] sm:$0xff]
        %v1860 = vld [vmem:[#allocation5 + $0x290] sm:$0xff]
        %v1861 = vld [vmem:[#allocation5 + $0x298] sm:$0xff]
        %v1862 = vld [vmem:[#allocation5 + $0x2a0] sm:$0xff]
        %v1863 = vld [vmem:[#allocation5 + $0x2a8] sm:$0xff]
        %v1864 = vld [vmem:[#allocation5 + $0x2b0] sm:$0xff]
        %v1865 = vld [vmem:[#allocation5 + $0x2b8] sm:$0xff]
        %v1866 = vld [vmem:[#allocation5 + $0x2c0] sm:$0xff]
        %v1867 = vld [vmem:[#allocation5 + $0x2c8] sm:$0xff]
        %v1868 = vld [vmem:[#allocation5 + $0x2d0] sm:$0xff]
        %v1869 = vld [vmem:[#allocation5 + $0x2d8] sm:$0xff]
        %v1870 = vld [vmem:[#allocation5 + $0x2e0] sm:$0xff]
        %v1871 = vld [vmem:[#allocation5 + $0x2e8] sm:$0xff]
        %v1872 = vld [vmem:[#allocation5 + $0x2f0] sm:$0xff]
        %v1873 = vld [vmem:[#allocation5 + $0x2f8] sm:$0xff]
        %1874 = vmatprep.subr.mxu0 0.0
        %1875 = vmatpush1.msra.mxu0 %v1873
        %1876 = vmatprep.subr.mxu0 0.0
        %1877 = vmatpush1.msra.mxu0 %v1872
        %1878 = vmatprep.subr.mxu0 0.0
        %1879 = vmatpush1.msra.mxu0 %v1871
        %1880 = vmatprep.subr.mxu0 0.0
        %1881 = vmatpush1.msra.mxu0 %v1870
        %1882 = vmatprep.subr.mxu0 0.0
        %1883 = vmatpush1.msra.mxu0 %v1869
        %1884 = vmatprep.subr.mxu0 0.0
        %1885 = vmatpush1.msra.mxu0 %v1868
        %1886 = vmatprep.subr.mxu0 0.0
        %1887 = vmatpush1.msra.mxu0 %v1867
        %1888 = vmatprep.subr.mxu0 0.0
        %1889 = vmatpush1.msra.mxu0 %v1866
        %1890 = vmatprep.subr.mxu0 0.0
        %1891 = vmatpush1.msra.mxu0 %v1865
        %1892 = vmatprep.subr.mxu0 0.0
        %1893 = vmatpush1.msra.mxu0 %v1864
        %1894 = vmatprep.subr.mxu0 0.0
        %1895 = vmatpush1.msra.mxu0 %v1863
        %1896 = vmatprep.subr.mxu0 0.0
        %1897 = vmatpush1.msra.mxu0 %v1862
        %1898 = vmatprep.subr.mxu0 0.0
        %1899 = vmatpush1.msra.mxu0 %v1861
        %1900 = vmatprep.subr.mxu0 0.0
        %1901 = vmatpush1.msra.mxu0 %v1860
        %1902 = vmatprep.subr.mxu0 0.0
        %1903 = vmatpush1.msra.mxu0 %v1859
        %1904 = vmatprep.subr.mxu0 0.0
        %1905 = vmatpush1.msra.mxu0 %v1858
        %1906 = vmatprep.subr.mxu0 0.0
        %1907 = vmatpush2.msra.mxu0 0.0
        %1908 = vmatprep.subr.mxu0 0.0
        %1909 = vmatpush2.msra.mxu0 0.0
        %1910 = vmatprep.subr.mxu0 0.0
        %1911 = vmatpush2.msra.mxu0 0.0
        %1912 = vmatprep.subr.mxu0 0.0
        %1913 = vmatpush2.msra.mxu0 0.0
        %1914 = vmatprep.subr.mxu0 0.0
        %1915 = vmatpush2.msra.mxu0 0.0
        %1916 = vmatprep.subr.mxu0 0.0
        %1917 = vmatpush2.msra.mxu0 0.0
        %1918 = vmatprep.subr.mxu0 0.0
        %1919 = vmatpush2.msra.mxu0 0.0
        %1920 = vmatprep.subr.mxu0 0.0
        %1921 = vmatpush2.msra.mxu0 0.0
        %1922 = vmatprep.subr.mxu0 0.0
        %1923 = vmatpush2.msra.mxu0 0.0
        %1924 = vmatprep.subr.mxu0 0.0
        %1925 = vmatpush2.msra.mxu0 0.0
        %1926 = vmatprep.subr.mxu0 0.0
        %1927 = vmatpush2.msra.mxu0 0.0
        %1928 = vmatprep.subr.mxu0 0.0
        %1929 = vmatpush2.msra.mxu0 0.0
        %1930 = vmatprep.subr.mxu0 0.0
        %1931 = vmatpush2.msra.mxu0 0.0
        %1932 = vmatprep.subr.mxu0 0.0
        %1933 = vmatpush2.msra.mxu0 0.0
        %1934 = vmatprep.subr.mxu0 0.0
        %1935 = vmatpush2.msra.mxu0 0.0
        %1936 = vmatprep.subr.mxu0 0.0
        %1937 = vmatpush2.msra.mxu0 0.0
        %1938 = vmatprep.mubr.f32.mxu0 0.0
        %1939 = vmatmul.mubr.f32.gmra.mxu0 %v1826
        %v1940 = vpop.f32.mrf.mxu0
        %v1941 = vadd.f32 0.0, %v1940
        %v1942 = vpop.f32.mrf.mxu0
        %1943 = vmatprep.mubr.f32.mxu0 0.0
        %1944 = vmatmul.mubr.f32.gmra.mxu0 %v1827
        %v1945 = vpop.f32.mrf.mxu0
        %v1946 = vadd.f32 0.0, %v1945
        %v1947 = vpop.f32.mrf.mxu0
        %1948 = vmatprep.mubr.f32.mxu0 0.0
        %1949 = vmatmul.mubr.f32.gmra.mxu0 %v1828
        %v1950 = vpop.f32.mrf.mxu0
        %v1951 = vadd.f32 0.0, %v1950
        %v1952 = vpop.f32.mrf.mxu0
        %1953 = vmatprep.mubr.f32.mxu0 0.0
        %1954 = vmatmul.mubr.f32.gmra.mxu0 %v1829
        %v1955 = vpop.f32.mrf.mxu0
        %v1956 = vadd.f32 0.0, %v1955
        %v1957 = vpop.f32.mrf.mxu0
        %1958 = vmatprep.mubr.f32.mxu0 0.0
        %1959 = vmatmul.mubr.f32.gmra.mxu0 %v1830
        %v1960 = vpop.f32.mrf.mxu0
        %v1961 = vadd.f32 0.0, %v1960
        %v1962 = vpop.f32.mrf.mxu0
        %1963 = vmatprep.mubr.f32.mxu0 0.0
        %1964 = vmatmul.mubr.f32.gmra.mxu0 %v1831
        %v1965 = vpop.f32.mrf.mxu0
        %v1966 = vadd.f32 0.0, %v1965
        %v1967 = vpop.f32.mrf.mxu0
        %1968 = vmatprep.mubr.f32.mxu0 0.0
        %1969 = vmatmul.mubr.f32.gmra.mxu0 %v1832
        %v1970 = vpop.f32.mrf.mxu0
        %v1971 = vadd.f32 0.0, %v1970
        %v1972 = vpop.f32.mrf.mxu0
        %1973 = vmatprep.mubr.f32.mxu0 0.0
        %1974 = vmatmul.mubr.f32.gmra.mxu0 %v1833
        %v1975 = vpop.f32.mrf.mxu0
        %v1976 = vadd.f32 0.0, %v1975
        %v1977 = vpop.f32.mrf.mxu0
        %1978 = vmatprep.mubr.f32.mxu0 0.0
        %1979 = vmatmul.mubr.f32.gmra.mxu0 %v1834
        %v1980 = vpop.f32.mrf.mxu0
        %v1981 = vadd.f32 0.0, %v1980
        %v1982 = vpop.f32.mrf.mxu0
        %1983 = vmatprep.mubr.f32.mxu0 0.0
        %1984 = vmatmul.mubr.f32.gmra.mxu0 %v1835
        %v1985 = vpop.f32.mrf.mxu0
        %v1986 = vadd.f32 0.0, %v1985
        %v1987 = vpop.f32.mrf.mxu0
        %1988 = vmatprep.mubr.f32.mxu0 0.0
        %1989 = vmatmul.mubr.f32.gmra.mxu0 %v1836
        %v1990 = vpop.f32.mrf.mxu0
        %v1991 = vadd.f32 0.0, %v1990
        %v1992 = vpop.f32.mrf.mxu0
        %1993 = vmatprep.mubr.f32.mxu0 0.0
        %1994 = vmatmul.mubr.f32.gmra.mxu0 %v1837
        %v1995 = vpop.f32.mrf.mxu0
        %v1996 = vadd.f32 0.0, %v1995
        %v1997 = vpop.f32.mrf.mxu0
        %1998 = vmatprep.mubr.f32.mxu0 0.0
        %1999 = vmatmul.mubr.f32.gmra.mxu0 %v1838
        %v2000 = vpop.f32.mrf.mxu0
        %v2001 = vadd.f32 0.0, %v2000
        %v2002 = vpop.f32.mrf.mxu0
        %2003 = vmatprep.mubr.f32.mxu0 0.0
        %2004 = vmatmul.mubr.f32.gmra.mxu0 %v1839
        %v2005 = vpop.f32.mrf.mxu0
        %v2006 = vadd.f32 0.0, %v2005
        %v2007 = vpop.f32.mrf.mxu0
        %2008 = vmatprep.mubr.f32.mxu0 0.0
        %2009 = vmatmul.mubr.f32.gmra.mxu0 %v1840
        %v2010 = vpop.f32.mrf.mxu0
        %v2011 = vadd.f32 0.0, %v2010
        %v2012 = vpop.f32.mrf.mxu0
        %2013 = vmatprep.mubr.f32.mxu0 0.0
        %2014 = vmatmul.mubr.f32.gmra.mxu0 %v1841
        %v2015 = vpop.f32.mrf.mxu0
        %v2016 = vadd.f32 0.0, %v2015
        %v2017 = vpop.f32.mrf.mxu0
        %2018 = vmatprep.mubr.f32.mxu0 0.0
        %2019 = vmatmul.mubr.f32.gmra.mxu0 %v1842
        %v2020 = vpop.f32.mrf.mxu0
        %v2021 = vadd.f32 0.0, %v2020
        %v2022 = vpop.f32.mrf.mxu0
        %2023 = vmatprep.mubr.f32.mxu0 0.0
        %2024 = vmatmul.mubr.f32.gmra.mxu0 %v1843
        %v2025 = vpop.f32.mrf.mxu0
        %v2026 = vadd.f32 0.0, %v2025
        %v2027 = vpop.f32.mrf.mxu0
        %2028 = vmatprep.mubr.f32.mxu0 0.0
        %2029 = vmatmul.mubr.f32.gmra.mxu0 %v1844
        %v2030 = vpop.f32.mrf.mxu0
        %v2031 = vadd.f32 0.0, %v2030
        %v2032 = vpop.f32.mrf.mxu0
        %2033 = vmatprep.mubr.f32.mxu0 0.0
        %2034 = vmatmul.mubr.f32.gmra.mxu0 %v1845
        %v2035 = vpop.f32.mrf.mxu0
        %v2036 = vadd.f32 0.0, %v2035
        %v2037 = vpop.f32.mrf.mxu0
        %2038 = vmatprep.mubr.f32.mxu0 0.0
        %2039 = vmatmul.mubr.f32.gmra.mxu0 %v1846
        %v2040 = vpop.f32.mrf.mxu0
        %v2041 = vadd.f32 0.0, %v2040
        %v2042 = vpop.f32.mrf.mxu0
        %2043 = vmatprep.mubr.f32.mxu0 0.0
        %2044 = vmatmul.mubr.f32.gmra.mxu0 %v1847
        %v2045 = vpop.f32.mrf.mxu0
        %v2046 = vadd.f32 0.0, %v2045
        %v2047 = vpop.f32.mrf.mxu0
        %2048 = vmatprep.mubr.f32.mxu0 0.0
        %2049 = vmatmul.mubr.f32.gmra.mxu0 %v1848
        %v2050 = vpop.f32.mrf.mxu0
        %v2051 = vadd.f32 0.0, %v2050
        %v2052 = vpop.f32.mrf.mxu0
        %2053 = vmatprep.mubr.f32.mxu0 0.0
        %2054 = vmatmul.mubr.f32.gmra.mxu0 %v1849
        %v2055 = vpop.f32.mrf.mxu0
        %v2056 = vadd.f32 0.0, %v2055
        %v2057 = vpop.f32.mrf.mxu0
        %2058 = vmatprep.mubr.f32.mxu0 0.0
        %2059 = vmatmul.mubr.f32.gmra.mxu0 %v1850
        %v2060 = vpop.f32.mrf.mxu0
        %v2061 = vadd.f32 0.0, %v2060
        %v2062 = vpop.f32.mrf.mxu0
        %2063 = vmatprep.mubr.f32.mxu0 0.0
        %2064 = vmatmul.mubr.f32.gmra.mxu0 %v1851
        %v2065 = vpop.f32.mrf.mxu0
        %v2066 = vadd.f32 0.0, %v2065
        %v2067 = vpop.f32.mrf.mxu0
        %2068 = vmatprep.mubr.f32.mxu0 0.0
        %2069 = vmatmul.mubr.f32.gmra.mxu0 %v1852
        %v2070 = vpop.f32.mrf.mxu0
        %v2071 = vadd.f32 0.0, %v2070
        %v2072 = vpop.f32.mrf.mxu0
        %2073 = vmatprep.mubr.f32.mxu0 0.0
        %2074 = vmatmul.mubr.f32.gmra.mxu0 %v1853
        %v2075 = vpop.f32.mrf.mxu0
        %v2076 = vadd.f32 0.0, %v2075
        %v2077 = vpop.f32.mrf.mxu0
        %2078 = vmatprep.mubr.f32.mxu0 0.0
        %2079 = vmatmul.mubr.f32.gmra.mxu0 %v1854
        %v2080 = vpop.f32.mrf.mxu0
        %v2081 = vadd.f32 0.0, %v2080
        %v2082 = vpop.f32.mrf.mxu0
        %2083 = vmatprep.mubr.f32.mxu0 0.0
        %2084 = vmatmul.mubr.f32.gmra.mxu0 %v1855
        %v2085 = vpop.f32.mrf.mxu0
        %v2086 = vadd.f32 0.0, %v2085
        %v2087 = vpop.f32.mrf.mxu0
        %2088 = vmatprep.mubr.f32.mxu0 0.0
        %2089 = vmatmul.mubr.f32.gmra.mxu0 %v1856
        %v2090 = vpop.f32.mrf.mxu0
        %v2091 = vadd.f32 0.0, %v2090
        %v2092 = vpop.f32.mrf.mxu0
        %2093 = vmatprep.mubr.f32.mxu0 0.0
        %2094 = vmatmul.mubr.f32.gmra.mxu0 %v1857
        %v2095 = vpop.f32.mrf.mxu0
        %v2096 = vadd.f32 0.0, %v2095
        %v2097 = vpop.f32.mrf.mxu0
        %2098 = vdwg.mxu0
        %v2099 = vadd.f32 %v1794, %v1941
        %v2100 = vadd.f32 %v1795, %v1946
        %v2101 = vadd.f32 %v1796, %v1951
        %v2102 = vadd.f32 %v1797, %v1956
        %v2103 = vadd.f32 %v1798, %v1961
        %v2104 = vadd.f32 %v1799, %v1966
        %v2105 = vadd.f32 %v1800, %v1971
        %v2106 = vadd.f32 %v1801, %v1976
        %v2107 = vadd.f32 %v1802, %v1981
        %v2108 = vadd.f32 %v1803, %v1986
        %v2109 = vadd.f32 %v1804, %v1991
        %v2110 = vadd.f32 %v1805, %v1996
        %v2111 = vadd.f32 %v1806, %v2001
        %v2112 = vadd.f32 %v1807, %v2006
        %v2113 = vadd.f32 %v1808, %v2011
        %v2114 = vadd.f32 %v1809, %v2016
        %v2115 = vadd.f32 %v1810, %v2021
        %v2116 = vadd.f32 %v1811, %v2026
        %v2117 = vadd.f32 %v1812, %v2031
        %v2118 = vadd.f32 %v1813, %v2036
        %v2119 = vadd.f32 %v1814, %v2041
        %v2120 = vadd.f32 %v1815, %v2046
        %v2121 = vadd.f32 %v1816, %v2051
        %v2122 = vadd.f32 %v1817, %v2056
        %v2123 = vadd.f32 %v1818, %v2061
        %v2124 = vadd.f32 %v1819, %v2066
        %v2125 = vadd.f32 %v1820, %v2071
        %v2126 = vadd.f32 %v1821, %v2076
        %v2127 = vadd.f32 %v1822, %v2081
        %v2128 = vadd.f32 %v1823, %v2086
        %v2129 = vadd.f32 %v1824, %v2091
        %v2130 = vadd.f32 %v1825, %v2096
        %s2131 = scalar_lea.vmem [#allocation2], 64
        %v2132 = vld [vmem:[%s2131 + $0x7] sm:$0xff]
        %v2133 = vld [vmem:[%s2131 + $0xf] sm:$0xff]
        %v2134 = vld [vmem:[%s2131 + $0x27] sm:$0xff]
        %v2135 = vld [vmem:[%s2131 + $0x2f] sm:$0xff]
        %v2136 = vld [vmem:[%s2131 + $0x47] sm:$0xff]
        %v2137 = vld [vmem:[%s2131 + $0x4f] sm:$0xff]
        %v2138 = vld [vmem:[%s2131 + $0x67] sm:$0xff]
        %v2139 = vld [vmem:[%s2131 + $0x6f] sm:$0xff]
        %v2140 = vld [vmem:[%s2131 + $0x87] sm:$0xff]
        %v2141 = vld [vmem:[%s2131 + $0x8f] sm:$0xff]
        %v2142 = vld [vmem:[%s2131 + $0xa7] sm:$0xff]
        %v2143 = vld [vmem:[%s2131 + $0xaf] sm:$0xff]
        %v2144 = vld [vmem:[%s2131 + $0xc7] sm:$0xff]
        %v2145 = vld [vmem:[%s2131 + $0xcf] sm:$0xff]
        %v2146 = vld [vmem:[%s2131 + $0xe7] sm:$0xff]
        %v2147 = vld [vmem:[%s2131 + $0xef] sm:$0xff]
        %v2148 = vld [vmem:[%s2131 + $0x107] sm:$0xff]
        %v2149 = vld [vmem:[%s2131 + $0x10f] sm:$0xff]
        %v2150 = vld [vmem:[%s2131 + $0x127] sm:$0xff]
        %v2151 = vld [vmem:[%s2131 + $0x12f] sm:$0xff]
        %v2152 = vld [vmem:[%s2131 + $0x147] sm:$0xff]
        %v2153 = vld [vmem:[%s2131 + $0x14f] sm:$0xff]
        %v2154 = vld [vmem:[%s2131 + $0x167] sm:$0xff]
        %v2155 = vld [vmem:[%s2131 + $0x16f] sm:$0xff]
        %v2156 = vld [vmem:[%s2131 + $0x187] sm:$0xff]
        %v2157 = vld [vmem:[%s2131 + $0x18f] sm:$0xff]
        %v2158 = vld [vmem:[%s2131 + $0x1a7] sm:$0xff]
        %v2159 = vld [vmem:[%s2131 + $0x1af] sm:$0xff]
        %v2160 = vld [vmem:[%s2131 + $0x1c7] sm:$0xff]
        %v2161 = vld [vmem:[%s2131 + $0x1cf] sm:$0xff]
        %v2162 = vld [vmem:[%s2131 + $0x1e7] sm:$0xff]
        %v2163 = vld [vmem:[%s2131 + $0x1ef] sm:$0xff]
        %v2164 = vld [vmem:[#allocation5 + $0x300] sm:$0xff]
        %v2165 = vld [vmem:[#allocation5 + $0x308] sm:$0xff]
        %v2166 = vld [vmem:[#allocation5 + $0x310] sm:$0xff]
        %v2167 = vld [vmem:[#allocation5 + $0x318] sm:$0xff]
        %v2168 = vld [vmem:[#allocation5 + $0x320] sm:$0xff]
        %v2169 = vld [vmem:[#allocation5 + $0x328] sm:$0xff]
        %v2170 = vld [vmem:[#allocation5 + $0x330] sm:$0xff]
        %v2171 = vld [vmem:[#allocation5 + $0x338] sm:$0xff]
        %v2172 = vld [vmem:[#allocation5 + $0x340] sm:$0xff]
        %v2173 = vld [vmem:[#allocation5 + $0x348] sm:$0xff]
        %v2174 = vld [vmem:[#allocation5 + $0x350] sm:$0xff]
        %v2175 = vld [vmem:[#allocation5 + $0x358] sm:$0xff]
        %v2176 = vld [vmem:[#allocation5 + $0x360] sm:$0xff]
        %v2177 = vld [vmem:[#allocation5 + $0x368] sm:$0xff]
        %v2178 = vld [vmem:[#allocation5 + $0x370] sm:$0xff]
        %v2179 = vld [vmem:[#allocation5 + $0x378] sm:$0xff]
        %2180 = vmatprep.subr.mxu0 0.0
        %2181 = vmatpush1.msra.mxu0 %v2179
        %2182 = vmatprep.subr.mxu0 0.0
        %2183 = vmatpush1.msra.mxu0 %v2178
        %2184 = vmatprep.subr.mxu0 0.0
        %2185 = vmatpush1.msra.mxu0 %v2177
        %2186 = vmatprep.subr.mxu0 0.0
        %2187 = vmatpush1.msra.mxu0 %v2176
        %2188 = vmatprep.subr.mxu0 0.0
        %2189 = vmatpush1.msra.mxu0 %v2175
        %2190 = vmatprep.subr.mxu0 0.0
        %2191 = vmatpush1.msra.mxu0 %v2174
        %2192 = vmatprep.subr.mxu0 0.0
        %2193 = vmatpush1.msra.mxu0 %v2173
        %2194 = vmatprep.subr.mxu0 0.0
        %2195 = vmatpush1.msra.mxu0 %v2172
        %2196 = vmatprep.subr.mxu0 0.0
        %2197 = vmatpush1.msra.mxu0 %v2171
        %2198 = vmatprep.subr.mxu0 0.0
        %2199 = vmatpush1.msra.mxu0 %v2170
        %2200 = vmatprep.subr.mxu0 0.0
        %2201 = vmatpush1.msra.mxu0 %v2169
        %2202 = vmatprep.subr.mxu0 0.0
        %2203 = vmatpush1.msra.mxu0 %v2168
        %2204 = vmatprep.subr.mxu0 0.0
        %2205 = vmatpush1.msra.mxu0 %v2167
        %2206 = vmatprep.subr.mxu0 0.0
        %2207 = vmatpush1.msra.mxu0 %v2166
        %2208 = vmatprep.subr.mxu0 0.0
        %2209 = vmatpush1.msra.mxu0 %v2165
        %2210 = vmatprep.subr.mxu0 0.0
        %2211 = vmatpush1.msra.mxu0 %v2164
        %2212 = vmatprep.subr.mxu0 0.0
        %2213 = vmatpush2.msra.mxu0 0.0
        %2214 = vmatprep.subr.mxu0 0.0
        %2215 = vmatpush2.msra.mxu0 0.0
        %2216 = vmatprep.subr.mxu0 0.0
        %2217 = vmatpush2.msra.mxu0 0.0
        %2218 = vmatprep.subr.mxu0 0.0
        %2219 = vmatpush2.msra.mxu0 0.0
        %2220 = vmatprep.subr.mxu0 0.0
        %2221 = vmatpush2.msra.mxu0 0.0
        %2222 = vmatprep.subr.mxu0 0.0
        %2223 = vmatpush2.msra.mxu0 0.0
        %2224 = vmatprep.subr.mxu0 0.0
        %2225 = vmatpush2.msra.mxu0 0.0
        %2226 = vmatprep.subr.mxu0 0.0
        %2227 = vmatpush2.msra.mxu0 0.0
        %2228 = vmatprep.subr.mxu0 0.0
        %2229 = vmatpush2.msra.mxu0 0.0
        %2230 = vmatprep.subr.mxu0 0.0
        %2231 = vmatpush2.msra.mxu0 0.0
        %2232 = vmatprep.subr.mxu0 0.0
        %2233 = vmatpush2.msra.mxu0 0.0
        %2234 = vmatprep.subr.mxu0 0.0
        %2235 = vmatpush2.msra.mxu0 0.0
        %2236 = vmatprep.subr.mxu0 0.0
        %2237 = vmatpush2.msra.mxu0 0.0
        %2238 = vmatprep.subr.mxu0 0.0
        %2239 = vmatpush2.msra.mxu0 0.0
        %2240 = vmatprep.subr.mxu0 0.0
        %2241 = vmatpush2.msra.mxu0 0.0
        %2242 = vmatprep.subr.mxu0 0.0
        %2243 = vmatpush2.msra.mxu0 0.0
        %2244 = vmatprep.mubr.f32.mxu0 0.0
        %2245 = vmatmul.mubr.f32.gmra.mxu0 %v2132
        %v2246 = vpop.f32.mrf.mxu0
        %v2247 = vadd.f32 0.0, %v2246
        %v2248 = vpop.f32.mrf.mxu0
        %2249 = vmatprep.mubr.f32.mxu0 0.0
        %2250 = vmatmul.mubr.f32.gmra.mxu0 %v2133
        %v2251 = vpop.f32.mrf.mxu0
        %v2252 = vadd.f32 0.0, %v2251
        %v2253 = vpop.f32.mrf.mxu0
        %2254 = vmatprep.mubr.f32.mxu0 0.0
        %2255 = vmatmul.mubr.f32.gmra.mxu0 %v2134
        %v2256 = vpop.f32.mrf.mxu0
        %v2257 = vadd.f32 0.0, %v2256
        %v2258 = vpop.f32.mrf.mxu0
        %2259 = vmatprep.mubr.f32.mxu0 0.0
        %2260 = vmatmul.mubr.f32.gmra.mxu0 %v2135
        %v2261 = vpop.f32.mrf.mxu0
        %v2262 = vadd.f32 0.0, %v2261
        %v2263 = vpop.f32.mrf.mxu0
        %2264 = vmatprep.mubr.f32.mxu0 0.0
        %2265 = vmatmul.mubr.f32.gmra.mxu0 %v2136
        %v2266 = vpop.f32.mrf.mxu0
        %v2267 = vadd.f32 0.0, %v2266
        %v2268 = vpop.f32.mrf.mxu0
        %2269 = vmatprep.mubr.f32.mxu0 0.0
        %2270 = vmatmul.mubr.f32.gmra.mxu0 %v2137
        %v2271 = vpop.f32.mrf.mxu0
        %v2272 = vadd.f32 0.0, %v2271
        %v2273 = vpop.f32.mrf.mxu0
        %2274 = vmatprep.mubr.f32.mxu0 0.0
        %2275 = vmatmul.mubr.f32.gmra.mxu0 %v2138
        %v2276 = vpop.f32.mrf.mxu0
        %v2277 = vadd.f32 0.0, %v2276
        %v2278 = vpop.f32.mrf.mxu0
        %2279 = vmatprep.mubr.f32.mxu0 0.0
        %2280 = vmatmul.mubr.f32.gmra.mxu0 %v2139
        %v2281 = vpop.f32.mrf.mxu0
        %v2282 = vadd.f32 0.0, %v2281
        %v2283 = vpop.f32.mrf.mxu0
        %2284 = vmatprep.mubr.f32.mxu0 0.0
        %2285 = vmatmul.mubr.f32.gmra.mxu0 %v2140
        %v2286 = vpop.f32.mrf.mxu0
        %v2287 = vadd.f32 0.0, %v2286
        %v2288 = vpop.f32.mrf.mxu0
        %2289 = vmatprep.mubr.f32.mxu0 0.0
        %2290 = vmatmul.mubr.f32.gmra.mxu0 %v2141
        %v2291 = vpop.f32.mrf.mxu0
        %v2292 = vadd.f32 0.0, %v2291
        %v2293 = vpop.f32.mrf.mxu0
        %2294 = vmatprep.mubr.f32.mxu0 0.0
        %2295 = vmatmul.mubr.f32.gmra.mxu0 %v2142
        %v2296 = vpop.f32.mrf.mxu0
        %v2297 = vadd.f32 0.0, %v2296
        %v2298 = vpop.f32.mrf.mxu0
        %2299 = vmatprep.mubr.f32.mxu0 0.0
        %2300 = vmatmul.mubr.f32.gmra.mxu0 %v2143
        %v2301 = vpop.f32.mrf.mxu0
        %v2302 = vadd.f32 0.0, %v2301
        %v2303 = vpop.f32.mrf.mxu0
        %2304 = vmatprep.mubr.f32.mxu0 0.0
        %2305 = vmatmul.mubr.f32.gmra.mxu0 %v2144
        %v2306 = vpop.f32.mrf.mxu0
        %v2307 = vadd.f32 0.0, %v2306
        %v2308 = vpop.f32.mrf.mxu0
        %2309 = vmatprep.mubr.f32.mxu0 0.0
        %2310 = vmatmul.mubr.f32.gmra.mxu0 %v2145
        %v2311 = vpop.f32.mrf.mxu0
        %v2312 = vadd.f32 0.0, %v2311
        %v2313 = vpop.f32.mrf.mxu0
        %2314 = vmatprep.mubr.f32.mxu0 0.0
        %2315 = vmatmul.mubr.f32.gmra.mxu0 %v2146
        %v2316 = vpop.f32.mrf.mxu0
        %v2317 = vadd.f32 0.0, %v2316
        %v2318 = vpop.f32.mrf.mxu0
        %2319 = vmatprep.mubr.f32.mxu0 0.0
        %2320 = vmatmul.mubr.f32.gmra.mxu0 %v2147
        %v2321 = vpop.f32.mrf.mxu0
        %v2322 = vadd.f32 0.0, %v2321
        %v2323 = vpop.f32.mrf.mxu0
        %2324 = vmatprep.mubr.f32.mxu0 0.0
        %2325 = vmatmul.mubr.f32.gmra.mxu0 %v2148
        %v2326 = vpop.f32.mrf.mxu0
        %v2327 = vadd.f32 0.0, %v2326
        %v2328 = vpop.f32.mrf.mxu0
        %2329 = vmatprep.mubr.f32.mxu0 0.0
        %2330 = vmatmul.mubr.f32.gmra.mxu0 %v2149
        %v2331 = vpop.f32.mrf.mxu0
        %v2332 = vadd.f32 0.0, %v2331
        %v2333 = vpop.f32.mrf.mxu0
        %2334 = vmatprep.mubr.f32.mxu0 0.0
        %2335 = vmatmul.mubr.f32.gmra.mxu0 %v2150
        %v2336 = vpop.f32.mrf.mxu0
        %v2337 = vadd.f32 0.0, %v2336
        %v2338 = vpop.f32.mrf.mxu0
        %2339 = vmatprep.mubr.f32.mxu0 0.0
        %2340 = vmatmul.mubr.f32.gmra.mxu0 %v2151
        %v2341 = vpop.f32.mrf.mxu0
        %v2342 = vadd.f32 0.0, %v2341
        %v2343 = vpop.f32.mrf.mxu0
        %2344 = vmatprep.mubr.f32.mxu0 0.0
        %2345 = vmatmul.mubr.f32.gmra.mxu0 %v2152
        %v2346 = vpop.f32.mrf.mxu0
        %v2347 = vadd.f32 0.0, %v2346
        %v2348 = vpop.f32.mrf.mxu0
        %2349 = vmatprep.mubr.f32.mxu0 0.0
        %2350 = vmatmul.mubr.f32.gmra.mxu0 %v2153
        %v2351 = vpop.f32.mrf.mxu0
        %v2352 = vadd.f32 0.0, %v2351
        %v2353 = vpop.f32.mrf.mxu0
        %2354 = vmatprep.mubr.f32.mxu0 0.0
        %2355 = vmatmul.mubr.f32.gmra.mxu0 %v2154
        %v2356 = vpop.f32.mrf.mxu0
        %v2357 = vadd.f32 0.0, %v2356
        %v2358 = vpop.f32.mrf.mxu0
        %2359 = vmatprep.mubr.f32.mxu0 0.0
        %2360 = vmatmul.mubr.f32.gmra.mxu0 %v2155
        %v2361 = vpop.f32.mrf.mxu0
        %v2362 = vadd.f32 0.0, %v2361
        %v2363 = vpop.f32.mrf.mxu0
        %2364 = vmatprep.mubr.f32.mxu0 0.0
        %2365 = vmatmul.mubr.f32.gmra.mxu0 %v2156
        %v2366 = vpop.f32.mrf.mxu0
        %v2367 = vadd.f32 0.0, %v2366
        %v2368 = vpop.f32.mrf.mxu0
        %2369 = vmatprep.mubr.f32.mxu0 0.0
        %2370 = vmatmul.mubr.f32.gmra.mxu0 %v2157
        %v2371 = vpop.f32.mrf.mxu0
        %v2372 = vadd.f32 0.0, %v2371
        %v2373 = vpop.f32.mrf.mxu0
        %2374 = vmatprep.mubr.f32.mxu0 0.0
        %2375 = vmatmul.mubr.f32.gmra.mxu0 %v2158
        %v2376 = vpop.f32.mrf.mxu0
        %v2377 = vadd.f32 0.0, %v2376
        %v2378 = vpop.f32.mrf.mxu0
        %2379 = vmatprep.mubr.f32.mxu0 0.0
        %2380 = vmatmul.mubr.f32.gmra.mxu0 %v2159
        %v2381 = vpop.f32.mrf.mxu0
        %v2382 = vadd.f32 0.0, %v2381
        %v2383 = vpop.f32.mrf.mxu0
        %2384 = vmatprep.mubr.f32.mxu0 0.0
        %2385 = vmatmul.mubr.f32.gmra.mxu0 %v2160
        %v2386 = vpop.f32.mrf.mxu0
        %v2387 = vadd.f32 0.0, %v2386
        %v2388 = vpop.f32.mrf.mxu0
        %2389 = vmatprep.mubr.f32.mxu0 0.0
        %2390 = vmatmul.mubr.f32.gmra.mxu0 %v2161
        %v2391 = vpop.f32.mrf.mxu0
        %v2392 = vadd.f32 0.0, %v2391
        %v2393 = vpop.f32.mrf.mxu0
        %2394 = vmatprep.mubr.f32.mxu0 0.0
        %2395 = vmatmul.mubr.f32.gmra.mxu0 %v2162
        %v2396 = vpop.f32.mrf.mxu0
        %v2397 = vadd.f32 0.0, %v2396
        %v2398 = vpop.f32.mrf.mxu0
        %2399 = vmatprep.mubr.f32.mxu0 0.0
        %2400 = vmatmul.mubr.f32.gmra.mxu0 %v2163
        %v2401 = vpop.f32.mrf.mxu0
        %v2402 = vadd.f32 0.0, %v2401
        %v2403 = vpop.f32.mrf.mxu0
        %2404 = vdwg.mxu0
        %v2405 = vadd.f32 %v2099, %v2247
        %v2406 = vadd.f32 %v2100, %v2252
        %v2407 = vadd.f32 %v2101, %v2257
        %v2408 = vadd.f32 %v2102, %v2262
        %v2409 = vadd.f32 %v2103, %v2267
        %v2410 = vadd.f32 %v2104, %v2272
        %v2411 = vadd.f32 %v2105, %v2277
        %v2412 = vadd.f32 %v2106, %v2282
        %v2413 = vadd.f32 %v2107, %v2287
        %v2414 = vadd.f32 %v2108, %v2292
        %v2415 = vadd.f32 %v2109, %v2297
        %v2416 = vadd.f32 %v2110, %v2302
        %v2417 = vadd.f32 %v2111, %v2307
        %v2418 = vadd.f32 %v2112, %v2312
        %v2419 = vadd.f32 %v2113, %v2317
        %v2420 = vadd.f32 %v2114, %v2322
        %v2421 = vadd.f32 %v2115, %v2327
        %v2422 = vadd.f32 %v2116, %v2332
        %v2423 = vadd.f32 %v2117, %v2337
        %v2424 = vadd.f32 %v2118, %v2342
        %v2425 = vadd.f32 %v2119, %v2347
        %v2426 = vadd.f32 %v2120, %v2352
        %v2427 = vadd.f32 %v2121, %v2357
        %v2428 = vadd.f32 %v2122, %v2362
        %v2429 = vadd.f32 %v2123, %v2367
        %v2430 = vadd.f32 %v2124, %v2372
        %v2431 = vadd.f32 %v2125, %v2377
        %v2432 = vadd.f32 %v2126, %v2382
        %v2433 = vadd.f32 %v2127, %v2387
        %v2434 = vadd.f32 %v2128, %v2392
        %v2435 = vadd.f32 %v2129, %v2397
        %v2436 = vadd.f32 %v2130, %v2402
        %v2437 = vld [vmem:[%s2131 + $0x8] sm:$0xff]
        %v2438 = vld [vmem:[%s2131 + $0x10] sm:$0xff]
        %v2439 = vld [vmem:[%s2131 + $0x28] sm:$0xff]
        %v2440 = vld [vmem:[%s2131 + $0x30] sm:$0xff]
        %v2441 = vld [vmem:[%s2131 + $0x48] sm:$0xff]
        %v2442 = vld [vmem:[%s2131 + $0x50] sm:$0xff]
        %v2443 = vld [vmem:[%s2131 + $0x68] sm:$0xff]
        %v2444 = vld [vmem:[%s2131 + $0x70] sm:$0xff]
        %v2445 = vld [vmem:[%s2131 + $0x88] sm:$0xff]
        %v2446 = vld [vmem:[%s2131 + $0x90] sm:$0xff]
        %v2447 = vld [vmem:[%s2131 + $0xa8] sm:$0xff]
        %v2448 = vld [vmem:[%s2131 + $0xb0] sm:$0xff]
        %v2449 = vld [vmem:[%s2131 + $0xc8] sm:$0xff]
        %v2450 = vld [vmem:[%s2131 + $0xd0] sm:$0xff]
        %v2451 = vld [vmem:[%s2131 + $0xe8] sm:$0xff]
        %v2452 = vld [vmem:[%s2131 + $0xf0] sm:$0xff]
        %v2453 = vld [vmem:[%s2131 + $0x108] sm:$0xff]
        %v2454 = vld [vmem:[%s2131 + $0x110] sm:$0xff]
        %v2455 = vld [vmem:[%s2131 + $0x128] sm:$0xff]
        %v2456 = vld [vmem:[%s2131 + $0x130] sm:$0xff]
        %v2457 = vld [vmem:[%s2131 + $0x148] sm:$0xff]
        %v2458 = vld [vmem:[%s2131 + $0x150] sm:$0xff]
        %v2459 = vld [vmem:[%s2131 + $0x168] sm:$0xff]
        %v2460 = vld [vmem:[%s2131 + $0x170] sm:$0xff]
        %v2461 = vld [vmem:[%s2131 + $0x188] sm:$0xff]
        %v2462 = vld [vmem:[%s2131 + $0x190] sm:$0xff]
        %v2463 = vld [vmem:[%s2131 + $0x1a8] sm:$0xff]
        %v2464 = vld [vmem:[%s2131 + $0x1b0] sm:$0xff]
        %v2465 = vld [vmem:[%s2131 + $0x1c8] sm:$0xff]
        %v2466 = vld [vmem:[%s2131 + $0x1d0] sm:$0xff]
        %v2467 = vld [vmem:[%s2131 + $0x1e8] sm:$0xff]
        %v2468 = vld [vmem:[%s2131 + $0x1f0] sm:$0xff]
        %v2469 = vld [vmem:[#allocation5 + $0x380] sm:$0xff]
        %v2470 = vld [vmem:[#allocation5 + $0x388] sm:$0xff]
        %v2471 = vld [vmem:[#allocation5 + $0x390] sm:$0xff]
        %v2472 = vld [vmem:[#allocation5 + $0x398] sm:$0xff]
        %v2473 = vld [vmem:[#allocation5 + $0x3a0] sm:$0xff]
        %v2474 = vld [vmem:[#allocation5 + $0x3a8] sm:$0xff]
        %v2475 = vld [vmem:[#allocation5 + $0x3b0] sm:$0xff]
        %v2476 = vld [vmem:[#allocation5 + $0x3b8] sm:$0xff]
        %v2477 = vld [vmem:[#allocation5 + $0x3c0] sm:$0xff]
        %v2478 = vld [vmem:[#allocation5 + $0x3c8] sm:$0xff]
        %v2479 = vld [vmem:[#allocation5 + $0x3d0] sm:$0xff]
        %v2480 = vld [vmem:[#allocation5 + $0x3d8] sm:$0xff]
        %v2481 = vld [vmem:[#allocation5 + $0x3e0] sm:$0xff]
        %v2482 = vld [vmem:[#allocation5 + $0x3e8] sm:$0xff]
        %v2483 = vld [vmem:[#allocation5 + $0x3f0] sm:$0xff]
        %v2484 = vld [vmem:[#allocation5 + $0x3f8] sm:$0xff]
        %2485 = vmatprep.subr.mxu0 0.0
        %2486 = vmatpush1.msra.mxu0 %v2484
        %2487 = vmatprep.subr.mxu0 0.0
        %2488 = vmatpush1.msra.mxu0 %v2483
        %2489 = vmatprep.subr.mxu0 0.0
        %2490 = vmatpush1.msra.mxu0 %v2482
        %2491 = vmatprep.subr.mxu0 0.0
        %2492 = vmatpush1.msra.mxu0 %v2481
        %2493 = vmatprep.subr.mxu0 0.0
        %2494 = vmatpush1.msra.mxu0 %v2480
        %2495 = vmatprep.subr.mxu0 0.0
        %2496 = vmatpush1.msra.mxu0 %v2479
        %2497 = vmatprep.subr.mxu0 0.0
        %2498 = vmatpush1.msra.mxu0 %v2478
        %2499 = vmatprep.subr.mxu0 0.0
        %2500 = vmatpush1.msra.mxu0 %v2477
        %2501 = vmatprep.subr.mxu0 0.0
        %2502 = vmatpush1.msra.mxu0 %v2476
        %2503 = vmatprep.subr.mxu0 0.0
        %2504 = vmatpush1.msra.mxu0 %v2475
        %2505 = vmatprep.subr.mxu0 0.0
        %2506 = vmatpush1.msra.mxu0 %v2474
        %2507 = vmatprep.subr.mxu0 0.0
        %2508 = vmatpush1.msra.mxu0 %v2473
        %2509 = vmatprep.subr.mxu0 0.0
        %2510 = vmatpush1.msra.mxu0 %v2472
        %2511 = vmatprep.subr.mxu0 0.0
        %2512 = vmatpush1.msra.mxu0 %v2471
        %2513 = vmatprep.subr.mxu0 0.0
        %2514 = vmatpush1.msra.mxu0 %v2470
        %2515 = vmatprep.subr.mxu0 0.0
        %2516 = vmatpush1.msra.mxu0 %v2469
        %2517 = vmatprep.subr.mxu0 0.0
        %2518 = vmatpush2.msra.mxu0 0.0
        %2519 = vmatprep.subr.mxu0 0.0
        %2520 = vmatpush2.msra.mxu0 0.0
        %2521 = vmatprep.subr.mxu0 0.0
        %2522 = vmatpush2.msra.mxu0 0.0
        %2523 = vmatprep.subr.mxu0 0.0
        %2524 = vmatpush2.msra.mxu0 0.0
        %2525 = vmatprep.subr.mxu0 0.0
        %2526 = vmatpush2.msra.mxu0 0.0
        %2527 = vmatprep.subr.mxu0 0.0
        %2528 = vmatpush2.msra.mxu0 0.0
        %2529 = vmatprep.subr.mxu0 0.0
        %2530 = vmatpush2.msra.mxu0 0.0
        %2531 = vmatprep.subr.mxu0 0.0
        %2532 = vmatpush2.msra.mxu0 0.0
        %2533 = vmatprep.subr.mxu0 0.0
        %2534 = vmatpush2.msra.mxu0 0.0
        %2535 = vmatprep.subr.mxu0 0.0
        %2536 = vmatpush2.msra.mxu0 0.0
        %2537 = vmatprep.subr.mxu0 0.0
        %2538 = vmatpush2.msra.mxu0 0.0
        %2539 = vmatprep.subr.mxu0 0.0
        %2540 = vmatpush2.msra.mxu0 0.0
        %2541 = vmatprep.subr.mxu0 0.0
        %2542 = vmatpush2.msra.mxu0 0.0
        %2543 = vmatprep.subr.mxu0 0.0
        %2544 = vmatpush2.msra.mxu0 0.0
        %2545 = vmatprep.subr.mxu0 0.0
        %2546 = vmatpush2.msra.mxu0 0.0
        %2547 = vmatprep.subr.mxu0 0.0
        %2548 = vmatpush2.msra.mxu0 0.0
        %2549 = vmatprep.mubr.f32.mxu0 0.0
        %2550 = vmatmul.mubr.f32.gmra.mxu0 %v2437
        %v2551 = vpop.f32.mrf.mxu0
        %v2552 = vadd.f32 0.0, %v2551
        %v2553 = vpop.f32.mrf.mxu0
        %2554 = vmatprep.mubr.f32.mxu0 0.0
        %2555 = vmatmul.mubr.f32.gmra.mxu0 %v2438
        %v2556 = vpop.f32.mrf.mxu0
        %v2557 = vadd.f32 0.0, %v2556
        %v2558 = vpop.f32.mrf.mxu0
        %2559 = vmatprep.mubr.f32.mxu0 0.0
        %2560 = vmatmul.mubr.f32.gmra.mxu0 %v2439
        %v2561 = vpop.f32.mrf.mxu0
        %v2562 = vadd.f32 0.0, %v2561
        %v2563 = vpop.f32.mrf.mxu0
        %2564 = vmatprep.mubr.f32.mxu0 0.0
        %2565 = vmatmul.mubr.f32.gmra.mxu0 %v2440
        %v2566 = vpop.f32.mrf.mxu0
        %v2567 = vadd.f32 0.0, %v2566
        %v2568 = vpop.f32.mrf.mxu0
        %2569 = vmatprep.mubr.f32.mxu0 0.0
        %2570 = vmatmul.mubr.f32.gmra.mxu0 %v2441
        %v2571 = vpop.f32.mrf.mxu0
        %v2572 = vadd.f32 0.0, %v2571
        %v2573 = vpop.f32.mrf.mxu0
        %2574 = vmatprep.mubr.f32.mxu0 0.0
        %2575 = vmatmul.mubr.f32.gmra.mxu0 %v2442
        %v2576 = vpop.f32.mrf.mxu0
        %v2577 = vadd.f32 0.0, %v2576
        %v2578 = vpop.f32.mrf.mxu0
        %2579 = vmatprep.mubr.f32.mxu0 0.0
        %2580 = vmatmul.mubr.f32.gmra.mxu0 %v2443
        %v2581 = vpop.f32.mrf.mxu0
        %v2582 = vadd.f32 0.0, %v2581
        %v2583 = vpop.f32.mrf.mxu0
        %2584 = vmatprep.mubr.f32.mxu0 0.0
        %2585 = vmatmul.mubr.f32.gmra.mxu0 %v2444
        %v2586 = vpop.f32.mrf.mxu0
        %v2587 = vadd.f32 0.0, %v2586
        %v2588 = vpop.f32.mrf.mxu0
        %2589 = vmatprep.mubr.f32.mxu0 0.0
        %2590 = vmatmul.mubr.f32.gmra.mxu0 %v2445
        %v2591 = vpop.f32.mrf.mxu0
        %v2592 = vadd.f32 0.0, %v2591
        %v2593 = vpop.f32.mrf.mxu0
        %2594 = vmatprep.mubr.f32.mxu0 0.0
        %2595 = vmatmul.mubr.f32.gmra.mxu0 %v2446
        %v2596 = vpop.f32.mrf.mxu0
        %v2597 = vadd.f32 0.0, %v2596
        %v2598 = vpop.f32.mrf.mxu0
        %2599 = vmatprep.mubr.f32.mxu0 0.0
        %2600 = vmatmul.mubr.f32.gmra.mxu0 %v2447
        %v2601 = vpop.f32.mrf.mxu0
        %v2602 = vadd.f32 0.0, %v2601
        %v2603 = vpop.f32.mrf.mxu0
        %2604 = vmatprep.mubr.f32.mxu0 0.0
        %2605 = vmatmul.mubr.f32.gmra.mxu0 %v2448
        %v2606 = vpop.f32.mrf.mxu0
        %v2607 = vadd.f32 0.0, %v2606
        %v2608 = vpop.f32.mrf.mxu0
        %2609 = vmatprep.mubr.f32.mxu0 0.0
        %2610 = vmatmul.mubr.f32.gmra.mxu0 %v2449
        %v2611 = vpop.f32.mrf.mxu0
        %v2612 = vadd.f32 0.0, %v2611
        %v2613 = vpop.f32.mrf.mxu0
        %2614 = vmatprep.mubr.f32.mxu0 0.0
        %2615 = vmatmul.mubr.f32.gmra.mxu0 %v2450
        %v2616 = vpop.f32.mrf.mxu0
        %v2617 = vadd.f32 0.0, %v2616
        %v2618 = vpop.f32.mrf.mxu0
        %2619 = vmatprep.mubr.f32.mxu0 0.0
        %2620 = vmatmul.mubr.f32.gmra.mxu0 %v2451
        %v2621 = vpop.f32.mrf.mxu0
        %v2622 = vadd.f32 0.0, %v2621
        %v2623 = vpop.f32.mrf.mxu0
        %2624 = vmatprep.mubr.f32.mxu0 0.0
        %2625 = vmatmul.mubr.f32.gmra.mxu0 %v2452
        %v2626 = vpop.f32.mrf.mxu0
        %v2627 = vadd.f32 0.0, %v2626
        %v2628 = vpop.f32.mrf.mxu0
        %2629 = vmatprep.mubr.f32.mxu0 0.0
        %2630 = vmatmul.mubr.f32.gmra.mxu0 %v2453
        %v2631 = vpop.f32.mrf.mxu0
        %v2632 = vadd.f32 0.0, %v2631
        %v2633 = vpop.f32.mrf.mxu0
        %2634 = vmatprep.mubr.f32.mxu0 0.0
        %2635 = vmatmul.mubr.f32.gmra.mxu0 %v2454
        %v2636 = vpop.f32.mrf.mxu0
        %v2637 = vadd.f32 0.0, %v2636
        %v2638 = vpop.f32.mrf.mxu0
        %2639 = vmatprep.mubr.f32.mxu0 0.0
        %2640 = vmatmul.mubr.f32.gmra.mxu0 %v2455
        %v2641 = vpop.f32.mrf.mxu0
        %v2642 = vadd.f32 0.0, %v2641
        %v2643 = vpop.f32.mrf.mxu0
        %2644 = vmatprep.mubr.f32.mxu0 0.0
        %2645 = vmatmul.mubr.f32.gmra.mxu0 %v2456
        %v2646 = vpop.f32.mrf.mxu0
        %v2647 = vadd.f32 0.0, %v2646
        %v2648 = vpop.f32.mrf.mxu0
        %2649 = vmatprep.mubr.f32.mxu0 0.0
        %2650 = vmatmul.mubr.f32.gmra.mxu0 %v2457
        %v2651 = vpop.f32.mrf.mxu0
        %v2652 = vadd.f32 0.0, %v2651
        %v2653 = vpop.f32.mrf.mxu0
        %2654 = vmatprep.mubr.f32.mxu0 0.0
        %2655 = vmatmul.mubr.f32.gmra.mxu0 %v2458
        %v2656 = vpop.f32.mrf.mxu0
        %v2657 = vadd.f32 0.0, %v2656
        %v2658 = vpop.f32.mrf.mxu0
        %2659 = vmatprep.mubr.f32.mxu0 0.0
        %2660 = vmatmul.mubr.f32.gmra.mxu0 %v2459
        %v2661 = vpop.f32.mrf.mxu0
        %v2662 = vadd.f32 0.0, %v2661
        %v2663 = vpop.f32.mrf.mxu0
        %2664 = vmatprep.mubr.f32.mxu0 0.0
        %2665 = vmatmul.mubr.f32.gmra.mxu0 %v2460
        %v2666 = vpop.f32.mrf.mxu0
        %v2667 = vadd.f32 0.0, %v2666
        %v2668 = vpop.f32.mrf.mxu0
        %2669 = vmatprep.mubr.f32.mxu0 0.0
        %2670 = vmatmul.mubr.f32.gmra.mxu0 %v2461
        %v2671 = vpop.f32.mrf.mxu0
        %v2672 = vadd.f32 0.0, %v2671
        %v2673 = vpop.f32.mrf.mxu0
        %2674 = vmatprep.mubr.f32.mxu0 0.0
        %2675 = vmatmul.mubr.f32.gmra.mxu0 %v2462
        %v2676 = vpop.f32.mrf.mxu0
        %v2677 = vadd.f32 0.0, %v2676
        %v2678 = vpop.f32.mrf.mxu0
        %2679 = vmatprep.mubr.f32.mxu0 0.0
        %2680 = vmatmul.mubr.f32.gmra.mxu0 %v2463
        %v2681 = vpop.f32.mrf.mxu0
        %v2682 = vadd.f32 0.0, %v2681
        %v2683 = vpop.f32.mrf.mxu0
        %2684 = vmatprep.mubr.f32.mxu0 0.0
        %2685 = vmatmul.mubr.f32.gmra.mxu0 %v2464
        %v2686 = vpop.f32.mrf.mxu0
        %v2687 = vadd.f32 0.0, %v2686
        %v2688 = vpop.f32.mrf.mxu0
        %2689 = vmatprep.mubr.f32.mxu0 0.0
        %2690 = vmatmul.mubr.f32.gmra.mxu0 %v2465
        %v2691 = vpop.f32.mrf.mxu0
        %v2692 = vadd.f32 0.0, %v2691
        %v2693 = vpop.f32.mrf.mxu0
        %2694 = vmatprep.mubr.f32.mxu0 0.0
        %2695 = vmatmul.mubr.f32.gmra.mxu0 %v2466
        %v2696 = vpop.f32.mrf.mxu0
        %v2697 = vadd.f32 0.0, %v2696
        %v2698 = vpop.f32.mrf.mxu0
        %2699 = vmatprep.mubr.f32.mxu0 0.0
        %2700 = vmatmul.mubr.f32.gmra.mxu0 %v2467
        %v2701 = vpop.f32.mrf.mxu0
        %v2702 = vadd.f32 0.0, %v2701
        %v2703 = vpop.f32.mrf.mxu0
        %2704 = vmatprep.mubr.f32.mxu0 0.0
        %2705 = vmatmul.mubr.f32.gmra.mxu0 %v2468
        %v2706 = vpop.f32.mrf.mxu0
        %v2707 = vadd.f32 0.0, %v2706
        %v2708 = vpop.f32.mrf.mxu0
        %2709 = vdwg.mxu0
        %v2710 = vadd.f32 %v2405, %v2552
        %v2711 = vadd.f32 %v2406, %v2557
        %v2712 = vadd.f32 %v2407, %v2562
        %v2713 = vadd.f32 %v2408, %v2567
        %v2714 = vadd.f32 %v2409, %v2572
        %v2715 = vadd.f32 %v2410, %v2577
        %v2716 = vadd.f32 %v2411, %v2582
        %v2717 = vadd.f32 %v2412, %v2587
        %v2718 = vadd.f32 %v2413, %v2592
        %v2719 = vadd.f32 %v2414, %v2597
        %v2720 = vadd.f32 %v2415, %v2602
        %v2721 = vadd.f32 %v2416, %v2607
        %v2722 = vadd.f32 %v2417, %v2612
        %v2723 = vadd.f32 %v2418, %v2617
        %v2724 = vadd.f32 %v2419, %v2622
        %v2725 = vadd.f32 %v2420, %v2627
        %v2726 = vadd.f32 %v2421, %v2632
        %v2727 = vadd.f32 %v2422, %v2637
        %v2728 = vadd.f32 %v2423, %v2642
        %v2729 = vadd.f32 %v2424, %v2647
        %v2730 = vadd.f32 %v2425, %v2652
        %v2731 = vadd.f32 %v2426, %v2657
        %v2732 = vadd.f32 %v2427, %v2662
        %v2733 = vadd.f32 %v2428, %v2667
        %v2734 = vadd.f32 %v2429, %v2672
        %v2735 = vadd.f32 %v2430, %v2677
        %v2736 = vadd.f32 %v2431, %v2682
        %v2737 = vadd.f32 %v2432, %v2687
        %v2738 = vadd.f32 %v2433, %v2692
        %v2739 = vadd.f32 %v2434, %v2697
        %v2740 = vadd.f32 %v2435, %v2702
        %v2741 = vadd.f32 %v2436, %v2707
        %v2742 = vld [vmem:[%s2131 + $0x9] sm:$0xff]
        %v2743 = vld [vmem:[%s2131 + $0x11] sm:$0xff]
        %v2744 = vld [vmem:[%s2131 + $0x29] sm:$0xff]
        %v2745 = vld [vmem:[%s2131 + $0x31] sm:$0xff]
        %v2746 = vld [vmem:[%s2131 + $0x49] sm:$0xff]
        %v2747 = vld [vmem:[%s2131 + $0x51] sm:$0xff]
        %v2748 = vld [vmem:[%s2131 + $0x69] sm:$0xff]
        %v2749 = vld [vmem:[%s2131 + $0x71] sm:$0xff]
        %v2750 = vld [vmem:[%s2131 + $0x89] sm:$0xff]
        %v2751 = vld [vmem:[%s2131 + $0x91] sm:$0xff]
        %v2752 = vld [vmem:[%s2131 + $0xa9] sm:$0xff]
        %v2753 = vld [vmem:[%s2131 + $0xb1] sm:$0xff]
        %v2754 = vld [vmem:[%s2131 + $0xc9] sm:$0xff]
        %v2755 = vld [vmem:[%s2131 + $0xd1] sm:$0xff]
        %v2756 = vld [vmem:[%s2131 + $0xe9] sm:$0xff]
        %v2757 = vld [vmem:[%s2131 + $0xf1] sm:$0xff]
        %v2758 = vld [vmem:[%s2131 + $0x109] sm:$0xff]
        %v2759 = vld [vmem:[%s2131 + $0x111] sm:$0xff]
        %v2760 = vld [vmem:[%s2131 + $0x129] sm:$0xff]
        %v2761 = vld [vmem:[%s2131 + $0x131] sm:$0xff]
        %v2762 = vld [vmem:[%s2131 + $0x149] sm:$0xff]
        %v2763 = vld [vmem:[%s2131 + $0x151] sm:$0xff]
        %v2764 = vld [vmem:[%s2131 + $0x169] sm:$0xff]
        %v2765 = vld [vmem:[%s2131 + $0x171] sm:$0xff]
        %v2766 = vld [vmem:[%s2131 + $0x189] sm:$0xff]
        %v2767 = vld [vmem:[%s2131 + $0x191] sm:$0xff]
        %v2768 = vld [vmem:[%s2131 + $0x1a9] sm:$0xff]
        %v2769 = vld [vmem:[%s2131 + $0x1b1] sm:$0xff]
        %v2770 = vld [vmem:[%s2131 + $0x1c9] sm:$0xff]
        %v2771 = vld [vmem:[%s2131 + $0x1d1] sm:$0xff]
        %v2772 = vld [vmem:[%s2131 + $0x1e9] sm:$0xff]
        %v2773 = vld [vmem:[%s2131 + $0x1f1] sm:$0xff]
        %v2774 = vld [vmem:[#allocation5 + $0x400] sm:$0xff]
        %v2775 = vld [vmem:[#allocation5 + $0x408] sm:$0xff]
        %v2776 = vld [vmem:[#allocation5 + $0x410] sm:$0xff]
        %v2777 = vld [vmem:[#allocation5 + $0x418] sm:$0xff]
        %v2778 = vld [vmem:[#allocation5 + $0x420] sm:$0xff]
        %v2779 = vld [vmem:[#allocation5 + $0x428] sm:$0xff]
        %v2780 = vld [vmem:[#allocation5 + $0x430] sm:$0xff]
        %v2781 = vld [vmem:[#allocation5 + $0x438] sm:$0xff]
        %v2782 = vld [vmem:[#allocation5 + $0x440] sm:$0xff]
        %v2783 = vld [vmem:[#allocation5 + $0x448] sm:$0xff]
        %v2784 = vld [vmem:[#allocation5 + $0x450] sm:$0xff]
        %v2785 = vld [vmem:[#allocation5 + $0x458] sm:$0xff]
        %v2786 = vld [vmem:[#allocation5 + $0x460] sm:$0xff]
        %v2787 = vld [vmem:[#allocation5 + $0x468] sm:$0xff]
        %v2788 = vld [vmem:[#allocation5 + $0x470] sm:$0xff]
        %v2789 = vld [vmem:[#allocation5 + $0x478] sm:$0xff]
        %2790 = vmatprep.subr.mxu0 0.0
        %2791 = vmatpush1.msra.mxu0 %v2789
        %2792 = vmatprep.subr.mxu0 0.0
        %2793 = vmatpush1.msra.mxu0 %v2788
        %2794 = vmatprep.subr.mxu0 0.0
        %2795 = vmatpush1.msra.mxu0 %v2787
        %2796 = vmatprep.subr.mxu0 0.0
        %2797 = vmatpush1.msra.mxu0 %v2786
        %2798 = vmatprep.subr.mxu0 0.0
        %2799 = vmatpush1.msra.mxu0 %v2785
        %2800 = vmatprep.subr.mxu0 0.0
        %2801 = vmatpush1.msra.mxu0 %v2784
        %2802 = vmatprep.subr.mxu0 0.0
        %2803 = vmatpush1.msra.mxu0 %v2783
        %2804 = vmatprep.subr.mxu0 0.0
        %2805 = vmatpush1.msra.mxu0 %v2782
        %2806 = vmatprep.subr.mxu0 0.0
        %2807 = vmatpush1.msra.mxu0 %v2781
        %2808 = vmatprep.subr.mxu0 0.0
        %2809 = vmatpush1.msra.mxu0 %v2780
        %2810 = vmatprep.subr.mxu0 0.0
        %2811 = vmatpush1.msra.mxu0 %v2779
        %2812 = vmatprep.subr.mxu0 0.0
        %2813 = vmatpush1.msra.mxu0 %v2778
        %2814 = vmatprep.subr.mxu0 0.0
        %2815 = vmatpush1.msra.mxu0 %v2777
        %2816 = vmatprep.subr.mxu0 0.0
        %2817 = vmatpush1.msra.mxu0 %v2776
        %2818 = vmatprep.subr.mxu0 0.0
        %2819 = vmatpush1.msra.mxu0 %v2775
        %2820 = vmatprep.subr.mxu0 0.0
        %2821 = vmatpush1.msra.mxu0 %v2774
        %2822 = vmatprep.subr.mxu0 0.0
        %2823 = vmatpush2.msra.mxu0 0.0
        %2824 = vmatprep.subr.mxu0 0.0
        %2825 = vmatpush2.msra.mxu0 0.0
        %2826 = vmatprep.subr.mxu0 0.0
        %2827 = vmatpush2.msra.mxu0 0.0
        %2828 = vmatprep.subr.mxu0 0.0
        %2829 = vmatpush2.msra.mxu0 0.0
        %2830 = vmatprep.subr.mxu0 0.0
        %2831 = vmatpush2.msra.mxu0 0.0
        %2832 = vmatprep.subr.mxu0 0.0
        %2833 = vmatpush2.msra.mxu0 0.0
        %2834 = vmatprep.subr.mxu0 0.0
        %2835 = vmatpush2.msra.mxu0 0.0
        %2836 = vmatprep.subr.mxu0 0.0
        %2837 = vmatpush2.msra.mxu0 0.0
        %2838 = vmatprep.subr.mxu0 0.0
        %2839 = vmatpush2.msra.mxu0 0.0
        %2840 = vmatprep.subr.mxu0 0.0
        %2841 = vmatpush2.msra.mxu0 0.0
        %2842 = vmatprep.subr.mxu0 0.0
        %2843 = vmatpush2.msra.mxu0 0.0
        %2844 = vmatprep.subr.mxu0 0.0
        %2845 = vmatpush2.msra.mxu0 0.0
        %2846 = vmatprep.subr.mxu0 0.0
        %2847 = vmatpush2.msra.mxu0 0.0
        %2848 = vmatprep.subr.mxu0 0.0
        %2849 = vmatpush2.msra.mxu0 0.0
        %2850 = vmatprep.subr.mxu0 0.0
        %2851 = vmatpush2.msra.mxu0 0.0
        %2852 = vmatprep.subr.mxu0 0.0
        %2853 = vmatpush2.msra.mxu0 0.0
        %2854 = vmatprep.mubr.f32.mxu0 0.0
        %2855 = vmatmul.mubr.f32.gmra.mxu0 %v2742
        %v2856 = vpop.f32.mrf.mxu0
        %v2857 = vadd.f32 0.0, %v2856
        %v2858 = vpop.f32.mrf.mxu0
        %2859 = vmatprep.mubr.f32.mxu0 0.0
        %2860 = vmatmul.mubr.f32.gmra.mxu0 %v2743
        %v2861 = vpop.f32.mrf.mxu0
        %v2862 = vadd.f32 0.0, %v2861
        %v2863 = vpop.f32.mrf.mxu0
        %2864 = vmatprep.mubr.f32.mxu0 0.0
        %2865 = vmatmul.mubr.f32.gmra.mxu0 %v2744
        %v2866 = vpop.f32.mrf.mxu0
        %v2867 = vadd.f32 0.0, %v2866
        %v2868 = vpop.f32.mrf.mxu0
        %2869 = vmatprep.mubr.f32.mxu0 0.0
        %2870 = vmatmul.mubr.f32.gmra.mxu0 %v2745
        %v2871 = vpop.f32.mrf.mxu0
        %v2872 = vadd.f32 0.0, %v2871
        %v2873 = vpop.f32.mrf.mxu0
        %2874 = vmatprep.mubr.f32.mxu0 0.0
        %2875 = vmatmul.mubr.f32.gmra.mxu0 %v2746
        %v2876 = vpop.f32.mrf.mxu0
        %v2877 = vadd.f32 0.0, %v2876
        %v2878 = vpop.f32.mrf.mxu0
        %2879 = vmatprep.mubr.f32.mxu0 0.0
        %2880 = vmatmul.mubr.f32.gmra.mxu0 %v2747
        %v2881 = vpop.f32.mrf.mxu0
        %v2882 = vadd.f32 0.0, %v2881
        %v2883 = vpop.f32.mrf.mxu0
        %2884 = vmatprep.mubr.f32.mxu0 0.0
        %2885 = vmatmul.mubr.f32.gmra.mxu0 %v2748
        %v2886 = vpop.f32.mrf.mxu0
        %v2887 = vadd.f32 0.0, %v2886
        %v2888 = vpop.f32.mrf.mxu0
        %2889 = vmatprep.mubr.f32.mxu0 0.0
        %2890 = vmatmul.mubr.f32.gmra.mxu0 %v2749
        %v2891 = vpop.f32.mrf.mxu0
        %v2892 = vadd.f32 0.0, %v2891
        %v2893 = vpop.f32.mrf.mxu0
        %2894 = vmatprep.mubr.f32.mxu0 0.0
        %2895 = vmatmul.mubr.f32.gmra.mxu0 %v2750
        %v2896 = vpop.f32.mrf.mxu0
        %v2897 = vadd.f32 0.0, %v2896
        %v2898 = vpop.f32.mrf.mxu0
        %2899 = vmatprep.mubr.f32.mxu0 0.0
        %2900 = vmatmul.mubr.f32.gmra.mxu0 %v2751
        %v2901 = vpop.f32.mrf.mxu0
        %v2902 = vadd.f32 0.0, %v2901
        %v2903 = vpop.f32.mrf.mxu0
        %2904 = vmatprep.mubr.f32.mxu0 0.0
        %2905 = vmatmul.mubr.f32.gmra.mxu0 %v2752
        %v2906 = vpop.f32.mrf.mxu0
        %v2907 = vadd.f32 0.0, %v2906
        %v2908 = vpop.f32.mrf.mxu0
        %2909 = vmatprep.mubr.f32.mxu0 0.0
        %2910 = vmatmul.mubr.f32.gmra.mxu0 %v2753
        %v2911 = vpop.f32.mrf.mxu0
        %v2912 = vadd.f32 0.0, %v2911
        %v2913 = vpop.f32.mrf.mxu0
        %2914 = vmatprep.mubr.f32.mxu0 0.0
        %2915 = vmatmul.mubr.f32.gmra.mxu0 %v2754
        %v2916 = vpop.f32.mrf.mxu0
        %v2917 = vadd.f32 0.0, %v2916
        %v2918 = vpop.f32.mrf.mxu0
        %2919 = vmatprep.mubr.f32.mxu0 0.0
        %2920 = vmatmul.mubr.f32.gmra.mxu0 %v2755
        %v2921 = vpop.f32.mrf.mxu0
        %v2922 = vadd.f32 0.0, %v2921
        %v2923 = vpop.f32.mrf.mxu0
        %2924 = vmatprep.mubr.f32.mxu0 0.0
        %2925 = vmatmul.mubr.f32.gmra.mxu0 %v2756
        %v2926 = vpop.f32.mrf.mxu0
        %v2927 = vadd.f32 0.0, %v2926
        %v2928 = vpop.f32.mrf.mxu0
        %2929 = vmatprep.mubr.f32.mxu0 0.0
        %2930 = vmatmul.mubr.f32.gmra.mxu0 %v2757
        %v2931 = vpop.f32.mrf.mxu0
        %v2932 = vadd.f32 0.0, %v2931
        %v2933 = vpop.f32.mrf.mxu0
        %2934 = vmatprep.mubr.f32.mxu0 0.0
        %2935 = vmatmul.mubr.f32.gmra.mxu0 %v2758
        %v2936 = vpop.f32.mrf.mxu0
        %v2937 = vadd.f32 0.0, %v2936
        %v2938 = vpop.f32.mrf.mxu0
        %2939 = vmatprep.mubr.f32.mxu0 0.0
        %2940 = vmatmul.mubr.f32.gmra.mxu0 %v2759
        %v2941 = vpop.f32.mrf.mxu0
        %v2942 = vadd.f32 0.0, %v2941
        %v2943 = vpop.f32.mrf.mxu0
        %2944 = vmatprep.mubr.f32.mxu0 0.0
        %2945 = vmatmul.mubr.f32.gmra.mxu0 %v2760
        %v2946 = vpop.f32.mrf.mxu0
        %v2947 = vadd.f32 0.0, %v2946
        %v2948 = vpop.f32.mrf.mxu0
        %2949 = vmatprep.mubr.f32.mxu0 0.0
        %2950 = vmatmul.mubr.f32.gmra.mxu0 %v2761
        %v2951 = vpop.f32.mrf.mxu0
        %v2952 = vadd.f32 0.0, %v2951
        %v2953 = vpop.f32.mrf.mxu0
        %2954 = vmatprep.mubr.f32.mxu0 0.0
        %2955 = vmatmul.mubr.f32.gmra.mxu0 %v2762
        %v2956 = vpop.f32.mrf.mxu0
        %v2957 = vadd.f32 0.0, %v2956
        %v2958 = vpop.f32.mrf.mxu0
        %2959 = vmatprep.mubr.f32.mxu0 0.0
        %2960 = vmatmul.mubr.f32.gmra.mxu0 %v2763
        %v2961 = vpop.f32.mrf.mxu0
        %v2962 = vadd.f32 0.0, %v2961
        %v2963 = vpop.f32.mrf.mxu0
        %2964 = vmatprep.mubr.f32.mxu0 0.0
        %2965 = vmatmul.mubr.f32.gmra.mxu0 %v2764
        %v2966 = vpop.f32.mrf.mxu0
        %v2967 = vadd.f32 0.0, %v2966
        %v2968 = vpop.f32.mrf.mxu0
        %2969 = vmatprep.mubr.f32.mxu0 0.0
        %2970 = vmatmul.mubr.f32.gmra.mxu0 %v2765
        %v2971 = vpop.f32.mrf.mxu0
        %v2972 = vadd.f32 0.0, %v2971
        %v2973 = vpop.f32.mrf.mxu0
        %2974 = vmatprep.mubr.f32.mxu0 0.0
        %2975 = vmatmul.mubr.f32.gmra.mxu0 %v2766
        %v2976 = vpop.f32.mrf.mxu0
        %v2977 = vadd.f32 0.0, %v2976
        %v2978 = vpop.f32.mrf.mxu0
        %2979 = vmatprep.mubr.f32.mxu0 0.0
        %2980 = vmatmul.mubr.f32.gmra.mxu0 %v2767
        %v2981 = vpop.f32.mrf.mxu0
        %v2982 = vadd.f32 0.0, %v2981
        %v2983 = vpop.f32.mrf.mxu0
        %2984 = vmatprep.mubr.f32.mxu0 0.0
        %2985 = vmatmul.mubr.f32.gmra.mxu0 %v2768
        %v2986 = vpop.f32.mrf.mxu0
        %v2987 = vadd.f32 0.0, %v2986
        %v2988 = vpop.f32.mrf.mxu0
        %2989 = vmatprep.mubr.f32.mxu0 0.0
        %2990 = vmatmul.mubr.f32.gmra.mxu0 %v2769
        %v2991 = vpop.f32.mrf.mxu0
        %v2992 = vadd.f32 0.0, %v2991
        %v2993 = vpop.f32.mrf.mxu0
        %2994 = vmatprep.mubr.f32.mxu0 0.0
        %2995 = vmatmul.mubr.f32.gmra.mxu0 %v2770
        %v2996 = vpop.f32.mrf.mxu0
        %v2997 = vadd.f32 0.0, %v2996
        %v2998 = vpop.f32.mrf.mxu0
        %2999 = vmatprep.mubr.f32.mxu0 0.0
        %3000 = vmatmul.mubr.f32.gmra.mxu0 %v2771
        %v3001 = vpop.f32.mrf.mxu0
        %v3002 = vadd.f32 0.0, %v3001
        %v3003 = vpop.f32.mrf.mxu0
        %3004 = vmatprep.mubr.f32.mxu0 0.0
        %3005 = vmatmul.mubr.f32.gmra.mxu0 %v2772
        %v3006 = vpop.f32.mrf.mxu0
        %v3007 = vadd.f32 0.0, %v3006
        %v3008 = vpop.f32.mrf.mxu0
        %3009 = vmatprep.mubr.f32.mxu0 0.0
        %3010 = vmatmul.mubr.f32.gmra.mxu0 %v2773
        %v3011 = vpop.f32.mrf.mxu0
        %v3012 = vadd.f32 0.0, %v3011
        %v3013 = vpop.f32.mrf.mxu0
        %3014 = vdwg.mxu0
        %v3015 = vadd.f32 %v2710, %v2857
        %v3016 = vadd.f32 %v2711, %v2862
        %v3017 = vadd.f32 %v2712, %v2867
        %v3018 = vadd.f32 %v2713, %v2872
        %v3019 = vadd.f32 %v2714, %v2877
        %v3020 = vadd.f32 %v2715, %v2882
        %v3021 = vadd.f32 %v2716, %v2887
        %v3022 = vadd.f32 %v2717, %v2892
        %v3023 = vadd.f32 %v2718, %v2897
        %v3024 = vadd.f32 %v2719, %v2902
        %v3025 = vadd.f32 %v2720, %v2907
        %v3026 = vadd.f32 %v2721, %v2912
        %v3027 = vadd.f32 %v2722, %v2917
        %v3028 = vadd.f32 %v2723, %v2922
        %v3029 = vadd.f32 %v2724, %v2927
        %v3030 = vadd.f32 %v2725, %v2932
        %v3031 = vadd.f32 %v2726, %v2937
        %v3032 = vadd.f32 %v2727, %v2942
        %v3033 = vadd.f32 %v2728, %v2947
        %v3034 = vadd.f32 %v2729, %v2952
        %v3035 = vadd.f32 %v2730, %v2957
        %v3036 = vadd.f32 %v2731, %v2962
        %v3037 = vadd.f32 %v2732, %v2967
        %v3038 = vadd.f32 %v2733, %v2972
        %v3039 = vadd.f32 %v2734, %v2977
        %v3040 = vadd.f32 %v2735, %v2982
        %v3041 = vadd.f32 %v2736, %v2987
        %v3042 = vadd.f32 %v2737, %v2992
        %v3043 = vadd.f32 %v2738, %v2997
        %v3044 = vadd.f32 %v2739, %v3002
        %v3045 = vadd.f32 %v2740, %v3007
        %v3046 = vadd.f32 %v2741, %v3012
        %v3047 = vld [vmem:[%s2] sm:$0x1]
        %v3049 = vlaneseq
        %v3050 = vshrl.u32 %v3049, 7
        %v3051 = vsub.s32 0, %v3050
        %v3052 = vrot.slane %v3047, %v3051
        %v3054 = vmul.f32 %v3015, %v3052
        %v3055 = vmul.f32 %v3016, %v3052
        %v3056 = vmul.f32 %v3017, %v3052
        %v3057 = vmul.f32 %v3018, %v3052
        %v3058 = vmul.f32 %v3019, %v3052
        %v3059 = vmul.f32 %v3020, %v3052
        %v3060 = vmul.f32 %v3021, %v3052
        %v3061 = vmul.f32 %v3022, %v3052
        %v3062 = vmul.f32 %v3023, %v3052
        %v3063 = vmul.f32 %v3024, %v3052
        %v3064 = vmul.f32 %v3025, %v3052
        %v3065 = vmul.f32 %v3026, %v3052
        %v3066 = vmul.f32 %v3027, %v3052
        %v3067 = vmul.f32 %v3028, %v3052
        %v3068 = vmul.f32 %v3029, %v3052
        %v3069 = vmul.f32 %v3030, %v3052
        %v3070 = vmul.f32 %v3031, %v3052
        %v3071 = vmul.f32 %v3032, %v3052
        %v3072 = vmul.f32 %v3033, %v3052
        %v3073 = vmul.f32 %v3034, %v3052
        %v3074 = vmul.f32 %v3035, %v3052
        %v3075 = vmul.f32 %v3036, %v3052
        %v3076 = vmul.f32 %v3037, %v3052
        %v3077 = vmul.f32 %v3038, %v3052
        %v3078 = vmul.f32 %v3039, %v3052
        %v3079 = vmul.f32 %v3040, %v3052
        %v3080 = vmul.f32 %v3041, %v3052
        %v3081 = vmul.f32 %v3042, %v3052
        %v3082 = vmul.f32 %v3043, %v3052
        %v3083 = vmul.f32 %v3044, %v3052
        %v3084 = vmul.f32 %v3045, %v3052
        %v3085 = vmul.f32 %v3046, %v3052
        %v3086 = vld [vmem:[%s3] sm:$0x1]
        %v3088 = vlaneseq
        %v3089 = vshrl.u32 %v3088, 7
        %v3090 = vsub.s32 0, %v3089
        %v3091 = vrot.slane %v3086, %v3090
        %v3093 = vadd.f32 %v3054, %v3091
        %v3094 = vadd.f32 %v3055, %v3091
        %v3095 = vadd.f32 %v3056, %v3091
        %v3096 = vadd.f32 %v3057, %v3091
        %v3097 = vadd.f32 %v3058, %v3091
        %v3098 = vadd.f32 %v3059, %v3091
        %v3099 = vadd.f32 %v3060, %v3091
        %v3100 = vadd.f32 %v3061, %v3091
        %v3101 = vadd.f32 %v3062, %v3091
        %v3102 = vadd.f32 %v3063, %v3091
        %v3103 = vadd.f32 %v3064, %v3091
        %v3104 = vadd.f32 %v3065, %v3091
        %v3105 = vadd.f32 %v3066, %v3091
        %v3106 = vadd.f32 %v3067, %v3091
        %v3107 = vadd.f32 %v3068, %v3091
        %v3108 = vadd.f32 %v3069, %v3091
        %v3109 = vadd.f32 %v3070, %v3091
        %v3110 = vadd.f32 %v3071, %v3091
        %v3111 = vadd.f32 %v3072, %v3091
        %v3112 = vadd.f32 %v3073, %v3091
        %v3113 = vadd.f32 %v3074, %v3091
        %v3114 = vadd.f32 %v3075, %v3091
        %v3115 = vadd.f32 %v3076, %v3091
        %v3116 = vadd.f32 %v3077, %v3091
        %v3117 = vadd.f32 %v3078, %v3091
        %v3118 = vadd.f32 %v3079, %v3091
        %v3119 = vadd.f32 %v3080, %v3091
        %v3120 = vadd.f32 %v3081, %v3091
        %v3121 = vadd.f32 %v3082, %v3091
        %v3122 = vadd.f32 %v3083, %v3091
        %v3123 = vadd.f32 %v3084, %v3091
        %v3124 = vadd.f32 %v3085, %v3091
        %vm3125 = vcmp.ge.f32.partialorder %v3093, 0.0
        %vm3126 = vcmp.ge.f32.partialorder %v3094, 0.0
        %vm3127 = vcmp.ge.f32.partialorder %v3095, 0.0
        %vm3128 = vcmp.ge.f32.partialorder %v3096, 0.0
        %vm3129 = vcmp.ge.f32.partialorder %v3097, 0.0
        %vm3130 = vcmp.ge.f32.partialorder %v3098, 0.0
        %vm3131 = vcmp.ge.f32.partialorder %v3099, 0.0
        %vm3132 = vcmp.ge.f32.partialorder %v3100, 0.0
        %vm3133 = vcmp.ge.f32.partialorder %v3101, 0.0
        %vm3134 = vcmp.ge.f32.partialorder %v3102, 0.0
        %vm3135 = vcmp.ge.f32.partialorder %v3103, 0.0
        %vm3136 = vcmp.ge.f32.partialorder %v3104, 0.0
        %vm3137 = vcmp.ge.f32.partialorder %v3105, 0.0
        %vm3138 = vcmp.ge.f32.partialorder %v3106, 0.0
        %vm3139 = vcmp.ge.f32.partialorder %v3107, 0.0
        %vm3140 = vcmp.ge.f32.partialorder %v3108, 0.0
        %vm3141 = vcmp.ge.f32.partialorder %v3109, 0.0
        %vm3142 = vcmp.ge.f32.partialorder %v3110, 0.0
        %vm3143 = vcmp.ge.f32.partialorder %v3111, 0.0
        %vm3144 = vcmp.ge.f32.partialorder %v3112, 0.0
        %vm3145 = vcmp.ge.f32.partialorder %v3113, 0.0
        %vm3146 = vcmp.ge.f32.partialorder %v3114, 0.0
        %vm3147 = vcmp.ge.f32.partialorder %v3115, 0.0
        %vm3148 = vcmp.ge.f32.partialorder %v3116, 0.0
        %vm3149 = vcmp.ge.f32.partialorder %v3117, 0.0
        %vm3150 = vcmp.ge.f32.partialorder %v3118, 0.0
        %vm3151 = vcmp.ge.f32.partialorder %v3119, 0.0
        %vm3152 = vcmp.ge.f32.partialorder %v3120, 0.0
        %vm3153 = vcmp.ge.f32.partialorder %v3121, 0.0
        %vm3154 = vcmp.ge.f32.partialorder %v3122, 0.0
        %vm3155 = vcmp.ge.f32.partialorder %v3123, 0.0
        %vm3156 = vcmp.ge.f32.partialorder %v3124, 0.0
        %v3157 = vmul.f32 %v3093, 0.2
        %v3158 = vmul.f32 %v3094, 0.2
        %v3159 = vmul.f32 %v3095, 0.2
        %v3160 = vmul.f32 %v3096, 0.2
        %v3161 = vmul.f32 %v3097, 0.2
        %v3162 = vmul.f32 %v3098, 0.2
        %v3163 = vmul.f32 %v3099, 0.2
        %v3164 = vmul.f32 %v3100, 0.2
        %v3165 = vmul.f32 %v3101, 0.2
        %v3166 = vmul.f32 %v3102, 0.2
        %v3167 = vmul.f32 %v3103, 0.2
        %v3168 = vmul.f32 %v3104, 0.2
        %v3169 = vmul.f32 %v3105, 0.2
        %v3170 = vmul.f32 %v3106, 0.2
        %v3171 = vmul.f32 %v3107, 0.2
        %v3172 = vmul.f32 %v3108, 0.2
        %v3173 = vmul.f32 %v3109, 0.2
        %v3174 = vmul.f32 %v3110, 0.2
        %v3175 = vmul.f32 %v3111, 0.2
        %v3176 = vmul.f32 %v3112, 0.2
        %v3177 = vmul.f32 %v3113, 0.2
        %v3178 = vmul.f32 %v3114, 0.2
        %v3179 = vmul.f32 %v3115, 0.2
        %v3180 = vmul.f32 %v3116, 0.2
        %v3181 = vmul.f32 %v3117, 0.2
        %v3182 = vmul.f32 %v3118, 0.2
        %v3183 = vmul.f32 %v3119, 0.2
        %v3184 = vmul.f32 %v3120, 0.2
        %v3185 = vmul.f32 %v3121, 0.2
        %v3186 = vmul.f32 %v3122, 0.2
        %v3187 = vmul.f32 %v3123, 0.2
        %v3188 = vmul.f32 %v3124, 0.2
        %v3189 = vsel %vm3125, %v3093, %v3157
        %v3190 = vsel %vm3126, %v3094, %v3158
        %v3191 = vsel %vm3127, %v3095, %v3159
        %v3192 = vsel %vm3128, %v3096, %v3160
        %v3193 = vsel %vm3129, %v3097, %v3161
        %v3194 = vsel %vm3130, %v3098, %v3162
        %v3195 = vsel %vm3131, %v3099, %v3163
        %v3196 = vsel %vm3132, %v3100, %v3164
        %v3197 = vsel %vm3133, %v3101, %v3165
        %v3198 = vsel %vm3134, %v3102, %v3166
        %v3199 = vsel %vm3135, %v3103, %v3167
        %v3200 = vsel %vm3136, %v3104, %v3168
        %v3201 = vsel %vm3137, %v3105, %v3169
        %v3202 = vsel %vm3138, %v3106, %v3170
        %v3203 = vsel %vm3139, %v3107, %v3171
        %v3204 = vsel %vm3140, %v3108, %v3172
        %v3205 = vsel %vm3141, %v3109, %v3173
        %v3206 = vsel %vm3142, %v3110, %v3174
        %v3207 = vsel %vm3143, %v3111, %v3175
        %v3208 = vsel %vm3144, %v3112, %v3176
        %v3209 = vsel %vm3145, %v3113, %v3177
        %v3210 = vsel %vm3146, %v3114, %v3178
        %v3211 = vsel %vm3147, %v3115, %v3179
        %v3212 = vsel %vm3148, %v3116, %v3180
        %v3213 = vsel %vm3149, %v3117, %v3181
        %v3214 = vsel %vm3150, %v3118, %v3182
        %v3215 = vsel %vm3151, %v3119, %v3183
        %v3216 = vsel %vm3152, %v3120, %v3184
        %v3217 = vsel %vm3153, %v3121, %v3185
        %v3218 = vsel %vm3154, %v3122, %v3186
        %v3219 = vsel %vm3155, %v3123, %v3187
        %v3220 = vsel %vm3156, %v3124, %v3188
        %s3221 = scalar_lea.vmem [#allocation3], 32
        %3222 = vst [vmem:[%s3221 + $0x8] sm:$0xff] %v3189
        %3223 = vst [vmem:[%s3221 + $0x10] sm:$0xff] %v3190
        %3224 = vst [vmem:[%s3221 + $0x28] sm:$0xff] %v3191
        %3225 = vst [vmem:[%s3221 + $0x30] sm:$0xff] %v3192
        %3226 = vst [vmem:[%s3221 + $0x48] sm:$0xff] %v3193
        %3227 = vst [vmem:[%s3221 + $0x50] sm:$0xff] %v3194
        %3228 = vst [vmem:[%s3221 + $0x68] sm:$0xff] %v3195
        %3229 = vst [vmem:[%s3221 + $0x70] sm:$0xff] %v3196
        %3230 = vst [vmem:[%s3221 + $0x88] sm:$0xff] %v3197
        %3231 = vst [vmem:[%s3221 + $0x90] sm:$0xff] %v3198
        %3232 = vst [vmem:[%s3221 + $0xa8] sm:$0xff] %v3199
        %3233 = vst [vmem:[%s3221 + $0xb0] sm:$0xff] %v3200
        %3234 = vst [vmem:[%s3221 + $0xc8] sm:$0xff] %v3201
        %3235 = vst [vmem:[%s3221 + $0xd0] sm:$0xff] %v3202
        %3236 = vst [vmem:[%s3221 + $0xe8] sm:$0xff] %v3203
        %3237 = vst [vmem:[%s3221 + $0xf0] sm:$0xff] %v3204
        %3238 = vst [vmem:[%s3221 + $0x108] sm:$0xff] %v3205
        %3239 = vst [vmem:[%s3221 + $0x110] sm:$0xff] %v3206
        %3240 = vst [vmem:[%s3221 + $0x128] sm:$0xff] %v3207
        %3241 = vst [vmem:[%s3221 + $0x130] sm:$0xff] %v3208
        %3242 = vst [vmem:[%s3221 + $0x148] sm:$0xff] %v3209
        %3243 = vst [vmem:[%s3221 + $0x150] sm:$0xff] %v3210
        %3244 = vst [vmem:[%s3221 + $0x168] sm:$0xff] %v3211
        %3245 = vst [vmem:[%s3221 + $0x170] sm:$0xff] %v3212
        %3246 = vst [vmem:[%s3221 + $0x188] sm:$0xff] %v3213
        %3247 = vst [vmem:[%s3221 + $0x190] sm:$0xff] %v3214
        %3248 = vst [vmem:[%s3221 + $0x1a8] sm:$0xff] %v3215
        %3249 = vst [vmem:[%s3221 + $0x1b0] sm:$0xff] %v3216
        %3250 = vst [vmem:[%s3221 + $0x1c8] sm:$0xff] %v3217
        %3251 = vst [vmem:[%s3221 + $0x1d0] sm:$0xff] %v3218
        %3252 = vst [vmem:[%s3221 + $0x1e8] sm:$0xff] %v3219
        %3253 = vst [vmem:[%s3221 + $0x1f0] sm:$0xff] %v3220
        %v3254 = vld [vmem:[#allocation3 + $0x7] sm:$0xff]
        %v3255 = vld [vmem:[#allocation3 + $0xf] sm:$0xff]
        %v3256 = vld [vmem:[#allocation3 + $0x27] sm:$0xff]
        %v3257 = vld [vmem:[#allocation3 + $0x2f] sm:$0xff]
        %v3258 = vld [vmem:[#allocation3 + $0x47] sm:$0xff]
        %v3259 = vld [vmem:[#allocation3 + $0x4f] sm:$0xff]
        %v3260 = vld [vmem:[#allocation3 + $0x67] sm:$0xff]
        %v3261 = vld [vmem:[#allocation3 + $0x6f] sm:$0xff]
        %v3262 = vld [vmem:[#allocation3 + $0x87] sm:$0xff]
        %v3263 = vld [vmem:[#allocation3 + $0x8f] sm:$0xff]
        %v3264 = vld [vmem:[#allocation3 + $0xa7] sm:$0xff]
        %v3265 = vld [vmem:[#allocation3 + $0xaf] sm:$0xff]
        %v3266 = vld [vmem:[#allocation3 + $0xc7] sm:$0xff]
        %v3267 = vld [vmem:[#allocation3 + $0xcf] sm:$0xff]
        %v3268 = vld [vmem:[#allocation3 + $0xe7] sm:$0xff]
        %v3269 = vld [vmem:[#allocation3 + $0xef] sm:$0xff]
        %v3270 = vld [vmem:[#allocation3 + $0x107] sm:$0xff]
        %v3271 = vld [vmem:[#allocation3 + $0x10f] sm:$0xff]
        %v3272 = vld [vmem:[#allocation3 + $0x127] sm:$0xff]
        %v3273 = vld [vmem:[#allocation3 + $0x12f] sm:$0xff]
        %v3274 = vld [vmem:[#allocation3 + $0x147] sm:$0xff]
        %v3275 = vld [vmem:[#allocation3 + $0x14f] sm:$0xff]
        %v3276 = vld [vmem:[#allocation3 + $0x167] sm:$0xff]
        %v3277 = vld [vmem:[#allocation3 + $0x16f] sm:$0xff]
        %v3278 = vld [vmem:[#allocation3 + $0x187] sm:$0xff]
        %v3279 = vld [vmem:[#allocation3 + $0x18f] sm:$0xff]
        %v3280 = vld [vmem:[#allocation3 + $0x1a7] sm:$0xff]
        %v3281 = vld [vmem:[#allocation3 + $0x1af] sm:$0xff]
        %v3282 = vld [vmem:[#allocation3 + $0x1c7] sm:$0xff]
        %v3283 = vld [vmem:[#allocation3 + $0x1cf] sm:$0xff]
        %v3284 = vld [vmem:[#allocation3 + $0x1e7] sm:$0xff]
        %v3285 = vld [vmem:[#allocation3 + $0x1ef] sm:$0xff]
        %v3286 = vld [vmem:[#allocation8] sm:$0xff]
        %v3287 = vld [vmem:[#allocation8 + $0x8] sm:$0xff]
        %v3288 = vld [vmem:[#allocation8 + $0x10] sm:$0xff]
        %v3289 = vld [vmem:[#allocation8 + $0x18] sm:$0xff]
        %v3290 = vld [vmem:[#allocation8 + $0x20] sm:$0xff]
        %v3291 = vld [vmem:[#allocation8 + $0x28] sm:$0xff]
        %v3292 = vld [vmem:[#allocation8 + $0x30] sm:$0xff]
        %v3293 = vld [vmem:[#allocation8 + $0x38] sm:$0xff]
        %v3294 = vld [vmem:[#allocation8 + $0x40] sm:$0xff]
        %v3295 = vld [vmem:[#allocation8 + $0x48] sm:$0xff]
        %v3296 = vld [vmem:[#allocation8 + $0x50] sm:$0xff]
        %v3297 = vld [vmem:[#allocation8 + $0x58] sm:$0xff]
        %v3298 = vld [vmem:[#allocation8 + $0x60] sm:$0xff]
        %v3299 = vld [vmem:[#allocation8 + $0x68] sm:$0xff]
        %v3300 = vld [vmem:[#allocation8 + $0x70] sm:$0xff]
        %v3301 = vld [vmem:[#allocation8 + $0x78] sm:$0xff]
        %v3302 = vld [vmem:[#allocation3 + $0x8] sm:$0xff]
        %v3303 = vld [vmem:[#allocation3 + $0x10] sm:$0xff]
        %v3304 = vld [vmem:[#allocation3 + $0x28] sm:$0xff]
        %v3305 = vld [vmem:[#allocation3 + $0x30] sm:$0xff]
        %v3306 = vld [vmem:[#allocation3 + $0x48] sm:$0xff]
        %v3307 = vld [vmem:[#allocation3 + $0x50] sm:$0xff]
        %v3308 = vld [vmem:[#allocation3 + $0x68] sm:$0xff]
        %v3309 = vld [vmem:[#allocation3 + $0x70] sm:$0xff]
        %v3310 = vld [vmem:[#allocation3 + $0x88] sm:$0xff]
        %v3311 = vld [vmem:[#allocation3 + $0x90] sm:$0xff]
        %v3312 = vld [vmem:[#allocation3 + $0xa8] sm:$0xff]
        %v3313 = vld [vmem:[#allocation3 + $0xb0] sm:$0xff]
        %v3314 = vld [vmem:[#allocation3 + $0xc8] sm:$0xff]
        %v3315 = vld [vmem:[#allocation3 + $0xd0] sm:$0xff]
        %v3316 = vld [vmem:[#allocation3 + $0xe8] sm:$0xff]
        %v3317 = vld [vmem:[#allocation3 + $0xf0] sm:$0xff]
        %v3318 = vld [vmem:[#allocation3 + $0x108] sm:$0xff]
        %v3319 = vld [vmem:[#allocation3 + $0x110] sm:$0xff]
        %v3320 = vld [vmem:[#allocation3 + $0x128] sm:$0xff]
        %v3321 = vld [vmem:[#allocation3 + $0x130] sm:$0xff]
        %v3322 = vld [vmem:[#allocation3 + $0x148] sm:$0xff]
        %v3323 = vld [vmem:[#allocation3 + $0x150] sm:$0xff]
        %v3324 = vld [vmem:[#allocation3 + $0x168] sm:$0xff]
        %v3325 = vld [vmem:[#allocation3 + $0x170] sm:$0xff]
        %v3326 = vld [vmem:[#allocation3 + $0x188] sm:$0xff]
        %v3327 = vld [vmem:[#allocation3 + $0x190] sm:$0xff]
        %v3328 = vld [vmem:[#allocation3 + $0x1a8] sm:$0xff]
        %v3329 = vld [vmem:[#allocation3 + $0x1b0] sm:$0xff]
        %v3330 = vld [vmem:[#allocation3 + $0x1c8] sm:$0xff]
        %v3331 = vld [vmem:[#allocation3 + $0x1d0] sm:$0xff]
        %v3332 = vld [vmem:[#allocation3 + $0x1e8] sm:$0xff]
        %v3333 = vld [vmem:[#allocation3 + $0x1f0] sm:$0xff]
        %v3334 = vld [vmem:[#allocation8 + $0x80] sm:$0xff]
        %v3335 = vld [vmem:[#allocation8 + $0x88] sm:$0xff]
        %v3336 = vld [vmem:[#allocation8 + $0x90] sm:$0xff]
        %v3337 = vld [vmem:[#allocation8 + $0x98] sm:$0xff]
        %v3338 = vld [vmem:[#allocation8 + $0xa0] sm:$0xff]
        %v3339 = vld [vmem:[#allocation8 + $0xa8] sm:$0xff]
        %v3340 = vld [vmem:[#allocation8 + $0xb0] sm:$0xff]
        %v3341 = vld [vmem:[#allocation8 + $0xb8] sm:$0xff]
        %v3342 = vld [vmem:[#allocation8 + $0xc0] sm:$0xff]
        %v3343 = vld [vmem:[#allocation8 + $0xc8] sm:$0xff]
        %v3344 = vld [vmem:[#allocation8 + $0xd0] sm:$0xff]
        %v3345 = vld [vmem:[#allocation8 + $0xd8] sm:$0xff]
        %v3346 = vld [vmem:[#allocation8 + $0xe0] sm:$0xff]
        %v3347 = vld [vmem:[#allocation8 + $0xe8] sm:$0xff]
        %v3348 = vld [vmem:[#allocation8 + $0xf0] sm:$0xff]
        %v3349 = vld [vmem:[#allocation8 + $0xf8] sm:$0xff]
        %3350 = vmatprep.subr.mxu0 0.0
        %3351 = vmatpush1.msra.mxu0 %v3349
        %3352 = vmatprep.subr.mxu0 0.0
        %3353 = vmatpush1.msra.mxu0 %v3348
        %3354 = vmatprep.subr.mxu0 0.0
        %3355 = vmatpush1.msra.mxu0 %v3347
        %3356 = vmatprep.subr.mxu0 0.0
        %3357 = vmatpush1.msra.mxu0 %v3346
        %3358 = vmatprep.subr.mxu0 0.0
        %3359 = vmatpush1.msra.mxu0 %v3345
        %3360 = vmatprep.subr.mxu0 0.0
        %3361 = vmatpush1.msra.mxu0 %v3344
        %3362 = vmatprep.subr.mxu0 0.0
        %3363 = vmatpush1.msra.mxu0 %v3343
        %3364 = vmatprep.subr.mxu0 0.0
        %3365 = vmatpush1.msra.mxu0 %v3342
        %3366 = vmatprep.subr.mxu0 0.0
        %3367 = vmatpush1.msra.mxu0 %v3341
        %3368 = vmatprep.subr.mxu0 0.0
        %3369 = vmatpush1.msra.mxu0 %v3340
        %3370 = vmatprep.subr.mxu0 0.0
        %3371 = vmatpush1.msra.mxu0 %v3339
        %3372 = vmatprep.subr.mxu0 0.0
        %3373 = vmatpush1.msra.mxu0 %v3338
        %3374 = vmatprep.subr.mxu0 0.0
        %3375 = vmatpush1.msra.mxu0 %v3337
        %3376 = vmatprep.subr.mxu0 0.0
        %3377 = vmatpush1.msra.mxu0 %v3336
        %3378 = vmatprep.subr.mxu0 0.0
        %3379 = vmatpush1.msra.mxu0 %v3335
        %3380 = vmatprep.subr.mxu0 0.0
        %3381 = vmatpush1.msra.mxu0 %v3334
        %3382 = vmatprep.subr.mxu0 0.0
        %3383 = vmatpush2.msra.mxu0 0.0
        %3384 = vmatprep.subr.mxu0 0.0
        %3385 = vmatpush2.msra.mxu0 0.0
        %3386 = vmatprep.subr.mxu0 0.0
        %3387 = vmatpush2.msra.mxu0 0.0
        %3388 = vmatprep.subr.mxu0 0.0
        %3389 = vmatpush2.msra.mxu0 0.0
        %3390 = vmatprep.subr.mxu0 0.0
        %3391 = vmatpush2.msra.mxu0 0.0
        %3392 = vmatprep.subr.mxu0 0.0
        %3393 = vmatpush2.msra.mxu0 0.0
        %3394 = vmatprep.subr.mxu0 0.0
        %3395 = vmatpush2.msra.mxu0 0.0
        %3396 = vmatprep.subr.mxu0 0.0
        %3397 = vmatpush2.msra.mxu0 0.0
        %3398 = vmatprep.subr.mxu0 0.0
        %3399 = vmatpush2.msra.mxu0 0.0
        %3400 = vmatprep.subr.mxu0 0.0
        %3401 = vmatpush2.msra.mxu0 0.0
        %3402 = vmatprep.subr.mxu0 0.0
        %3403 = vmatpush2.msra.mxu0 0.0
        %3404 = vmatprep.subr.mxu0 0.0
        %3405 = vmatpush2.msra.mxu0 0.0
        %3406 = vmatprep.subr.mxu0 0.0
        %3407 = vmatpush2.msra.mxu0 0.0
        %3408 = vmatprep.subr.mxu0 0.0
        %3409 = vmatpush2.msra.mxu0 0.0
        %3410 = vmatprep.subr.mxu0 0.0
        %3411 = vmatpush2.msra.mxu0 0.0
        %3412 = vmatprep.subr.mxu0 0.0
        %3413 = vmatpush2.msra.mxu0 0.0
        %3414 = vmatprep.mubr.f32.mxu0 0.0
        %3415 = vmatmul.mubr.f32.gmra.mxu0 %v3302
        %v3416 = vpop.f32.mrf.mxu0
        %v3417 = vadd.f32 0.0, %v3416
        %v3418 = vpop.f32.mrf.mxu0
        %3419 = vmatprep.mubr.f32.mxu0 0.0
        %3420 = vmatmul.mubr.f32.gmra.mxu0 %v3303
        %v3421 = vpop.f32.mrf.mxu0
        %v3422 = vadd.f32 0.0, %v3421
        %v3423 = vpop.f32.mrf.mxu0
        %3424 = vmatprep.mubr.f32.mxu0 0.0
        %3425 = vmatmul.mubr.f32.gmra.mxu0 %v3304
        %v3426 = vpop.f32.mrf.mxu0
        %v3427 = vadd.f32 0.0, %v3426
        %v3428 = vpop.f32.mrf.mxu0
        %3429 = vmatprep.mubr.f32.mxu0 0.0
        %3430 = vmatmul.mubr.f32.gmra.mxu0 %v3305
        %v3431 = vpop.f32.mrf.mxu0
        %v3432 = vadd.f32 0.0, %v3431
        %v3433 = vpop.f32.mrf.mxu0
        %3434 = vmatprep.mubr.f32.mxu0 0.0
        %3435 = vmatmul.mubr.f32.gmra.mxu0 %v3306
        %v3436 = vpop.f32.mrf.mxu0
        %v3437 = vadd.f32 0.0, %v3436
        %v3438 = vpop.f32.mrf.mxu0
        %3439 = vmatprep.mubr.f32.mxu0 0.0
        %3440 = vmatmul.mubr.f32.gmra.mxu0 %v3307
        %v3441 = vpop.f32.mrf.mxu0
        %v3442 = vadd.f32 0.0, %v3441
        %v3443 = vpop.f32.mrf.mxu0
        %3444 = vmatprep.mubr.f32.mxu0 0.0
        %3445 = vmatmul.mubr.f32.gmra.mxu0 %v3308
        %v3446 = vpop.f32.mrf.mxu0
        %v3447 = vadd.f32 0.0, %v3446
        %v3448 = vpop.f32.mrf.mxu0
        %3449 = vmatprep.mubr.f32.mxu0 0.0
        %3450 = vmatmul.mubr.f32.gmra.mxu0 %v3309
        %v3451 = vpop.f32.mrf.mxu0
        %v3452 = vadd.f32 0.0, %v3451
        %v3453 = vpop.f32.mrf.mxu0
        %3454 = vmatprep.mubr.f32.mxu0 0.0
        %3455 = vmatmul.mubr.f32.gmra.mxu0 %v3310
        %v3456 = vpop.f32.mrf.mxu0
        %v3457 = vadd.f32 0.0, %v3456
        %v3458 = vpop.f32.mrf.mxu0
        %3459 = vmatprep.mubr.f32.mxu0 0.0
        %3460 = vmatmul.mubr.f32.gmra.mxu0 %v3311
        %v3461 = vpop.f32.mrf.mxu0
        %v3462 = vadd.f32 0.0, %v3461
        %v3463 = vpop.f32.mrf.mxu0
        %3464 = vmatprep.mubr.f32.mxu0 0.0
        %3465 = vmatmul.mubr.f32.gmra.mxu0 %v3312
        %v3466 = vpop.f32.mrf.mxu0
        %v3467 = vadd.f32 0.0, %v3466
        %v3468 = vpop.f32.mrf.mxu0
        %3469 = vmatprep.mubr.f32.mxu0 0.0
        %3470 = vmatmul.mubr.f32.gmra.mxu0 %v3313
        %v3471 = vpop.f32.mrf.mxu0
        %v3472 = vadd.f32 0.0, %v3471
        %v3473 = vpop.f32.mrf.mxu0
        %3474 = vmatprep.mubr.f32.mxu0 0.0
        %3475 = vmatmul.mubr.f32.gmra.mxu0 %v3314
        %v3476 = vpop.f32.mrf.mxu0
        %v3477 = vadd.f32 0.0, %v3476
        %v3478 = vpop.f32.mrf.mxu0
        %3479 = vmatprep.mubr.f32.mxu0 0.0
        %3480 = vmatmul.mubr.f32.gmra.mxu0 %v3315
        %v3481 = vpop.f32.mrf.mxu0
        %v3482 = vadd.f32 0.0, %v3481
        %v3483 = vpop.f32.mrf.mxu0
        %3484 = vmatprep.mubr.f32.mxu0 0.0
        %3485 = vmatmul.mubr.f32.gmra.mxu0 %v3316
        %v3486 = vpop.f32.mrf.mxu0
        %v3487 = vadd.f32 0.0, %v3486
        %v3488 = vpop.f32.mrf.mxu0
        %3489 = vmatprep.mubr.f32.mxu0 0.0
        %3490 = vmatmul.mubr.f32.gmra.mxu0 %v3317
        %v3491 = vpop.f32.mrf.mxu0
        %v3492 = vadd.f32 0.0, %v3491
        %v3493 = vpop.f32.mrf.mxu0
        %3494 = vmatprep.mubr.f32.mxu0 0.0
        %3495 = vmatmul.mubr.f32.gmra.mxu0 %v3318
        %v3496 = vpop.f32.mrf.mxu0
        %v3497 = vadd.f32 0.0, %v3496
        %v3498 = vpop.f32.mrf.mxu0
        %3499 = vmatprep.mubr.f32.mxu0 0.0
        %3500 = vmatmul.mubr.f32.gmra.mxu0 %v3319
        %v3501 = vpop.f32.mrf.mxu0
        %v3502 = vadd.f32 0.0, %v3501
        %v3503 = vpop.f32.mrf.mxu0
        %3504 = vmatprep.mubr.f32.mxu0 0.0
        %3505 = vmatmul.mubr.f32.gmra.mxu0 %v3320
        %v3506 = vpop.f32.mrf.mxu0
        %v3507 = vadd.f32 0.0, %v3506
        %v3508 = vpop.f32.mrf.mxu0
        %3509 = vmatprep.mubr.f32.mxu0 0.0
        %3510 = vmatmul.mubr.f32.gmra.mxu0 %v3321
        %v3511 = vpop.f32.mrf.mxu0
        %v3512 = vadd.f32 0.0, %v3511
        %v3513 = vpop.f32.mrf.mxu0
        %3514 = vmatprep.mubr.f32.mxu0 0.0
        %3515 = vmatmul.mubr.f32.gmra.mxu0 %v3322
        %v3516 = vpop.f32.mrf.mxu0
        %v3517 = vadd.f32 0.0, %v3516
        %v3518 = vpop.f32.mrf.mxu0
        %3519 = vmatprep.mubr.f32.mxu0 0.0
        %3520 = vmatmul.mubr.f32.gmra.mxu0 %v3323
        %v3521 = vpop.f32.mrf.mxu0
        %v3522 = vadd.f32 0.0, %v3521
        %v3523 = vpop.f32.mrf.mxu0
        %3524 = vmatprep.mubr.f32.mxu0 0.0
        %3525 = vmatmul.mubr.f32.gmra.mxu0 %v3324
        %v3526 = vpop.f32.mrf.mxu0
        %v3527 = vadd.f32 0.0, %v3526
        %v3528 = vpop.f32.mrf.mxu0
        %3529 = vmatprep.mubr.f32.mxu0 0.0
        %3530 = vmatmul.mubr.f32.gmra.mxu0 %v3325
        %v3531 = vpop.f32.mrf.mxu0
        %v3532 = vadd.f32 0.0, %v3531
        %v3533 = vpop.f32.mrf.mxu0
        %3534 = vmatprep.mubr.f32.mxu0 0.0
        %3535 = vmatmul.mubr.f32.gmra.mxu0 %v3326
        %v3536 = vpop.f32.mrf.mxu0
        %v3537 = vadd.f32 0.0, %v3536
        %v3538 = vpop.f32.mrf.mxu0
        %3539 = vmatprep.mubr.f32.mxu0 0.0
        %3540 = vmatmul.mubr.f32.gmra.mxu0 %v3327
        %v3541 = vpop.f32.mrf.mxu0
        %v3542 = vadd.f32 0.0, %v3541
        %v3543 = vpop.f32.mrf.mxu0
        %3544 = vmatprep.mubr.f32.mxu0 0.0
        %3545 = vmatmul.mubr.f32.gmra.mxu0 %v3328
        %v3546 = vpop.f32.mrf.mxu0
        %v3547 = vadd.f32 0.0, %v3546
        %v3548 = vpop.f32.mrf.mxu0
        %3549 = vmatprep.mubr.f32.mxu0 0.0
        %3550 = vmatmul.mubr.f32.gmra.mxu0 %v3329
        %v3551 = vpop.f32.mrf.mxu0
        %v3552 = vadd.f32 0.0, %v3551
        %v3553 = vpop.f32.mrf.mxu0
        %3554 = vmatprep.mubr.f32.mxu0 0.0
        %3555 = vmatmul.mubr.f32.gmra.mxu0 %v3330
        %v3556 = vpop.f32.mrf.mxu0
        %v3557 = vadd.f32 0.0, %v3556
        %v3558 = vpop.f32.mrf.mxu0
        %3559 = vmatprep.mubr.f32.mxu0 0.0
        %3560 = vmatmul.mubr.f32.gmra.mxu0 %v3331
        %v3561 = vpop.f32.mrf.mxu0
        %v3562 = vadd.f32 0.0, %v3561
        %v3563 = vpop.f32.mrf.mxu0
        %3564 = vmatprep.mubr.f32.mxu0 0.0
        %3565 = vmatmul.mubr.f32.gmra.mxu0 %v3332
        %v3566 = vpop.f32.mrf.mxu0
        %v3567 = vadd.f32 0.0, %v3566
        %v3568 = vpop.f32.mrf.mxu0
        %3569 = vmatprep.mubr.f32.mxu0 0.0
        %3570 = vmatmul.mubr.f32.gmra.mxu0 %v3333
        %v3571 = vpop.f32.mrf.mxu0
        %v3572 = vadd.f32 0.0, %v3571
        %v3573 = vpop.f32.mrf.mxu0
        %3574 = vdwg.mxu0
        %3575 = vmatprep.subr.mxu0 0.0
        %3576 = vmatpush1.msra.mxu0 %v3301
        %3577 = vmatprep.subr.mxu0 0.0
        %3578 = vmatpush1.msra.mxu0 %v3300
        %3579 = vmatprep.subr.mxu0 0.0
        %3580 = vmatpush1.msra.mxu0 %v3299
        %3581 = vmatprep.subr.mxu0 0.0
        %3582 = vmatpush1.msra.mxu0 %v3298
        %3583 = vmatprep.subr.mxu0 0.0
        %3584 = vmatpush1.msra.mxu0 %v3297
        %3585 = vmatprep.subr.mxu0 0.0
        %3586 = vmatpush1.msra.mxu0 %v3296
        %3587 = vmatprep.subr.mxu0 0.0
        %3588 = vmatpush1.msra.mxu0 %v3295
        %3589 = vmatprep.subr.mxu0 0.0
        %3590 = vmatpush1.msra.mxu0 %v3294
        %3591 = vmatprep.subr.mxu0 0.0
        %3592 = vmatpush1.msra.mxu0 %v3293
        %3593 = vmatprep.subr.mxu0 0.0
        %3594 = vmatpush1.msra.mxu0 %v3292
        %3595 = vmatprep.subr.mxu0 0.0
        %3596 = vmatpush1.msra.mxu0 %v3291
        %3597 = vmatprep.subr.mxu0 0.0
        %3598 = vmatpush1.msra.mxu0 %v3290
        %3599 = vmatprep.subr.mxu0 0.0
        %3600 = vmatpush1.msra.mxu0 %v3289
        %3601 = vmatprep.subr.mxu0 0.0
        %3602 = vmatpush1.msra.mxu0 %v3288
        %3603 = vmatprep.subr.mxu0 0.0
        %3604 = vmatpush1.msra.mxu0 %v3287
        %3605 = vmatprep.subr.mxu0 0.0
        %3606 = vmatpush1.msra.mxu0 %v3286
        %3607 = vmatprep.subr.mxu0 0.0
        %3608 = vmatpush2.msra.mxu0 0.0
        %3609 = vmatprep.subr.mxu0 0.0
        %3610 = vmatpush2.msra.mxu0 0.0
        %3611 = vmatprep.subr.mxu0 0.0
        %3612 = vmatpush2.msra.mxu0 0.0
        %3613 = vmatprep.subr.mxu0 0.0
        %3614 = vmatpush2.msra.mxu0 0.0
        %3615 = vmatprep.subr.mxu0 0.0
        %3616 = vmatpush2.msra.mxu0 0.0
        %3617 = vmatprep.subr.mxu0 0.0
        %3618 = vmatpush2.msra.mxu0 0.0
        %3619 = vmatprep.subr.mxu0 0.0
        %3620 = vmatpush2.msra.mxu0 0.0
        %3621 = vmatprep.subr.mxu0 0.0
        %3622 = vmatpush2.msra.mxu0 0.0
        %3623 = vmatprep.subr.mxu0 0.0
        %3624 = vmatpush2.msra.mxu0 0.0
        %3625 = vmatprep.subr.mxu0 0.0
        %3626 = vmatpush2.msra.mxu0 0.0
        %3627 = vmatprep.subr.mxu0 0.0
        %3628 = vmatpush2.msra.mxu0 0.0
        %3629 = vmatprep.subr.mxu0 0.0
        %3630 = vmatpush2.msra.mxu0 0.0
        %3631 = vmatprep.subr.mxu0 0.0
        %3632 = vmatpush2.msra.mxu0 0.0
        %3633 = vmatprep.subr.mxu0 0.0
        %3634 = vmatpush2.msra.mxu0 0.0
        %3635 = vmatprep.subr.mxu0 0.0
        %3636 = vmatpush2.msra.mxu0 0.0
        %3637 = vmatprep.subr.mxu0 0.0
        %3638 = vmatpush2.msra.mxu0 0.0
        %3639 = vmatprep.mubr.f32.mxu0 0.0
        %3640 = vmatmul.mubr.f32.gmra.mxu0 %v3254
        %v3641 = vpop.f32.mrf.mxu0
        %v3642 = vadd.f32 %v3417, %v3641
        %v3643 = vpop.f32.mrf.mxu0
        %3644 = vmatprep.mubr.f32.mxu0 0.0
        %3645 = vmatmul.mubr.f32.gmra.mxu0 %v3255
        %v3646 = vpop.f32.mrf.mxu0
        %v3647 = vadd.f32 %v3422, %v3646
        %v3648 = vpop.f32.mrf.mxu0
        %3649 = vmatprep.mubr.f32.mxu0 0.0
        %3650 = vmatmul.mubr.f32.gmra.mxu0 %v3256
        %v3651 = vpop.f32.mrf.mxu0
        %v3652 = vadd.f32 %v3427, %v3651
        %v3653 = vpop.f32.mrf.mxu0
        %3654 = vmatprep.mubr.f32.mxu0 0.0
        %3655 = vmatmul.mubr.f32.gmra.mxu0 %v3257
        %v3656 = vpop.f32.mrf.mxu0
        %v3657 = vadd.f32 %v3432, %v3656
        %v3658 = vpop.f32.mrf.mxu0
        %3659 = vmatprep.mubr.f32.mxu0 0.0
        %3660 = vmatmul.mubr.f32.gmra.mxu0 %v3258
        %v3661 = vpop.f32.mrf.mxu0
        %v3662 = vadd.f32 %v3437, %v3661
        %v3663 = vpop.f32.mrf.mxu0
        %3664 = vmatprep.mubr.f32.mxu0 0.0
        %3665 = vmatmul.mubr.f32.gmra.mxu0 %v3259
        %v3666 = vpop.f32.mrf.mxu0
        %v3667 = vadd.f32 %v3442, %v3666
        %v3668 = vpop.f32.mrf.mxu0
        %3669 = vmatprep.mubr.f32.mxu0 0.0
        %3670 = vmatmul.mubr.f32.gmra.mxu0 %v3260
        %v3671 = vpop.f32.mrf.mxu0
        %v3672 = vadd.f32 %v3447, %v3671
        %v3673 = vpop.f32.mrf.mxu0
        %3674 = vmatprep.mubr.f32.mxu0 0.0
        %3675 = vmatmul.mubr.f32.gmra.mxu0 %v3261
        %v3676 = vpop.f32.mrf.mxu0
        %v3677 = vadd.f32 %v3452, %v3676
        %v3678 = vpop.f32.mrf.mxu0
        %3679 = vmatprep.mubr.f32.mxu0 0.0
        %3680 = vmatmul.mubr.f32.gmra.mxu0 %v3262
        %v3681 = vpop.f32.mrf.mxu0
        %v3682 = vadd.f32 %v3457, %v3681
        %v3683 = vpop.f32.mrf.mxu0
        %3684 = vmatprep.mubr.f32.mxu0 0.0
        %3685 = vmatmul.mubr.f32.gmra.mxu0 %v3263
        %v3686 = vpop.f32.mrf.mxu0
        %v3687 = vadd.f32 %v3462, %v3686
        %v3688 = vpop.f32.mrf.mxu0
        %3689 = vmatprep.mubr.f32.mxu0 0.0
        %3690 = vmatmul.mubr.f32.gmra.mxu0 %v3264
        %v3691 = vpop.f32.mrf.mxu0
        %v3692 = vadd.f32 %v3467, %v3691
        %v3693 = vpop.f32.mrf.mxu0
        %3694 = vmatprep.mubr.f32.mxu0 0.0
        %3695 = vmatmul.mubr.f32.gmra.mxu0 %v3265
        %v3696 = vpop.f32.mrf.mxu0
        %v3697 = vadd.f32 %v3472, %v3696
        %v3698 = vpop.f32.mrf.mxu0
        %3699 = vmatprep.mubr.f32.mxu0 0.0
        %3700 = vmatmul.mubr.f32.gmra.mxu0 %v3266
        %v3701 = vpop.f32.mrf.mxu0
        %v3702 = vadd.f32 %v3477, %v3701
        %v3703 = vpop.f32.mrf.mxu0
        %3704 = vmatprep.mubr.f32.mxu0 0.0
        %3705 = vmatmul.mubr.f32.gmra.mxu0 %v3267
        %v3706 = vpop.f32.mrf.mxu0
        %v3707 = vadd.f32 %v3482, %v3706
        %v3708 = vpop.f32.mrf.mxu0
        %3709 = vmatprep.mubr.f32.mxu0 0.0
        %3710 = vmatmul.mubr.f32.gmra.mxu0 %v3268
        %v3711 = vpop.f32.mrf.mxu0
        %v3712 = vadd.f32 %v3487, %v3711
        %v3713 = vpop.f32.mrf.mxu0
        %3714 = vmatprep.mubr.f32.mxu0 0.0
        %3715 = vmatmul.mubr.f32.gmra.mxu0 %v3269
        %v3716 = vpop.f32.mrf.mxu0
        %v3717 = vadd.f32 %v3492, %v3716
        %v3718 = vpop.f32.mrf.mxu0
        %3719 = vmatprep.mubr.f32.mxu0 0.0
        %3720 = vmatmul.mubr.f32.gmra.mxu0 %v3270
        %v3721 = vpop.f32.mrf.mxu0
        %v3722 = vadd.f32 %v3497, %v3721
        %v3723 = vpop.f32.mrf.mxu0
        %3724 = vmatprep.mubr.f32.mxu0 0.0
        %3725 = vmatmul.mubr.f32.gmra.mxu0 %v3271
        %v3726 = vpop.f32.mrf.mxu0
        %v3727 = vadd.f32 %v3502, %v3726
        %v3728 = vpop.f32.mrf.mxu0
        %3729 = vmatprep.mubr.f32.mxu0 0.0
        %3730 = vmatmul.mubr.f32.gmra.mxu0 %v3272
        %v3731 = vpop.f32.mrf.mxu0
        %v3732 = vadd.f32 %v3507, %v3731
        %v3733 = vpop.f32.mrf.mxu0
        %3734 = vmatprep.mubr.f32.mxu0 0.0
        %3735 = vmatmul.mubr.f32.gmra.mxu0 %v3273
        %v3736 = vpop.f32.mrf.mxu0
        %v3737 = vadd.f32 %v3512, %v3736
        %v3738 = vpop.f32.mrf.mxu0
        %3739 = vmatprep.mubr.f32.mxu0 0.0
        %3740 = vmatmul.mubr.f32.gmra.mxu0 %v3274
        %v3741 = vpop.f32.mrf.mxu0
        %v3742 = vadd.f32 %v3517, %v3741
        %v3743 = vpop.f32.mrf.mxu0
        %3744 = vmatprep.mubr.f32.mxu0 0.0
        %3745 = vmatmul.mubr.f32.gmra.mxu0 %v3275
        %v3746 = vpop.f32.mrf.mxu0
        %v3747 = vadd.f32 %v3522, %v3746
        %v3748 = vpop.f32.mrf.mxu0
        %3749 = vmatprep.mubr.f32.mxu0 0.0
        %3750 = vmatmul.mubr.f32.gmra.mxu0 %v3276
        %v3751 = vpop.f32.mrf.mxu0
        %v3752 = vadd.f32 %v3527, %v3751
        %v3753 = vpop.f32.mrf.mxu0
        %3754 = vmatprep.mubr.f32.mxu0 0.0
        %3755 = vmatmul.mubr.f32.gmra.mxu0 %v3277
        %v3756 = vpop.f32.mrf.mxu0
        %v3757 = vadd.f32 %v3532, %v3756
        %v3758 = vpop.f32.mrf.mxu0
        %3759 = vmatprep.mubr.f32.mxu0 0.0
        %3760 = vmatmul.mubr.f32.gmra.mxu0 %v3278
        %v3761 = vpop.f32.mrf.mxu0
        %v3762 = vadd.f32 %v3537, %v3761
        %v3763 = vpop.f32.mrf.mxu0
        %3764 = vmatprep.mubr.f32.mxu0 0.0
        %3765 = vmatmul.mubr.f32.gmra.mxu0 %v3279
        %v3766 = vpop.f32.mrf.mxu0
        %v3767 = vadd.f32 %v3542, %v3766
        %v3768 = vpop.f32.mrf.mxu0
        %3769 = vmatprep.mubr.f32.mxu0 0.0
        %3770 = vmatmul.mubr.f32.gmra.mxu0 %v3280
        %v3771 = vpop.f32.mrf.mxu0
        %v3772 = vadd.f32 %v3547, %v3771
        %v3773 = vpop.f32.mrf.mxu0
        %3774 = vmatprep.mubr.f32.mxu0 0.0
        %3775 = vmatmul.mubr.f32.gmra.mxu0 %v3281
        %v3776 = vpop.f32.mrf.mxu0
        %v3777 = vadd.f32 %v3552, %v3776
        %v3778 = vpop.f32.mrf.mxu0
        %3779 = vmatprep.mubr.f32.mxu0 0.0
        %3780 = vmatmul.mubr.f32.gmra.mxu0 %v3282
        %v3781 = vpop.f32.mrf.mxu0
        %v3782 = vadd.f32 %v3557, %v3781
        %v3783 = vpop.f32.mrf.mxu0
        %3784 = vmatprep.mubr.f32.mxu0 0.0
        %3785 = vmatmul.mubr.f32.gmra.mxu0 %v3283
        %v3786 = vpop.f32.mrf.mxu0
        %v3787 = vadd.f32 %v3562, %v3786
        %v3788 = vpop.f32.mrf.mxu0
        %3789 = vmatprep.mubr.f32.mxu0 0.0
        %3790 = vmatmul.mubr.f32.gmra.mxu0 %v3284
        %v3791 = vpop.f32.mrf.mxu0
        %v3792 = vadd.f32 %v3567, %v3791
        %v3793 = vpop.f32.mrf.mxu0
        %3794 = vmatprep.mubr.f32.mxu0 0.0
        %3795 = vmatmul.mubr.f32.gmra.mxu0 %v3285
        %v3796 = vpop.f32.mrf.mxu0
        %v3797 = vadd.f32 %v3572, %v3796
        %v3798 = vpop.f32.mrf.mxu0
        %3799 = vdwg.mxu0
        %v3800 = vld [vmem:[#allocation3 + $0x9] sm:$0xff]
        %v3801 = vld [vmem:[#allocation3 + $0x11] sm:$0xff]
        %v3802 = vld [vmem:[#allocation3 + $0x29] sm:$0xff]
        %v3803 = vld [vmem:[#allocation3 + $0x31] sm:$0xff]
        %v3804 = vld [vmem:[#allocation3 + $0x49] sm:$0xff]
        %v3805 = vld [vmem:[#allocation3 + $0x51] sm:$0xff]
        %v3806 = vld [vmem:[#allocation3 + $0x69] sm:$0xff]
        %v3807 = vld [vmem:[#allocation3 + $0x71] sm:$0xff]
        %v3808 = vld [vmem:[#allocation3 + $0x89] sm:$0xff]
        %v3809 = vld [vmem:[#allocation3 + $0x91] sm:$0xff]
        %v3810 = vld [vmem:[#allocation3 + $0xa9] sm:$0xff]
        %v3811 = vld [vmem:[#allocation3 + $0xb1] sm:$0xff]
        %v3812 = vld [vmem:[#allocation3 + $0xc9] sm:$0xff]
        %v3813 = vld [vmem:[#allocation3 + $0xd1] sm:$0xff]
        %v3814 = vld [vmem:[#allocation3 + $0xe9] sm:$0xff]
        %v3815 = vld [vmem:[#allocation3 + $0xf1] sm:$0xff]
        %v3816 = vld [vmem:[#allocation3 + $0x109] sm:$0xff]
        %v3817 = vld [vmem:[#allocation3 + $0x111] sm:$0xff]
        %v3818 = vld [vmem:[#allocation3 + $0x129] sm:$0xff]
        %v3819 = vld [vmem:[#allocation3 + $0x131] sm:$0xff]
        %v3820 = vld [vmem:[#allocation3 + $0x149] sm:$0xff]
        %v3821 = vld [vmem:[#allocation3 + $0x151] sm:$0xff]
        %v3822 = vld [vmem:[#allocation3 + $0x169] sm:$0xff]
        %v3823 = vld [vmem:[#allocation3 + $0x171] sm:$0xff]
        %v3824 = vld [vmem:[#allocation3 + $0x189] sm:$0xff]
        %v3825 = vld [vmem:[#allocation3 + $0x191] sm:$0xff]
        %v3826 = vld [vmem:[#allocation3 + $0x1a9] sm:$0xff]
        %v3827 = vld [vmem:[#allocation3 + $0x1b1] sm:$0xff]
        %v3828 = vld [vmem:[#allocation3 + $0x1c9] sm:$0xff]
        %v3829 = vld [vmem:[#allocation3 + $0x1d1] sm:$0xff]
        %v3830 = vld [vmem:[#allocation3 + $0x1e9] sm:$0xff]
        %v3831 = vld [vmem:[#allocation3 + $0x1f1] sm:$0xff]
        %v3832 = vld [vmem:[#allocation8 + $0x100] sm:$0xff]
        %v3833 = vld [vmem:[#allocation8 + $0x108] sm:$0xff]
        %v3834 = vld [vmem:[#allocation8 + $0x110] sm:$0xff]
        %v3835 = vld [vmem:[#allocation8 + $0x118] sm:$0xff]
        %v3836 = vld [vmem:[#allocation8 + $0x120] sm:$0xff]
        %v3837 = vld [vmem:[#allocation8 + $0x128] sm:$0xff]
        %v3838 = vld [vmem:[#allocation8 + $0x130] sm:$0xff]
        %v3839 = vld [vmem:[#allocation8 + $0x138] sm:$0xff]
        %v3840 = vld [vmem:[#allocation8 + $0x140] sm:$0xff]
        %v3841 = vld [vmem:[#allocation8 + $0x148] sm:$0xff]
        %v3842 = vld [vmem:[#allocation8 + $0x150] sm:$0xff]
        %v3843 = vld [vmem:[#allocation8 + $0x158] sm:$0xff]
        %v3844 = vld [vmem:[#allocation8 + $0x160] sm:$0xff]
        %v3845 = vld [vmem:[#allocation8 + $0x168] sm:$0xff]
        %v3846 = vld [vmem:[#allocation8 + $0x170] sm:$0xff]
        %v3847 = vld [vmem:[#allocation8 + $0x178] sm:$0xff]
        %3848 = vmatprep.subr.mxu0 0.0
        %3849 = vmatpush1.msra.mxu0 %v3847
        %3850 = vmatprep.subr.mxu0 0.0
        %3851 = vmatpush1.msra.mxu0 %v3846
        %3852 = vmatprep.subr.mxu0 0.0
        %3853 = vmatpush1.msra.mxu0 %v3845
        %3854 = vmatprep.subr.mxu0 0.0
        %3855 = vmatpush1.msra.mxu0 %v3844
        %3856 = vmatprep.subr.mxu0 0.0
        %3857 = vmatpush1.msra.mxu0 %v3843
        %3858 = vmatprep.subr.mxu0 0.0
        %3859 = vmatpush1.msra.mxu0 %v3842
        %3860 = vmatprep.subr.mxu0 0.0
        %3861 = vmatpush1.msra.mxu0 %v3841
        %3862 = vmatprep.subr.mxu0 0.0
        %3863 = vmatpush1.msra.mxu0 %v3840
        %3864 = vmatprep.subr.mxu0 0.0
        %3865 = vmatpush1.msra.mxu0 %v3839
        %3866 = vmatprep.subr.mxu0 0.0
        %3867 = vmatpush1.msra.mxu0 %v3838
        %3868 = vmatprep.subr.mxu0 0.0
        %3869 = vmatpush1.msra.mxu0 %v3837
        %3870 = vmatprep.subr.mxu0 0.0
        %3871 = vmatpush1.msra.mxu0 %v3836
        %3872 = vmatprep.subr.mxu0 0.0
        %3873 = vmatpush1.msra.mxu0 %v3835
        %3874 = vmatprep.subr.mxu0 0.0
        %3875 = vmatpush1.msra.mxu0 %v3834
        %3876 = vmatprep.subr.mxu0 0.0
        %3877 = vmatpush1.msra.mxu0 %v3833
        %3878 = vmatprep.subr.mxu0 0.0
        %3879 = vmatpush1.msra.mxu0 %v3832
        %3880 = vmatprep.subr.mxu0 0.0
        %3881 = vmatpush2.msra.mxu0 0.0
        %3882 = vmatprep.subr.mxu0 0.0
        %3883 = vmatpush2.msra.mxu0 0.0
        %3884 = vmatprep.subr.mxu0 0.0
        %3885 = vmatpush2.msra.mxu0 0.0
        %3886 = vmatprep.subr.mxu0 0.0
        %3887 = vmatpush2.msra.mxu0 0.0
        %3888 = vmatprep.subr.mxu0 0.0
        %3889 = vmatpush2.msra.mxu0 0.0
        %3890 = vmatprep.subr.mxu0 0.0
        %3891 = vmatpush2.msra.mxu0 0.0
        %3892 = vmatprep.subr.mxu0 0.0
        %3893 = vmatpush2.msra.mxu0 0.0
        %3894 = vmatprep.subr.mxu0 0.0
        %3895 = vmatpush2.msra.mxu0 0.0
        %3896 = vmatprep.subr.mxu0 0.0
        %3897 = vmatpush2.msra.mxu0 0.0
        %3898 = vmatprep.subr.mxu0 0.0
        %3899 = vmatpush2.msra.mxu0 0.0
        %3900 = vmatprep.subr.mxu0 0.0
        %3901 = vmatpush2.msra.mxu0 0.0
        %3902 = vmatprep.subr.mxu0 0.0
        %3903 = vmatpush2.msra.mxu0 0.0
        %3904 = vmatprep.subr.mxu0 0.0
        %3905 = vmatpush2.msra.mxu0 0.0
        %3906 = vmatprep.subr.mxu0 0.0
        %3907 = vmatpush2.msra.mxu0 0.0
        %3908 = vmatprep.subr.mxu0 0.0
        %3909 = vmatpush2.msra.mxu0 0.0
        %3910 = vmatprep.subr.mxu0 0.0
        %3911 = vmatpush2.msra.mxu0 0.0
        %3912 = vmatprep.mubr.f32.mxu0 0.0
        %3913 = vmatmul.mubr.f32.gmra.mxu0 %v3800
        %v3914 = vpop.f32.mrf.mxu0
        %v3915 = vadd.f32 0.0, %v3914
        %v3916 = vpop.f32.mrf.mxu0
        %3917 = vmatprep.mubr.f32.mxu0 0.0
        %3918 = vmatmul.mubr.f32.gmra.mxu0 %v3801
        %v3919 = vpop.f32.mrf.mxu0
        %v3920 = vadd.f32 0.0, %v3919
        %v3921 = vpop.f32.mrf.mxu0
        %3922 = vmatprep.mubr.f32.mxu0 0.0
        %3923 = vmatmul.mubr.f32.gmra.mxu0 %v3802
        %v3924 = vpop.f32.mrf.mxu0
        %v3925 = vadd.f32 0.0, %v3924
        %v3926 = vpop.f32.mrf.mxu0
        %3927 = vmatprep.mubr.f32.mxu0 0.0
        %3928 = vmatmul.mubr.f32.gmra.mxu0 %v3803
        %v3929 = vpop.f32.mrf.mxu0
        %v3930 = vadd.f32 0.0, %v3929
        %v3931 = vpop.f32.mrf.mxu0
        %3932 = vmatprep.mubr.f32.mxu0 0.0
        %3933 = vmatmul.mubr.f32.gmra.mxu0 %v3804
        %v3934 = vpop.f32.mrf.mxu0
        %v3935 = vadd.f32 0.0, %v3934
        %v3936 = vpop.f32.mrf.mxu0
        %3937 = vmatprep.mubr.f32.mxu0 0.0
        %3938 = vmatmul.mubr.f32.gmra.mxu0 %v3805
        %v3939 = vpop.f32.mrf.mxu0
        %v3940 = vadd.f32 0.0, %v3939
        %v3941 = vpop.f32.mrf.mxu0
        %3942 = vmatprep.mubr.f32.mxu0 0.0
        %3943 = vmatmul.mubr.f32.gmra.mxu0 %v3806
        %v3944 = vpop.f32.mrf.mxu0
        %v3945 = vadd.f32 0.0, %v3944
        %v3946 = vpop.f32.mrf.mxu0
        %3947 = vmatprep.mubr.f32.mxu0 0.0
        %3948 = vmatmul.mubr.f32.gmra.mxu0 %v3807
        %v3949 = vpop.f32.mrf.mxu0
        %v3950 = vadd.f32 0.0, %v3949
        %v3951 = vpop.f32.mrf.mxu0
        %3952 = vmatprep.mubr.f32.mxu0 0.0
        %3953 = vmatmul.mubr.f32.gmra.mxu0 %v3808
        %v3954 = vpop.f32.mrf.mxu0
        %v3955 = vadd.f32 0.0, %v3954
        %v3956 = vpop.f32.mrf.mxu0
        %3957 = vmatprep.mubr.f32.mxu0 0.0
        %3958 = vmatmul.mubr.f32.gmra.mxu0 %v3809
        %v3959 = vpop.f32.mrf.mxu0
        %v3960 = vadd.f32 0.0, %v3959
        %v3961 = vpop.f32.mrf.mxu0
        %3962 = vmatprep.mubr.f32.mxu0 0.0
        %3963 = vmatmul.mubr.f32.gmra.mxu0 %v3810
        %v3964 = vpop.f32.mrf.mxu0
        %v3965 = vadd.f32 0.0, %v3964
        %v3966 = vpop.f32.mrf.mxu0
        %3967 = vmatprep.mubr.f32.mxu0 0.0
        %3968 = vmatmul.mubr.f32.gmra.mxu0 %v3811
        %v3969 = vpop.f32.mrf.mxu0
        %v3970 = vadd.f32 0.0, %v3969
        %v3971 = vpop.f32.mrf.mxu0
        %3972 = vmatprep.mubr.f32.mxu0 0.0
        %3973 = vmatmul.mubr.f32.gmra.mxu0 %v3812
        %v3974 = vpop.f32.mrf.mxu0
        %v3975 = vadd.f32 0.0, %v3974
        %v3976 = vpop.f32.mrf.mxu0
        %3977 = vmatprep.mubr.f32.mxu0 0.0
        %3978 = vmatmul.mubr.f32.gmra.mxu0 %v3813
        %v3979 = vpop.f32.mrf.mxu0
        %v3980 = vadd.f32 0.0, %v3979
        %v3981 = vpop.f32.mrf.mxu0
        %3982 = vmatprep.mubr.f32.mxu0 0.0
        %3983 = vmatmul.mubr.f32.gmra.mxu0 %v3814
        %v3984 = vpop.f32.mrf.mxu0
        %v3985 = vadd.f32 0.0, %v3984
        %v3986 = vpop.f32.mrf.mxu0
        %3987 = vmatprep.mubr.f32.mxu0 0.0
        %3988 = vmatmul.mubr.f32.gmra.mxu0 %v3815
        %v3989 = vpop.f32.mrf.mxu0
        %v3990 = vadd.f32 0.0, %v3989
        %v3991 = vpop.f32.mrf.mxu0
        %3992 = vmatprep.mubr.f32.mxu0 0.0
        %3993 = vmatmul.mubr.f32.gmra.mxu0 %v3816
        %v3994 = vpop.f32.mrf.mxu0
        %v3995 = vadd.f32 0.0, %v3994
        %v3996 = vpop.f32.mrf.mxu0
        %3997 = vmatprep.mubr.f32.mxu0 0.0
        %3998 = vmatmul.mubr.f32.gmra.mxu0 %v3817
        %v3999 = vpop.f32.mrf.mxu0
        %v4000 = vadd.f32 0.0, %v3999
        %v4001 = vpop.f32.mrf.mxu0
        %4002 = vmatprep.mubr.f32.mxu0 0.0
        %4003 = vmatmul.mubr.f32.gmra.mxu0 %v3818
        %v4004 = vpop.f32.mrf.mxu0
        %v4005 = vadd.f32 0.0, %v4004
        %v4006 = vpop.f32.mrf.mxu0
        %4007 = vmatprep.mubr.f32.mxu0 0.0
        %4008 = vmatmul.mubr.f32.gmra.mxu0 %v3819
        %v4009 = vpop.f32.mrf.mxu0
        %v4010 = vadd.f32 0.0, %v4009
        %v4011 = vpop.f32.mrf.mxu0
        %4012 = vmatprep.mubr.f32.mxu0 0.0
        %4013 = vmatmul.mubr.f32.gmra.mxu0 %v3820
        %v4014 = vpop.f32.mrf.mxu0
        %v4015 = vadd.f32 0.0, %v4014
        %v4016 = vpop.f32.mrf.mxu0
        %4017 = vmatprep.mubr.f32.mxu0 0.0
        %4018 = vmatmul.mubr.f32.gmra.mxu0 %v3821
        %v4019 = vpop.f32.mrf.mxu0
        %v4020 = vadd.f32 0.0, %v4019
        %v4021 = vpop.f32.mrf.mxu0
        %4022 = vmatprep.mubr.f32.mxu0 0.0
        %4023 = vmatmul.mubr.f32.gmra.mxu0 %v3822
        %v4024 = vpop.f32.mrf.mxu0
        %v4025 = vadd.f32 0.0, %v4024
        %v4026 = vpop.f32.mrf.mxu0
        %4027 = vmatprep.mubr.f32.mxu0 0.0
        %4028 = vmatmul.mubr.f32.gmra.mxu0 %v3823
        %v4029 = vpop.f32.mrf.mxu0
        %v4030 = vadd.f32 0.0, %v4029
        %v4031 = vpop.f32.mrf.mxu0
        %4032 = vmatprep.mubr.f32.mxu0 0.0
        %4033 = vmatmul.mubr.f32.gmra.mxu0 %v3824
        %v4034 = vpop.f32.mrf.mxu0
        %v4035 = vadd.f32 0.0, %v4034
        %v4036 = vpop.f32.mrf.mxu0
        %4037 = vmatprep.mubr.f32.mxu0 0.0
        %4038 = vmatmul.mubr.f32.gmra.mxu0 %v3825
        %v4039 = vpop.f32.mrf.mxu0
        %v4040 = vadd.f32 0.0, %v4039
        %v4041 = vpop.f32.mrf.mxu0
        %4042 = vmatprep.mubr.f32.mxu0 0.0
        %4043 = vmatmul.mubr.f32.gmra.mxu0 %v3826
        %v4044 = vpop.f32.mrf.mxu0
        %v4045 = vadd.f32 0.0, %v4044
        %v4046 = vpop.f32.mrf.mxu0
        %4047 = vmatprep.mubr.f32.mxu0 0.0
        %4048 = vmatmul.mubr.f32.gmra.mxu0 %v3827
        %v4049 = vpop.f32.mrf.mxu0
        %v4050 = vadd.f32 0.0, %v4049
        %v4051 = vpop.f32.mrf.mxu0
        %4052 = vmatprep.mubr.f32.mxu0 0.0
        %4053 = vmatmul.mubr.f32.gmra.mxu0 %v3828
        %v4054 = vpop.f32.mrf.mxu0
        %v4055 = vadd.f32 0.0, %v4054
        %v4056 = vpop.f32.mrf.mxu0
        %4057 = vmatprep.mubr.f32.mxu0 0.0
        %4058 = vmatmul.mubr.f32.gmra.mxu0 %v3829
        %v4059 = vpop.f32.mrf.mxu0
        %v4060 = vadd.f32 0.0, %v4059
        %v4061 = vpop.f32.mrf.mxu0
        %4062 = vmatprep.mubr.f32.mxu0 0.0
        %4063 = vmatmul.mubr.f32.gmra.mxu0 %v3830
        %v4064 = vpop.f32.mrf.mxu0
        %v4065 = vadd.f32 0.0, %v4064
        %v4066 = vpop.f32.mrf.mxu0
        %4067 = vmatprep.mubr.f32.mxu0 0.0
        %4068 = vmatmul.mubr.f32.gmra.mxu0 %v3831
        %v4069 = vpop.f32.mrf.mxu0
        %v4070 = vadd.f32 0.0, %v4069
        %v4071 = vpop.f32.mrf.mxu0
        %4072 = vdwg.mxu0
        %v4073 = vadd.f32 %v3642, %v3915
        %v4074 = vadd.f32 %v3647, %v3920
        %v4075 = vadd.f32 %v3652, %v3925
        %v4076 = vadd.f32 %v3657, %v3930
        %v4077 = vadd.f32 %v3662, %v3935
        %v4078 = vadd.f32 %v3667, %v3940
        %v4079 = vadd.f32 %v3672, %v3945
        %v4080 = vadd.f32 %v3677, %v3950
        %v4081 = vadd.f32 %v3682, %v3955
        %v4082 = vadd.f32 %v3687, %v3960
        %v4083 = vadd.f32 %v3692, %v3965
        %v4084 = vadd.f32 %v3697, %v3970
        %v4085 = vadd.f32 %v3702, %v3975
        %v4086 = vadd.f32 %v3707, %v3980
        %v4087 = vadd.f32 %v3712, %v3985
        %v4088 = vadd.f32 %v3717, %v3990
        %v4089 = vadd.f32 %v3722, %v3995
        %v4090 = vadd.f32 %v3727, %v4000
        %v4091 = vadd.f32 %v3732, %v4005
        %v4092 = vadd.f32 %v3737, %v4010
        %v4093 = vadd.f32 %v3742, %v4015
        %v4094 = vadd.f32 %v3747, %v4020
        %v4095 = vadd.f32 %v3752, %v4025
        %v4096 = vadd.f32 %v3757, %v4030
        %v4097 = vadd.f32 %v3762, %v4035
        %v4098 = vadd.f32 %v3767, %v4040
        %v4099 = vadd.f32 %v3772, %v4045
        %v4100 = vadd.f32 %v3777, %v4050
        %v4101 = vadd.f32 %v3782, %v4055
        %v4102 = vadd.f32 %v3787, %v4060
        %v4103 = vadd.f32 %v3792, %v4065
        %v4104 = vadd.f32 %v3797, %v4070
        %v4105 = vld [vmem:[%s3221 + $0x7] sm:$0xff]
        %v4106 = vld [vmem:[%s3221 + $0xf] sm:$0xff]
        %v4107 = vld [vmem:[%s3221 + $0x27] sm:$0xff]
        %v4108 = vld [vmem:[%s3221 + $0x2f] sm:$0xff]
        %v4109 = vld [vmem:[%s3221 + $0x47] sm:$0xff]
        %v4110 = vld [vmem:[%s3221 + $0x4f] sm:$0xff]
        %v4111 = vld [vmem:[%s3221 + $0x67] sm:$0xff]
        %v4112 = vld [vmem:[%s3221 + $0x6f] sm:$0xff]
        %v4113 = vld [vmem:[%s3221 + $0x87] sm:$0xff]
        %v4114 = vld [vmem:[%s3221 + $0x8f] sm:$0xff]
        %v4115 = vld [vmem:[%s3221 + $0xa7] sm:$0xff]
        %v4116 = vld [vmem:[%s3221 + $0xaf] sm:$0xff]
        %v4117 = vld [vmem:[%s3221 + $0xc7] sm:$0xff]
        %v4118 = vld [vmem:[%s3221 + $0xcf] sm:$0xff]
        %v4119 = vld [vmem:[%s3221 + $0xe7] sm:$0xff]
        %v4120 = vld [vmem:[%s3221 + $0xef] sm:$0xff]
        %v4121 = vld [vmem:[%s3221 + $0x107] sm:$0xff]
        %v4122 = vld [vmem:[%s3221 + $0x10f] sm:$0xff]
        %v4123 = vld [vmem:[%s3221 + $0x127] sm:$0xff]
        %v4124 = vld [vmem:[%s3221 + $0x12f] sm:$0xff]
        %v4125 = vld [vmem:[%s3221 + $0x147] sm:$0xff]
        %v4126 = vld [vmem:[%s3221 + $0x14f] sm:$0xff]
        %v4127 = vld [vmem:[%s3221 + $0x167] sm:$0xff]
        %v4128 = vld [vmem:[%s3221 + $0x16f] sm:$0xff]
        %v4129 = vld [vmem:[%s3221 + $0x187] sm:$0xff]
        %v4130 = vld [vmem:[%s3221 + $0x18f] sm:$0xff]
        %v4131 = vld [vmem:[%s3221 + $0x1a7] sm:$0xff]
        %v4132 = vld [vmem:[%s3221 + $0x1af] sm:$0xff]
        %v4133 = vld [vmem:[%s3221 + $0x1c7] sm:$0xff]
        %v4134 = vld [vmem:[%s3221 + $0x1cf] sm:$0xff]
        %v4135 = vld [vmem:[%s3221 + $0x1e7] sm:$0xff]
        %v4136 = vld [vmem:[%s3221 + $0x1ef] sm:$0xff]
        %v4137 = vld [vmem:[#allocation8 + $0x180] sm:$0xff]
        %v4138 = vld [vmem:[#allocation8 + $0x188] sm:$0xff]
        %v4139 = vld [vmem:[#allocation8 + $0x190] sm:$0xff]
        %v4140 = vld [vmem:[#allocation8 + $0x198] sm:$0xff]
        %v4141 = vld [vmem:[#allocation8 + $0x1a0] sm:$0xff]
        %v4142 = vld [vmem:[#allocation8 + $0x1a8] sm:$0xff]
        %v4143 = vld [vmem:[#allocation8 + $0x1b0] sm:$0xff]
        %v4144 = vld [vmem:[#allocation8 + $0x1b8] sm:$0xff]
        %v4145 = vld [vmem:[#allocation8 + $0x1c0] sm:$0xff]
        %v4146 = vld [vmem:[#allocation8 + $0x1c8] sm:$0xff]
        %v4147 = vld [vmem:[#allocation8 + $0x1d0] sm:$0xff]
        %v4148 = vld [vmem:[#allocation8 + $0x1d8] sm:$0xff]
        %v4149 = vld [vmem:[#allocation8 + $0x1e0] sm:$0xff]
        %v4150 = vld [vmem:[#allocation8 + $0x1e8] sm:$0xff]
        %v4151 = vld [vmem:[#allocation8 + $0x1f0] sm:$0xff]
        %v4152 = vld [vmem:[#allocation8 + $0x1f8] sm:$0xff]
        %4153 = vmatprep.subr.mxu0 0.0
        %4154 = vmatpush1.msra.mxu0 %v4152
        %4155 = vmatprep.subr.mxu0 0.0
        %4156 = vmatpush1.msra.mxu0 %v4151
        %4157 = vmatprep.subr.mxu0 0.0
        %4158 = vmatpush1.msra.mxu0 %v4150
        %4159 = vmatprep.subr.mxu0 0.0
        %4160 = vmatpush1.msra.mxu0 %v4149
        %4161 = vmatprep.subr.mxu0 0.0
        %4162 = vmatpush1.msra.mxu0 %v4148
        %4163 = vmatprep.subr.mxu0 0.0
        %4164 = vmatpush1.msra.mxu0 %v4147
        %4165 = vmatprep.subr.mxu0 0.0
        %4166 = vmatpush1.msra.mxu0 %v4146
        %4167 = vmatprep.subr.mxu0 0.0
        %4168 = vmatpush1.msra.mxu0 %v4145
        %4169 = vmatprep.subr.mxu0 0.0
        %4170 = vmatpush1.msra.mxu0 %v4144
        %4171 = vmatprep.subr.mxu0 0.0
        %4172 = vmatpush1.msra.mxu0 %v4143
        %4173 = vmatprep.subr.mxu0 0.0
        %4174 = vmatpush1.msra.mxu0 %v4142
        %4175 = vmatprep.subr.mxu0 0.0
        %4176 = vmatpush1.msra.mxu0 %v4141
        %4177 = vmatprep.subr.mxu0 0.0
        %4178 = vmatpush1.msra.mxu0 %v4140
        %4179 = vmatprep.subr.mxu0 0.0
        %4180 = vmatpush1.msra.mxu0 %v4139
        %4181 = vmatprep.subr.mxu0 0.0
        %4182 = vmatpush1.msra.mxu0 %v4138
        %4183 = vmatprep.subr.mxu0 0.0
        %4184 = vmatpush1.msra.mxu0 %v4137
        %4185 = vmatprep.subr.mxu0 0.0
        %4186 = vmatpush2.msra.mxu0 0.0
        %4187 = vmatprep.subr.mxu0 0.0
        %4188 = vmatpush2.msra.mxu0 0.0
        %4189 = vmatprep.subr.mxu0 0.0
        %4190 = vmatpush2.msra.mxu0 0.0
        %4191 = vmatprep.subr.mxu0 0.0
        %4192 = vmatpush2.msra.mxu0 0.0
        %4193 = vmatprep.subr.mxu0 0.0
        %4194 = vmatpush2.msra.mxu0 0.0
        %4195 = vmatprep.subr.mxu0 0.0
        %4196 = vmatpush2.msra.mxu0 0.0
        %4197 = vmatprep.subr.mxu0 0.0
        %4198 = vmatpush2.msra.mxu0 0.0
        %4199 = vmatprep.subr.mxu0 0.0
        %4200 = vmatpush2.msra.mxu0 0.0
        %4201 = vmatprep.subr.mxu0 0.0
        %4202 = vmatpush2.msra.mxu0 0.0
        %4203 = vmatprep.subr.mxu0 0.0
        %4204 = vmatpush2.msra.mxu0 0.0
        %4205 = vmatprep.subr.mxu0 0.0
        %4206 = vmatpush2.msra.mxu0 0.0
        %4207 = vmatprep.subr.mxu0 0.0
        %4208 = vmatpush2.msra.mxu0 0.0
        %4209 = vmatprep.subr.mxu0 0.0
        %4210 = vmatpush2.msra.mxu0 0.0
        %4211 = vmatprep.subr.mxu0 0.0
        %4212 = vmatpush2.msra.mxu0 0.0
        %4213 = vmatprep.subr.mxu0 0.0
        %4214 = vmatpush2.msra.mxu0 0.0
        %4215 = vmatprep.subr.mxu0 0.0
        %4216 = vmatpush2.msra.mxu0 0.0
        %4217 = vmatprep.mubr.f32.mxu0 0.0
        %4218 = vmatmul.mubr.f32.gmra.mxu0 %v4105
        %v4219 = vpop.f32.mrf.mxu0
        %v4220 = vadd.f32 0.0, %v4219
        %v4221 = vpop.f32.mrf.mxu0
        %4222 = vmatprep.mubr.f32.mxu0 0.0
        %4223 = vmatmul.mubr.f32.gmra.mxu0 %v4106
        %v4224 = vpop.f32.mrf.mxu0
        %v4225 = vadd.f32 0.0, %v4224
        %v4226 = vpop.f32.mrf.mxu0
        %4227 = vmatprep.mubr.f32.mxu0 0.0
        %4228 = vmatmul.mubr.f32.gmra.mxu0 %v4107
        %v4229 = vpop.f32.mrf.mxu0
        %v4230 = vadd.f32 0.0, %v4229
        %v4231 = vpop.f32.mrf.mxu0
        %4232 = vmatprep.mubr.f32.mxu0 0.0
        %4233 = vmatmul.mubr.f32.gmra.mxu0 %v4108
        %v4234 = vpop.f32.mrf.mxu0
        %v4235 = vadd.f32 0.0, %v4234
        %v4236 = vpop.f32.mrf.mxu0
        %4237 = vmatprep.mubr.f32.mxu0 0.0
        %4238 = vmatmul.mubr.f32.gmra.mxu0 %v4109
        %v4239 = vpop.f32.mrf.mxu0
        %v4240 = vadd.f32 0.0, %v4239
        %v4241 = vpop.f32.mrf.mxu0
        %4242 = vmatprep.mubr.f32.mxu0 0.0
        %4243 = vmatmul.mubr.f32.gmra.mxu0 %v4110
        %v4244 = vpop.f32.mrf.mxu0
        %v4245 = vadd.f32 0.0, %v4244
        %v4246 = vpop.f32.mrf.mxu0
        %4247 = vmatprep.mubr.f32.mxu0 0.0
        %4248 = vmatmul.mubr.f32.gmra.mxu0 %v4111
        %v4249 = vpop.f32.mrf.mxu0
        %v4250 = vadd.f32 0.0, %v4249
        %v4251 = vpop.f32.mrf.mxu0
        %4252 = vmatprep.mubr.f32.mxu0 0.0
        %4253 = vmatmul.mubr.f32.gmra.mxu0 %v4112
        %v4254 = vpop.f32.mrf.mxu0
        %v4255 = vadd.f32 0.0, %v4254
        %v4256 = vpop.f32.mrf.mxu0
        %4257 = vmatprep.mubr.f32.mxu0 0.0
        %4258 = vmatmul.mubr.f32.gmra.mxu0 %v4113
        %v4259 = vpop.f32.mrf.mxu0
        %v4260 = vadd.f32 0.0, %v4259
        %v4261 = vpop.f32.mrf.mxu0
        %4262 = vmatprep.mubr.f32.mxu0 0.0
        %4263 = vmatmul.mubr.f32.gmra.mxu0 %v4114
        %v4264 = vpop.f32.mrf.mxu0
        %v4265 = vadd.f32 0.0, %v4264
        %v4266 = vpop.f32.mrf.mxu0
        %4267 = vmatprep.mubr.f32.mxu0 0.0
        %4268 = vmatmul.mubr.f32.gmra.mxu0 %v4115
        %v4269 = vpop.f32.mrf.mxu0
        %v4270 = vadd.f32 0.0, %v4269
        %v4271 = vpop.f32.mrf.mxu0
        %4272 = vmatprep.mubr.f32.mxu0 0.0
        %4273 = vmatmul.mubr.f32.gmra.mxu0 %v4116
        %v4274 = vpop.f32.mrf.mxu0
        %v4275 = vadd.f32 0.0, %v4274
        %v4276 = vpop.f32.mrf.mxu0
        %4277 = vmatprep.mubr.f32.mxu0 0.0
        %4278 = vmatmul.mubr.f32.gmra.mxu0 %v4117
        %v4279 = vpop.f32.mrf.mxu0
        %v4280 = vadd.f32 0.0, %v4279
        %v4281 = vpop.f32.mrf.mxu0
        %4282 = vmatprep.mubr.f32.mxu0 0.0
        %4283 = vmatmul.mubr.f32.gmra.mxu0 %v4118
        %v4284 = vpop.f32.mrf.mxu0
        %v4285 = vadd.f32 0.0, %v4284
        %v4286 = vpop.f32.mrf.mxu0
        %4287 = vmatprep.mubr.f32.mxu0 0.0
        %4288 = vmatmul.mubr.f32.gmra.mxu0 %v4119
        %v4289 = vpop.f32.mrf.mxu0
        %v4290 = vadd.f32 0.0, %v4289
        %v4291 = vpop.f32.mrf.mxu0
        %4292 = vmatprep.mubr.f32.mxu0 0.0
        %4293 = vmatmul.mubr.f32.gmra.mxu0 %v4120
        %v4294 = vpop.f32.mrf.mxu0
        %v4295 = vadd.f32 0.0, %v4294
        %v4296 = vpop.f32.mrf.mxu0
        %4297 = vmatprep.mubr.f32.mxu0 0.0
        %4298 = vmatmul.mubr.f32.gmra.mxu0 %v4121
        %v4299 = vpop.f32.mrf.mxu0
        %v4300 = vadd.f32 0.0, %v4299
        %v4301 = vpop.f32.mrf.mxu0
        %4302 = vmatprep.mubr.f32.mxu0 0.0
        %4303 = vmatmul.mubr.f32.gmra.mxu0 %v4122
        %v4304 = vpop.f32.mrf.mxu0
        %v4305 = vadd.f32 0.0, %v4304
        %v4306 = vpop.f32.mrf.mxu0
        %4307 = vmatprep.mubr.f32.mxu0 0.0
        %4308 = vmatmul.mubr.f32.gmra.mxu0 %v4123
        %v4309 = vpop.f32.mrf.mxu0
        %v4310 = vadd.f32 0.0, %v4309
        %v4311 = vpop.f32.mrf.mxu0
        %4312 = vmatprep.mubr.f32.mxu0 0.0
        %4313 = vmatmul.mubr.f32.gmra.mxu0 %v4124
        %v4314 = vpop.f32.mrf.mxu0
        %v4315 = vadd.f32 0.0, %v4314
        %v4316 = vpop.f32.mrf.mxu0
        %4317 = vmatprep.mubr.f32.mxu0 0.0
        %4318 = vmatmul.mubr.f32.gmra.mxu0 %v4125
        %v4319 = vpop.f32.mrf.mxu0
        %v4320 = vadd.f32 0.0, %v4319
        %v4321 = vpop.f32.mrf.mxu0
        %4322 = vmatprep.mubr.f32.mxu0 0.0
        %4323 = vmatmul.mubr.f32.gmra.mxu0 %v4126
        %v4324 = vpop.f32.mrf.mxu0
        %v4325 = vadd.f32 0.0, %v4324
        %v4326 = vpop.f32.mrf.mxu0
        %4327 = vmatprep.mubr.f32.mxu0 0.0
        %4328 = vmatmul.mubr.f32.gmra.mxu0 %v4127
        %v4329 = vpop.f32.mrf.mxu0
        %v4330 = vadd.f32 0.0, %v4329
        %v4331 = vpop.f32.mrf.mxu0
        %4332 = vmatprep.mubr.f32.mxu0 0.0
        %4333 = vmatmul.mubr.f32.gmra.mxu0 %v4128
        %v4334 = vpop.f32.mrf.mxu0
        %v4335 = vadd.f32 0.0, %v4334
        %v4336 = vpop.f32.mrf.mxu0
        %4337 = vmatprep.mubr.f32.mxu0 0.0
        %4338 = vmatmul.mubr.f32.gmra.mxu0 %v4129
        %v4339 = vpop.f32.mrf.mxu0
        %v4340 = vadd.f32 0.0, %v4339
        %v4341 = vpop.f32.mrf.mxu0
        %4342 = vmatprep.mubr.f32.mxu0 0.0
        %4343 = vmatmul.mubr.f32.gmra.mxu0 %v4130
        %v4344 = vpop.f32.mrf.mxu0
        %v4345 = vadd.f32 0.0, %v4344
        %v4346 = vpop.f32.mrf.mxu0
        %4347 = vmatprep.mubr.f32.mxu0 0.0
        %4348 = vmatmul.mubr.f32.gmra.mxu0 %v4131
        %v4349 = vpop.f32.mrf.mxu0
        %v4350 = vadd.f32 0.0, %v4349
        %v4351 = vpop.f32.mrf.mxu0
        %4352 = vmatprep.mubr.f32.mxu0 0.0
        %4353 = vmatmul.mubr.f32.gmra.mxu0 %v4132
        %v4354 = vpop.f32.mrf.mxu0
        %v4355 = vadd.f32 0.0, %v4354
        %v4356 = vpop.f32.mrf.mxu0
        %4357 = vmatprep.mubr.f32.mxu0 0.0
        %4358 = vmatmul.mubr.f32.gmra.mxu0 %v4133
        %v4359 = vpop.f32.mrf.mxu0
        %v4360 = vadd.f32 0.0, %v4359
        %v4361 = vpop.f32.mrf.mxu0
        %4362 = vmatprep.mubr.f32.mxu0 0.0
        %4363 = vmatmul.mubr.f32.gmra.mxu0 %v4134
        %v4364 = vpop.f32.mrf.mxu0
        %v4365 = vadd.f32 0.0, %v4364
        %v4366 = vpop.f32.mrf.mxu0
        %4367 = vmatprep.mubr.f32.mxu0 0.0
        %4368 = vmatmul.mubr.f32.gmra.mxu0 %v4135
        %v4369 = vpop.f32.mrf.mxu0
        %v4370 = vadd.f32 0.0, %v4369
        %v4371 = vpop.f32.mrf.mxu0
        %4372 = vmatprep.mubr.f32.mxu0 0.0
        %4373 = vmatmul.mubr.f32.gmra.mxu0 %v4136
        %v4374 = vpop.f32.mrf.mxu0
        %v4375 = vadd.f32 0.0, %v4374
        %v4376 = vpop.f32.mrf.mxu0
        %4377 = vdwg.mxu0
        %v4378 = vadd.f32 %v4073, %v4220
        %v4379 = vadd.f32 %v4074, %v4225
        %v4380 = vadd.f32 %v4075, %v4230
        %v4381 = vadd.f32 %v4076, %v4235
        %v4382 = vadd.f32 %v4077, %v4240
        %v4383 = vadd.f32 %v4078, %v4245
        %v4384 = vadd.f32 %v4079, %v4250
        %v4385 = vadd.f32 %v4080, %v4255
        %v4386 = vadd.f32 %v4081, %v4260
        %v4387 = vadd.f32 %v4082, %v4265
        %v4388 = vadd.f32 %v4083, %v4270
        %v4389 = vadd.f32 %v4084, %v4275
        %v4390 = vadd.f32 %v4085, %v4280
        %v4391 = vadd.f32 %v4086, %v4285
        %v4392 = vadd.f32 %v4087, %v4290
        %v4393 = vadd.f32 %v4088, %v4295
        %v4394 = vadd.f32 %v4089, %v4300
        %v4395 = vadd.f32 %v4090, %v4305
        %v4396 = vadd.f32 %v4091, %v4310
        %v4397 = vadd.f32 %v4092, %v4315
        %v4398 = vadd.f32 %v4093, %v4320
        %v4399 = vadd.f32 %v4094, %v4325
        %v4400 = vadd.f32 %v4095, %v4330
        %v4401 = vadd.f32 %v4096, %v4335
        %v4402 = vadd.f32 %v4097, %v4340
        %v4403 = vadd.f32 %v4098, %v4345
        %v4404 = vadd.f32 %v4099, %v4350
        %v4405 = vadd.f32 %v4100, %v4355
        %v4406 = vadd.f32 %v4101, %v4360
        %v4407 = vadd.f32 %v4102, %v4365
        %v4408 = vadd.f32 %v4103, %v4370
        %v4409 = vadd.f32 %v4104, %v4375
        %v4410 = vld [vmem:[%s3221 + $0x8] sm:$0xff]
        %v4411 = vld [vmem:[%s3221 + $0x10] sm:$0xff]
        %v4412 = vld [vmem:[%s3221 + $0x28] sm:$0xff]
        %v4413 = vld [vmem:[%s3221 + $0x30] sm:$0xff]
        %v4414 = vld [vmem:[%s3221 + $0x48] sm:$0xff]
        %v4415 = vld [vmem:[%s3221 + $0x50] sm:$0xff]
        %v4416 = vld [vmem:[%s3221 + $0x68] sm:$0xff]
        %v4417 = vld [vmem:[%s3221 + $0x70] sm:$0xff]
        %v4418 = vld [vmem:[%s3221 + $0x88] sm:$0xff]
        %v4419 = vld [vmem:[%s3221 + $0x90] sm:$0xff]
        %v4420 = vld [vmem:[%s3221 + $0xa8] sm:$0xff]
        %v4421 = vld [vmem:[%s3221 + $0xb0] sm:$0xff]
        %v4422 = vld [vmem:[%s3221 + $0xc8] sm:$0xff]
        %v4423 = vld [vmem:[%s3221 + $0xd0] sm:$0xff]
        %v4424 = vld [vmem:[%s3221 + $0xe8] sm:$0xff]
        %v4425 = vld [vmem:[%s3221 + $0xf0] sm:$0xff]
        %v4426 = vld [vmem:[%s3221 + $0x108] sm:$0xff]
        %v4427 = vld [vmem:[%s3221 + $0x110] sm:$0xff]
        %v4428 = vld [vmem:[%s3221 + $0x128] sm:$0xff]
        %v4429 = vld [vmem:[%s3221 + $0x130] sm:$0xff]
        %v4430 = vld [vmem:[%s3221 + $0x148] sm:$0xff]
        %v4431 = vld [vmem:[%s3221 + $0x150] sm:$0xff]
        %v4432 = vld [vmem:[%s3221 + $0x168] sm:$0xff]
        %v4433 = vld [vmem:[%s3221 + $0x170] sm:$0xff]
        %v4434 = vld [vmem:[%s3221 + $0x188] sm:$0xff]
        %v4435 = vld [vmem:[%s3221 + $0x190] sm:$0xff]
        %v4436 = vld [vmem:[%s3221 + $0x1a8] sm:$0xff]
        %v4437 = vld [vmem:[%s3221 + $0x1b0] sm:$0xff]
        %v4438 = vld [vmem:[%s3221 + $0x1c8] sm:$0xff]
        %v4439 = vld [vmem:[%s3221 + $0x1d0] sm:$0xff]
        %v4440 = vld [vmem:[%s3221 + $0x1e8] sm:$0xff]
        %v4441 = vld [vmem:[%s3221 + $0x1f0] sm:$0xff]
        %v4442 = vld [vmem:[#allocation8 + $0x200] sm:$0xff]
        %v4443 = vld [vmem:[#allocation8 + $0x208] sm:$0xff]
        %v4444 = vld [vmem:[#allocation8 + $0x210] sm:$0xff]
        %v4445 = vld [vmem:[#allocation8 + $0x218] sm:$0xff]
        %v4446 = vld [vmem:[#allocation8 + $0x220] sm:$0xff]
        %v4447 = vld [vmem:[#allocation8 + $0x228] sm:$0xff]
        %v4448 = vld [vmem:[#allocation8 + $0x230] sm:$0xff]
        %v4449 = vld [vmem:[#allocation8 + $0x238] sm:$0xff]
        %v4450 = vld [vmem:[#allocation8 + $0x240] sm:$0xff]
        %v4451 = vld [vmem:[#allocation8 + $0x248] sm:$0xff]
        %v4452 = vld [vmem:[#allocation8 + $0x250] sm:$0xff]
        %v4453 = vld [vmem:[#allocation8 + $0x258] sm:$0xff]
        %v4454 = vld [vmem:[#allocation8 + $0x260] sm:$0xff]
        %v4455 = vld [vmem:[#allocation8 + $0x268] sm:$0xff]
        %v4456 = vld [vmem:[#allocation8 + $0x270] sm:$0xff]
        %v4457 = vld [vmem:[#allocation8 + $0x278] sm:$0xff]
        %4458 = vmatprep.subr.mxu0 0.0
        %4459 = vmatpush1.msra.mxu0 %v4457
        %4460 = vmatprep.subr.mxu0 0.0
        %4461 = vmatpush1.msra.mxu0 %v4456
        %4462 = vmatprep.subr.mxu0 0.0
        %4463 = vmatpush1.msra.mxu0 %v4455
        %4464 = vmatprep.subr.mxu0 0.0
        %4465 = vmatpush1.msra.mxu0 %v4454
        %4466 = vmatprep.subr.mxu0 0.0
        %4467 = vmatpush1.msra.mxu0 %v4453
        %4468 = vmatprep.subr.mxu0 0.0
        %4469 = vmatpush1.msra.mxu0 %v4452
        %4470 = vmatprep.subr.mxu0 0.0
        %4471 = vmatpush1.msra.mxu0 %v4451
        %4472 = vmatprep.subr.mxu0 0.0
        %4473 = vmatpush1.msra.mxu0 %v4450
        %4474 = vmatprep.subr.mxu0 0.0
        %4475 = vmatpush1.msra.mxu0 %v4449
        %4476 = vmatprep.subr.mxu0 0.0
        %4477 = vmatpush1.msra.mxu0 %v4448
        %4478 = vmatprep.subr.mxu0 0.0
        %4479 = vmatpush1.msra.mxu0 %v4447
        %4480 = vmatprep.subr.mxu0 0.0
        %4481 = vmatpush1.msra.mxu0 %v4446
        %4482 = vmatprep.subr.mxu0 0.0
        %4483 = vmatpush1.msra.mxu0 %v4445
        %4484 = vmatprep.subr.mxu0 0.0
        %4485 = vmatpush1.msra.mxu0 %v4444
        %4486 = vmatprep.subr.mxu0 0.0
        %4487 = vmatpush1.msra.mxu0 %v4443
        %4488 = vmatprep.subr.mxu0 0.0
        %4489 = vmatpush1.msra.mxu0 %v4442
        %4490 = vmatprep.subr.mxu0 0.0
        %4491 = vmatpush2.msra.mxu0 0.0
        %4492 = vmatprep.subr.mxu0 0.0
        %4493 = vmatpush2.msra.mxu0 0.0
        %4494 = vmatprep.subr.mxu0 0.0
        %4495 = vmatpush2.msra.mxu0 0.0
        %4496 = vmatprep.subr.mxu0 0.0
        %4497 = vmatpush2.msra.mxu0 0.0
        %4498 = vmatprep.subr.mxu0 0.0
        %4499 = vmatpush2.msra.mxu0 0.0
        %4500 = vmatprep.subr.mxu0 0.0
        %4501 = vmatpush2.msra.mxu0 0.0
        %4502 = vmatprep.subr.mxu0 0.0
        %4503 = vmatpush2.msra.mxu0 0.0
        %4504 = vmatprep.subr.mxu0 0.0
        %4505 = vmatpush2.msra.mxu0 0.0
        %4506 = vmatprep.subr.mxu0 0.0
        %4507 = vmatpush2.msra.mxu0 0.0
        %4508 = vmatprep.subr.mxu0 0.0
        %4509 = vmatpush2.msra.mxu0 0.0
        %4510 = vmatprep.subr.mxu0 0.0
        %4511 = vmatpush2.msra.mxu0 0.0
        %4512 = vmatprep.subr.mxu0 0.0
        %4513 = vmatpush2.msra.mxu0 0.0
        %4514 = vmatprep.subr.mxu0 0.0
        %4515 = vmatpush2.msra.mxu0 0.0
        %4516 = vmatprep.subr.mxu0 0.0
        %4517 = vmatpush2.msra.mxu0 0.0
        %4518 = vmatprep.subr.mxu0 0.0
        %4519 = vmatpush2.msra.mxu0 0.0
        %4520 = vmatprep.subr.mxu0 0.0
        %4521 = vmatpush2.msra.mxu0 0.0
        %4522 = vmatprep.mubr.f32.mxu0 0.0
        %4523 = vmatmul.mubr.f32.gmra.mxu0 %v4410
        %v4524 = vpop.f32.mrf.mxu0
        %v4525 = vadd.f32 0.0, %v4524
        %v4526 = vpop.f32.mrf.mxu0
        %4527 = vmatprep.mubr.f32.mxu0 0.0
        %4528 = vmatmul.mubr.f32.gmra.mxu0 %v4411
        %v4529 = vpop.f32.mrf.mxu0
        %v4530 = vadd.f32 0.0, %v4529
        %v4531 = vpop.f32.mrf.mxu0
        %4532 = vmatprep.mubr.f32.mxu0 0.0
        %4533 = vmatmul.mubr.f32.gmra.mxu0 %v4412
        %v4534 = vpop.f32.mrf.mxu0
        %v4535 = vadd.f32 0.0, %v4534
        %v4536 = vpop.f32.mrf.mxu0
        %4537 = vmatprep.mubr.f32.mxu0 0.0
        %4538 = vmatmul.mubr.f32.gmra.mxu0 %v4413
        %v4539 = vpop.f32.mrf.mxu0
        %v4540 = vadd.f32 0.0, %v4539
        %v4541 = vpop.f32.mrf.mxu0
        %4542 = vmatprep.mubr.f32.mxu0 0.0
        %4543 = vmatmul.mubr.f32.gmra.mxu0 %v4414
        %v4544 = vpop.f32.mrf.mxu0
        %v4545 = vadd.f32 0.0, %v4544
        %v4546 = vpop.f32.mrf.mxu0
        %4547 = vmatprep.mubr.f32.mxu0 0.0
        %4548 = vmatmul.mubr.f32.gmra.mxu0 %v4415
        %v4549 = vpop.f32.mrf.mxu0
        %v4550 = vadd.f32 0.0, %v4549
        %v4551 = vpop.f32.mrf.mxu0
        %4552 = vmatprep.mubr.f32.mxu0 0.0
        %4553 = vmatmul.mubr.f32.gmra.mxu0 %v4416
        %v4554 = vpop.f32.mrf.mxu0
        %v4555 = vadd.f32 0.0, %v4554
        %v4556 = vpop.f32.mrf.mxu0
        %4557 = vmatprep.mubr.f32.mxu0 0.0
        %4558 = vmatmul.mubr.f32.gmra.mxu0 %v4417
        %v4559 = vpop.f32.mrf.mxu0
        %v4560 = vadd.f32 0.0, %v4559
        %v4561 = vpop.f32.mrf.mxu0
        %4562 = vmatprep.mubr.f32.mxu0 0.0
        %4563 = vmatmul.mubr.f32.gmra.mxu0 %v4418
        %v4564 = vpop.f32.mrf.mxu0
        %v4565 = vadd.f32 0.0, %v4564
        %v4566 = vpop.f32.mrf.mxu0
        %4567 = vmatprep.mubr.f32.mxu0 0.0
        %4568 = vmatmul.mubr.f32.gmra.mxu0 %v4419
        %v4569 = vpop.f32.mrf.mxu0
        %v4570 = vadd.f32 0.0, %v4569
        %v4571 = vpop.f32.mrf.mxu0
        %4572 = vmatprep.mubr.f32.mxu0 0.0
        %4573 = vmatmul.mubr.f32.gmra.mxu0 %v4420
        %v4574 = vpop.f32.mrf.mxu0
        %v4575 = vadd.f32 0.0, %v4574
        %v4576 = vpop.f32.mrf.mxu0
        %4577 = vmatprep.mubr.f32.mxu0 0.0
        %4578 = vmatmul.mubr.f32.gmra.mxu0 %v4421
        %v4579 = vpop.f32.mrf.mxu0
        %v4580 = vadd.f32 0.0, %v4579
        %v4581 = vpop.f32.mrf.mxu0
        %4582 = vmatprep.mubr.f32.mxu0 0.0
        %4583 = vmatmul.mubr.f32.gmra.mxu0 %v4422
        %v4584 = vpop.f32.mrf.mxu0
        %v4585 = vadd.f32 0.0, %v4584
        %v4586 = vpop.f32.mrf.mxu0
        %4587 = vmatprep.mubr.f32.mxu0 0.0
        %4588 = vmatmul.mubr.f32.gmra.mxu0 %v4423
        %v4589 = vpop.f32.mrf.mxu0
        %v4590 = vadd.f32 0.0, %v4589
        %v4591 = vpop.f32.mrf.mxu0
        %4592 = vmatprep.mubr.f32.mxu0 0.0
        %4593 = vmatmul.mubr.f32.gmra.mxu0 %v4424
        %v4594 = vpop.f32.mrf.mxu0
        %v4595 = vadd.f32 0.0, %v4594
        %v4596 = vpop.f32.mrf.mxu0
        %4597 = vmatprep.mubr.f32.mxu0 0.0
        %4598 = vmatmul.mubr.f32.gmra.mxu0 %v4425
        %v4599 = vpop.f32.mrf.mxu0
        %v4600 = vadd.f32 0.0, %v4599
        %v4601 = vpop.f32.mrf.mxu0
        %4602 = vmatprep.mubr.f32.mxu0 0.0
        %4603 = vmatmul.mubr.f32.gmra.mxu0 %v4426
        %v4604 = vpop.f32.mrf.mxu0
        %v4605 = vadd.f32 0.0, %v4604
        %v4606 = vpop.f32.mrf.mxu0
        %4607 = vmatprep.mubr.f32.mxu0 0.0
        %4608 = vmatmul.mubr.f32.gmra.mxu0 %v4427
        %v4609 = vpop.f32.mrf.mxu0
        %v4610 = vadd.f32 0.0, %v4609
        %v4611 = vpop.f32.mrf.mxu0
        %4612 = vmatprep.mubr.f32.mxu0 0.0
        %4613 = vmatmul.mubr.f32.gmra.mxu0 %v4428
        %v4614 = vpop.f32.mrf.mxu0
        %v4615 = vadd.f32 0.0, %v4614
        %v4616 = vpop.f32.mrf.mxu0
        %4617 = vmatprep.mubr.f32.mxu0 0.0
        %4618 = vmatmul.mubr.f32.gmra.mxu0 %v4429
        %v4619 = vpop.f32.mrf.mxu0
        %v4620 = vadd.f32 0.0, %v4619
        %v4621 = vpop.f32.mrf.mxu0
        %4622 = vmatprep.mubr.f32.mxu0 0.0
        %4623 = vmatmul.mubr.f32.gmra.mxu0 %v4430
        %v4624 = vpop.f32.mrf.mxu0
        %v4625 = vadd.f32 0.0, %v4624
        %v4626 = vpop.f32.mrf.mxu0
        %4627 = vmatprep.mubr.f32.mxu0 0.0
        %4628 = vmatmul.mubr.f32.gmra.mxu0 %v4431
        %v4629 = vpop.f32.mrf.mxu0
        %v4630 = vadd.f32 0.0, %v4629
        %v4631 = vpop.f32.mrf.mxu0
        %4632 = vmatprep.mubr.f32.mxu0 0.0
        %4633 = vmatmul.mubr.f32.gmra.mxu0 %v4432
        %v4634 = vpop.f32.mrf.mxu0
        %v4635 = vadd.f32 0.0, %v4634
        %v4636 = vpop.f32.mrf.mxu0
        %4637 = vmatprep.mubr.f32.mxu0 0.0
        %4638 = vmatmul.mubr.f32.gmra.mxu0 %v4433
        %v4639 = vpop.f32.mrf.mxu0
        %v4640 = vadd.f32 0.0, %v4639
        %v4641 = vpop.f32.mrf.mxu0
        %4642 = vmatprep.mubr.f32.mxu0 0.0
        %4643 = vmatmul.mubr.f32.gmra.mxu0 %v4434
        %v4644 = vpop.f32.mrf.mxu0
        %v4645 = vadd.f32 0.0, %v4644
        %v4646 = vpop.f32.mrf.mxu0
        %4647 = vmatprep.mubr.f32.mxu0 0.0
        %4648 = vmatmul.mubr.f32.gmra.mxu0 %v4435
        %v4649 = vpop.f32.mrf.mxu0
        %v4650 = vadd.f32 0.0, %v4649
        %v4651 = vpop.f32.mrf.mxu0
        %4652 = vmatprep.mubr.f32.mxu0 0.0
        %4653 = vmatmul.mubr.f32.gmra.mxu0 %v4436
        %v4654 = vpop.f32.mrf.mxu0
        %v4655 = vadd.f32 0.0, %v4654
        %v4656 = vpop.f32.mrf.mxu0
        %4657 = vmatprep.mubr.f32.mxu0 0.0
        %4658 = vmatmul.mubr.f32.gmra.mxu0 %v4437
        %v4659 = vpop.f32.mrf.mxu0
        %v4660 = vadd.f32 0.0, %v4659
        %v4661 = vpop.f32.mrf.mxu0
        %4662 = vmatprep.mubr.f32.mxu0 0.0
        %4663 = vmatmul.mubr.f32.gmra.mxu0 %v4438
        %v4664 = vpop.f32.mrf.mxu0
        %v4665 = vadd.f32 0.0, %v4664
        %v4666 = vpop.f32.mrf.mxu0
        %4667 = vmatprep.mubr.f32.mxu0 0.0
        %4668 = vmatmul.mubr.f32.gmra.mxu0 %v4439
        %v4669 = vpop.f32.mrf.mxu0
        %v4670 = vadd.f32 0.0, %v4669
        %v4671 = vpop.f32.mrf.mxu0
        %4672 = vmatprep.mubr.f32.mxu0 0.0
        %4673 = vmatmul.mubr.f32.gmra.mxu0 %v4440
        %v4674 = vpop.f32.mrf.mxu0
        %v4675 = vadd.f32 0.0, %v4674
        %v4676 = vpop.f32.mrf.mxu0
        %4677 = vmatprep.mubr.f32.mxu0 0.0
        %4678 = vmatmul.mubr.f32.gmra.mxu0 %v4441
        %v4679 = vpop.f32.mrf.mxu0
        %v4680 = vadd.f32 0.0, %v4679
        %v4681 = vpop.f32.mrf.mxu0
        %4682 = vdwg.mxu0
        %v4683 = vadd.f32 %v4378, %v4525
        %v4684 = vadd.f32 %v4379, %v4530
        %v4685 = vadd.f32 %v4380, %v4535
        %v4686 = vadd.f32 %v4381, %v4540
        %v4687 = vadd.f32 %v4382, %v4545
        %v4688 = vadd.f32 %v4383, %v4550
        %v4689 = vadd.f32 %v4384, %v4555
        %v4690 = vadd.f32 %v4385, %v4560
        %v4691 = vadd.f32 %v4386, %v4565
        %v4692 = vadd.f32 %v4387, %v4570
        %v4693 = vadd.f32 %v4388, %v4575
        %v4694 = vadd.f32 %v4389, %v4580
        %v4695 = vadd.f32 %v4390, %v4585
        %v4696 = vadd.f32 %v4391, %v4590
        %v4697 = vadd.f32 %v4392, %v4595
        %v4698 = vadd.f32 %v4393, %v4600
        %v4699 = vadd.f32 %v4394, %v4605
        %v4700 = vadd.f32 %v4395, %v4610
        %v4701 = vadd.f32 %v4396, %v4615
        %v4702 = vadd.f32 %v4397, %v4620
        %v4703 = vadd.f32 %v4398, %v4625
        %v4704 = vadd.f32 %v4399, %v4630
        %v4705 = vadd.f32 %v4400, %v4635
        %v4706 = vadd.f32 %v4401, %v4640
        %v4707 = vadd.f32 %v4402, %v4645
        %v4708 = vadd.f32 %v4403, %v4650
        %v4709 = vadd.f32 %v4404, %v4655
        %v4710 = vadd.f32 %v4405, %v4660
        %v4711 = vadd.f32 %v4406, %v4665
        %v4712 = vadd.f32 %v4407, %v4670
        %v4713 = vadd.f32 %v4408, %v4675
        %v4714 = vadd.f32 %v4409, %v4680
        %v4715 = vld [vmem:[%s3221 + $0x9] sm:$0xff]
        %v4716 = vld [vmem:[%s3221 + $0x11] sm:$0xff]
        %v4717 = vld [vmem:[%s3221 + $0x29] sm:$0xff]
        %v4718 = vld [vmem:[%s3221 + $0x31] sm:$0xff]
        %v4719 = vld [vmem:[%s3221 + $0x49] sm:$0xff]
        %v4720 = vld [vmem:[%s3221 + $0x51] sm:$0xff]
        %v4721 = vld [vmem:[%s3221 + $0x69] sm:$0xff]
        %v4722 = vld [vmem:[%s3221 + $0x71] sm:$0xff]
        %v4723 = vld [vmem:[%s3221 + $0x89] sm:$0xff]
        %v4724 = vld [vmem:[%s3221 + $0x91] sm:$0xff]
        %v4725 = vld [vmem:[%s3221 + $0xa9] sm:$0xff]
        %v4726 = vld [vmem:[%s3221 + $0xb1] sm:$0xff]
        %v4727 = vld [vmem:[%s3221 + $0xc9] sm:$0xff]
        %v4728 = vld [vmem:[%s3221 + $0xd1] sm:$0xff]
        %v4729 = vld [vmem:[%s3221 + $0xe9] sm:$0xff]
        %v4730 = vld [vmem:[%s3221 + $0xf1] sm:$0xff]
        %v4731 = vld [vmem:[%s3221 + $0x109] sm:$0xff]
        %v4732 = vld [vmem:[%s3221 + $0x111] sm:$0xff]
        %v4733 = vld [vmem:[%s3221 + $0x129] sm:$0xff]
        %v4734 = vld [vmem:[%s3221 + $0x131] sm:$0xff]
        %v4735 = vld [vmem:[%s3221 + $0x149] sm:$0xff]
        %v4736 = vld [vmem:[%s3221 + $0x151] sm:$0xff]
        %v4737 = vld [vmem:[%s3221 + $0x169] sm:$0xff]
        %v4738 = vld [vmem:[%s3221 + $0x171] sm:$0xff]
        %v4739 = vld [vmem:[%s3221 + $0x189] sm:$0xff]
        %v4740 = vld [vmem:[%s3221 + $0x191] sm:$0xff]
        %v4741 = vld [vmem:[%s3221 + $0x1a9] sm:$0xff]
        %v4742 = vld [vmem:[%s3221 + $0x1b1] sm:$0xff]
        %v4743 = vld [vmem:[%s3221 + $0x1c9] sm:$0xff]
        %v4744 = vld [vmem:[%s3221 + $0x1d1] sm:$0xff]
        %v4745 = vld [vmem:[%s3221 + $0x1e9] sm:$0xff]
        %v4746 = vld [vmem:[%s3221 + $0x1f1] sm:$0xff]
        %v4747 = vld [vmem:[#allocation8 + $0x280] sm:$0xff]
        %v4748 = vld [vmem:[#allocation8 + $0x288] sm:$0xff]
        %v4749 = vld [vmem:[#allocation8 + $0x290] sm:$0xff]
        %v4750 = vld [vmem:[#allocation8 + $0x298] sm:$0xff]
        %v4751 = vld [vmem:[#allocation8 + $0x2a0] sm:$0xff]
        %v4752 = vld [vmem:[#allocation8 + $0x2a8] sm:$0xff]
        %v4753 = vld [vmem:[#allocation8 + $0x2b0] sm:$0xff]
        %v4754 = vld [vmem:[#allocation8 + $0x2b8] sm:$0xff]
        %v4755 = vld [vmem:[#allocation8 + $0x2c0] sm:$0xff]
        %v4756 = vld [vmem:[#allocation8 + $0x2c8] sm:$0xff]
        %v4757 = vld [vmem:[#allocation8 + $0x2d0] sm:$0xff]
        %v4758 = vld [vmem:[#allocation8 + $0x2d8] sm:$0xff]
        %v4759 = vld [vmem:[#allocation8 + $0x2e0] sm:$0xff]
        %v4760 = vld [vmem:[#allocation8 + $0x2e8] sm:$0xff]
        %v4761 = vld [vmem:[#allocation8 + $0x2f0] sm:$0xff]
        %v4762 = vld [vmem:[#allocation8 + $0x2f8] sm:$0xff]
        %4763 = vmatprep.subr.mxu0 0.0
        %4764 = vmatpush1.msra.mxu0 %v4762
        %4765 = vmatprep.subr.mxu0 0.0
        %4766 = vmatpush1.msra.mxu0 %v4761
        %4767 = vmatprep.subr.mxu0 0.0
        %4768 = vmatpush1.msra.mxu0 %v4760
        %4769 = vmatprep.subr.mxu0 0.0
        %4770 = vmatpush1.msra.mxu0 %v4759
        %4771 = vmatprep.subr.mxu0 0.0
        %4772 = vmatpush1.msra.mxu0 %v4758
        %4773 = vmatprep.subr.mxu0 0.0
        %4774 = vmatpush1.msra.mxu0 %v4757
        %4775 = vmatprep.subr.mxu0 0.0
        %4776 = vmatpush1.msra.mxu0 %v4756
        %4777 = vmatprep.subr.mxu0 0.0
        %4778 = vmatpush1.msra.mxu0 %v4755
        %4779 = vmatprep.subr.mxu0 0.0
        %4780 = vmatpush1.msra.mxu0 %v4754
        %4781 = vmatprep.subr.mxu0 0.0
        %4782 = vmatpush1.msra.mxu0 %v4753
        %4783 = vmatprep.subr.mxu0 0.0
        %4784 = vmatpush1.msra.mxu0 %v4752
        %4785 = vmatprep.subr.mxu0 0.0
        %4786 = vmatpush1.msra.mxu0 %v4751
        %4787 = vmatprep.subr.mxu0 0.0
        %4788 = vmatpush1.msra.mxu0 %v4750
        %4789 = vmatprep.subr.mxu0 0.0
        %4790 = vmatpush1.msra.mxu0 %v4749
        %4791 = vmatprep.subr.mxu0 0.0
        %4792 = vmatpush1.msra.mxu0 %v4748
        %4793 = vmatprep.subr.mxu0 0.0
        %4794 = vmatpush1.msra.mxu0 %v4747
        %4795 = vmatprep.subr.mxu0 0.0
        %4796 = vmatpush2.msra.mxu0 0.0
        %4797 = vmatprep.subr.mxu0 0.0
        %4798 = vmatpush2.msra.mxu0 0.0
        %4799 = vmatprep.subr.mxu0 0.0
        %4800 = vmatpush2.msra.mxu0 0.0
        %4801 = vmatprep.subr.mxu0 0.0
        %4802 = vmatpush2.msra.mxu0 0.0
        %4803 = vmatprep.subr.mxu0 0.0
        %4804 = vmatpush2.msra.mxu0 0.0
        %4805 = vmatprep.subr.mxu0 0.0
        %4806 = vmatpush2.msra.mxu0 0.0
        %4807 = vmatprep.subr.mxu0 0.0
        %4808 = vmatpush2.msra.mxu0 0.0
        %4809 = vmatprep.subr.mxu0 0.0
        %4810 = vmatpush2.msra.mxu0 0.0
        %4811 = vmatprep.subr.mxu0 0.0
        %4812 = vmatpush2.msra.mxu0 0.0
        %4813 = vmatprep.subr.mxu0 0.0
        %4814 = vmatpush2.msra.mxu0 0.0
        %4815 = vmatprep.subr.mxu0 0.0
        %4816 = vmatpush2.msra.mxu0 0.0
        %4817 = vmatprep.subr.mxu0 0.0
        %4818 = vmatpush2.msra.mxu0 0.0
        %4819 = vmatprep.subr.mxu0 0.0
        %4820 = vmatpush2.msra.mxu0 0.0
        %4821 = vmatprep.subr.mxu0 0.0
        %4822 = vmatpush2.msra.mxu0 0.0
        %4823 = vmatprep.subr.mxu0 0.0
        %4824 = vmatpush2.msra.mxu0 0.0
        %4825 = vmatprep.subr.mxu0 0.0
        %4826 = vmatpush2.msra.mxu0 0.0
        %4827 = vmatprep.mubr.f32.mxu0 0.0
        %4828 = vmatmul.mubr.f32.gmra.mxu0 %v4715
        %v4829 = vpop.f32.mrf.mxu0
        %v4830 = vadd.f32 0.0, %v4829
        %v4831 = vpop.f32.mrf.mxu0
        %4832 = vmatprep.mubr.f32.mxu0 0.0
        %4833 = vmatmul.mubr.f32.gmra.mxu0 %v4716
        %v4834 = vpop.f32.mrf.mxu0
        %v4835 = vadd.f32 0.0, %v4834
        %v4836 = vpop.f32.mrf.mxu0
        %4837 = vmatprep.mubr.f32.mxu0 0.0
        %4838 = vmatmul.mubr.f32.gmra.mxu0 %v4717
        %v4839 = vpop.f32.mrf.mxu0
        %v4840 = vadd.f32 0.0, %v4839
        %v4841 = vpop.f32.mrf.mxu0
        %4842 = vmatprep.mubr.f32.mxu0 0.0
        %4843 = vmatmul.mubr.f32.gmra.mxu0 %v4718
        %v4844 = vpop.f32.mrf.mxu0
        %v4845 = vadd.f32 0.0, %v4844
        %v4846 = vpop.f32.mrf.mxu0
        %4847 = vmatprep.mubr.f32.mxu0 0.0
        %4848 = vmatmul.mubr.f32.gmra.mxu0 %v4719
        %v4849 = vpop.f32.mrf.mxu0
        %v4850 = vadd.f32 0.0, %v4849
        %v4851 = vpop.f32.mrf.mxu0
        %4852 = vmatprep.mubr.f32.mxu0 0.0
        %4853 = vmatmul.mubr.f32.gmra.mxu0 %v4720
        %v4854 = vpop.f32.mrf.mxu0
        %v4855 = vadd.f32 0.0, %v4854
        %v4856 = vpop.f32.mrf.mxu0
        %4857 = vmatprep.mubr.f32.mxu0 0.0
        %4858 = vmatmul.mubr.f32.gmra.mxu0 %v4721
        %v4859 = vpop.f32.mrf.mxu0
        %v4860 = vadd.f32 0.0, %v4859
        %v4861 = vpop.f32.mrf.mxu0
        %4862 = vmatprep.mubr.f32.mxu0 0.0
        %4863 = vmatmul.mubr.f32.gmra.mxu0 %v4722
        %v4864 = vpop.f32.mrf.mxu0
        %v4865 = vadd.f32 0.0, %v4864
        %v4866 = vpop.f32.mrf.mxu0
        %4867 = vmatprep.mubr.f32.mxu0 0.0
        %4868 = vmatmul.mubr.f32.gmra.mxu0 %v4723
        %v4869 = vpop.f32.mrf.mxu0
        %v4870 = vadd.f32 0.0, %v4869
        %v4871 = vpop.f32.mrf.mxu0
        %4872 = vmatprep.mubr.f32.mxu0 0.0
        %4873 = vmatmul.mubr.f32.gmra.mxu0 %v4724
        %v4874 = vpop.f32.mrf.mxu0
        %v4875 = vadd.f32 0.0, %v4874
        %v4876 = vpop.f32.mrf.mxu0
        %4877 = vmatprep.mubr.f32.mxu0 0.0
        %4878 = vmatmul.mubr.f32.gmra.mxu0 %v4725
        %v4879 = vpop.f32.mrf.mxu0
        %v4880 = vadd.f32 0.0, %v4879
        %v4881 = vpop.f32.mrf.mxu0
        %4882 = vmatprep.mubr.f32.mxu0 0.0
        %4883 = vmatmul.mubr.f32.gmra.mxu0 %v4726
        %v4884 = vpop.f32.mrf.mxu0
        %v4885 = vadd.f32 0.0, %v4884
        %v4886 = vpop.f32.mrf.mxu0
        %4887 = vmatprep.mubr.f32.mxu0 0.0
        %4888 = vmatmul.mubr.f32.gmra.mxu0 %v4727
        %v4889 = vpop.f32.mrf.mxu0
        %v4890 = vadd.f32 0.0, %v4889
        %v4891 = vpop.f32.mrf.mxu0
        %4892 = vmatprep.mubr.f32.mxu0 0.0
        %4893 = vmatmul.mubr.f32.gmra.mxu0 %v4728
        %v4894 = vpop.f32.mrf.mxu0
        %v4895 = vadd.f32 0.0, %v4894
        %v4896 = vpop.f32.mrf.mxu0
        %4897 = vmatprep.mubr.f32.mxu0 0.0
        %4898 = vmatmul.mubr.f32.gmra.mxu0 %v4729
        %v4899 = vpop.f32.mrf.mxu0
        %v4900 = vadd.f32 0.0, %v4899
        %v4901 = vpop.f32.mrf.mxu0
        %4902 = vmatprep.mubr.f32.mxu0 0.0
        %4903 = vmatmul.mubr.f32.gmra.mxu0 %v4730
        %v4904 = vpop.f32.mrf.mxu0
        %v4905 = vadd.f32 0.0, %v4904
        %v4906 = vpop.f32.mrf.mxu0
        %4907 = vmatprep.mubr.f32.mxu0 0.0
        %4908 = vmatmul.mubr.f32.gmra.mxu0 %v4731
        %v4909 = vpop.f32.mrf.mxu0
        %v4910 = vadd.f32 0.0, %v4909
        %v4911 = vpop.f32.mrf.mxu0
        %4912 = vmatprep.mubr.f32.mxu0 0.0
        %4913 = vmatmul.mubr.f32.gmra.mxu0 %v4732
        %v4914 = vpop.f32.mrf.mxu0
        %v4915 = vadd.f32 0.0, %v4914
        %v4916 = vpop.f32.mrf.mxu0
        %4917 = vmatprep.mubr.f32.mxu0 0.0
        %4918 = vmatmul.mubr.f32.gmra.mxu0 %v4733
        %v4919 = vpop.f32.mrf.mxu0
        %v4920 = vadd.f32 0.0, %v4919
        %v4921 = vpop.f32.mrf.mxu0
        %4922 = vmatprep.mubr.f32.mxu0 0.0
        %4923 = vmatmul.mubr.f32.gmra.mxu0 %v4734
        %v4924 = vpop.f32.mrf.mxu0
        %v4925 = vadd.f32 0.0, %v4924
        %v4926 = vpop.f32.mrf.mxu0
        %4927 = vmatprep.mubr.f32.mxu0 0.0
        %4928 = vmatmul.mubr.f32.gmra.mxu0 %v4735
        %v4929 = vpop.f32.mrf.mxu0
        %v4930 = vadd.f32 0.0, %v4929
        %v4931 = vpop.f32.mrf.mxu0
        %4932 = vmatprep.mubr.f32.mxu0 0.0
        %4933 = vmatmul.mubr.f32.gmra.mxu0 %v4736
        %v4934 = vpop.f32.mrf.mxu0
        %v4935 = vadd.f32 0.0, %v4934
        %v4936 = vpop.f32.mrf.mxu0
        %4937 = vmatprep.mubr.f32.mxu0 0.0
        %4938 = vmatmul.mubr.f32.gmra.mxu0 %v4737
        %v4939 = vpop.f32.mrf.mxu0
        %v4940 = vadd.f32 0.0, %v4939
        %v4941 = vpop.f32.mrf.mxu0
        %4942 = vmatprep.mubr.f32.mxu0 0.0
        %4943 = vmatmul.mubr.f32.gmra.mxu0 %v4738
        %v4944 = vpop.f32.mrf.mxu0
        %v4945 = vadd.f32 0.0, %v4944
        %v4946 = vpop.f32.mrf.mxu0
        %4947 = vmatprep.mubr.f32.mxu0 0.0
        %4948 = vmatmul.mubr.f32.gmra.mxu0 %v4739
        %v4949 = vpop.f32.mrf.mxu0
        %v4950 = vadd.f32 0.0, %v4949
        %v4951 = vpop.f32.mrf.mxu0
        %4952 = vmatprep.mubr.f32.mxu0 0.0
        %4953 = vmatmul.mubr.f32.gmra.mxu0 %v4740
        %v4954 = vpop.f32.mrf.mxu0
        %v4955 = vadd.f32 0.0, %v4954
        %v4956 = vpop.f32.mrf.mxu0
        %4957 = vmatprep.mubr.f32.mxu0 0.0
        %4958 = vmatmul.mubr.f32.gmra.mxu0 %v4741
        %v4959 = vpop.f32.mrf.mxu0
        %v4960 = vadd.f32 0.0, %v4959
        %v4961 = vpop.f32.mrf.mxu0
        %4962 = vmatprep.mubr.f32.mxu0 0.0
        %4963 = vmatmul.mubr.f32.gmra.mxu0 %v4742
        %v4964 = vpop.f32.mrf.mxu0
        %v4965 = vadd.f32 0.0, %v4964
        %v4966 = vpop.f32.mrf.mxu0
        %4967 = vmatprep.mubr.f32.mxu0 0.0
        %4968 = vmatmul.mubr.f32.gmra.mxu0 %v4743
        %v4969 = vpop.f32.mrf.mxu0
        %v4970 = vadd.f32 0.0, %v4969
        %v4971 = vpop.f32.mrf.mxu0
        %4972 = vmatprep.mubr.f32.mxu0 0.0
        %4973 = vmatmul.mubr.f32.gmra.mxu0 %v4744
        %v4974 = vpop.f32.mrf.mxu0
        %v4975 = vadd.f32 0.0, %v4974
        %v4976 = vpop.f32.mrf.mxu0
        %4977 = vmatprep.mubr.f32.mxu0 0.0
        %4978 = vmatmul.mubr.f32.gmra.mxu0 %v4745
        %v4979 = vpop.f32.mrf.mxu0
        %v4980 = vadd.f32 0.0, %v4979
        %v4981 = vpop.f32.mrf.mxu0
        %4982 = vmatprep.mubr.f32.mxu0 0.0
        %4983 = vmatmul.mubr.f32.gmra.mxu0 %v4746
        %v4984 = vpop.f32.mrf.mxu0
        %v4985 = vadd.f32 0.0, %v4984
        %v4986 = vpop.f32.mrf.mxu0
        %4987 = vdwg.mxu0
        %v4988 = vadd.f32 %v4683, %v4830
        %v4989 = vadd.f32 %v4684, %v4835
        %v4990 = vadd.f32 %v4685, %v4840
        %v4991 = vadd.f32 %v4686, %v4845
        %v4992 = vadd.f32 %v4687, %v4850
        %v4993 = vadd.f32 %v4688, %v4855
        %v4994 = vadd.f32 %v4689, %v4860
        %v4995 = vadd.f32 %v4690, %v4865
        %v4996 = vadd.f32 %v4691, %v4870
        %v4997 = vadd.f32 %v4692, %v4875
        %v4998 = vadd.f32 %v4693, %v4880
        %v4999 = vadd.f32 %v4694, %v4885
        %v5000 = vadd.f32 %v4695, %v4890
        %v5001 = vadd.f32 %v4696, %v4895
        %v5002 = vadd.f32 %v4697, %v4900
        %v5003 = vadd.f32 %v4698, %v4905
        %v5004 = vadd.f32 %v4699, %v4910
        %v5005 = vadd.f32 %v4700, %v4915
        %v5006 = vadd.f32 %v4701, %v4920
        %v5007 = vadd.f32 %v4702, %v4925
        %v5008 = vadd.f32 %v4703, %v4930
        %v5009 = vadd.f32 %v4704, %v4935
        %v5010 = vadd.f32 %v4705, %v4940
        %v5011 = vadd.f32 %v4706, %v4945
        %v5012 = vadd.f32 %v4707, %v4950
        %v5013 = vadd.f32 %v4708, %v4955
        %v5014 = vadd.f32 %v4709, %v4960
        %v5015 = vadd.f32 %v4710, %v4965
        %v5016 = vadd.f32 %v4711, %v4970
        %v5017 = vadd.f32 %v4712, %v4975
        %v5018 = vadd.f32 %v4713, %v4980
        %v5019 = vadd.f32 %v4714, %v4985
        %s5020 = scalar_lea.vmem [#allocation3], 64
        %v5021 = vld [vmem:[%s5020 + $0x7] sm:$0xff]
        %v5022 = vld [vmem:[%s5020 + $0xf] sm:$0xff]
        %v5023 = vld [vmem:[%s5020 + $0x27] sm:$0xff]
        %v5024 = vld [vmem:[%s5020 + $0x2f] sm:$0xff]
        %v5025 = vld [vmem:[%s5020 + $0x47] sm:$0xff]
        %v5026 = vld [vmem:[%s5020 + $0x4f] sm:$0xff]
        %v5027 = vld [vmem:[%s5020 + $0x67] sm:$0xff]
        %v5028 = vld [vmem:[%s5020 + $0x6f] sm:$0xff]
        %v5029 = vld [vmem:[%s5020 + $0x87] sm:$0xff]
        %v5030 = vld [vmem:[%s5020 + $0x8f] sm:$0xff]
        %v5031 = vld [vmem:[%s5020 + $0xa7] sm:$0xff]
        %v5032 = vld [vmem:[%s5020 + $0xaf] sm:$0xff]
        %v5033 = vld [vmem:[%s5020 + $0xc7] sm:$0xff]
        %v5034 = vld [vmem:[%s5020 + $0xcf] sm:$0xff]
        %v5035 = vld [vmem:[%s5020 + $0xe7] sm:$0xff]
        %v5036 = vld [vmem:[%s5020 + $0xef] sm:$0xff]
        %v5037 = vld [vmem:[%s5020 + $0x107] sm:$0xff]
        %v5038 = vld [vmem:[%s5020 + $0x10f] sm:$0xff]
        %v5039 = vld [vmem:[%s5020 + $0x127] sm:$0xff]
        %v5040 = vld [vmem:[%s5020 + $0x12f] sm:$0xff]
        %v5041 = vld [vmem:[%s5020 + $0x147] sm:$0xff]
        %v5042 = vld [vmem:[%s5020 + $0x14f] sm:$0xff]
        %v5043 = vld [vmem:[%s5020 + $0x167] sm:$0xff]
        %v5044 = vld [vmem:[%s5020 + $0x16f] sm:$0xff]
        %v5045 = vld [vmem:[%s5020 + $0x187] sm:$0xff]
        %v5046 = vld [vmem:[%s5020 + $0x18f] sm:$0xff]
        %v5047 = vld [vmem:[%s5020 + $0x1a7] sm:$0xff]
        %v5048 = vld [vmem:[%s5020 + $0x1af] sm:$0xff]
        %v5049 = vld [vmem:[%s5020 + $0x1c7] sm:$0xff]
        %v5050 = vld [vmem:[%s5020 + $0x1cf] sm:$0xff]
        %v5051 = vld [vmem:[%s5020 + $0x1e7] sm:$0xff]
        %v5052 = vld [vmem:[%s5020 + $0x1ef] sm:$0xff]
        %v5053 = vld [vmem:[#allocation8 + $0x300] sm:$0xff]
        %v5054 = vld [vmem:[#allocation8 + $0x308] sm:$0xff]
        %v5055 = vld [vmem:[#allocation8 + $0x310] sm:$0xff]
        %v5056 = vld [vmem:[#allocation8 + $0x318] sm:$0xff]
        %v5057 = vld [vmem:[#allocation8 + $0x320] sm:$0xff]
        %v5058 = vld [vmem:[#allocation8 + $0x328] sm:$0xff]
        %v5059 = vld [vmem:[#allocation8 + $0x330] sm:$0xff]
        %v5060 = vld [vmem:[#allocation8 + $0x338] sm:$0xff]
        %v5061 = vld [vmem:[#allocation8 + $0x340] sm:$0xff]
        %v5062 = vld [vmem:[#allocation8 + $0x348] sm:$0xff]
        %v5063 = vld [vmem:[#allocation8 + $0x350] sm:$0xff]
        %v5064 = vld [vmem:[#allocation8 + $0x358] sm:$0xff]
        %v5065 = vld [vmem:[#allocation8 + $0x360] sm:$0xff]
        %v5066 = vld [vmem:[#allocation8 + $0x368] sm:$0xff]
        %v5067 = vld [vmem:[#allocation8 + $0x370] sm:$0xff]
        %v5068 = vld [vmem:[#allocation8 + $0x378] sm:$0xff]
        %5069 = vmatprep.subr.mxu0 0.0
        %5070 = vmatpush1.msra.mxu0 %v5068
        %5071 = vmatprep.subr.mxu0 0.0
        %5072 = vmatpush1.msra.mxu0 %v5067
        %5073 = vmatprep.subr.mxu0 0.0
        %5074 = vmatpush1.msra.mxu0 %v5066
        %5075 = vmatprep.subr.mxu0 0.0
        %5076 = vmatpush1.msra.mxu0 %v5065
        %5077 = vmatprep.subr.mxu0 0.0
        %5078 = vmatpush1.msra.mxu0 %v5064
        %5079 = vmatprep.subr.mxu0 0.0
        %5080 = vmatpush1.msra.mxu0 %v5063
        %5081 = vmatprep.subr.mxu0 0.0
        %5082 = vmatpush1.msra.mxu0 %v5062
        %5083 = vmatprep.subr.mxu0 0.0
        %5084 = vmatpush1.msra.mxu0 %v5061
        %5085 = vmatprep.subr.mxu0 0.0
        %5086 = vmatpush1.msra.mxu0 %v5060
        %5087 = vmatprep.subr.mxu0 0.0
        %5088 = vmatpush1.msra.mxu0 %v5059
        %5089 = vmatprep.subr.mxu0 0.0
        %5090 = vmatpush1.msra.mxu0 %v5058
        %5091 = vmatprep.subr.mxu0 0.0
        %5092 = vmatpush1.msra.mxu0 %v5057
        %5093 = vmatprep.subr.mxu0 0.0
        %5094 = vmatpush1.msra.mxu0 %v5056
        %5095 = vmatprep.subr.mxu0 0.0
        %5096 = vmatpush1.msra.mxu0 %v5055
        %5097 = vmatprep.subr.mxu0 0.0
        %5098 = vmatpush1.msra.mxu0 %v5054
        %5099 = vmatprep.subr.mxu0 0.0
        %5100 = vmatpush1.msra.mxu0 %v5053
        %5101 = vmatprep.subr.mxu0 0.0
        %5102 = vmatpush2.msra.mxu0 0.0
        %5103 = vmatprep.subr.mxu0 0.0
        %5104 = vmatpush2.msra.mxu0 0.0
        %5105 = vmatprep.subr.mxu0 0.0
        %5106 = vmatpush2.msra.mxu0 0.0
        %5107 = vmatprep.subr.mxu0 0.0
        %5108 = vmatpush2.msra.mxu0 0.0
        %5109 = vmatprep.subr.mxu0 0.0
        %5110 = vmatpush2.msra.mxu0 0.0
        %5111 = vmatprep.subr.mxu0 0.0
        %5112 = vmatpush2.msra.mxu0 0.0
        %5113 = vmatprep.subr.mxu0 0.0
        %5114 = vmatpush2.msra.mxu0 0.0
        %5115 = vmatprep.subr.mxu0 0.0
        %5116 = vmatpush2.msra.mxu0 0.0
        %5117 = vmatprep.subr.mxu0 0.0
        %5118 = vmatpush2.msra.mxu0 0.0
        %5119 = vmatprep.subr.mxu0 0.0
        %5120 = vmatpush2.msra.mxu0 0.0
        %5121 = vmatprep.subr.mxu0 0.0
        %5122 = vmatpush2.msra.mxu0 0.0
        %5123 = vmatprep.subr.mxu0 0.0
        %5124 = vmatpush2.msra.mxu0 0.0
        %5125 = vmatprep.subr.mxu0 0.0
        %5126 = vmatpush2.msra.mxu0 0.0
        %5127 = vmatprep.subr.mxu0 0.0
        %5128 = vmatpush2.msra.mxu0 0.0
        %5129 = vmatprep.subr.mxu0 0.0
        %5130 = vmatpush2.msra.mxu0 0.0
        %5131 = vmatprep.subr.mxu0 0.0
        %5132 = vmatpush2.msra.mxu0 0.0
        %5133 = vmatprep.mubr.f32.mxu0 0.0
        %5134 = vmatmul.mubr.f32.gmra.mxu0 %v5021
        %v5135 = vpop.f32.mrf.mxu0
        %v5136 = vadd.f32 0.0, %v5135
        %v5137 = vpop.f32.mrf.mxu0
        %5138 = vmatprep.mubr.f32.mxu0 0.0
        %5139 = vmatmul.mubr.f32.gmra.mxu0 %v5022
        %v5140 = vpop.f32.mrf.mxu0
        %v5141 = vadd.f32 0.0, %v5140
        %v5142 = vpop.f32.mrf.mxu0
        %5143 = vmatprep.mubr.f32.mxu0 0.0
        %5144 = vmatmul.mubr.f32.gmra.mxu0 %v5023
        %v5145 = vpop.f32.mrf.mxu0
        %v5146 = vadd.f32 0.0, %v5145
        %v5147 = vpop.f32.mrf.mxu0
        %5148 = vmatprep.mubr.f32.mxu0 0.0
        %5149 = vmatmul.mubr.f32.gmra.mxu0 %v5024
        %v5150 = vpop.f32.mrf.mxu0
        %v5151 = vadd.f32 0.0, %v5150
        %v5152 = vpop.f32.mrf.mxu0
        %5153 = vmatprep.mubr.f32.mxu0 0.0
        %5154 = vmatmul.mubr.f32.gmra.mxu0 %v5025
        %v5155 = vpop.f32.mrf.mxu0
        %v5156 = vadd.f32 0.0, %v5155
        %v5157 = vpop.f32.mrf.mxu0
        %5158 = vmatprep.mubr.f32.mxu0 0.0
        %5159 = vmatmul.mubr.f32.gmra.mxu0 %v5026
        %v5160 = vpop.f32.mrf.mxu0
        %v5161 = vadd.f32 0.0, %v5160
        %v5162 = vpop.f32.mrf.mxu0
        %5163 = vmatprep.mubr.f32.mxu0 0.0
        %5164 = vmatmul.mubr.f32.gmra.mxu0 %v5027
        %v5165 = vpop.f32.mrf.mxu0
        %v5166 = vadd.f32 0.0, %v5165
        %v5167 = vpop.f32.mrf.mxu0
        %5168 = vmatprep.mubr.f32.mxu0 0.0
        %5169 = vmatmul.mubr.f32.gmra.mxu0 %v5028
        %v5170 = vpop.f32.mrf.mxu0
        %v5171 = vadd.f32 0.0, %v5170
        %v5172 = vpop.f32.mrf.mxu0
        %5173 = vmatprep.mubr.f32.mxu0 0.0
        %5174 = vmatmul.mubr.f32.gmra.mxu0 %v5029
        %v5175 = vpop.f32.mrf.mxu0
        %v5176 = vadd.f32 0.0, %v5175
        %v5177 = vpop.f32.mrf.mxu0
        %5178 = vmatprep.mubr.f32.mxu0 0.0
        %5179 = vmatmul.mubr.f32.gmra.mxu0 %v5030
        %v5180 = vpop.f32.mrf.mxu0
        %v5181 = vadd.f32 0.0, %v5180
        %v5182 = vpop.f32.mrf.mxu0
        %5183 = vmatprep.mubr.f32.mxu0 0.0
        %5184 = vmatmul.mubr.f32.gmra.mxu0 %v5031
        %v5185 = vpop.f32.mrf.mxu0
        %v5186 = vadd.f32 0.0, %v5185
        %v5187 = vpop.f32.mrf.mxu0
        %5188 = vmatprep.mubr.f32.mxu0 0.0
        %5189 = vmatmul.mubr.f32.gmra.mxu0 %v5032
        %v5190 = vpop.f32.mrf.mxu0
        %v5191 = vadd.f32 0.0, %v5190
        %v5192 = vpop.f32.mrf.mxu0
        %5193 = vmatprep.mubr.f32.mxu0 0.0
        %5194 = vmatmul.mubr.f32.gmra.mxu0 %v5033
        %v5195 = vpop.f32.mrf.mxu0
        %v5196 = vadd.f32 0.0, %v5195
        %v5197 = vpop.f32.mrf.mxu0
        %5198 = vmatprep.mubr.f32.mxu0 0.0
        %5199 = vmatmul.mubr.f32.gmra.mxu0 %v5034
        %v5200 = vpop.f32.mrf.mxu0
        %v5201 = vadd.f32 0.0, %v5200
        %v5202 = vpop.f32.mrf.mxu0
        %5203 = vmatprep.mubr.f32.mxu0 0.0
        %5204 = vmatmul.mubr.f32.gmra.mxu0 %v5035
        %v5205 = vpop.f32.mrf.mxu0
        %v5206 = vadd.f32 0.0, %v5205
        %v5207 = vpop.f32.mrf.mxu0
        %5208 = vmatprep.mubr.f32.mxu0 0.0
        %5209 = vmatmul.mubr.f32.gmra.mxu0 %v5036
        %v5210 = vpop.f32.mrf.mxu0
        %v5211 = vadd.f32 0.0, %v5210
        %v5212 = vpop.f32.mrf.mxu0
        %5213 = vmatprep.mubr.f32.mxu0 0.0
        %5214 = vmatmul.mubr.f32.gmra.mxu0 %v5037
        %v5215 = vpop.f32.mrf.mxu0
        %v5216 = vadd.f32 0.0, %v5215
        %v5217 = vpop.f32.mrf.mxu0
        %5218 = vmatprep.mubr.f32.mxu0 0.0
        %5219 = vmatmul.mubr.f32.gmra.mxu0 %v5038
        %v5220 = vpop.f32.mrf.mxu0
        %v5221 = vadd.f32 0.0, %v5220
        %v5222 = vpop.f32.mrf.mxu0
        %5223 = vmatprep.mubr.f32.mxu0 0.0
        %5224 = vmatmul.mubr.f32.gmra.mxu0 %v5039
        %v5225 = vpop.f32.mrf.mxu0
        %v5226 = vadd.f32 0.0, %v5225
        %v5227 = vpop.f32.mrf.mxu0
        %5228 = vmatprep.mubr.f32.mxu0 0.0
        %5229 = vmatmul.mubr.f32.gmra.mxu0 %v5040
        %v5230 = vpop.f32.mrf.mxu0
        %v5231 = vadd.f32 0.0, %v5230
        %v5232 = vpop.f32.mrf.mxu0
        %5233 = vmatprep.mubr.f32.mxu0 0.0
        %5234 = vmatmul.mubr.f32.gmra.mxu0 %v5041
        %v5235 = vpop.f32.mrf.mxu0
        %v5236 = vadd.f32 0.0, %v5235
        %v5237 = vpop.f32.mrf.mxu0
        %5238 = vmatprep.mubr.f32.mxu0 0.0
        %5239 = vmatmul.mubr.f32.gmra.mxu0 %v5042
        %v5240 = vpop.f32.mrf.mxu0
        %v5241 = vadd.f32 0.0, %v5240
        %v5242 = vpop.f32.mrf.mxu0
        %5243 = vmatprep.mubr.f32.mxu0 0.0
        %5244 = vmatmul.mubr.f32.gmra.mxu0 %v5043
        %v5245 = vpop.f32.mrf.mxu0
        %v5246 = vadd.f32 0.0, %v5245
        %v5247 = vpop.f32.mrf.mxu0
        %5248 = vmatprep.mubr.f32.mxu0 0.0
        %5249 = vmatmul.mubr.f32.gmra.mxu0 %v5044
        %v5250 = vpop.f32.mrf.mxu0
        %v5251 = vadd.f32 0.0, %v5250
        %v5252 = vpop.f32.mrf.mxu0
        %5253 = vmatprep.mubr.f32.mxu0 0.0
        %5254 = vmatmul.mubr.f32.gmra.mxu0 %v5045
        %v5255 = vpop.f32.mrf.mxu0
        %v5256 = vadd.f32 0.0, %v5255
        %v5257 = vpop.f32.mrf.mxu0
        %5258 = vmatprep.mubr.f32.mxu0 0.0
        %5259 = vmatmul.mubr.f32.gmra.mxu0 %v5046
        %v5260 = vpop.f32.mrf.mxu0
        %v5261 = vadd.f32 0.0, %v5260
        %v5262 = vpop.f32.mrf.mxu0
        %5263 = vmatprep.mubr.f32.mxu0 0.0
        %5264 = vmatmul.mubr.f32.gmra.mxu0 %v5047
        %v5265 = vpop.f32.mrf.mxu0
        %v5266 = vadd.f32 0.0, %v5265
        %v5267 = vpop.f32.mrf.mxu0
        %5268 = vmatprep.mubr.f32.mxu0 0.0
        %5269 = vmatmul.mubr.f32.gmra.mxu0 %v5048
        %v5270 = vpop.f32.mrf.mxu0
        %v5271 = vadd.f32 0.0, %v5270
        %v5272 = vpop.f32.mrf.mxu0
        %5273 = vmatprep.mubr.f32.mxu0 0.0
        %5274 = vmatmul.mubr.f32.gmra.mxu0 %v5049
        %v5275 = vpop.f32.mrf.mxu0
        %v5276 = vadd.f32 0.0, %v5275
        %v5277 = vpop.f32.mrf.mxu0
        %5278 = vmatprep.mubr.f32.mxu0 0.0
        %5279 = vmatmul.mubr.f32.gmra.mxu0 %v5050
        %v5280 = vpop.f32.mrf.mxu0
        %v5281 = vadd.f32 0.0, %v5280
        %v5282 = vpop.f32.mrf.mxu0
        %5283 = vmatprep.mubr.f32.mxu0 0.0
        %5284 = vmatmul.mubr.f32.gmra.mxu0 %v5051
        %v5285 = vpop.f32.mrf.mxu0
        %v5286 = vadd.f32 0.0, %v5285
        %v5287 = vpop.f32.mrf.mxu0
        %5288 = vmatprep.mubr.f32.mxu0 0.0
        %5289 = vmatmul.mubr.f32.gmra.mxu0 %v5052
        %v5290 = vpop.f32.mrf.mxu0
        %v5291 = vadd.f32 0.0, %v5290
        %v5292 = vpop.f32.mrf.mxu0
        %5293 = vdwg.mxu0
        %v5294 = vadd.f32 %v4988, %v5136
        %v5295 = vadd.f32 %v4989, %v5141
        %v5296 = vadd.f32 %v4990, %v5146
        %v5297 = vadd.f32 %v4991, %v5151
        %v5298 = vadd.f32 %v4992, %v5156
        %v5299 = vadd.f32 %v4993, %v5161
        %v5300 = vadd.f32 %v4994, %v5166
        %v5301 = vadd.f32 %v4995, %v5171
        %v5302 = vadd.f32 %v4996, %v5176
        %v5303 = vadd.f32 %v4997, %v5181
        %v5304 = vadd.f32 %v4998, %v5186
        %v5305 = vadd.f32 %v4999, %v5191
        %v5306 = vadd.f32 %v5000, %v5196
        %v5307 = vadd.f32 %v5001, %v5201
        %v5308 = vadd.f32 %v5002, %v5206
        %v5309 = vadd.f32 %v5003, %v5211
        %v5310 = vadd.f32 %v5004, %v5216
        %v5311 = vadd.f32 %v5005, %v5221
        %v5312 = vadd.f32 %v5006, %v5226
        %v5313 = vadd.f32 %v5007, %v5231
        %v5314 = vadd.f32 %v5008, %v5236
        %v5315 = vadd.f32 %v5009, %v5241
        %v5316 = vadd.f32 %v5010, %v5246
        %v5317 = vadd.f32 %v5011, %v5251
        %v5318 = vadd.f32 %v5012, %v5256
        %v5319 = vadd.f32 %v5013, %v5261
        %v5320 = vadd.f32 %v5014, %v5266
        %v5321 = vadd.f32 %v5015, %v5271
        %v5322 = vadd.f32 %v5016, %v5276
        %v5323 = vadd.f32 %v5017, %v5281
        %v5324 = vadd.f32 %v5018, %v5286
        %v5325 = vadd.f32 %v5019, %v5291
        %v5326 = vld [vmem:[%s5020 + $0x8] sm:$0xff]
        %v5327 = vld [vmem:[%s5020 + $0x10] sm:$0xff]
        %v5328 = vld [vmem:[%s5020 + $0x28] sm:$0xff]
        %v5329 = vld [vmem:[%s5020 + $0x30] sm:$0xff]
        %v5330 = vld [vmem:[%s5020 + $0x48] sm:$0xff]
        %v5331 = vld [vmem:[%s5020 + $0x50] sm:$0xff]
        %v5332 = vld [vmem:[%s5020 + $0x68] sm:$0xff]
        %v5333 = vld [vmem:[%s5020 + $0x70] sm:$0xff]
        %v5334 = vld [vmem:[%s5020 + $0x88] sm:$0xff]
        %v5335 = vld [vmem:[%s5020 + $0x90] sm:$0xff]
        %v5336 = vld [vmem:[%s5020 + $0xa8] sm:$0xff]
        %v5337 = vld [vmem:[%s5020 + $0xb0] sm:$0xff]
        %v5338 = vld [vmem:[%s5020 + $0xc8] sm:$0xff]
        %v5339 = vld [vmem:[%s5020 + $0xd0] sm:$0xff]
        %v5340 = vld [vmem:[%s5020 + $0xe8] sm:$0xff]
        %v5341 = vld [vmem:[%s5020 + $0xf0] sm:$0xff]
        %v5342 = vld [vmem:[%s5020 + $0x108] sm:$0xff]
        %v5343 = vld [vmem:[%s5020 + $0x110] sm:$0xff]
        %v5344 = vld [vmem:[%s5020 + $0x128] sm:$0xff]
        %v5345 = vld [vmem:[%s5020 + $0x130] sm:$0xff]
        %v5346 = vld [vmem:[%s5020 + $0x148] sm:$0xff]
        %v5347 = vld [vmem:[%s5020 + $0x150] sm:$0xff]
        %v5348 = vld [vmem:[%s5020 + $0x168] sm:$0xff]
        %v5349 = vld [vmem:[%s5020 + $0x170] sm:$0xff]
        %v5350 = vld [vmem:[%s5020 + $0x188] sm:$0xff]
        %v5351 = vld [vmem:[%s5020 + $0x190] sm:$0xff]
        %v5352 = vld [vmem:[%s5020 + $0x1a8] sm:$0xff]
        %v5353 = vld [vmem:[%s5020 + $0x1b0] sm:$0xff]
        %v5354 = vld [vmem:[%s5020 + $0x1c8] sm:$0xff]
        %v5355 = vld [vmem:[%s5020 + $0x1d0] sm:$0xff]
        %v5356 = vld [vmem:[%s5020 + $0x1e8] sm:$0xff]
        %v5357 = vld [vmem:[%s5020 + $0x1f0] sm:$0xff]
        %v5358 = vld [vmem:[#allocation8 + $0x380] sm:$0xff]
        %v5359 = vld [vmem:[#allocation8 + $0x388] sm:$0xff]
        %v5360 = vld [vmem:[#allocation8 + $0x390] sm:$0xff]
        %v5361 = vld [vmem:[#allocation8 + $0x398] sm:$0xff]
        %v5362 = vld [vmem:[#allocation8 + $0x3a0] sm:$0xff]
        %v5363 = vld [vmem:[#allocation8 + $0x3a8] sm:$0xff]
        %v5364 = vld [vmem:[#allocation8 + $0x3b0] sm:$0xff]
        %v5365 = vld [vmem:[#allocation8 + $0x3b8] sm:$0xff]
        %v5366 = vld [vmem:[#allocation8 + $0x3c0] sm:$0xff]
        %v5367 = vld [vmem:[#allocation8 + $0x3c8] sm:$0xff]
        %v5368 = vld [vmem:[#allocation8 + $0x3d0] sm:$0xff]
        %v5369 = vld [vmem:[#allocation8 + $0x3d8] sm:$0xff]
        %v5370 = vld [vmem:[#allocation8 + $0x3e0] sm:$0xff]
        %v5371 = vld [vmem:[#allocation8 + $0x3e8] sm:$0xff]
        %v5372 = vld [vmem:[#allocation8 + $0x3f0] sm:$0xff]
        %v5373 = vld [vmem:[#allocation8 + $0x3f8] sm:$0xff]
        %5374 = vmatprep.subr.mxu0 0.0
        %5375 = vmatpush1.msra.mxu0 %v5373
        %5376 = vmatprep.subr.mxu0 0.0
        %5377 = vmatpush1.msra.mxu0 %v5372
        %5378 = vmatprep.subr.mxu0 0.0
        %5379 = vmatpush1.msra.mxu0 %v5371
        %5380 = vmatprep.subr.mxu0 0.0
        %5381 = vmatpush1.msra.mxu0 %v5370
        %5382 = vmatprep.subr.mxu0 0.0
        %5383 = vmatpush1.msra.mxu0 %v5369
        %5384 = vmatprep.subr.mxu0 0.0
        %5385 = vmatpush1.msra.mxu0 %v5368
        %5386 = vmatprep.subr.mxu0 0.0
        %5387 = vmatpush1.msra.mxu0 %v5367
        %5388 = vmatprep.subr.mxu0 0.0
        %5389 = vmatpush1.msra.mxu0 %v5366
        %5390 = vmatprep.subr.mxu0 0.0
        %5391 = vmatpush1.msra.mxu0 %v5365
        %5392 = vmatprep.subr.mxu0 0.0
        %5393 = vmatpush1.msra.mxu0 %v5364
        %5394 = vmatprep.subr.mxu0 0.0
        %5395 = vmatpush1.msra.mxu0 %v5363
        %5396 = vmatprep.subr.mxu0 0.0
        %5397 = vmatpush1.msra.mxu0 %v5362
        %5398 = vmatprep.subr.mxu0 0.0
        %5399 = vmatpush1.msra.mxu0 %v5361
        %5400 = vmatprep.subr.mxu0 0.0
        %5401 = vmatpush1.msra.mxu0 %v5360
        %5402 = vmatprep.subr.mxu0 0.0
        %5403 = vmatpush1.msra.mxu0 %v5359
        %5404 = vmatprep.subr.mxu0 0.0
        %5405 = vmatpush1.msra.mxu0 %v5358
        %5406 = vmatprep.subr.mxu0 0.0
        %5407 = vmatpush2.msra.mxu0 0.0
        %5408 = vmatprep.subr.mxu0 0.0
        %5409 = vmatpush2.msra.mxu0 0.0
        %5410 = vmatprep.subr.mxu0 0.0
        %5411 = vmatpush2.msra.mxu0 0.0
        %5412 = vmatprep.subr.mxu0 0.0
        %5413 = vmatpush2.msra.mxu0 0.0
        %5414 = vmatprep.subr.mxu0 0.0
        %5415 = vmatpush2.msra.mxu0 0.0
        %5416 = vmatprep.subr.mxu0 0.0
        %5417 = vmatpush2.msra.mxu0 0.0
        %5418 = vmatprep.subr.mxu0 0.0
        %5419 = vmatpush2.msra.mxu0 0.0
        %5420 = vmatprep.subr.mxu0 0.0
        %5421 = vmatpush2.msra.mxu0 0.0
        %5422 = vmatprep.subr.mxu0 0.0
        %5423 = vmatpush2.msra.mxu0 0.0
        %5424 = vmatprep.subr.mxu0 0.0
        %5425 = vmatpush2.msra.mxu0 0.0
        %5426 = vmatprep.subr.mxu0 0.0
        %5427 = vmatpush2.msra.mxu0 0.0
        %5428 = vmatprep.subr.mxu0 0.0
        %5429 = vmatpush2.msra.mxu0 0.0
        %5430 = vmatprep.subr.mxu0 0.0
        %5431 = vmatpush2.msra.mxu0 0.0
        %5432 = vmatprep.subr.mxu0 0.0
        %5433 = vmatpush2.msra.mxu0 0.0
        %5434 = vmatprep.subr.mxu0 0.0
        %5435 = vmatpush2.msra.mxu0 0.0
        %5436 = vmatprep.subr.mxu0 0.0
        %5437 = vmatpush2.msra.mxu0 0.0
        %5438 = vmatprep.mubr.f32.mxu0 0.0
        %5439 = vmatmul.mubr.f32.gmra.mxu0 %v5326
        %v5440 = vpop.f32.mrf.mxu0
        %v5441 = vadd.f32 0.0, %v5440
        %v5442 = vpop.f32.mrf.mxu0
        %5443 = vmatprep.mubr.f32.mxu0 0.0
        %5444 = vmatmul.mubr.f32.gmra.mxu0 %v5327
        %v5445 = vpop.f32.mrf.mxu0
        %v5446 = vadd.f32 0.0, %v5445
        %v5447 = vpop.f32.mrf.mxu0
        %5448 = vmatprep.mubr.f32.mxu0 0.0
        %5449 = vmatmul.mubr.f32.gmra.mxu0 %v5328
        %v5450 = vpop.f32.mrf.mxu0
        %v5451 = vadd.f32 0.0, %v5450
        %v5452 = vpop.f32.mrf.mxu0
        %5453 = vmatprep.mubr.f32.mxu0 0.0
        %5454 = vmatmul.mubr.f32.gmra.mxu0 %v5329
        %v5455 = vpop.f32.mrf.mxu0
        %v5456 = vadd.f32 0.0, %v5455
        %v5457 = vpop.f32.mrf.mxu0
        %5458 = vmatprep.mubr.f32.mxu0 0.0
        %5459 = vmatmul.mubr.f32.gmra.mxu0 %v5330
        %v5460 = vpop.f32.mrf.mxu0
        %v5461 = vadd.f32 0.0, %v5460
        %v5462 = vpop.f32.mrf.mxu0
        %5463 = vmatprep.mubr.f32.mxu0 0.0
        %5464 = vmatmul.mubr.f32.gmra.mxu0 %v5331
        %v5465 = vpop.f32.mrf.mxu0
        %v5466 = vadd.f32 0.0, %v5465
        %v5467 = vpop.f32.mrf.mxu0
        %5468 = vmatprep.mubr.f32.mxu0 0.0
        %5469 = vmatmul.mubr.f32.gmra.mxu0 %v5332
        %v5470 = vpop.f32.mrf.mxu0
        %v5471 = vadd.f32 0.0, %v5470
        %v5472 = vpop.f32.mrf.mxu0
        %5473 = vmatprep.mubr.f32.mxu0 0.0
        %5474 = vmatmul.mubr.f32.gmra.mxu0 %v5333
        %v5475 = vpop.f32.mrf.mxu0
        %v5476 = vadd.f32 0.0, %v5475
        %v5477 = vpop.f32.mrf.mxu0
        %5478 = vmatprep.mubr.f32.mxu0 0.0
        %5479 = vmatmul.mubr.f32.gmra.mxu0 %v5334
        %v5480 = vpop.f32.mrf.mxu0
        %v5481 = vadd.f32 0.0, %v5480
        %v5482 = vpop.f32.mrf.mxu0
        %5483 = vmatprep.mubr.f32.mxu0 0.0
        %5484 = vmatmul.mubr.f32.gmra.mxu0 %v5335
        %v5485 = vpop.f32.mrf.mxu0
        %v5486 = vadd.f32 0.0, %v5485
        %v5487 = vpop.f32.mrf.mxu0
        %5488 = vmatprep.mubr.f32.mxu0 0.0
        %5489 = vmatmul.mubr.f32.gmra.mxu0 %v5336
        %v5490 = vpop.f32.mrf.mxu0
        %v5491 = vadd.f32 0.0, %v5490
        %v5492 = vpop.f32.mrf.mxu0
        %5493 = vmatprep.mubr.f32.mxu0 0.0
        %5494 = vmatmul.mubr.f32.gmra.mxu0 %v5337
        %v5495 = vpop.f32.mrf.mxu0
        %v5496 = vadd.f32 0.0, %v5495
        %v5497 = vpop.f32.mrf.mxu0
        %5498 = vmatprep.mubr.f32.mxu0 0.0
        %5499 = vmatmul.mubr.f32.gmra.mxu0 %v5338
        %v5500 = vpop.f32.mrf.mxu0
        %v5501 = vadd.f32 0.0, %v5500
        %v5502 = vpop.f32.mrf.mxu0
        %5503 = vmatprep.mubr.f32.mxu0 0.0
        %5504 = vmatmul.mubr.f32.gmra.mxu0 %v5339
        %v5505 = vpop.f32.mrf.mxu0
        %v5506 = vadd.f32 0.0, %v5505
        %v5507 = vpop.f32.mrf.mxu0
        %5508 = vmatprep.mubr.f32.mxu0 0.0
        %5509 = vmatmul.mubr.f32.gmra.mxu0 %v5340
        %v5510 = vpop.f32.mrf.mxu0
        %v5511 = vadd.f32 0.0, %v5510
        %v5512 = vpop.f32.mrf.mxu0
        %5513 = vmatprep.mubr.f32.mxu0 0.0
        %5514 = vmatmul.mubr.f32.gmra.mxu0 %v5341
        %v5515 = vpop.f32.mrf.mxu0
        %v5516 = vadd.f32 0.0, %v5515
        %v5517 = vpop.f32.mrf.mxu0
        %5518 = vmatprep.mubr.f32.mxu0 0.0
        %5519 = vmatmul.mubr.f32.gmra.mxu0 %v5342
        %v5520 = vpop.f32.mrf.mxu0
        %v5521 = vadd.f32 0.0, %v5520
        %v5522 = vpop.f32.mrf.mxu0
        %5523 = vmatprep.mubr.f32.mxu0 0.0
        %5524 = vmatmul.mubr.f32.gmra.mxu0 %v5343
        %v5525 = vpop.f32.mrf.mxu0
        %v5526 = vadd.f32 0.0, %v5525
        %v5527 = vpop.f32.mrf.mxu0
        %5528 = vmatprep.mubr.f32.mxu0 0.0
        %5529 = vmatmul.mubr.f32.gmra.mxu0 %v5344
        %v5530 = vpop.f32.mrf.mxu0
        %v5531 = vadd.f32 0.0, %v5530
        %v5532 = vpop.f32.mrf.mxu0
        %5533 = vmatprep.mubr.f32.mxu0 0.0
        %5534 = vmatmul.mubr.f32.gmra.mxu0 %v5345
        %v5535 = vpop.f32.mrf.mxu0
        %v5536 = vadd.f32 0.0, %v5535
        %v5537 = vpop.f32.mrf.mxu0
        %5538 = vmatprep.mubr.f32.mxu0 0.0
        %5539 = vmatmul.mubr.f32.gmra.mxu0 %v5346
        %v5540 = vpop.f32.mrf.mxu0
        %v5541 = vadd.f32 0.0, %v5540
        %v5542 = vpop.f32.mrf.mxu0
        %5543 = vmatprep.mubr.f32.mxu0 0.0
        %5544 = vmatmul.mubr.f32.gmra.mxu0 %v5347
        %v5545 = vpop.f32.mrf.mxu0
        %v5546 = vadd.f32 0.0, %v5545
        %v5547 = vpop.f32.mrf.mxu0
        %5548 = vmatprep.mubr.f32.mxu0 0.0
        %5549 = vmatmul.mubr.f32.gmra.mxu0 %v5348
        %v5550 = vpop.f32.mrf.mxu0
        %v5551 = vadd.f32 0.0, %v5550
        %v5552 = vpop.f32.mrf.mxu0
        %5553 = vmatprep.mubr.f32.mxu0 0.0
        %5554 = vmatmul.mubr.f32.gmra.mxu0 %v5349
        %v5555 = vpop.f32.mrf.mxu0
        %v5556 = vadd.f32 0.0, %v5555
        %v5557 = vpop.f32.mrf.mxu0
        %5558 = vmatprep.mubr.f32.mxu0 0.0
        %5559 = vmatmul.mubr.f32.gmra.mxu0 %v5350
        %v5560 = vpop.f32.mrf.mxu0
        %v5561 = vadd.f32 0.0, %v5560
        %v5562 = vpop.f32.mrf.mxu0
        %5563 = vmatprep.mubr.f32.mxu0 0.0
        %5564 = vmatmul.mubr.f32.gmra.mxu0 %v5351
        %v5565 = vpop.f32.mrf.mxu0
        %v5566 = vadd.f32 0.0, %v5565
        %v5567 = vpop.f32.mrf.mxu0
        %5568 = vmatprep.mubr.f32.mxu0 0.0
        %5569 = vmatmul.mubr.f32.gmra.mxu0 %v5352
        %v5570 = vpop.f32.mrf.mxu0
        %v5571 = vadd.f32 0.0, %v5570
        %v5572 = vpop.f32.mrf.mxu0
        %5573 = vmatprep.mubr.f32.mxu0 0.0
        %5574 = vmatmul.mubr.f32.gmra.mxu0 %v5353
        %v5575 = vpop.f32.mrf.mxu0
        %v5576 = vadd.f32 0.0, %v5575
        %v5577 = vpop.f32.mrf.mxu0
        %5578 = vmatprep.mubr.f32.mxu0 0.0
        %5579 = vmatmul.mubr.f32.gmra.mxu0 %v5354
        %v5580 = vpop.f32.mrf.mxu0
        %v5581 = vadd.f32 0.0, %v5580
        %v5582 = vpop.f32.mrf.mxu0
        %5583 = vmatprep.mubr.f32.mxu0 0.0
        %5584 = vmatmul.mubr.f32.gmra.mxu0 %v5355
        %v5585 = vpop.f32.mrf.mxu0
        %v5586 = vadd.f32 0.0, %v5585
        %v5587 = vpop.f32.mrf.mxu0
        %5588 = vmatprep.mubr.f32.mxu0 0.0
        %5589 = vmatmul.mubr.f32.gmra.mxu0 %v5356
        %v5590 = vpop.f32.mrf.mxu0
        %v5591 = vadd.f32 0.0, %v5590
        %v5592 = vpop.f32.mrf.mxu0
        %5593 = vmatprep.mubr.f32.mxu0 0.0
        %5594 = vmatmul.mubr.f32.gmra.mxu0 %v5357
        %v5595 = vpop.f32.mrf.mxu0
        %v5596 = vadd.f32 0.0, %v5595
        %v5597 = vpop.f32.mrf.mxu0
        %5598 = vdwg.mxu0
        %v5599 = vadd.f32 %v5294, %v5441
        %v5600 = vadd.f32 %v5295, %v5446
        %v5601 = vadd.f32 %v5296, %v5451
        %v5602 = vadd.f32 %v5297, %v5456
        %v5603 = vadd.f32 %v5298, %v5461
        %v5604 = vadd.f32 %v5299, %v5466
        %v5605 = vadd.f32 %v5300, %v5471
        %v5606 = vadd.f32 %v5301, %v5476
        %v5607 = vadd.f32 %v5302, %v5481
        %v5608 = vadd.f32 %v5303, %v5486
        %v5609 = vadd.f32 %v5304, %v5491
        %v5610 = vadd.f32 %v5305, %v5496
        %v5611 = vadd.f32 %v5306, %v5501
        %v5612 = vadd.f32 %v5307, %v5506
        %v5613 = vadd.f32 %v5308, %v5511
        %v5614 = vadd.f32 %v5309, %v5516
        %v5615 = vadd.f32 %v5310, %v5521
        %v5616 = vadd.f32 %v5311, %v5526
        %v5617 = vadd.f32 %v5312, %v5531
        %v5618 = vadd.f32 %v5313, %v5536
        %v5619 = vadd.f32 %v5314, %v5541
        %v5620 = vadd.f32 %v5315, %v5546
        %v5621 = vadd.f32 %v5316, %v5551
        %v5622 = vadd.f32 %v5317, %v5556
        %v5623 = vadd.f32 %v5318, %v5561
        %v5624 = vadd.f32 %v5319, %v5566
        %v5625 = vadd.f32 %v5320, %v5571
        %v5626 = vadd.f32 %v5321, %v5576
        %v5627 = vadd.f32 %v5322, %v5581
        %v5628 = vadd.f32 %v5323, %v5586
        %v5629 = vadd.f32 %v5324, %v5591
        %v5630 = vadd.f32 %v5325, %v5596
        %v5631 = vld [vmem:[%s5020 + $0x9] sm:$0xff]
        %v5632 = vld [vmem:[%s5020 + $0x11] sm:$0xff]
        %v5633 = vld [vmem:[%s5020 + $0x29] sm:$0xff]
        %v5634 = vld [vmem:[%s5020 + $0x31] sm:$0xff]
        %v5635 = vld [vmem:[%s5020 + $0x49] sm:$0xff]
        %v5636 = vld [vmem:[%s5020 + $0x51] sm:$0xff]
        %v5637 = vld [vmem:[%s5020 + $0x69] sm:$0xff]
        %v5638 = vld [vmem:[%s5020 + $0x71] sm:$0xff]
        %v5639 = vld [vmem:[%s5020 + $0x89] sm:$0xff]
        %v5640 = vld [vmem:[%s5020 + $0x91] sm:$0xff]
        %v5641 = vld [vmem:[%s5020 + $0xa9] sm:$0xff]
        %v5642 = vld [vmem:[%s5020 + $0xb1] sm:$0xff]
        %v5643 = vld [vmem:[%s5020 + $0xc9] sm:$0xff]
        %v5644 = vld [vmem:[%s5020 + $0xd1] sm:$0xff]
        %v5645 = vld [vmem:[%s5020 + $0xe9] sm:$0xff]
        %v5646 = vld [vmem:[%s5020 + $0xf1] sm:$0xff]
        %v5647 = vld [vmem:[%s5020 + $0x109] sm:$0xff]
        %v5648 = vld [vmem:[%s5020 + $0x111] sm:$0xff]
        %v5649 = vld [vmem:[%s5020 + $0x129] sm:$0xff]
        %v5650 = vld [vmem:[%s5020 + $0x131] sm:$0xff]
        %v5651 = vld [vmem:[%s5020 + $0x149] sm:$0xff]
        %v5652 = vld [vmem:[%s5020 + $0x151] sm:$0xff]
        %v5653 = vld [vmem:[%s5020 + $0x169] sm:$0xff]
        %v5654 = vld [vmem:[%s5020 + $0x171] sm:$0xff]
        %v5655 = vld [vmem:[%s5020 + $0x189] sm:$0xff]
        %v5656 = vld [vmem:[%s5020 + $0x191] sm:$0xff]
        %v5657 = vld [vmem:[%s5020 + $0x1a9] sm:$0xff]
        %v5658 = vld [vmem:[%s5020 + $0x1b1] sm:$0xff]
        %v5659 = vld [vmem:[%s5020 + $0x1c9] sm:$0xff]
        %v5660 = vld [vmem:[%s5020 + $0x1d1] sm:$0xff]
        %v5661 = vld [vmem:[%s5020 + $0x1e9] sm:$0xff]
        %v5662 = vld [vmem:[%s5020 + $0x1f1] sm:$0xff]
        %v5663 = vld [vmem:[#allocation8 + $0x400] sm:$0xff]
        %v5664 = vld [vmem:[#allocation8 + $0x408] sm:$0xff]
        %v5665 = vld [vmem:[#allocation8 + $0x410] sm:$0xff]
        %v5666 = vld [vmem:[#allocation8 + $0x418] sm:$0xff]
        %v5667 = vld [vmem:[#allocation8 + $0x420] sm:$0xff]
        %v5668 = vld [vmem:[#allocation8 + $0x428] sm:$0xff]
        %v5669 = vld [vmem:[#allocation8 + $0x430] sm:$0xff]
        %v5670 = vld [vmem:[#allocation8 + $0x438] sm:$0xff]
        %v5671 = vld [vmem:[#allocation8 + $0x440] sm:$0xff]
        %v5672 = vld [vmem:[#allocation8 + $0x448] sm:$0xff]
        %v5673 = vld [vmem:[#allocation8 + $0x450] sm:$0xff]
        %v5674 = vld [vmem:[#allocation8 + $0x458] sm:$0xff]
        %v5675 = vld [vmem:[#allocation8 + $0x460] sm:$0xff]
        %v5676 = vld [vmem:[#allocation8 + $0x468] sm:$0xff]
        %v5677 = vld [vmem:[#allocation8 + $0x470] sm:$0xff]
        %v5678 = vld [vmem:[#allocation8 + $0x478] sm:$0xff]
        %5679 = vmatprep.subr.mxu0 0.0
        %5680 = vmatpush1.msra.mxu0 %v5678
        %5681 = vmatprep.subr.mxu0 0.0
        %5682 = vmatpush1.msra.mxu0 %v5677
        %5683 = vmatprep.subr.mxu0 0.0
        %5684 = vmatpush1.msra.mxu0 %v5676
        %5685 = vmatprep.subr.mxu0 0.0
        %5686 = vmatpush1.msra.mxu0 %v5675
        %5687 = vmatprep.subr.mxu0 0.0
        %5688 = vmatpush1.msra.mxu0 %v5674
        %5689 = vmatprep.subr.mxu0 0.0
        %5690 = vmatpush1.msra.mxu0 %v5673
        %5691 = vmatprep.subr.mxu0 0.0
        %5692 = vmatpush1.msra.mxu0 %v5672
        %5693 = vmatprep.subr.mxu0 0.0
        %5694 = vmatpush1.msra.mxu0 %v5671
        %5695 = vmatprep.subr.mxu0 0.0
        %5696 = vmatpush1.msra.mxu0 %v5670
        %5697 = vmatprep.subr.mxu0 0.0
        %5698 = vmatpush1.msra.mxu0 %v5669
        %5699 = vmatprep.subr.mxu0 0.0
        %5700 = vmatpush1.msra.mxu0 %v5668
        %5701 = vmatprep.subr.mxu0 0.0
        %5702 = vmatpush1.msra.mxu0 %v5667
        %5703 = vmatprep.subr.mxu0 0.0
        %5704 = vmatpush1.msra.mxu0 %v5666
        %5705 = vmatprep.subr.mxu0 0.0
        %5706 = vmatpush1.msra.mxu0 %v5665
        %5707 = vmatprep.subr.mxu0 0.0
        %5708 = vmatpush1.msra.mxu0 %v5664
        %5709 = vmatprep.subr.mxu0 0.0
        %5710 = vmatpush1.msra.mxu0 %v5663
        %5711 = vmatprep.subr.mxu0 0.0
        %5712 = vmatpush2.msra.mxu0 0.0
        %5713 = vmatprep.subr.mxu0 0.0
        %5714 = vmatpush2.msra.mxu0 0.0
        %5715 = vmatprep.subr.mxu0 0.0
        %5716 = vmatpush2.msra.mxu0 0.0
        %5717 = vmatprep.subr.mxu0 0.0
        %5718 = vmatpush2.msra.mxu0 0.0
        %5719 = vmatprep.subr.mxu0 0.0
        %5720 = vmatpush2.msra.mxu0 0.0
        %5721 = vmatprep.subr.mxu0 0.0
        %5722 = vmatpush2.msra.mxu0 0.0
        %5723 = vmatprep.subr.mxu0 0.0
        %5724 = vmatpush2.msra.mxu0 0.0
        %5725 = vmatprep.subr.mxu0 0.0
        %5726 = vmatpush2.msra.mxu0 0.0
        %5727 = vmatprep.subr.mxu0 0.0
        %5728 = vmatpush2.msra.mxu0 0.0
        %5729 = vmatprep.subr.mxu0 0.0
        %5730 = vmatpush2.msra.mxu0 0.0
        %5731 = vmatprep.subr.mxu0 0.0
        %5732 = vmatpush2.msra.mxu0 0.0
        %5733 = vmatprep.subr.mxu0 0.0
        %5734 = vmatpush2.msra.mxu0 0.0
        %5735 = vmatprep.subr.mxu0 0.0
        %5736 = vmatpush2.msra.mxu0 0.0
        %5737 = vmatprep.subr.mxu0 0.0
        %5738 = vmatpush2.msra.mxu0 0.0
        %5739 = vmatprep.subr.mxu0 0.0
        %5740 = vmatpush2.msra.mxu0 0.0
        %5741 = vmatprep.subr.mxu0 0.0
        %5742 = vmatpush2.msra.mxu0 0.0
        %5743 = vmatprep.mubr.f32.mxu0 0.0
        %5744 = vmatmul.mubr.f32.gmra.mxu0 %v5631
        %v5745 = vpop.f32.mrf.mxu0
        %v5746 = vadd.f32 0.0, %v5745
        %v5747 = vpop.f32.mrf.mxu0
        %5748 = vmatprep.mubr.f32.mxu0 0.0
        %5749 = vmatmul.mubr.f32.gmra.mxu0 %v5632
        %v5750 = vpop.f32.mrf.mxu0
        %v5751 = vadd.f32 0.0, %v5750
        %v5752 = vpop.f32.mrf.mxu0
        %5753 = vmatprep.mubr.f32.mxu0 0.0
        %5754 = vmatmul.mubr.f32.gmra.mxu0 %v5633
        %v5755 = vpop.f32.mrf.mxu0
        %v5756 = vadd.f32 0.0, %v5755
        %v5757 = vpop.f32.mrf.mxu0
        %5758 = vmatprep.mubr.f32.mxu0 0.0
        %5759 = vmatmul.mubr.f32.gmra.mxu0 %v5634
        %v5760 = vpop.f32.mrf.mxu0
        %v5761 = vadd.f32 0.0, %v5760
        %v5762 = vpop.f32.mrf.mxu0
        %5763 = vmatprep.mubr.f32.mxu0 0.0
        %5764 = vmatmul.mubr.f32.gmra.mxu0 %v5635
        %v5765 = vpop.f32.mrf.mxu0
        %v5766 = vadd.f32 0.0, %v5765
        %v5767 = vpop.f32.mrf.mxu0
        %5768 = vmatprep.mubr.f32.mxu0 0.0
        %5769 = vmatmul.mubr.f32.gmra.mxu0 %v5636
        %v5770 = vpop.f32.mrf.mxu0
        %v5771 = vadd.f32 0.0, %v5770
        %v5772 = vpop.f32.mrf.mxu0
        %5773 = vmatprep.mubr.f32.mxu0 0.0
        %5774 = vmatmul.mubr.f32.gmra.mxu0 %v5637
        %v5775 = vpop.f32.mrf.mxu0
        %v5776 = vadd.f32 0.0, %v5775
        %v5777 = vpop.f32.mrf.mxu0
        %5778 = vmatprep.mubr.f32.mxu0 0.0
        %5779 = vmatmul.mubr.f32.gmra.mxu0 %v5638
        %v5780 = vpop.f32.mrf.mxu0
        %v5781 = vadd.f32 0.0, %v5780
        %v5782 = vpop.f32.mrf.mxu0
        %5783 = vmatprep.mubr.f32.mxu0 0.0
        %5784 = vmatmul.mubr.f32.gmra.mxu0 %v5639
        %v5785 = vpop.f32.mrf.mxu0
        %v5786 = vadd.f32 0.0, %v5785
        %v5787 = vpop.f32.mrf.mxu0
        %5788 = vmatprep.mubr.f32.mxu0 0.0
        %5789 = vmatmul.mubr.f32.gmra.mxu0 %v5640
        %v5790 = vpop.f32.mrf.mxu0
        %v5791 = vadd.f32 0.0, %v5790
        %v5792 = vpop.f32.mrf.mxu0
        %5793 = vmatprep.mubr.f32.mxu0 0.0
        %5794 = vmatmul.mubr.f32.gmra.mxu0 %v5641
        %v5795 = vpop.f32.mrf.mxu0
        %v5796 = vadd.f32 0.0, %v5795
        %v5797 = vpop.f32.mrf.mxu0
        %5798 = vmatprep.mubr.f32.mxu0 0.0
        %5799 = vmatmul.mubr.f32.gmra.mxu0 %v5642
        %v5800 = vpop.f32.mrf.mxu0
        %v5801 = vadd.f32 0.0, %v5800
        %v5802 = vpop.f32.mrf.mxu0
        %5803 = vmatprep.mubr.f32.mxu0 0.0
        %5804 = vmatmul.mubr.f32.gmra.mxu0 %v5643
        %v5805 = vpop.f32.mrf.mxu0
        %v5806 = vadd.f32 0.0, %v5805
        %v5807 = vpop.f32.mrf.mxu0
        %5808 = vmatprep.mubr.f32.mxu0 0.0
        %5809 = vmatmul.mubr.f32.gmra.mxu0 %v5644
        %v5810 = vpop.f32.mrf.mxu0
        %v5811 = vadd.f32 0.0, %v5810
        %v5812 = vpop.f32.mrf.mxu0
        %5813 = vmatprep.mubr.f32.mxu0 0.0
        %5814 = vmatmul.mubr.f32.gmra.mxu0 %v5645
        %v5815 = vpop.f32.mrf.mxu0
        %v5816 = vadd.f32 0.0, %v5815
        %v5817 = vpop.f32.mrf.mxu0
        %5818 = vmatprep.mubr.f32.mxu0 0.0
        %5819 = vmatmul.mubr.f32.gmra.mxu0 %v5646
        %v5820 = vpop.f32.mrf.mxu0
        %v5821 = vadd.f32 0.0, %v5820
        %v5822 = vpop.f32.mrf.mxu0
        %5823 = vmatprep.mubr.f32.mxu0 0.0
        %5824 = vmatmul.mubr.f32.gmra.mxu0 %v5647
        %v5825 = vpop.f32.mrf.mxu0
        %v5826 = vadd.f32 0.0, %v5825
        %v5827 = vpop.f32.mrf.mxu0
        %5828 = vmatprep.mubr.f32.mxu0 0.0
        %5829 = vmatmul.mubr.f32.gmra.mxu0 %v5648
        %v5830 = vpop.f32.mrf.mxu0
        %v5831 = vadd.f32 0.0, %v5830
        %v5832 = vpop.f32.mrf.mxu0
        %5833 = vmatprep.mubr.f32.mxu0 0.0
        %5834 = vmatmul.mubr.f32.gmra.mxu0 %v5649
        %v5835 = vpop.f32.mrf.mxu0
        %v5836 = vadd.f32 0.0, %v5835
        %v5837 = vpop.f32.mrf.mxu0
        %5838 = vmatprep.mubr.f32.mxu0 0.0
        %5839 = vmatmul.mubr.f32.gmra.mxu0 %v5650
        %v5840 = vpop.f32.mrf.mxu0
        %v5841 = vadd.f32 0.0, %v5840
        %v5842 = vpop.f32.mrf.mxu0
        %5843 = vmatprep.mubr.f32.mxu0 0.0
        %5844 = vmatmul.mubr.f32.gmra.mxu0 %v5651
        %v5845 = vpop.f32.mrf.mxu0
        %v5846 = vadd.f32 0.0, %v5845
        %v5847 = vpop.f32.mrf.mxu0
        %5848 = vmatprep.mubr.f32.mxu0 0.0
        %5849 = vmatmul.mubr.f32.gmra.mxu0 %v5652
        %v5850 = vpop.f32.mrf.mxu0
        %v5851 = vadd.f32 0.0, %v5850
        %v5852 = vpop.f32.mrf.mxu0
        %5853 = vmatprep.mubr.f32.mxu0 0.0
        %5854 = vmatmul.mubr.f32.gmra.mxu0 %v5653
        %v5855 = vpop.f32.mrf.mxu0
        %v5856 = vadd.f32 0.0, %v5855
        %v5857 = vpop.f32.mrf.mxu0
        %5858 = vmatprep.mubr.f32.mxu0 0.0
        %5859 = vmatmul.mubr.f32.gmra.mxu0 %v5654
        %v5860 = vpop.f32.mrf.mxu0
        %v5861 = vadd.f32 0.0, %v5860
        %v5862 = vpop.f32.mrf.mxu0
        %5863 = vmatprep.mubr.f32.mxu0 0.0
        %5864 = vmatmul.mubr.f32.gmra.mxu0 %v5655
        %v5865 = vpop.f32.mrf.mxu0
        %v5866 = vadd.f32 0.0, %v5865
        %v5867 = vpop.f32.mrf.mxu0
        %5868 = vmatprep.mubr.f32.mxu0 0.0
        %5869 = vmatmul.mubr.f32.gmra.mxu0 %v5656
        %v5870 = vpop.f32.mrf.mxu0
        %v5871 = vadd.f32 0.0, %v5870
        %v5872 = vpop.f32.mrf.mxu0
        %5873 = vmatprep.mubr.f32.mxu0 0.0
        %5874 = vmatmul.mubr.f32.gmra.mxu0 %v5657
        %v5875 = vpop.f32.mrf.mxu0
        %v5876 = vadd.f32 0.0, %v5875
        %v5877 = vpop.f32.mrf.mxu0
        %5878 = vmatprep.mubr.f32.mxu0 0.0
        %5879 = vmatmul.mubr.f32.gmra.mxu0 %v5658
        %v5880 = vpop.f32.mrf.mxu0
        %v5881 = vadd.f32 0.0, %v5880
        %v5882 = vpop.f32.mrf.mxu0
        %5883 = vmatprep.mubr.f32.mxu0 0.0
        %5884 = vmatmul.mubr.f32.gmra.mxu0 %v5659
        %v5885 = vpop.f32.mrf.mxu0
        %v5886 = vadd.f32 0.0, %v5885
        %v5887 = vpop.f32.mrf.mxu0
        %5888 = vmatprep.mubr.f32.mxu0 0.0
        %5889 = vmatmul.mubr.f32.gmra.mxu0 %v5660
        %v5890 = vpop.f32.mrf.mxu0
        %v5891 = vadd.f32 0.0, %v5890
        %v5892 = vpop.f32.mrf.mxu0
        %5893 = vmatprep.mubr.f32.mxu0 0.0
        %5894 = vmatmul.mubr.f32.gmra.mxu0 %v5661
        %v5895 = vpop.f32.mrf.mxu0
        %v5896 = vadd.f32 0.0, %v5895
        %v5897 = vpop.f32.mrf.mxu0
        %5898 = vmatprep.mubr.f32.mxu0 0.0
        %5899 = vmatmul.mubr.f32.gmra.mxu0 %v5662
        %v5900 = vpop.f32.mrf.mxu0
        %v5901 = vadd.f32 0.0, %v5900
        %v5902 = vpop.f32.mrf.mxu0
        %5903 = vdwg.mxu0
        %v5904 = vadd.f32 %v5599, %v5746
        %v5905 = vadd.f32 %v5600, %v5751
        %v5906 = vadd.f32 %v5601, %v5756
        %v5907 = vadd.f32 %v5602, %v5761
        %v5908 = vadd.f32 %v5603, %v5766
        %v5909 = vadd.f32 %v5604, %v5771
        %v5910 = vadd.f32 %v5605, %v5776
        %v5911 = vadd.f32 %v5606, %v5781
        %v5912 = vadd.f32 %v5607, %v5786
        %v5913 = vadd.f32 %v5608, %v5791
        %v5914 = vadd.f32 %v5609, %v5796
        %v5915 = vadd.f32 %v5610, %v5801
        %v5916 = vadd.f32 %v5611, %v5806
        %v5917 = vadd.f32 %v5612, %v5811
        %v5918 = vadd.f32 %v5613, %v5816
        %v5919 = vadd.f32 %v5614, %v5821
        %v5920 = vadd.f32 %v5615, %v5826
        %v5921 = vadd.f32 %v5616, %v5831
        %v5922 = vadd.f32 %v5617, %v5836
        %v5923 = vadd.f32 %v5618, %v5841
        %v5924 = vadd.f32 %v5619, %v5846
        %v5925 = vadd.f32 %v5620, %v5851
        %v5926 = vadd.f32 %v5621, %v5856
        %v5927 = vadd.f32 %v5622, %v5861
        %v5928 = vadd.f32 %v5623, %v5866
        %v5929 = vadd.f32 %v5624, %v5871
        %v5930 = vadd.f32 %v5625, %v5876
        %v5931 = vadd.f32 %v5626, %v5881
        %v5932 = vadd.f32 %v5627, %v5886
        %v5933 = vadd.f32 %v5628, %v5891
        %v5934 = vadd.f32 %v5629, %v5896
        %v5935 = vadd.f32 %v5630, %v5901
        %v5936 = vld [vmem:[%s5] sm:$0x1]
        %v5938 = vlaneseq
        %v5939 = vshrl.u32 %v5938, 7
        %v5940 = vsub.s32 0, %v5939
        %v5941 = vrot.slane %v5936, %v5940
        %v5943 = vmul.f32 %v5904, %v5941
        %v5944 = vmul.f32 %v5905, %v5941
        %v5945 = vmul.f32 %v5906, %v5941
        %v5946 = vmul.f32 %v5907, %v5941
        %v5947 = vmul.f32 %v5908, %v5941
        %v5948 = vmul.f32 %v5909, %v5941
        %v5949 = vmul.f32 %v5910, %v5941
        %v5950 = vmul.f32 %v5911, %v5941
        %v5951 = vmul.f32 %v5912, %v5941
        %v5952 = vmul.f32 %v5913, %v5941
        %v5953 = vmul.f32 %v5914, %v5941
        %v5954 = vmul.f32 %v5915, %v5941
        %v5955 = vmul.f32 %v5916, %v5941
        %v5956 = vmul.f32 %v5917, %v5941
        %v5957 = vmul.f32 %v5918, %v5941
        %v5958 = vmul.f32 %v5919, %v5941
        %v5959 = vmul.f32 %v5920, %v5941
        %v5960 = vmul.f32 %v5921, %v5941
        %v5961 = vmul.f32 %v5922, %v5941
        %v5962 = vmul.f32 %v5923, %v5941
        %v5963 = vmul.f32 %v5924, %v5941
        %v5964 = vmul.f32 %v5925, %v5941
        %v5965 = vmul.f32 %v5926, %v5941
        %v5966 = vmul.f32 %v5927, %v5941
        %v5967 = vmul.f32 %v5928, %v5941
        %v5968 = vmul.f32 %v5929, %v5941
        %v5969 = vmul.f32 %v5930, %v5941
        %v5970 = vmul.f32 %v5931, %v5941
        %v5971 = vmul.f32 %v5932, %v5941
        %v5972 = vmul.f32 %v5933, %v5941
        %v5973 = vmul.f32 %v5934, %v5941
        %v5974 = vmul.f32 %v5935, %v5941
        %v5975 = vld [vmem:[%s6] sm:$0x1]
        %v5977 = vlaneseq
        %v5978 = vshrl.u32 %v5977, 7
        %v5979 = vsub.s32 0, %v5978
        %v5980 = vrot.slane %v5975, %v5979
        %v5982 = vadd.f32 %v5943, %v5980
        %v5983 = vadd.f32 %v5944, %v5980
        %v5984 = vadd.f32 %v5945, %v5980
        %v5985 = vadd.f32 %v5946, %v5980
        %v5986 = vadd.f32 %v5947, %v5980
        %v5987 = vadd.f32 %v5948, %v5980
        %v5988 = vadd.f32 %v5949, %v5980
        %v5989 = vadd.f32 %v5950, %v5980
        %v5990 = vadd.f32 %v5951, %v5980
        %v5991 = vadd.f32 %v5952, %v5980
        %v5992 = vadd.f32 %v5953, %v5980
        %v5993 = vadd.f32 %v5954, %v5980
        %v5994 = vadd.f32 %v5955, %v5980
        %v5995 = vadd.f32 %v5956, %v5980
        %v5996 = vadd.f32 %v5957, %v5980
        %v5997 = vadd.f32 %v5958, %v5980
        %v5998 = vadd.f32 %v5959, %v5980
        %v5999 = vadd.f32 %v5960, %v5980
        %v6000 = vadd.f32 %v5961, %v5980
        %v6001 = vadd.f32 %v5962, %v5980
        %v6002 = vadd.f32 %v5963, %v5980
        %v6003 = vadd.f32 %v5964, %v5980
        %v6004 = vadd.f32 %v5965, %v5980
        %v6005 = vadd.f32 %v5966, %v5980
        %v6006 = vadd.f32 %v5967, %v5980
        %v6007 = vadd.f32 %v5968, %v5980
        %v6008 = vadd.f32 %v5969, %v5980
        %v6009 = vadd.f32 %v5970, %v5980
        %v6010 = vadd.f32 %v5971, %v5980
        %v6011 = vadd.f32 %v5972, %v5980
        %v6012 = vadd.f32 %v5973, %v5980
        %v6013 = vadd.f32 %v5974, %v5980
        %v6014 = vld [vmem:[%s1215 + $0x8] sm:$0xff]
        %v6015 = vld [vmem:[%s1215 + $0x10] sm:$0xff]
        %v6016 = vld [vmem:[%s1215 + $0x28] sm:$0xff]
        %v6017 = vld [vmem:[%s1215 + $0x30] sm:$0xff]
        %v6018 = vld [vmem:[%s1215 + $0x48] sm:$0xff]
        %v6019 = vld [vmem:[%s1215 + $0x50] sm:$0xff]
        %v6020 = vld [vmem:[%s1215 + $0x68] sm:$0xff]
        %v6021 = vld [vmem:[%s1215 + $0x70] sm:$0xff]
        %v6022 = vld [vmem:[%s1215 + $0x88] sm:$0xff]
        %v6023 = vld [vmem:[%s1215 + $0x90] sm:$0xff]
        %v6024 = vld [vmem:[%s1215 + $0xa8] sm:$0xff]
        %v6025 = vld [vmem:[%s1215 + $0xb0] sm:$0xff]
        %v6026 = vld [vmem:[%s1215 + $0xc8] sm:$0xff]
        %v6027 = vld [vmem:[%s1215 + $0xd0] sm:$0xff]
        %v6028 = vld [vmem:[%s1215 + $0xe8] sm:$0xff]
        %v6029 = vld [vmem:[%s1215 + $0xf0] sm:$0xff]
        %v6030 = vld [vmem:[%s1215 + $0x108] sm:$0xff]
        %v6031 = vld [vmem:[%s1215 + $0x110] sm:$0xff]
        %v6032 = vld [vmem:[%s1215 + $0x128] sm:$0xff]
        %v6033 = vld [vmem:[%s1215 + $0x130] sm:$0xff]
        %v6034 = vld [vmem:[%s1215 + $0x148] sm:$0xff]
        %v6035 = vld [vmem:[%s1215 + $0x150] sm:$0xff]
        %v6036 = vld [vmem:[%s1215 + $0x168] sm:$0xff]
        %v6037 = vld [vmem:[%s1215 + $0x170] sm:$0xff]
        %v6038 = vld [vmem:[%s1215 + $0x188] sm:$0xff]
        %v6039 = vld [vmem:[%s1215 + $0x190] sm:$0xff]
        %v6040 = vld [vmem:[%s1215 + $0x1a8] sm:$0xff]
        %v6041 = vld [vmem:[%s1215 + $0x1b0] sm:$0xff]
        %v6042 = vld [vmem:[%s1215 + $0x1c8] sm:$0xff]
        %v6043 = vld [vmem:[%s1215 + $0x1d0] sm:$0xff]
        %v6044 = vld [vmem:[%s1215 + $0x1e8] sm:$0xff]
        %v6045 = vld [vmem:[%s1215 + $0x1f0] sm:$0xff]
        %v6046 = vadd.f32 %v5982, %v6014
        %v6047 = vadd.f32 %v5983, %v6015
        %v6048 = vadd.f32 %v5984, %v6016
        %v6049 = vadd.f32 %v5985, %v6017
        %v6050 = vadd.f32 %v5986, %v6018
        %v6051 = vadd.f32 %v5987, %v6019
        %v6052 = vadd.f32 %v5988, %v6020
        %v6053 = vadd.f32 %v5989, %v6021
        %v6054 = vadd.f32 %v5990, %v6022
        %v6055 = vadd.f32 %v5991, %v6023
        %v6056 = vadd.f32 %v5992, %v6024
        %v6057 = vadd.f32 %v5993, %v6025
        %v6058 = vadd.f32 %v5994, %v6026
        %v6059 = vadd.f32 %v5995, %v6027
        %v6060 = vadd.f32 %v5996, %v6028
        %v6061 = vadd.f32 %v5997, %v6029
        %v6062 = vadd.f32 %v5998, %v6030
        %v6063 = vadd.f32 %v5999, %v6031
        %v6064 = vadd.f32 %v6000, %v6032
        %v6065 = vadd.f32 %v6001, %v6033
        %v6066 = vadd.f32 %v6002, %v6034
        %v6067 = vadd.f32 %v6003, %v6035
        %v6068 = vadd.f32 %v6004, %v6036
        %v6069 = vadd.f32 %v6005, %v6037
        %v6070 = vadd.f32 %v6006, %v6038
        %v6071 = vadd.f32 %v6007, %v6039
        %v6072 = vadd.f32 %v6008, %v6040
        %v6073 = vadd.f32 %v6009, %v6041
        %v6074 = vadd.f32 %v6010, %v6042
        %v6075 = vadd.f32 %v6011, %v6043
        %v6076 = vadd.f32 %v6012, %v6044
        %v6077 = vadd.f32 %v6013, %v6045
        %vm6078 = vcmp.ge.f32.partialorder %v6046, 0.0
        %vm6079 = vcmp.ge.f32.partialorder %v6047, 0.0
        %vm6080 = vcmp.ge.f32.partialorder %v6048, 0.0
        %vm6081 = vcmp.ge.f32.partialorder %v6049, 0.0
        %vm6082 = vcmp.ge.f32.partialorder %v6050, 0.0
        %vm6083 = vcmp.ge.f32.partialorder %v6051, 0.0
        %vm6084 = vcmp.ge.f32.partialorder %v6052, 0.0
        %vm6085 = vcmp.ge.f32.partialorder %v6053, 0.0
        %vm6086 = vcmp.ge.f32.partialorder %v6054, 0.0
        %vm6087 = vcmp.ge.f32.partialorder %v6055, 0.0
        %vm6088 = vcmp.ge.f32.partialorder %v6056, 0.0
        %vm6089 = vcmp.ge.f32.partialorder %v6057, 0.0
        %vm6090 = vcmp.ge.f32.partialorder %v6058, 0.0
        %vm6091 = vcmp.ge.f32.partialorder %v6059, 0.0
        %vm6092 = vcmp.ge.f32.partialorder %v6060, 0.0
        %vm6093 = vcmp.ge.f32.partialorder %v6061, 0.0
        %vm6094 = vcmp.ge.f32.partialorder %v6062, 0.0
        %vm6095 = vcmp.ge.f32.partialorder %v6063, 0.0
        %vm6096 = vcmp.ge.f32.partialorder %v6064, 0.0
        %vm6097 = vcmp.ge.f32.partialorder %v6065, 0.0
        %vm6098 = vcmp.ge.f32.partialorder %v6066, 0.0
        %vm6099 = vcmp.ge.f32.partialorder %v6067, 0.0
        %vm6100 = vcmp.ge.f32.partialorder %v6068, 0.0
        %vm6101 = vcmp.ge.f32.partialorder %v6069, 0.0
        %vm6102 = vcmp.ge.f32.partialorder %v6070, 0.0
        %vm6103 = vcmp.ge.f32.partialorder %v6071, 0.0
        %vm6104 = vcmp.ge.f32.partialorder %v6072, 0.0
        %vm6105 = vcmp.ge.f32.partialorder %v6073, 0.0
        %vm6106 = vcmp.ge.f32.partialorder %v6074, 0.0
        %vm6107 = vcmp.ge.f32.partialorder %v6075, 0.0
        %vm6108 = vcmp.ge.f32.partialorder %v6076, 0.0
        %vm6109 = vcmp.ge.f32.partialorder %v6077, 0.0
        %v6110 = vmul.f32 %v6046, 0.2
        %v6111 = vmul.f32 %v6047, 0.2
        %v6112 = vmul.f32 %v6048, 0.2
        %v6113 = vmul.f32 %v6049, 0.2
        %v6114 = vmul.f32 %v6050, 0.2
        %v6115 = vmul.f32 %v6051, 0.2
        %v6116 = vmul.f32 %v6052, 0.2
        %v6117 = vmul.f32 %v6053, 0.2
        %v6118 = vmul.f32 %v6054, 0.2
        %v6119 = vmul.f32 %v6055, 0.2
        %v6120 = vmul.f32 %v6056, 0.2
        %v6121 = vmul.f32 %v6057, 0.2
        %v6122 = vmul.f32 %v6058, 0.2
        %v6123 = vmul.f32 %v6059, 0.2
        %v6124 = vmul.f32 %v6060, 0.2
        %v6125 = vmul.f32 %v6061, 0.2
        %v6126 = vmul.f32 %v6062, 0.2
        %v6127 = vmul.f32 %v6063, 0.2
        %v6128 = vmul.f32 %v6064, 0.2
        %v6129 = vmul.f32 %v6065, 0.2
        %v6130 = vmul.f32 %v6066, 0.2
        %v6131 = vmul.f32 %v6067, 0.2
        %v6132 = vmul.f32 %v6068, 0.2
        %v6133 = vmul.f32 %v6069, 0.2
        %v6134 = vmul.f32 %v6070, 0.2
        %v6135 = vmul.f32 %v6071, 0.2
        %v6136 = vmul.f32 %v6072, 0.2
        %v6137 = vmul.f32 %v6073, 0.2
        %v6138 = vmul.f32 %v6074, 0.2
        %v6139 = vmul.f32 %v6075, 0.2
        %v6140 = vmul.f32 %v6076, 0.2
        %v6141 = vmul.f32 %v6077, 0.2
        %v6142 = vsel %vm6078, %v6046, %v6110
        %v6143 = vsel %vm6079, %v6047, %v6111
        %v6144 = vsel %vm6080, %v6048, %v6112
        %v6145 = vsel %vm6081, %v6049, %v6113
        %v6146 = vsel %vm6082, %v6050, %v6114
        %v6147 = vsel %vm6083, %v6051, %v6115
        %v6148 = vsel %vm6084, %v6052, %v6116
        %v6149 = vsel %vm6085, %v6053, %v6117
        %v6150 = vsel %vm6086, %v6054, %v6118
        %v6151 = vsel %vm6087, %v6055, %v6119
        %v6152 = vsel %vm6088, %v6056, %v6120
        %v6153 = vsel %vm6089, %v6057, %v6121
        %v6154 = vsel %vm6090, %v6058, %v6122
        %v6155 = vsel %vm6091, %v6059, %v6123
        %v6156 = vsel %vm6092, %v6060, %v6124
        %v6157 = vsel %vm6093, %v6061, %v6125
        %v6158 = vsel %vm6094, %v6062, %v6126
        %v6159 = vsel %vm6095, %v6063, %v6127
        %v6160 = vsel %vm6096, %v6064, %v6128
        %v6161 = vsel %vm6097, %v6065, %v6129
        %v6162 = vsel %vm6098, %v6066, %v6130
        %v6163 = vsel %vm6099, %v6067, %v6131
        %v6164 = vsel %vm6100, %v6068, %v6132
        %v6165 = vsel %vm6101, %v6069, %v6133
        %v6166 = vsel %vm6102, %v6070, %v6134
        %v6167 = vsel %vm6103, %v6071, %v6135
        %v6168 = vsel %vm6104, %v6072, %v6136
        %v6169 = vsel %vm6105, %v6073, %v6137
        %v6170 = vsel %vm6106, %v6074, %v6138
        %v6171 = vsel %vm6107, %v6075, %v6139
        %v6172 = vsel %vm6108, %v6076, %v6140
        %v6173 = vsel %vm6109, %v6077, %v6141
        %6174 = vst [vmem:[%s260] sm:$0xff] %v6142
        %6175 = vst [vmem:[%s260 + $0x8] sm:$0xff] %v6143
        %6176 = vst [vmem:[%s260 + $0x10] sm:$0xff] %v6144
        %6177 = vst [vmem:[%s260 + $0x18] sm:$0xff] %v6145
        %6178 = vst [vmem:[%s260 + $0x20] sm:$0xff] %v6146
        %6179 = vst [vmem:[%s260 + $0x28] sm:$0xff] %v6147
        %6180 = vst [vmem:[%s260 + $0x30] sm:$0xff] %v6148
        %6181 = vst [vmem:[%s260 + $0x38] sm:$0xff] %v6149
        %6182 = vst [vmem:[%s260 + $0x40] sm:$0xff] %v6150
        %6183 = vst [vmem:[%s260 + $0x48] sm:$0xff] %v6151
        %6184 = vst [vmem:[%s260 + $0x50] sm:$0xff] %v6152
        %6185 = vst [vmem:[%s260 + $0x58] sm:$0xff] %v6153
        %6186 = vst [vmem:[%s260 + $0x60] sm:$0xff] %v6154
        %6187 = vst [vmem:[%s260 + $0x68] sm:$0xff] %v6155
        %6188 = vst [vmem:[%s260 + $0x70] sm:$0xff] %v6156
        %6189 = vst [vmem:[%s260 + $0x78] sm:$0xff] %v6157
        %6190 = vst [vmem:[%s260 + $0x80] sm:$0xff] %v6158
        %6191 = vst [vmem:[%s260 + $0x88] sm:$0xff] %v6159
        %6192 = vst [vmem:[%s260 + $0x90] sm:$0xff] %v6160
        %6193 = vst [vmem:[%s260 + $0x98] sm:$0xff] %v6161
        %6194 = vst [vmem:[%s260 + $0xa0] sm:$0xff] %v6162
        %6195 = vst [vmem:[%s260 + $0xa8] sm:$0xff] %v6163
        %6196 = vst [vmem:[%s260 + $0xb0] sm:$0xff] %v6164
        %6197 = vst [vmem:[%s260 + $0xb8] sm:$0xff] %v6165
        %6198 = vst [vmem:[%s260 + $0xc0] sm:$0xff] %v6166
        %6199 = vst [vmem:[%s260 + $0xc8] sm:$0xff] %v6167
        %6200 = vst [vmem:[%s260 + $0xd0] sm:$0xff] %v6168
        %6201 = vst [vmem:[%s260 + $0xd8] sm:$0xff] %v6169
        %6202 = vst [vmem:[%s260 + $0xe0] sm:$0xff] %v6170
        %6203 = vst [vmem:[%s260 + $0xe8] sm:$0xff] %v6171
        %6204 = vst [vmem:[%s260 + $0xf0] sm:$0xff] %v6172
        %6205 = vst [vmem:[%s260 + $0xf8] sm:$0xff] %v6173
        %s6206 = sand.u32 %s157, 1
        %s6207 = scalar_lea.sflag [#allocation7], %s6206
        %s6208 = sand.u32 %s157, 1
        %s6209 = smul.addr %s6208, 256
        %s6210 = scalar_lea.vmem [#allocation10], %s6209
        // Predicated region
        $region53: #{tpu_custom_call.1} parent=43 // pred_check
          %p6211 = pneg %p167
        $region54: #{tpu_custom_call.1} parent=43 // pred_check_branch
          %6213 = sbr.rel (%p6211) target = $region56
        $region55: #{tpu_custom_call.1} parent=43 // pred_region
          %s6215 = ssub.s32 4096, 4096
          %6216 = vsyncadd %s6207, %s6215
          %s6217 = smul.addr %s23, 32
          %s6218 = smul.addr %s6217, 128
          %s6219 = scalar_lea.hbm %s7, %s6218
          %s6220 = sshll.u32 %s6210, 4
          %s6221 = int_to_ptr.vmem [resolvable:$true] %s6220
          %6226 = dma.vmem_to_hbm [thread:$0]  %s6221, 4096, %s6219, %s6207, 128, 128, 8
        $region56: #{tpu_custom_call.1} parent=43 // pred_fallthru
          _
      $region44: #{tpu_custom_call.1} parent=5 // pred_fallthru
        _
      %p6227 = scmp.le.s32.totalorder 2, %s18
      // Predicated region
      $region57: #{tpu_custom_call.1} parent=5 // pred_check
        %p6228 = pneg %p6227
      $region58: #{tpu_custom_call.1} parent=5 // pred_check_branch
        %6230 = sbr.rel (%p6228) target = $region60
      $region59: #{tpu_custom_call.1} parent=5 // pred_region
        %s6231 = ssub.s32 %s18, 2
        // Predicated region
        $region61: #{tpu_custom_call.1} parent=59 // pred_check
          %p6232 = pneg %p173
        $region62: #{tpu_custom_call.1} parent=59 // pred_check_branch
          %6234 = sbr.rel (%p6232) target = $region64
        $region63: #{tpu_custom_call.1} parent=59 // pred_region
          %s6235 = sand.u32 %s158, 1
          %s6236 = scalar_lea.sflag [#allocation7], %s6235
          %s6237 = sand.u32 %s158, 1
          %s6238 = smul.addr %s6237, 256
          %s6239 = scalar_lea.vmem [#allocation10], %s6238
          %6240 = dma.done %s6236, 4096
        $region64: #{tpu_custom_call.1} parent=59 // pred_fallthru
          _
      $region60: #{tpu_custom_call.1} parent=5 // pred_fallthru
        _
    $region6: #{tpu_custom_call.1} parent=1 // loop_footer
      %s22 = sadd.s32 1, %s18
    $region7: #{tpu_custom_call.1} parent=1 // loop_footer_branch
      %17 = sbr.rel target = $region3
    $region8: #{tpu_custom_call.1} parent=1 // loop_exit
      _
    %6241 = vsyncpa [#allocation6], 1
    %s6242 = scalar_lea.sflag [#allocation6], 1
    %6243 = vsyncpa %s6242, 1
    %6244 = vsyncpa [#allocation9], 1
    %6245 = vsyncpa [#allocation7], 1
    %s6246 = scalar_lea.sflag [#allocation7], 1
    %6247 = vsyncpa %s6246, 1
  %6248 = vsyncmov [#allocation4]
  %s6249 = vpop.sfrf %6248
  %p6250 = scmp.eq.s32.totalorder %s6249, 0
  %p6251 = pneg %p6250
  %6253 = shalt.err (%p6251)

</llo_original>
